<compile_context>
chip_gen: v7x
topology: tpu7x:2x2x1
jax: 0.10.0
libtpu: 0.0.40
codegen_flags: <defaults>
</compile_context>

<pallas_src>
import functools

import jax
import jax.numpy as jnp
from jax.experimental import pallas as pl
from jax.experimental.pallas import tpu as pltpu


# ---------------------------------------------------------------------------
# The single fused kernel.
# ---------------------------------------------------------------------------
def _fused_lstm_kernel(ids_ref, emb_ref,
                       wih1_ref, b1_ref, whh1_ref,
                       wih2_ref, b2_ref, whh2_ref,
                       wh_ref, bh_ref,
                       out_ref, gx_scr, h1_scr):
    Bp = out_ref.shape[0]                 # sublane-padded batch (multiple of 8)
    TBp = gx_scr.shape[0]
    T = TBp // Bp
    H2 = whh1_ref.shape[0]                # 2H (concat fw|bw hidden)
    H = H2 // 2
    G = 8 * H                             # 4 gates x 2 directions

    # ---- embedding lookup as an exact one-hot matmul on the MXU ----
    Vp = emb_ref.shape[0]                 # vocab padded to a lane multiple
    ids = ids_ref[...]                                        # (TBp, 1) int32
    vocab_iota = jax.lax.broadcasted_iota(jnp.int32, (TBp, Vp), 1)
    one_hot = (vocab_iota == ids).astype(jnp.float32)
    x0 = jnp.dot(one_hot, emb_ref[...],
                 preferred_element_type=jnp.float32)          # (TBp, E)
    # nn.Dropout(0.2) is identity at inference time.

    # Lane mask: even H-wide gate blocks belong to the forward direction.
    lane = jax.lax.broadcasted_iota(jnp.int32, (Bp, G), 1)
    fw_lane = (lane % (2 * H)) < H

    def bilstm(x_bf, wih_ref, b_ref, whh_ref, out_scr):
        # Hoisted input projection: one big-M matmul for all timesteps and
        # both directions (bf16 operands, f32 accumulate).
        gx_scr[...] = (jnp.dot(x_bf, wih_ref[...],
                               preferred_element_type=jnp.float32)
                       + b_ref[...])
        h = jnp.zeros((Bp, H2), jnp.float32)     # lanes [0:H]=fw, [H:2H]=bw
        c = jnp.zeros((Bp, H2), jnp.float32)
        h_sum = jnp.zeros((Bp, H2), jnp.float32)
        # T small & static -> full unroll; every slice offset is a static
        # multiple of Bp=8 sublanes, so reads/writes are full-tile aligned.
        for t in range(T):
            r = T - 1 - t
            # gate-x: fw lanes from time t, bw lanes from time r (one select)
            gx = jnp.where(fw_lane,
                           gx_scr[t * Bp:(t + 1) * Bp, :],
                           gx_scr[r * Bp:(r + 1) * Bp, :])
            # single fused K=2H recurrent matmul (block-diagonal W_hh)
            g = gx + jnp.dot(h.astype(jnp.bfloat16), whh_ref[...],
                             preferred_element_type=jnp.float32)
            i_g = jax.nn.sigmoid(g[:, 0 * H2:1 * H2])
            f_g = jax.nn.sigmoid(g[:, 1 * H2:2 * H2])
            g_g = jnp.tanh(g[:, 2 * H2:3 * H2])
            o_g = jax.nn.sigmoid(g[:, 3 * H2:4 * H2])
            c = f_g * c + i_g * g_g
            h = o_g * jnp.tanh(c)
            h_sum = h_sum + h
            if out_scr is not None:
                out_scr[t * Bp:(t + 1) * Bp, 0:H] = h[:, 0:H]      # fw @ t
                out_scr[r * Bp:(r + 1) * Bp, H:H2] = h[:, H:H2]    # bw @ r
        return h_sum

    # Layer 1: full (T*Bp, 2H) output stays in VMEM scratch.
    bilstm(x0.astype(jnp.bfloat16), wih1_ref, b1_ref, whh1_ref, h1_scr)
    # Layer 2: only the time-sum of h is needed for the pooled head.
    h_sum2 = bilstm(h1_scr[...].astype(jnp.bfloat16),
                    wih2_ref, b2_ref, whh2_ref, None)

    # Fused head: mean over T, then pre-composed decoder1..3 (one matmul).
    pooled = h_sum2 * (1.0 / T)
    out_ref[...] = (jnp.dot(pooled, wh_ref[...],
                            preferred_element_type=jnp.float32)
                    + bh_ref[...])


# ---------------------------------------------------------------------------
# Parameter init + packing into the fused-kernel layouts.
#   wih : (d_in, 8H) bf16, columns [i_f,i_b,f_f,f_b,g_f,g_b,o_f,o_b]
#   b   : (1, 8H) f32 = b_ih + b_hh, same column order
#   whh : (2H, 8H) bf16 block-diagonal (rows [h_fw | h_bw])
#   w_head/b_head : pre-composed decoder1 @ decoder2 @ decoder3 (exact).
# ---------------------------------------------------------------------------
def init_params(key, vocab, embed_dim, hidden_dim, output_dim):
    H = hidden_dim
    keys = iter(jax.random.split(key, 32))

    emb = 0.1 * jax.random.normal(next(keys), (vocab, embed_dim), jnp.float32)
    vocab_p = ((vocab + 127) // 128) * 128          # lane-pad vocab (zero rows)
    emb_p = jnp.zeros((vocab_p, embed_dim), jnp.float32).at[:vocab].set(emb)

    def interleave(fw, bw):
        parts = []
        for g in range(4):
            parts.append(fw[..., g * H:(g + 1) * H])
            parts.append(bw[..., g * H:(g + 1) * H])
        return jnp.concatenate(parts, axis=-1)

    bound = float(H) ** -0.5
    layers = []
    for d_in in (embed_dim, 2 * H):
        w_ih, w_hh, bias = {}, {}, {}
        for d in ("fw", "bw"):
            w_ih[d] = jax.random.uniform(next(keys), (d_in, 4 * H),
                                         jnp.float32, -bound, bound)
            w_hh[d] = jax.random.uniform(next(keys), (H, 4 * H),
                                         jnp.float32, -bound, bound)
            b_ih = jax.random.uniform(next(keys), (4 * H,),
                                      jnp.float32, -bound, bound)
            b_hh = jax.random.uniform(next(keys), (4 * H,),
                                      jnp.float32, -bound, bound)
            bias[d] = b_ih + b_hh
        wih = interleave(w_ih["fw"], w_ih["bw"]).astype(jnp.bfloat16)
        b = interleave(bias["fw"], bias["bw"]).reshape(1, 8 * H)
        z = jnp.zeros((H, 4 * H), jnp.float32)
        whh = jnp.concatenate([interleave(w_hh["fw"], z),
                               interleave(z, w_hh["bw"])],
                              axis=0).astype(jnp.bfloat16)
        layers.append(dict(wih=wih, b=b, whh=whh))

    def lin(k1, k2, din, dout):
        bnd = float(din) ** -0.5
        w = jax.random.uniform(k1, (din, dout), jnp.float32, -bnd, bnd)
        b = jax.random.uniform(k2, (dout,), jnp.float32, -bnd, bnd)
        return w, b

    w1, b1 = lin(next(keys), next(keys), 2 * H, 64)
    w2, b2 = lin(next(keys), next(keys), 64, 16)
    w3, b3 = lin(next(keys), next(keys), 16, output_dim)
    w_head = w1 @ w2 @ w3                                   # (2H, out)
    b_head = ((b1 @ w2 + b2) @ w3 + b3).reshape(1, -1)      # (1, out)

    return dict(embedding=emb_p, l1=layers[0], l2=layers[1],
                w_head=w_head, b_head=b_head)


# ---------------------------------------------------------------------------
# Forward pass mirroring LSTM.forward (inference): ONE pallas_call total.
# ---------------------------------------------------------------------------
def forward(params, x_ids):
    B, T = x_ids.shape
    Bp = ((B + 7) // 8) * 8                 # sublane-pad batch to multiple of 8
    H = params["l1"]["whh"].shape[0] // 2
    out_dim = params["w_head"].shape[1]

    ids = jnp.pad(x_ids.astype(jnp.int32), ((0, Bp - B), (0, 0)))
    ids_tm = ids.T.reshape(T * Bp, 1)       # time-major rows (t*Bp + b)

    out_p = pl.pallas_call(
        _fused_lstm_kernel,
        out_shape=jax.ShapeDtypeStruct((Bp, out_dim), jnp.float32),
        scratch_shapes=[
            pltpu.VMEM((T * Bp, 8 * H), jnp.float32),   # gate-x scratch
            pltpu.VMEM((T * Bp, 2 * H), jnp.float32),   # layer-1 output
        ],
        # Total VMEM footprint here is ~2.5 MiB -- well under every
        # generation's scoped limit, so no vmem_limit_bytes override needed.
    )(ids_tm, params["embedding"],
      params["l1"]["wih"], params["l1"]["b"], params["l1"]["whh"],
      params["l2"]["wih"], params["l2"]["b"], params["l2"]["whh"],
      params["w_head"], params["b_head"])
    return out_p[:B]                        # drop padded batch rows


if __name__ == "__main__":
    vocab, embed_dim, hidden_dim, output_dim = 50, 128, 128, 4
    B, T = 2, 8

    key = jax.random.PRNGKey(0)
    pkey, xkey = jax.random.split(key)
    params = init_params(pkey, vocab, embed_dim, hidden_dim, output_dim)
    x_ids = jax.random.randint(xkey, (B, T), 0, vocab, dtype=jnp.int32)

    out = jax.jit(functools.partial(forward, params))(x_ids)
    jax.block_until_ready(out)
    assert out.shape == (B, output_dim)
    assert bool(jnp.all(jnp.isfinite(out)))
    print("KERNEL_OK")
</pallas_src>

<mosaic_0001>
module attributes {stable_mosaic.version = 11 : i64} {
  func.func @_fused_lstm_kernel(%arg0: memref<64x1xi32, #tpu.memory_space<vmem>>, %arg1: memref<128x128xf32, #tpu.memory_space<vmem>>, %arg2: memref<128x1024xbf16, #tpu.memory_space<vmem>>, %arg3: memref<1x1024xf32, #tpu.memory_space<vmem>>, %arg4: memref<256x1024xbf16, #tpu.memory_space<vmem>>, %arg5: memref<256x1024xbf16, #tpu.memory_space<vmem>>, %arg6: memref<1x1024xf32, #tpu.memory_space<vmem>>, %arg7: memref<256x1024xbf16, #tpu.memory_space<vmem>>, %arg8: memref<256x4xf32, #tpu.memory_space<vmem>>, %arg9: memref<1x4xf32, #tpu.memory_space<vmem>>, %arg10: memref<8x4xf32, #tpu.memory_space<vmem>>, %arg11: memref<64x1024xf32, #tpu.memory_space<vmem>>, %arg12: memref<64x256xf32, #tpu.memory_space<vmem>>) attributes {dimension_semantics = [], scalar_prefetch = 0 : i64, scratch_operands = 2 : i64, tpu.core_type = #tpu.core_type<tc>} {
    %c0 = arith.constant 0 : index
    %c0_0 = arith.constant 0 : index
    %0 = vector.load %arg0[%c0, %c0_0] : memref<64x1xi32, #tpu.memory_space<vmem>>, vector<64x1xi32>
    %1 = tpu.iota {dimensions = array<i32: 1>} : vector<64x128xi32>
    %2 = vector.broadcast %0 : vector<64x1xi32> to vector<64x128xi32>
    %3 = arith.cmpi eq, %1, %2 : vector<64x128xi32>
    %4 = arith.extui %3 : vector<64x128xi1> to vector<64x128xi32>
    %5 = arith.sitofp %4 : vector<64x128xi32> to vector<64x128xf32>
    %c0_1 = arith.constant 0 : index
    %c0_2 = arith.constant 0 : index
    %6 = vector.load %arg1[%c0_1, %c0_2] : memref<128x128xf32, #tpu.memory_space<vmem>>, vector<128x128xf32>
    %cst = arith.constant dense<0.000000e+00> : vector<64x128xf32>
    %7 = tpu.matmul %5, %6, %cst {dimension_numbers = #tpu.dot_dimension_numbers<[1], [0], [0], [1], [0, 0, 1, 1], [], []>} : vector<64x128xf32>, vector<128x128xf32>, vector<64x128xf32> -> vector<64x128xf32>
    %8 = tpu.iota {dimensions = array<i32: 1>} : vector<8x1024xi32>
    %c256_i32 = arith.constant 256 : i32
    %c0_i32 = arith.constant 0 : i32
    %9 = arith.cmpi eq, %c256_i32, %c0_i32 : i32
    %c1_i32 = arith.constant 1 : i32
    %10 = arith.select %9, %c1_i32, %c256_i32 : i32
    %11 = vector.broadcast %10 : i32 to vector<8x1024xi32>
    %12 = arith.remsi %8, %11 : vector<8x1024xi32>
    %c0_i32_3 = arith.constant 0 : i32
    %13 = vector.broadcast %c0_i32_3 : i32 to vector<8x1024xi32>
    %14 = arith.cmpi ne, %12, %13 : vector<8x1024xi32>
    %c0_i32_4 = arith.constant 0 : i32
    %15 = vector.broadcast %c0_i32_4 : i32 to vector<8x1024xi32>
    %16 = arith.cmpi slt, %12, %15 : vector<8x1024xi32>
    %c0_i32_5 = arith.constant 0 : i32
    %17 = arith.cmpi slt, %10, %c0_i32_5 : i32
    %18 = vector.broadcast %17 : i1 to vector<8x1024xi1>
    %19 = vector.broadcast %18 : vector<8x1024xi1> to vector<8x1024xi1>
    %20 = arith.xori %16, %19 : vector<8x1024xi1>
    %21 = arith.andi %20, %14 : vector<8x1024xi1>
    %22 = vector.broadcast %10 : i32 to vector<8x1024xi32>
    %23 = arith.addi %12, %22 : vector<8x1024xi32>
    %24 = arith.select %21, %23, %12 : vector<8x1024xi1>, vector<8x1024xi32>
    %c128_i32 = arith.constant 128 : i32
    %25 = vector.broadcast %c128_i32 : i32 to vector<8x1024xi32>
    %26 = arith.cmpi slt, %24, %25 : vector<8x1024xi32>
    %27 = arith.truncf %7 : vector<64x128xf32> to vector<64x128xbf16>
    %c0_6 = arith.constant 0 : index
    %c0_7 = arith.constant 0 : index
    %28 = vector.load %arg2[%c0_6, %c0_7] : memref<128x1024xbf16, #tpu.memory_space<vmem>>, vector<128x1024xbf16>
    %cst_8 = arith.constant dense<0.000000e+00> : vector<64x1024xf32>
    %29 = tpu.matmul %27, %28, %cst_8 {dimension_numbers = #tpu.dot_dimension_numbers<[1], [0], [0], [1], [0, 0, 1, 1], [], []>} : vector<64x128xbf16>, vector<128x1024xbf16>, vector<64x1024xf32> -> vector<64x1024xf32>
    %c0_9 = arith.constant 0 : index
    %c0_10 = arith.constant 0 : index
    %30 = vector.load %arg3[%c0_9, %c0_10] : memref<1x1024xf32, #tpu.memory_space<vmem>>, vector<1x1024xf32>
    %31 = vector.broadcast %30 : vector<1x1024xf32> to vector<64x1024xf32>
    %32 = arith.addf %29, %31 : vector<64x1024xf32>
    %c0_11 = arith.constant 0 : index
    %c0_12 = arith.constant 0 : index
    %33 = vector.load %arg11[%c0_11, %c0_12] : memref<64x1024xf32, #tpu.memory_space<vmem>>, vector<64x1024xf32>
    tpu.vector_store %arg11[%c0_11, %c0_12], %32 {strides = array<i32>} : memref<64x1024xf32, #tpu.memory_space<vmem>>, vector<64x1024xf32>,
    %cst_13 = arith.constant 0.000000e+00 : f32
    %34 = vector.broadcast %cst_13 : f32 to vector<8x256xf32>
    %cst_14 = arith.constant 0.000000e+00 : f32
    %35 = vector.broadcast %cst_14 : f32 to vector<8x256xf32>
    %c0_15 = arith.constant 0 : index
    %c0_16 = arith.constant 0 : index
    %36 = vector.load %arg11[%c0_15, %c0_16] : memref<64x1024xf32, #tpu.memory_space<vmem>>, vector<8x1024xf32>
    %c56 = arith.constant 56 : index
    %c0_17 = arith.constant 0 : index
    %37 = vector.load %arg11[%c56, %c0_17] : memref<64x1024xf32, #tpu.memory_space<vmem>>, vector<8x1024xf32>
    %38 = arith.select %26, %36, %37 : vector<8x1024xi1>, vector<8x1024xf32>
    %39 = arith.truncf %34 : vector<8x256xf32> to vector<8x256xbf16>
    %c0_18 = arith.constant 0 : index
    %c0_19 = arith.constant 0 : index
    %40 = vector.load %arg4[%c0_18, %c0_19] : memref<256x1024xbf16, #tpu.memory_space<vmem>>, vector<256x1024xbf16>
    %cst_20 = arith.constant dense<0.000000e+00> : vector<8x1024xf32>
    %41 = tpu.matmul %39, %40, %cst_20 {dimension_numbers = #tpu.dot_dimension_numbers<[1], [0], [0], [1], [0, 0, 1, 1], [], []>} : vector<8x256xbf16>, vector<256x1024xbf16>, vector<8x1024xf32> -> vector<8x1024xf32>
    %42 = arith.addf %38, %41 : vector<8x1024xf32>
    %43 = vector.extract_strided_slice %42 {offsets = [0, 0], sizes = [8, 256], strides = [1, 1]} : vector<8x1024xf32> to vector<8x256xf32>
    %44 = arith.negf %43 : vector<8x256xf32>
    %45 = math.exp %44 : vector<8x256xf32>
    %cst_21 = arith.constant 1.000000e+00 : f32
    %46 = vector.broadcast %cst_21 : f32 to vector<8x256xf32>
    %47 = arith.addf %46, %45 : vector<8x256xf32>
    %48 = arith.divf %46, %47 : vector<8x256xf32>
    %49 = vector.extract_strided_slice %42 {offsets = [0, 256], sizes = [8, 256], strides = [1, 1]} : vector<8x1024xf32> to vector<8x256xf32>
    %50 = arith.negf %49 : vector<8x256xf32>
    %51 = math.exp %50 : vector<8x256xf32>
    %cst_22 = arith.constant 1.000000e+00 : f32
    %52 = vector.broadcast %cst_22 : f32 to vector<8x256xf32>
    %53 = arith.addf %52, %51 : vector<8x256xf32>
    %54 = arith.divf %52, %53 : vector<8x256xf32>
    %55 = vector.extract_strided_slice %42 {offsets = [0, 512], sizes = [8, 256], strides = [1, 1]} : vector<8x1024xf32> to vector<8x256xf32>
    %56 = math.tanh %55 : vector<8x256xf32>
    %57 = vector.extract_strided_slice %42 {offsets = [0, 768], sizes = [8, 256], strides = [1, 1]} : vector<8x1024xf32> to vector<8x256xf32>
    %58 = arith.negf %57 : vector<8x256xf32>
    %59 = math.exp %58 : vector<8x256xf32>
    %cst_23 = arith.constant 1.000000e+00 : f32
    %60 = vector.broadcast %cst_23 : f32 to vector<8x256xf32>
    %61 = arith.addf %60, %59 : vector<8x256xf32>
    %62 = arith.divf %60, %61 : vector<8x256xf32>
    %63 = arith.mulf %54, %35 : vector<8x256xf32>
    %64 = arith.mulf %48, %56 : vector<8x256xf32>
    %65 = arith.addf %63, %64 : vector<8x256xf32>
    %66 = math.tanh %65 : vector<8x256xf32>
    %67 = arith.mulf %62, %66 : vector<8x256xf32>
    %68 = vector.extract_strided_slice %67 {offsets = [0, 0], sizes = [8, 128], strides = [1, 1]} : vector<8x256xf32> to vector<8x128xf32>
    %c0_24 = arith.constant 0 : index
    %c0_25 = arith.constant 0 : index
    %69 = vector.load %arg12[%c0_24, %c0_25] : memref<64x256xf32, #tpu.memory_space<vmem>>, vector<8x128xf32>
    tpu.vector_store %arg12[%c0_24, %c0_25], %68 {strides = array<i32>} : memref<64x256xf32, #tpu.memory_space<vmem>>, vector<8x128xf32>,
    %70 = vector.extract_strided_slice %67 {offsets = [0, 128], sizes = [8, 128], strides = [1, 1]} : vector<8x256xf32> to vector<8x128xf32>
    %c56_26 = arith.constant 56 : index
    %c128 = arith.constant 128 : index
    %71 = vector.load %arg12[%c56_26, %c128] : memref<64x256xf32, #tpu.memory_space<vmem>>, vector<8x128xf32>
    tpu.vector_store %arg12[%c56_26, %c128], %70 {strides = array<i32>} : memref<64x256xf32, #tpu.memory_space<vmem>>, vector<8x128xf32>,
    %c8 = arith.constant 8 : index
    %c0_27 = arith.constant 0 : index
    %72 = vector.load %arg11[%c8, %c0_27] : memref<64x1024xf32, #tpu.memory_space<vmem>>, vector<8x1024xf32>
    %c48 = arith.constant 48 : index
    %c0_28 = arith.constant 0 : index
    %73 = vector.load %arg11[%c48, %c0_28] : memref<64x1024xf32, #tpu.memory_space<vmem>>, vector<8x1024xf32>
    %74 = arith.select %26, %72, %73 : vector<8x1024xi1>, vector<8x1024xf32>
    %75 = arith.truncf %67 : vector<8x256xf32> to vector<8x256xbf16>
    %c0_29 = arith.constant 0 : index
    %c0_30 = arith.constant 0 : index
    %76 = vector.load %arg4[%c0_29, %c0_30] : memref<256x1024xbf16, #tpu.memory_space<vmem>>, vector<256x1024xbf16>
    %cst_31 = arith.constant dense<0.000000e+00> : vector<8x1024xf32>
    %77 = tpu.matmul %75, %76, %cst_31 {dimension_numbers = #tpu.dot_dimension_numbers<[1], [0], [0], [1], [0, 0, 1, 1], [], []>} : vector<8x256xbf16>, vector<256x1024xbf16>, vector<8x1024xf32> -> vector<8x1024xf32>
    %78 = arith.addf %74, %77 : vector<8x1024xf32>
    %79 = vector.extract_strided_slice %78 {offsets = [0, 0], sizes = [8, 256], strides = [1, 1]} : vector<8x1024xf32> to vector<8x256xf32>
    %80 = arith.negf %79 : vector<8x256xf32>
    %81 = math.exp %80 : vector<8x256xf32>
    %cst_32 = arith.constant 1.000000e+00 : f32
    %82 = vector.broadcast %cst_32 : f32 to vector<8x256xf32>
    %83 = arith.addf %82, %81 : vector<8x256xf32>
    %84 = arith.divf %82, %83 : vector<8x256xf32>
    %85 = vector.extract_strided_slice %78 {offsets = [0, 256], sizes = [8, 256], strides = [1, 1]} : vector<8x1024xf32> to vector<8x256xf32>
    %86 = arith.negf %85 : vector<8x256xf32>
    %87 = math.exp %86 : vector<8x256xf32>
    %cst_33 = arith.constant 1.000000e+00 : f32
    %88 = vector.broadcast %cst_33 : f32 to vector<8x256xf32>
    %89 = arith.addf %88, %87 : vector<8x256xf32>
    %90 = arith.divf %88, %89 : vector<8x256xf32>
    %91 = vector.extract_strided_slice %78 {offsets = [0, 512], sizes = [8, 256], strides = [1, 1]} : vector<8x1024xf32> to vector<8x256xf32>
    %92 = math.tanh %91 : vector<8x256xf32>
    %93 = vector.extract_strided_slice %78 {offsets = [0, 768], sizes = [8, 256], strides = [1, 1]} : vector<8x1024xf32> to vector<8x256xf32>
    %94 = arith.negf %93 : vector<8x256xf32>
    %95 = math.exp %94 : vector<8x256xf32>
    %cst_34 = arith.constant 1.000000e+00 : f32
    %96 = vector.broadcast %cst_34 : f32 to vector<8x256xf32>
    %97 = arith.addf %96, %95 : vector<8x256xf32>
    %98 = arith.divf %96, %97 : vector<8x256xf32>
    %99 = arith.mulf %90, %65 : vector<8x256xf32>
    %100 = arith.mulf %84, %92 : vector<8x256xf32>
    %101 = arith.addf %99, %100 : vector<8x256xf32>
    %102 = math.tanh %101 : vector<8x256xf32>
    %103 = arith.mulf %98, %102 : vector<8x256xf32>
    %104 = vector.extract_strided_slice %103 {offsets = [0, 0], sizes = [8, 128], strides = [1, 1]} : vector<8x256xf32> to vector<8x128xf32>
    %c8_35 = arith.constant 8 : index
    %c0_36 = arith.constant 0 : index
    %105 = vector.load %arg12[%c8_35, %c0_36] : memref<64x256xf32, #tpu.memory_space<vmem>>, vector<8x128xf32>
    tpu.vector_store %arg12[%c8_35, %c0_36], %104 {strides = array<i32>} : memref<64x256xf32, #tpu.memory_space<vmem>>, vector<8x128xf32>,
    %106 = vector.extract_strided_slice %103 {offsets = [0, 128], sizes = [8, 128], strides = [1, 1]} : vector<8x256xf32> to vector<8x128xf32>
    %c48_37 = arith.constant 48 : index
    %c128_38 = arith.constant 128 : index
    %107 = vector.load %arg12[%c48_37, %c128_38] : memref<64x256xf32, #tpu.memory_space<vmem>>, vector<8x128xf32>
    tpu.vector_store %arg12[%c48_37, %c128_38], %106 {strides = array<i32>} : memref<64x256xf32, #tpu.memory_space<vmem>>, vector<8x128xf32>,
    %c16 = arith.constant 16 : index
    %c0_39 = arith.constant 0 : index
    %108 = vector.load %arg11[%c16, %c0_39] : memref<64x1024xf32, #tpu.memory_space<vmem>>, vector<8x1024xf32>
    %c40 = arith.constant 40 : index
    %c0_40 = arith.constant 0 : index
    %109 = vector.load %arg11[%c40, %c0_40] : memref<64x1024xf32, #tpu.memory_space<vmem>>, vector<8x1024xf32>
    %110 = arith.select %26, %108, %109 : vector<8x1024xi1>, vector<8x1024xf32>
    %111 = arith.truncf %103 : vector<8x256xf32> to vector<8x256xbf16>
    %c0_41 = arith.constant 0 : index
    %c0_42 = arith.constant 0 : index
    %112 = vector.load %arg4[%c0_41, %c0_42] : memref<256x1024xbf16, #tpu.memory_space<vmem>>, vector<256x1024xbf16>
    %cst_43 = arith.constant dense<0.000000e+00> : vector<8x1024xf32>
    %113 = tpu.matmul %111, %112, %cst_43 {dimension_numbers = #tpu.dot_dimension_numbers<[1], [0], [0], [1], [0, 0, 1, 1], [], []>} : vector<8x256xbf16>, vector<256x1024xbf16>, vector<8x1024xf32> -> vector<8x1024xf32>
    %114 = arith.addf %110, %113 : vector<8x1024xf32>
    %115 = vector.extract_strided_slice %114 {offsets = [0, 0], sizes = [8, 256], strides = [1, 1]} : vector<8x1024xf32> to vector<8x256xf32>
    %116 = arith.negf %115 : vector<8x256xf32>
    %117 = math.exp %116 : vector<8x256xf32>
    %cst_44 = arith.constant 1.000000e+00 : f32
    %118 = vector.broadcast %cst_44 : f32 to vector<8x256xf32>
    %119 = arith.addf %118, %117 : vector<8x256xf32>
    %120 = arith.divf %118, %119 : vector<8x256xf32>
    %121 = vector.extract_strided_slice %114 {offsets = [0, 256], sizes = [8, 256], strides = [1, 1]} : vector<8x1024xf32> to vector<8x256xf32>
    %122 = arith.negf %121 : vector<8x256xf32>
    %123 = math.exp %122 : vector<8x256xf32>
    %cst_45 = arith.constant 1.000000e+00 : f32
    %124 = vector.broadcast %cst_45 : f32 to vector<8x256xf32>
    %125 = arith.addf %124, %123 : vector<8x256xf32>
    %126 = arith.divf %124, %125 : vector<8x256xf32>
    %127 = vector.extract_strided_slice %114 {offsets = [0, 512], sizes = [8, 256], strides = [1, 1]} : vector<8x1024xf32> to vector<8x256xf32>
    %128 = math.tanh %127 : vector<8x256xf32>
    %129 = vector.extract_strided_slice %114 {offsets = [0, 768], sizes = [8, 256], strides = [1, 1]} : vector<8x1024xf32> to vector<8x256xf32>
    %130 = arith.negf %129 : vector<8x256xf32>
    %131 = math.exp %130 : vector<8x256xf32>
    %cst_46 = arith.constant 1.000000e+00 : f32
    %132 = vector.broadcast %cst_46 : f32 to vector<8x256xf32>
    %133 = arith.addf %132, %131 : vector<8x256xf32>
    %134 = arith.divf %132, %133 : vector<8x256xf32>
    %135 = arith.mulf %126, %101 : vector<8x256xf32>
    %136 = arith.mulf %120, %128 : vector<8x256xf32>
    %137 = arith.addf %135, %136 : vector<8x256xf32>
    %138 = math.tanh %137 : vector<8x256xf32>
    %139 = arith.mulf %134, %138 : vector<8x256xf32>
    %140 = vector.extract_strided_slice %139 {offsets = [0, 0], sizes = [8, 128], strides = [1, 1]} : vector<8x256xf32> to vector<8x128xf32>
    %c16_47 = arith.constant 16 : index
    %c0_48 = arith.constant 0 : index
    %141 = vector.load %arg12[%c16_47, %c0_48] : memref<64x256xf32, #tpu.memory_space<vmem>>, vector<8x128xf32>
    tpu.vector_store %arg12[%c16_47, %c0_48], %140 {strides = array<i32>} : memref<64x256xf32, #tpu.memory_space<vmem>>, vector<8x128xf32>,
    %142 = vector.extract_strided_slice %139 {offsets = [0, 128], sizes = [8, 128], strides = [1, 1]} : vector<8x256xf32> to vector<8x128xf32>
    %c40_49 = arith.constant 40 : index
    %c128_50 = arith.constant 128 : index
    %143 = vector.load %arg12[%c40_49, %c128_50] : memref<64x256xf32, #tpu.memory_space<vmem>>, vector<8x128xf32>
    tpu.vector_store %arg12[%c40_49, %c128_50], %142 {strides = array<i32>} : memref<64x256xf32, #tpu.memory_space<vmem>>, vector<8x128xf32>,
    %c24 = arith.constant 24 : index
    %c0_51 = arith.constant 0 : index
    %144 = vector.load %arg11[%c24, %c0_51] : memref<64x1024xf32, #tpu.memory_space<vmem>>, vector<8x1024xf32>
    %c32 = arith.constant 32 : index
    %c0_52 = arith.constant 0 : index
    %145 = vector.load %arg11[%c32, %c0_52] : memref<64x1024xf32, #tpu.memory_space<vmem>>, vector<8x1024xf32>
    %146 = arith.select %26, %144, %145 : vector<8x1024xi1>, vector<8x1024xf32>
    %147 = arith.truncf %139 : vector<8x256xf32> to vector<8x256xbf16>
    %c0_53 = arith.constant 0 : index
    %c0_54 = arith.constant 0 : index
    %148 = vector.load %arg4[%c0_53, %c0_54] : memref<256x1024xbf16, #tpu.memory_space<vmem>>, vector<256x1024xbf16>
    %cst_55 = arith.constant dense<0.000000e+00> : vector<8x1024xf32>
    %149 = tpu.matmul %147, %148, %cst_55 {dimension_numbers = #tpu.dot_dimension_numbers<[1], [0], [0], [1], [0, 0, 1, 1], [], []>} : vector<8x256xbf16>, vector<256x1024xbf16>, vector<8x1024xf32> -> vector<8x1024xf32>
    %150 = arith.addf %146, %149 : vector<8x1024xf32>
    %151 = vector.extract_strided_slice %150 {offsets = [0, 0], sizes = [8, 256], strides = [1, 1]} : vector<8x1024xf32> to vector<8x256xf32>
    %152 = arith.negf %151 : vector<8x256xf32>
    %153 = math.exp %152 : vector<8x256xf32>
    %cst_56 = arith.constant 1.000000e+00 : f32
    %154 = vector.broadcast %cst_56 : f32 to vector<8x256xf32>
    %155 = arith.addf %154, %153 : vector<8x256xf32>
    %156 = arith.divf %154, %155 : vector<8x256xf32>
    %157 = vector.extract_strided_slice %150 {offsets = [0, 256], sizes = [8, 256], strides = [1, 1]} : vector<8x1024xf32> to vector<8x256xf32>
    %158 = arith.negf %157 : vector<8x256xf32>
    %159 = math.exp %158 : vector<8x256xf32>
    %cst_57 = arith.constant 1.000000e+00 : f32
    %160 = vector.broadcast %cst_57 : f32 to vector<8x256xf32>
    %161 = arith.addf %160, %159 : vector<8x256xf32>
    %162 = arith.divf %160, %161 : vector<8x256xf32>
    %163 = vector.extract_strided_slice %150 {offsets = [0, 512], sizes = [8, 256], strides = [1, 1]} : vector<8x1024xf32> to vector<8x256xf32>
    %164 = math.tanh %163 : vector<8x256xf32>
    %165 = vector.extract_strided_slice %150 {offsets = [0, 768], sizes = [8, 256], strides = [1, 1]} : vector<8x1024xf32> to vector<8x256xf32>
    %166 = arith.negf %165 : vector<8x256xf32>
    %167 = math.exp %166 : vector<8x256xf32>
    %cst_58 = arith.constant 1.000000e+00 : f32
    %168 = vector.broadcast %cst_58 : f32 to vector<8x256xf32>
    %169 = arith.addf %168, %167 : vector<8x256xf32>
    %170 = arith.divf %168, %169 : vector<8x256xf32>
    %171 = arith.mulf %162, %137 : vector<8x256xf32>
    %172 = arith.mulf %156, %164 : vector<8x256xf32>
    %173 = arith.addf %171, %172 : vector<8x256xf32>
    %174 = math.tanh %173 : vector<8x256xf32>
    %175 = arith.mulf %170, %174 : vector<8x256xf32>
    %176 = vector.extract_strided_slice %175 {offsets = [0, 0], sizes = [8, 128], strides = [1, 1]} : vector<8x256xf32> to vector<8x128xf32>
    %c24_59 = arith.constant 24 : index
    %c0_60 = arith.constant 0 : index
    %177 = vector.load %arg12[%c24_59, %c0_60] : memref<64x256xf32, #tpu.memory_space<vmem>>, vector<8x128xf32>
    tpu.vector_store %arg12[%c24_59, %c0_60], %176 {strides = array<i32>} : memref<64x256xf32, #tpu.memory_space<vmem>>, vector<8x128xf32>,
    %178 = vector.extract_strided_slice %175 {offsets = [0, 128], sizes = [8, 128], strides = [1, 1]} : vector<8x256xf32> to vector<8x128xf32>
    %c32_61 = arith.constant 32 : index
    %c128_62 = arith.constant 128 : index
    %179 = vector.load %arg12[%c32_61, %c128_62] : memref<64x256xf32, #tpu.memory_space<vmem>>, vector<8x128xf32>
    tpu.vector_store %arg12[%c32_61, %c128_62], %178 {strides = array<i32>} : memref<64x256xf32, #tpu.memory_space<vmem>>, vector<8x128xf32>,
    %c32_63 = arith.constant 32 : index
    %c0_64 = arith.constant 0 : index
    %180 = vector.load %arg11[%c32_63, %c0_64] : memref<64x1024xf32, #tpu.memory_space<vmem>>, vector<8x1024xf32>
    %c24_65 = arith.constant 24 : index
    %c0_66 = arith.constant 0 : index
    %181 = vector.load %arg11[%c24_65, %c0_66] : memref<64x1024xf32, #tpu.memory_space<vmem>>, vector<8x1024xf32>
    %182 = arith.select %26, %180, %181 : vector<8x1024xi1>, vector<8x1024xf32>
    %183 = arith.truncf %175 : vector<8x256xf32> to vector<8x256xbf16>
    %c0_67 = arith.constant 0 : index
    %c0_68 = arith.constant 0 : index
    %184 = vector.load %arg4[%c0_67, %c0_68] : memref<256x1024xbf16, #tpu.memory_space<vmem>>, vector<256x1024xbf16>
    %cst_69 = arith.constant dense<0.000000e+00> : vector<8x1024xf32>
    %185 = tpu.matmul %183, %184, %cst_69 {dimension_numbers = #tpu.dot_dimension_numbers<[1], [0], [0], [1], [0, 0, 1, 1], [], []>} : vector<8x256xbf16>, vector<256x1024xbf16>, vector<8x1024xf32> -> vector<8x1024xf32>
    %186 = arith.addf %182, %185 : vector<8x1024xf32>
    %187 = vector.extract_strided_slice %186 {offsets = [0, 0], sizes = [8, 256], strides = [1, 1]} : vector<8x1024xf32> to vector<8x256xf32>
    %188 = arith.negf %187 : vector<8x256xf32>
    %189 = math.exp %188 : vector<8x256xf32>
    %cst_70 = arith.constant 1.000000e+00 : f32
    %190 = vector.broadcast %cst_70 : f32 to vector<8x256xf32>
    %191 = arith.addf %190, %189 : vector<8x256xf32>
    %192 = arith.divf %190, %191 : vector<8x256xf32>
    %193 = vector.extract_strided_slice %186 {offsets = [0, 256], sizes = [8, 256], strides = [1, 1]} : vector<8x1024xf32> to vector<8x256xf32>
    %194 = arith.negf %193 : vector<8x256xf32>
    %195 = math.exp %194 : vector<8x256xf32>
    %cst_71 = arith.constant 1.000000e+00 : f32
    %196 = vector.broadcast %cst_71 : f32 to vector<8x256xf32>
    %197 = arith.addf %196, %195 : vector<8x256xf32>
    %198 = arith.divf %196, %197 : vector<8x256xf32>
    %199 = vector.extract_strided_slice %186 {offsets = [0, 512], sizes = [8, 256], strides = [1, 1]} : vector<8x1024xf32> to vector<8x256xf32>
    %200 = math.tanh %199 : vector<8x256xf32>
    %201 = vector.extract_strided_slice %186 {offsets = [0, 768], sizes = [8, 256], strides = [1, 1]} : vector<8x1024xf32> to vector<8x256xf32>
    %202 = arith.negf %201 : vector<8x256xf32>
    %203 = math.exp %202 : vector<8x256xf32>
    %cst_72 = arith.constant 1.000000e+00 : f32
    %204 = vector.broadcast %cst_72 : f32 to vector<8x256xf32>
    %205 = arith.addf %204, %203 : vector<8x256xf32>
    %206 = arith.divf %204, %205 : vector<8x256xf32>
    %207 = arith.mulf %198, %173 : vector<8x256xf32>
    %208 = arith.mulf %192, %200 : vector<8x256xf32>
    %209 = arith.addf %207, %208 : vector<8x256xf32>
    %210 = math.tanh %209 : vector<8x256xf32>
    %211 = arith.mulf %206, %210 : vector<8x256xf32>
    %212 = vector.extract_strided_slice %211 {offsets = [0, 0], sizes = [8, 128], strides = [1, 1]} : vector<8x256xf32> to vector<8x128xf32>
    %c32_73 = arith.constant 32 : index
    %c0_74 = arith.constant 0 : index
    %213 = vector.load %arg12[%c32_73, %c0_74] : memref<64x256xf32, #tpu.memory_space<vmem>>, vector<8x128xf32>
    tpu.vector_store %arg12[%c32_73, %c0_74], %212 {strides = array<i32>} : memref<64x256xf32, #tpu.memory_space<vmem>>, vector<8x128xf32>,
    %214 = vector.extract_strided_slice %211 {offsets = [0, 128], sizes = [8, 128], strides = [1, 1]} : vector<8x256xf32> to vector<8x128xf32>
    %c24_75 = arith.constant 24 : index
    %c128_76 = arith.constant 128 : index
    %215 = vector.load %arg12[%c24_75, %c128_76] : memref<64x256xf32, #tpu.memory_space<vmem>>, vector<8x128xf32>
    tpu.vector_store %arg12[%c24_75, %c128_76], %214 {strides = array<i32>} : memref<64x256xf32, #tpu.memory_space<vmem>>, vector<8x128xf32>,
    %c40_77 = arith.constant 40 : index
    %c0_78 = arith.constant 0 : index
    %216 = vector.load %arg11[%c40_77, %c0_78] : memref<64x1024xf32, #tpu.memory_space<vmem>>, vector<8x1024xf32>
    %c16_79 = arith.constant 16 : index
    %c0_80 = arith.constant 0 : index
    %217 = vector.load %arg11[%c16_79, %c0_80] : memref<64x1024xf32, #tpu.memory_space<vmem>>, vector<8x1024xf32>
    %218 = arith.select %26, %216, %217 : vector<8x1024xi1>, vector<8x1024xf32>
    %219 = arith.truncf %211 : vector<8x256xf32> to vector<8x256xbf16>
    %c0_81 = arith.constant 0 : index
    %c0_82 = arith.constant 0 : index
    %220 = vector.load %arg4[%c0_81, %c0_82] : memref<256x1024xbf16, #tpu.memory_space<vmem>>, vector<256x1024xbf16>
    %cst_83 = arith.constant dense<0.000000e+00> : vector<8x1024xf32>
    %221 = tpu.matmul %219, %220, %cst_83 {dimension_numbers = #tpu.dot_dimension_numbers<[1], [0], [0], [1], [0, 0, 1, 1], [], []>} : vector<8x256xbf16>, vector<256x1024xbf16>, vector<8x1024xf32> -> vector<8x1024xf32>
    %222 = arith.addf %218, %221 : vector<8x1024xf32>
    %223 = vector.extract_strided_slice %222 {offsets = [0, 0], sizes = [8, 256], strides = [1, 1]} : vector<8x1024xf32> to vector<8x256xf32>
    %224 = arith.negf %223 : vector<8x256xf32>
    %225 = math.exp %224 : vector<8x256xf32>
    %cst_84 = arith.constant 1.000000e+00 : f32
    %226 = vector.broadcast %cst_84 : f32 to vector<8x256xf32>
    %227 = arith.addf %226, %225 : vector<8x256xf32>
    %228 = arith.divf %226, %227 : vector<8x256xf32>
    %229 = vector.extract_strided_slice %222 {offsets = [0, 256], sizes = [8, 256], strides = [1, 1]} : vector<8x1024xf32> to vector<8x256xf32>
    %230 = arith.negf %229 : vector<8x256xf32>
    %231 = math.exp %230 : vector<8x256xf32>
    %cst_85 = arith.constant 1.000000e+00 : f32
    %232 = vector.broadcast %cst_85 : f32 to vector<8x256xf32>
    %233 = arith.addf %232, %231 : vector<8x256xf32>
    %234 = arith.divf %232, %233 : vector<8x256xf32>
    %235 = vector.extract_strided_slice %222 {offsets = [0, 512], sizes = [8, 256], strides = [1, 1]} : vector<8x1024xf32> to vector<8x256xf32>
    %236 = math.tanh %235 : vector<8x256xf32>
    %237 = vector.extract_strided_slice %222 {offsets = [0, 768], sizes = [8, 256], strides = [1, 1]} : vector<8x1024xf32> to vector<8x256xf32>
    %238 = arith.negf %237 : vector<8x256xf32>
    %239 = math.exp %238 : vector<8x256xf32>
    %cst_86 = arith.constant 1.000000e+00 : f32
    %240 = vector.broadcast %cst_86 : f32 to vector<8x256xf32>
    %241 = arith.addf %240, %239 : vector<8x256xf32>
    %242 = arith.divf %240, %241 : vector<8x256xf32>
    %243 = arith.mulf %234, %209 : vector<8x256xf32>
    %244 = arith.mulf %228, %236 : vector<8x256xf32>
    %245 = arith.addf %243, %244 : vector<8x256xf32>
    %246 = math.tanh %245 : vector<8x256xf32>
    %247 = arith.mulf %242, %246 : vector<8x256xf32>
    %248 = vector.extract_strided_slice %247 {offsets = [0, 0], sizes = [8, 128], strides = [1, 1]} : vector<8x256xf32> to vector<8x128xf32>
    %c40_87 = arith.constant 40 : index
    %c0_88 = arith.constant 0 : index
    %249 = vector.load %arg12[%c40_87, %c0_88] : memref<64x256xf32, #tpu.memory_space<vmem>>, vector<8x128xf32>
    tpu.vector_store %arg12[%c40_87, %c0_88], %248 {strides = array<i32>} : memref<64x256xf32, #tpu.memory_space<vmem>>, vector<8x128xf32>,
    %250 = vector.extract_strided_slice %247 {offsets = [0, 128], sizes = [8, 128], strides = [1, 1]} : vector<8x256xf32> to vector<8x128xf32>
    %c16_89 = arith.constant 16 : index
    %c128_90 = arith.constant 128 : index
    %251 = vector.load %arg12[%c16_89, %c128_90] : memref<64x256xf32, #tpu.memory_space<vmem>>, vector<8x128xf32>
    tpu.vector_store %arg12[%c16_89, %c128_90], %250 {strides = array<i32>} : memref<64x256xf32, #tpu.memory_space<vmem>>, vector<8x128xf32>,
    %c48_91 = arith.constant 48 : index
    %c0_92 = arith.constant 0 : index
    %252 = vector.load %arg11[%c48_91, %c0_92] : memref<64x1024xf32, #tpu.memory_space<vmem>>, vector<8x1024xf32>
    %c8_93 = arith.constant 8 : index
    %c0_94 = arith.constant 0 : index
    %253 = vector.load %arg11[%c8_93, %c0_94] : memref<64x1024xf32, #tpu.memory_space<vmem>>, vector<8x1024xf32>
    %254 = arith.select %26, %252, %253 : vector<8x1024xi1>, vector<8x1024xf32>
    %255 = arith.truncf %247 : vector<8x256xf32> to vector<8x256xbf16>
    %c0_95 = arith.constant 0 : index
    %c0_96 = arith.constant 0 : index
    %256 = vector.load %arg4[%c0_95, %c0_96] : memref<256x1024xbf16, #tpu.memory_space<vmem>>, vector<256x1024xbf16>
    %cst_97 = arith.constant dense<0.000000e+00> : vector<8x1024xf32>
    %257 = tpu.matmul %255, %256, %cst_97 {dimension_numbers = #tpu.dot_dimension_numbers<[1], [0], [0], [1], [0, 0, 1, 1], [], []>} : vector<8x256xbf16>, vector<256x1024xbf16>, vector<8x1024xf32> -> vector<8x1024xf32>
    %258 = arith.addf %254, %257 : vector<8x1024xf32>
    %259 = vector.extract_strided_slice %258 {offsets = [0, 0], sizes = [8, 256], strides = [1, 1]} : vector<8x1024xf32> to vector<8x256xf32>
    %260 = arith.negf %259 : vector<8x256xf32>
    %261 = math.exp %260 : vector<8x256xf32>
    %cst_98 = arith.constant 1.000000e+00 : f32
    %262 = vector.broadcast %cst_98 : f32 to vector<8x256xf32>
    %263 = arith.addf %262, %261 : vector<8x256xf32>
    %264 = arith.divf %262, %263 : vector<8x256xf32>
    %265 = vector.extract_strided_slice %258 {offsets = [0, 256], sizes = [8, 256], strides = [1, 1]} : vector<8x1024xf32> to vector<8x256xf32>
    %266 = arith.negf %265 : vector<8x256xf32>
    %267 = math.exp %266 : vector<8x256xf32>
    %cst_99 = arith.constant 1.000000e+00 : f32
    %268 = vector.broadcast %cst_99 : f32 to vector<8x256xf32>
    %269 = arith.addf %268, %267 : vector<8x256xf32>
    %270 = arith.divf %268, %269 : vector<8x256xf32>
    %271 = vector.extract_strided_slice %258 {offsets = [0, 512], sizes = [8, 256], strides = [1, 1]} : vector<8x1024xf32> to vector<8x256xf32>
    %272 = math.tanh %271 : vector<8x256xf32>
    %273 = vector.extract_strided_slice %258 {offsets = [0, 768], sizes = [8, 256], strides = [1, 1]} : vector<8x1024xf32> to vector<8x256xf32>
    %274 = arith.negf %273 : vector<8x256xf32>
    %275 = math.exp %274 : vector<8x256xf32>
    %cst_100 = arith.constant 1.000000e+00 : f32
    %276 = vector.broadcast %cst_100 : f32 to vector<8x256xf32>
    %277 = arith.addf %276, %275 : vector<8x256xf32>
    %278 = arith.divf %276, %277 : vector<8x256xf32>
    %279 = arith.mulf %270, %245 : vector<8x256xf32>
    %280 = arith.mulf %264, %272 : vector<8x256xf32>
    %281 = arith.addf %279, %280 : vector<8x256xf32>
    %282 = math.tanh %281 : vector<8x256xf32>
    %283 = arith.mulf %278, %282 : vector<8x256xf32>
    %284 = vector.extract_strided_slice %283 {offsets = [0, 0], sizes = [8, 128], strides = [1, 1]} : vector<8x256xf32> to vector<8x128xf32>
    %c48_101 = arith.constant 48 : index
    %c0_102 = arith.constant 0 : index
    %285 = vector.load %arg12[%c48_101, %c0_102] : memref<64x256xf32, #tpu.memory_space<vmem>>, vector<8x128xf32>
    tpu.vector_store %arg12[%c48_101, %c0_102], %284 {strides = array<i32>} : memref<64x256xf32, #tpu.memory_space<vmem>>, vector<8x128xf32>,
    %286 = vector.extract_strided_slice %283 {offsets = [0, 128], sizes = [8, 128], strides = [1, 1]} : vector<8x256xf32> to vector<8x128xf32>
    %c8_103 = arith.constant 8 : index
    %c128_104 = arith.constant 128 : index
    %287 = vector.load %arg12[%c8_103, %c128_104] : memref<64x256xf32, #tpu.memory_space<vmem>>, vector<8x128xf32>
    tpu.vector_store %arg12[%c8_103, %c128_104], %286 {strides = array<i32>} : memref<64x256xf32, #tpu.memory_space<vmem>>, vector<8x128xf32>,
    %c56_105 = arith.constant 56 : index
    %c0_106 = arith.constant 0 : index
    %288 = vector.load %arg11[%c56_105, %c0_106] : memref<64x1024xf32, #tpu.memory_space<vmem>>, vector<8x1024xf32>
    %c0_107 = arith.constant 0 : index
    %c0_108 = arith.constant 0 : index
    %289 = vector.load %arg11[%c0_107, %c0_108] : memref<64x1024xf32, #tpu.memory_space<vmem>>, vector<8x1024xf32>
    %290 = arith.select %26, %288, %289 : vector<8x1024xi1>, vector<8x1024xf32>
    %291 = arith.truncf %283 : vector<8x256xf32> to vector<8x256xbf16>
    %c0_109 = arith.constant 0 : index
    %c0_110 = arith.constant 0 : index
    %292 = vector.load %arg4[%c0_109, %c0_110] : memref<256x1024xbf16, #tpu.memory_space<vmem>>, vector<256x1024xbf16>
    %cst_111 = arith.constant dense<0.000000e+00> : vector<8x1024xf32>
    %293 = tpu.matmul %291, %292, %cst_111 {dimension_numbers = #tpu.dot_dimension_numbers<[1], [0], [0], [1], [0, 0, 1, 1], [], []>} : vector<8x256xbf16>, vector<256x1024xbf16>, vector<8x1024xf32> -> vector<8x1024xf32>
    %294 = arith.addf %290, %293 : vector<8x1024xf32>
    %295 = vector.extract_strided_slice %294 {offsets = [0, 0], sizes = [8, 256], strides = [1, 1]} : vector<8x1024xf32> to vector<8x256xf32>
    %296 = arith.negf %295 : vector<8x256xf32>
    %297 = math.exp %296 : vector<8x256xf32>
    %cst_112 = arith.constant 1.000000e+00 : f32
    %298 = vector.broadcast %cst_112 : f32 to vector<8x256xf32>
    %299 = arith.addf %298, %297 : vector<8x256xf32>
    %300 = arith.divf %298, %299 : vector<8x256xf32>
    %301 = vector.extract_strided_slice %294 {offsets = [0, 256], sizes = [8, 256], strides = [1, 1]} : vector<8x1024xf32> to vector<8x256xf32>
    %302 = arith.negf %301 : vector<8x256xf32>
    %303 = math.exp %302 : vector<8x256xf32>
    %cst_113 = arith.constant 1.000000e+00 : f32
    %304 = vector.broadcast %cst_113 : f32 to vector<8x256xf32>
    %305 = arith.addf %304, %303 : vector<8x256xf32>
    %306 = arith.divf %304, %305 : vector<8x256xf32>
    %307 = vector.extract_strided_slice %294 {offsets = [0, 512], sizes = [8, 256], strides = [1, 1]} : vector<8x1024xf32> to vector<8x256xf32>
    %308 = math.tanh %307 : vector<8x256xf32>
    %309 = vector.extract_strided_slice %294 {offsets = [0, 768], sizes = [8, 256], strides = [1, 1]} : vector<8x1024xf32> to vector<8x256xf32>
    %310 = arith.negf %309 : vector<8x256xf32>
    %311 = math.exp %310 : vector<8x256xf32>
    %cst_114 = arith.constant 1.000000e+00 : f32
    %312 = vector.broadcast %cst_114 : f32 to vector<8x256xf32>
    %313 = arith.addf %312, %311 : vector<8x256xf32>
    %314 = arith.divf %312, %313 : vector<8x256xf32>
    %315 = arith.mulf %306, %281 : vector<8x256xf32>
    %316 = arith.mulf %300, %308 : vector<8x256xf32>
    %317 = arith.addf %315, %316 : vector<8x256xf32>
    %318 = math.tanh %317 : vector<8x256xf32>
    %319 = arith.mulf %314, %318 : vector<8x256xf32>
    %320 = vector.extract_strided_slice %319 {offsets = [0, 0], sizes = [8, 128], strides = [1, 1]} : vector<8x256xf32> to vector<8x128xf32>
    %c56_115 = arith.constant 56 : index
    %c0_116 = arith.constant 0 : index
    %321 = vector.load %arg12[%c56_115, %c0_116] : memref<64x256xf32, #tpu.memory_space<vmem>>, vector<8x128xf32>
    tpu.vector_store %arg12[%c56_115, %c0_116], %320 {strides = array<i32>} : memref<64x256xf32, #tpu.memory_space<vmem>>, vector<8x128xf32>,
    %322 = vector.extract_strided_slice %319 {offsets = [0, 128], sizes = [8, 128], strides = [1, 1]} : vector<8x256xf32> to vector<8x128xf32>
    %c0_117 = arith.constant 0 : index
    %c128_118 = arith.constant 128 : index
    %323 = vector.load %arg12[%c0_117, %c128_118] : memref<64x256xf32, #tpu.memory_space<vmem>>, vector<8x128xf32>
    tpu.vector_store %arg12[%c0_117, %c128_118], %322 {strides = array<i32>} : memref<64x256xf32, #tpu.memory_space<vmem>>, vector<8x128xf32>,
    %c0_119 = arith.constant 0 : index
    %c0_120 = arith.constant 0 : index
    %324 = vector.load %arg12[%c0_119, %c0_120] : memref<64x256xf32, #tpu.memory_space<vmem>>, vector<64x256xf32>
    %325 = arith.truncf %324 : vector<64x256xf32> to vector<64x256xbf16>
    %c0_121 = arith.constant 0 : index
    %c0_122 = arith.constant 0 : index
    %326 = vector.load %arg5[%c0_121, %c0_122] : memref<256x1024xbf16, #tpu.memory_space<vmem>>, vector<256x1024xbf16>
    %cst_123 = arith.constant dense<0.000000e+00> : vector<64x1024xf32>
    %327 = tpu.matmul %325, %326, %cst_123 {dimension_numbers = #tpu.dot_dimension_numbers<[1], [0], [0], [1], [0, 0, 1, 1], [], []>} : vector<64x256xbf16>, vector<256x1024xbf16>, vector<64x1024xf32> -> vector<64x1024xf32>
    %c0_124 = arith.constant 0 : index
    %c0_125 = arith.constant 0 : index
    %328 = vector.load %arg6[%c0_124, %c0_125] : memref<1x1024xf32, #tpu.memory_space<vmem>>, vector<1x1024xf32>
    %329 = vector.broadcast %328 : vector<1x1024xf32> to vector<64x1024xf32>
    %330 = arith.addf %327, %329 : vector<64x1024xf32>
    %c0_126 = arith.constant 0 : index
    %c0_127 = arith.constant 0 : index
    %331 = vector.load %arg11[%c0_126, %c0_127] : memref<64x1024xf32, #tpu.memory_space<vmem>>, vector<64x1024xf32>
    tpu.vector_store %arg11[%c0_126, %c0_127], %330 {strides = array<i32>} : memref<64x1024xf32, #tpu.memory_space<vmem>>, vector<64x1024xf32>,
    %cst_128 = arith.constant 0.000000e+00 : f32
    %332 = vector.broadcast %cst_128 : f32 to vector<8x256xf32>
    %cst_129 = arith.constant 0.000000e+00 : f32
    %333 = vector.broadcast %cst_129 : f32 to vector<8x256xf32>
    %cst_130 = arith.constant 0.000000e+00 : f32
    %334 = vector.broadcast %cst_130 : f32 to vector<8x256xf32>
    %c0_131 = arith.constant 0 : index
    %c0_132 = arith.constant 0 : index
    %335 = vector.load %arg11[%c0_131, %c0_132] : memref<64x1024xf32, #tpu.memory_space<vmem>>, vector<8x1024xf32>
    %c56_133 = arith.constant 56 : index
    %c0_134 = arith.constant 0 : index
    %336 = vector.load %arg11[%c56_133, %c0_134] : memref<64x1024xf32, #tpu.memory_space<vmem>>, vector<8x1024xf32>
    %337 = arith.select %26, %335, %336 : vector<8x1024xi1>, vector<8x1024xf32>
    %338 = arith.truncf %332 : vector<8x256xf32> to vector<8x256xbf16>
    %c0_135 = arith.constant 0 : index
    %c0_136 = arith.constant 0 : index
    %339 = vector.load %arg7[%c0_135, %c0_136] : memref<256x1024xbf16, #tpu.memory_space<vmem>>, vector<256x1024xbf16>
    %cst_137 = arith.constant dense<0.000000e+00> : vector<8x1024xf32>
    %340 = tpu.matmul %338, %339, %cst_137 {dimension_numbers = #tpu.dot_dimension_numbers<[1], [0], [0], [1], [0, 0, 1, 1], [], []>} : vector<8x256xbf16>, vector<256x1024xbf16>, vector<8x1024xf32> -> vector<8x1024xf32>
    %341 = arith.addf %337, %340 : vector<8x1024xf32>
    %342 = vector.extract_strided_slice %341 {offsets = [0, 0], sizes = [8, 256], strides = [1, 1]} : vector<8x1024xf32> to vector<8x256xf32>
    %343 = arith.negf %342 : vector<8x256xf32>
    %344 = math.exp %343 : vector<8x256xf32>
    %cst_138 = arith.constant 1.000000e+00 : f32
    %345 = vector.broadcast %cst_138 : f32 to vector<8x256xf32>
    %346 = arith.addf %345, %344 : vector<8x256xf32>
    %347 = arith.divf %345, %346 : vector<8x256xf32>
    %348 = vector.extract_strided_slice %341 {offsets = [0, 256], sizes = [8, 256], strides = [1, 1]} : vector<8x1024xf32> to vector<8x256xf32>
    %349 = arith.negf %348 : vector<8x256xf32>
    %350 = math.exp %349 : vector<8x256xf32>
    %cst_139 = arith.constant 1.000000e+00 : f32
    %351 = vector.broadcast %cst_139 : f32 to vector<8x256xf32>
    %352 = arith.addf %351, %350 : vector<8x256xf32>
    %353 = arith.divf %351, %352 : vector<8x256xf32>
    %354 = vector.extract_strided_slice %341 {offsets = [0, 512], sizes = [8, 256], strides = [1, 1]} : vector<8x1024xf32> to vector<8x256xf32>
    %355 = math.tanh %354 : vector<8x256xf32>
    %356 = vector.extract_strided_slice %341 {offsets = [0, 768], sizes = [8, 256], strides = [1, 1]} : vector<8x1024xf32> to vector<8x256xf32>
    %357 = arith.negf %356 : vector<8x256xf32>
    %358 = math.exp %357 : vector<8x256xf32>
    %cst_140 = arith.constant 1.000000e+00 : f32
    %359 = vector.broadcast %cst_140 : f32 to vector<8x256xf32>
    %360 = arith.addf %359, %358 : vector<8x256xf32>
    %361 = arith.divf %359, %360 : vector<8x256xf32>
    %362 = arith.mulf %353, %333 : vector<8x256xf32>
    %363 = arith.mulf %347, %355 : vector<8x256xf32>
    %364 = arith.addf %362, %363 : vector<8x256xf32>
    %365 = math.tanh %364 : vector<8x256xf32>
    %366 = arith.mulf %361, %365 : vector<8x256xf32>
    %367 = arith.addf %334, %366 : vector<8x256xf32>
    %c8_141 = arith.constant 8 : index
    %c0_142 = arith.constant 0 : index
    %368 = vector.load %arg11[%c8_141, %c0_142] : memref<64x1024xf32, #tpu.memory_space<vmem>>, vector<8x1024xf32>
    %c48_143 = arith.constant 48 : index
    %c0_144 = arith.constant 0 : index
    %369 = vector.load %arg11[%c48_143, %c0_144] : memref<64x1024xf32, #tpu.memory_space<vmem>>, vector<8x1024xf32>
    %370 = arith.select %26, %368, %369 : vector<8x1024xi1>, vector<8x1024xf32>
    %371 = arith.truncf %366 : vector<8x256xf32> to vector<8x256xbf16>
    %c0_145 = arith.constant 0 : index
    %c0_146 = arith.constant 0 : index
    %372 = vector.load %arg7[%c0_145, %c0_146] : memref<256x1024xbf16, #tpu.memory_space<vmem>>, vector<256x1024xbf16>
    %cst_147 = arith.constant dense<0.000000e+00> : vector<8x1024xf32>
    %373 = tpu.matmul %371, %372, %cst_147 {dimension_numbers = #tpu.dot_dimension_numbers<[1], [0], [0], [1], [0, 0, 1, 1], [], []>} : vector<8x256xbf16>, vector<256x1024xbf16>, vector<8x1024xf32> -> vector<8x1024xf32>
    %374 = arith.addf %370, %373 : vector<8x1024xf32>
    %375 = vector.extract_strided_slice %374 {offsets = [0, 0], sizes = [8, 256], strides = [1, 1]} : vector<8x1024xf32> to vector<8x256xf32>
    %376 = arith.negf %375 : vector<8x256xf32>
    %377 = math.exp %376 : vector<8x256xf32>
    %cst_148 = arith.constant 1.000000e+00 : f32
    %378 = vector.broadcast %cst_148 : f32 to vector<8x256xf32>
    %379 = arith.addf %378, %377 : vector<8x256xf32>
    %380 = arith.divf %378, %379 : vector<8x256xf32>
    %381 = vector.extract_strided_slice %374 {offsets = [0, 256], sizes = [8, 256], strides = [1, 1]} : vector<8x1024xf32> to vector<8x256xf32>
    %382 = arith.negf %381 : vector<8x256xf32>
    %383 = math.exp %382 : vector<8x256xf32>
    %cst_149 = arith.constant 1.000000e+00 : f32
    %384 = vector.broadcast %cst_149 : f32 to vector<8x256xf32>
    %385 = arith.addf %384, %383 : vector<8x256xf32>
    %386 = arith.divf %384, %385 : vector<8x256xf32>
    %387 = vector.extract_strided_slice %374 {offsets = [0, 512], sizes = [8, 256], strides = [1, 1]} : vector<8x1024xf32> to vector<8x256xf32>
    %388 = math.tanh %387 : vector<8x256xf32>
    %389 = vector.extract_strided_slice %374 {offsets = [0, 768], sizes = [8, 256], strides = [1, 1]} : vector<8x1024xf32> to vector<8x256xf32>
    %390 = arith.negf %389 : vector<8x256xf32>
    %391 = math.exp %390 : vector<8x256xf32>
    %cst_150 = arith.constant 1.000000e+00 : f32
    %392 = vector.broadcast %cst_150 : f32 to vector<8x256xf32>
    %393 = arith.addf %392, %391 : vector<8x256xf32>
    %394 = arith.divf %392, %393 : vector<8x256xf32>
    %395 = arith.mulf %386, %364 : vector<8x256xf32>
    %396 = arith.mulf %380, %388 : vector<8x256xf32>
    %397 = arith.addf %395, %396 : vector<8x256xf32>
    %398 = math.tanh %397 : vector<8x256xf32>
    %399 = arith.mulf %394, %398 : vector<8x256xf32>
    %400 = arith.addf %367, %399 : vector<8x256xf32>
    %c16_151 = arith.constant 16 : index
    %c0_152 = arith.constant 0 : index
    %401 = vector.load %arg11[%c16_151, %c0_152] : memref<64x1024xf32, #tpu.memory_space<vmem>>, vector<8x1024xf32>
    %c40_153 = arith.constant 40 : index
    %c0_154 = arith.constant 0 : index
    %402 = vector.load %arg11[%c40_153, %c0_154] : memref<64x1024xf32, #tpu.memory_space<vmem>>, vector<8x1024xf32>
    %403 = arith.select %26, %401, %402 : vector<8x1024xi1>, vector<8x1024xf32>
    %404 = arith.truncf %399 : vector<8x256xf32> to vector<8x256xbf16>
    %c0_155 = arith.constant 0 : index
    %c0_156 = arith.constant 0 : index
    %405 = vector.load %arg7[%c0_155, %c0_156] : memref<256x1024xbf16, #tpu.memory_space<vmem>>, vector<256x1024xbf16>
    %cst_157 = arith.constant dense<0.000000e+00> : vector<8x1024xf32>
    %406 = tpu.matmul %404, %405, %cst_157 {dimension_numbers = #tpu.dot_dimension_numbers<[1], [0], [0], [1], [0, 0, 1, 1], [], []>} : vector<8x256xbf16>, vector<256x1024xbf16>, vector<8x1024xf32> -> vector<8x1024xf32>
    %407 = arith.addf %403, %406 : vector<8x1024xf32>
    %408 = vector.extract_strided_slice %407 {offsets = [0, 0], sizes = [8, 256], strides = [1, 1]} : vector<8x1024xf32> to vector<8x256xf32>
    %409 = arith.negf %408 : vector<8x256xf32>
    %410 = math.exp %409 : vector<8x256xf32>
    %cst_158 = arith.constant 1.000000e+00 : f32
    %411 = vector.broadcast %cst_158 : f32 to vector<8x256xf32>
    %412 = arith.addf %411, %410 : vector<8x256xf32>
    %413 = arith.divf %411, %412 : vector<8x256xf32>
    %414 = vector.extract_strided_slice %407 {offsets = [0, 256], sizes = [8, 256], strides = [1, 1]} : vector<8x1024xf32> to vector<8x256xf32>
    %415 = arith.negf %414 : vector<8x256xf32>
    %416 = math.exp %415 : vector<8x256xf32>
    %cst_159 = arith.constant 1.000000e+00 : f32
    %417 = vector.broadcast %cst_159 : f32 to vector<8x256xf32>
    %418 = arith.addf %417, %416 : vector<8x256xf32>
    %419 = arith.divf %417, %418 : vector<8x256xf32>
    %420 = vector.extract_strided_slice %407 {offsets = [0, 512], sizes = [8, 256], strides = [1, 1]} : vector<8x1024xf32> to vector<8x256xf32>
    %421 = math.tanh %420 : vector<8x256xf32>
    %422 = vector.extract_strided_slice %407 {offsets = [0, 768], sizes = [8, 256], strides = [1, 1]} : vector<8x1024xf32> to vector<8x256xf32>
    %423 = arith.negf %422 : vector<8x256xf32>
    %424 = math.exp %423 : vector<8x256xf32>
    %cst_160 = arith.constant 1.000000e+00 : f32
    %425 = vector.broadcast %cst_160 : f32 to vector<8x256xf32>
    %426 = arith.addf %425, %424 : vector<8x256xf32>
    %427 = arith.divf %425, %426 : vector<8x256xf32>
    %428 = arith.mulf %419, %397 : vector<8x256xf32>
    %429 = arith.mulf %413, %421 : vector<8x256xf32>
    %430 = arith.addf %428, %429 : vector<8x256xf32>
    %431 = math.tanh %430 : vector<8x256xf32>
    %432 = arith.mulf %427, %431 : vector<8x256xf32>
    %433 = arith.addf %400, %432 : vector<8x256xf32>
    %c24_161 = arith.constant 24 : index
    %c0_162 = arith.constant 0 : index
    %434 = vector.load %arg11[%c24_161, %c0_162] : memref<64x1024xf32, #tpu.memory_space<vmem>>, vector<8x1024xf32>
    %c32_163 = arith.constant 32 : index
    %c0_164 = arith.constant 0 : index
    %435 = vector.load %arg11[%c32_163, %c0_164] : memref<64x1024xf32, #tpu.memory_space<vmem>>, vector<8x1024xf32>
    %436 = arith.select %26, %434, %435 : vector<8x1024xi1>, vector<8x1024xf32>
    %437 = arith.truncf %432 : vector<8x256xf32> to vector<8x256xbf16>
    %c0_165 = arith.constant 0 : index
    %c0_166 = arith.constant 0 : index
    %438 = vector.load %arg7[%c0_165, %c0_166] : memref<256x1024xbf16, #tpu.memory_space<vmem>>, vector<256x1024xbf16>
    %cst_167 = arith.constant dense<0.000000e+00> : vector<8x1024xf32>
    %439 = tpu.matmul %437, %438, %cst_167 {dimension_numbers = #tpu.dot_dimension_numbers<[1], [0], [0], [1], [0, 0, 1, 1], [], []>} : vector<8x256xbf16>, vector<256x1024xbf16>, vector<8x1024xf32> -> vector<8x1024xf32>
    %440 = arith.addf %436, %439 : vector<8x1024xf32>
    %441 = vector.extract_strided_slice %440 {offsets = [0, 0], sizes = [8, 256], strides = [1, 1]} : vector<8x1024xf32> to vector<8x256xf32>
    %442 = arith.negf %441 : vector<8x256xf32>
    %443 = math.exp %442 : vector<8x256xf32>
    %cst_168 = arith.constant 1.000000e+00 : f32
    %444 = vector.broadcast %cst_168 : f32 to vector<8x256xf32>
    %445 = arith.addf %444, %443 : vector<8x256xf32>
    %446 = arith.divf %444, %445 : vector<8x256xf32>
    %447 = vector.extract_strided_slice %440 {offsets = [0, 256], sizes = [8, 256], strides = [1, 1]} : vector<8x1024xf32> to vector<8x256xf32>
    %448 = arith.negf %447 : vector<8x256xf32>
    %449 = math.exp %448 : vector<8x256xf32>
    %cst_169 = arith.constant 1.000000e+00 : f32
    %450 = vector.broadcast %cst_169 : f32 to vector<8x256xf32>
    %451 = arith.addf %450, %449 : vector<8x256xf32>
    %452 = arith.divf %450, %451 : vector<8x256xf32>
    %453 = vector.extract_strided_slice %440 {offsets = [0, 512], sizes = [8, 256], strides = [1, 1]} : vector<8x1024xf32> to vector<8x256xf32>
    %454 = math.tanh %453 : vector<8x256xf32>
    %455 = vector.extract_strided_slice %440 {offsets = [0, 768], sizes = [8, 256], strides = [1, 1]} : vector<8x1024xf32> to vector<8x256xf32>
    %456 = arith.negf %455 : vector<8x256xf32>
    %457 = math.exp %456 : vector<8x256xf32>
    %cst_170 = arith.constant 1.000000e+00 : f32
    %458 = vector.broadcast %cst_170 : f32 to vector<8x256xf32>
    %459 = arith.addf %458, %457 : vector<8x256xf32>
    %460 = arith.divf %458, %459 : vector<8x256xf32>
    %461 = arith.mulf %452, %430 : vector<8x256xf32>
    %462 = arith.mulf %446, %454 : vector<8x256xf32>
    %463 = arith.addf %461, %462 : vector<8x256xf32>
    %464 = math.tanh %463 : vector<8x256xf32>
    %465 = arith.mulf %460, %464 : vector<8x256xf32>
    %466 = arith.addf %433, %465 : vector<8x256xf32>
    %c32_171 = arith.constant 32 : index
    %c0_172 = arith.constant 0 : index
    %467 = vector.load %arg11[%c32_171, %c0_172] : memref<64x1024xf32, #tpu.memory_space<vmem>>, vector<8x1024xf32>
    %c24_173 = arith.constant 24 : index
    %c0_174 = arith.constant 0 : index
    %468 = vector.load %arg11[%c24_173, %c0_174] : memref<64x1024xf32, #tpu.memory_space<vmem>>, vector<8x1024xf32>
    %469 = arith.select %26, %467, %468 : vector<8x1024xi1>, vector<8x1024xf32>
    %470 = arith.truncf %465 : vector<8x256xf32> to vector<8x256xbf16>
    %c0_175 = arith.constant 0 : index
    %c0_176 = arith.constant 0 : index
    %471 = vector.load %arg7[%c0_175, %c0_176] : memref<256x1024xbf16, #tpu.memory_space<vmem>>, vector<256x1024xbf16>
    %cst_177 = arith.constant dense<0.000000e+00> : vector<8x1024xf32>
    %472 = tpu.matmul %470, %471, %cst_177 {dimension_numbers = #tpu.dot_dimension_numbers<[1], [0], [0], [1], [0, 0, 1, 1], [], []>} : vector<8x256xbf16>, vector<256x1024xbf16>, vector<8x1024xf32> -> vector<8x1024xf32>
    %473 = arith.addf %469, %472 : vector<8x1024xf32>
    %474 = vector.extract_strided_slice %473 {offsets = [0, 0], sizes = [8, 256], strides = [1, 1]} : vector<8x1024xf32> to vector<8x256xf32>
    %475 = arith.negf %474 : vector<8x256xf32>
    %476 = math.exp %475 : vector<8x256xf32>
    %cst_178 = arith.constant 1.000000e+00 : f32
    %477 = vector.broadcast %cst_178 : f32 to vector<8x256xf32>
    %478 = arith.addf %477, %476 : vector<8x256xf32>
    %479 = arith.divf %477, %478 : vector<8x256xf32>
    %480 = vector.extract_strided_slice %473 {offsets = [0, 256], sizes = [8, 256], strides = [1, 1]} : vector<8x1024xf32> to vector<8x256xf32>
    %481 = arith.negf %480 : vector<8x256xf32>
    %482 = math.exp %481 : vector<8x256xf32>
    %cst_179 = arith.constant 1.000000e+00 : f32
    %483 = vector.broadcast %cst_179 : f32 to vector<8x256xf32>
    %484 = arith.addf %483, %482 : vector<8x256xf32>
    %485 = arith.divf %483, %484 : vector<8x256xf32>
    %486 = vector.extract_strided_slice %473 {offsets = [0, 512], sizes = [8, 256], strides = [1, 1]} : vector<8x1024xf32> to vector<8x256xf32>
    %487 = math.tanh %486 : vector<8x256xf32>
    %488 = vector.extract_strided_slice %473 {offsets = [0, 768], sizes = [8, 256], strides = [1, 1]} : vector<8x1024xf32> to vector<8x256xf32>
    %489 = arith.negf %488 : vector<8x256xf32>
    %490 = math.exp %489 : vector<8x256xf32>
    %cst_180 = arith.constant 1.000000e+00 : f32
    %491 = vector.broadcast %cst_180 : f32 to vector<8x256xf32>
    %492 = arith.addf %491, %490 : vector<8x256xf32>
    %493 = arith.divf %491, %492 : vector<8x256xf32>
    %494 = arith.mulf %485, %463 : vector<8x256xf32>
    %495 = arith.mulf %479, %487 : vector<8x256xf32>
    %496 = arith.addf %494, %495 : vector<8x256xf32>
    %497 = math.tanh %496 : vector<8x256xf32>
    %498 = arith.mulf %493, %497 : vector<8x256xf32>
    %499 = arith.addf %466, %498 : vector<8x256xf32>
    %c40_181 = arith.constant 40 : index
    %c0_182 = arith.constant 0 : index
    %500 = vector.load %arg11[%c40_181, %c0_182] : memref<64x1024xf32, #tpu.memory_space<vmem>>, vector<8x1024xf32>
    %c16_183 = arith.constant 16 : index
    %c0_184 = arith.constant 0 : index
    %501 = vector.load %arg11[%c16_183, %c0_184] : memref<64x1024xf32, #tpu.memory_space<vmem>>, vector<8x1024xf32>
    %502 = arith.select %26, %500, %501 : vector<8x1024xi1>, vector<8x1024xf32>
    %503 = arith.truncf %498 : vector<8x256xf32> to vector<8x256xbf16>
    %c0_185 = arith.constant 0 : index
    %c0_186 = arith.constant 0 : index
    %504 = vector.load %arg7[%c0_185, %c0_186] : memref<256x1024xbf16, #tpu.memory_space<vmem>>, vector<256x1024xbf16>
    %cst_187 = arith.constant dense<0.000000e+00> : vector<8x1024xf32>
    %505 = tpu.matmul %503, %504, %cst_187 {dimension_numbers = #tpu.dot_dimension_numbers<[1], [0], [0], [1], [0, 0, 1, 1], [], []>} : vector<8x256xbf16>, vector<256x1024xbf16>, vector<8x1024xf32> -> vector<8x1024xf32>
    %506 = arith.addf %502, %505 : vector<8x1024xf32>
    %507 = vector.extract_strided_slice %506 {offsets = [0, 0], sizes = [8, 256], strides = [1, 1]} : vector<8x1024xf32> to vector<8x256xf32>
    %508 = arith.negf %507 : vector<8x256xf32>
    %509 = math.exp %508 : vector<8x256xf32>
    %cst_188 = arith.constant 1.000000e+00 : f32
    %510 = vector.broadcast %cst_188 : f32 to vector<8x256xf32>
    %511 = arith.addf %510, %509 : vector<8x256xf32>
    %512 = arith.divf %510, %511 : vector<8x256xf32>
    %513 = vector.extract_strided_slice %506 {offsets = [0, 256], sizes = [8, 256], strides = [1, 1]} : vector<8x1024xf32> to vector<8x256xf32>
    %514 = arith.negf %513 : vector<8x256xf32>
    %515 = math.exp %514 : vector<8x256xf32>
    %cst_189 = arith.constant 1.000000e+00 : f32
    %516 = vector.broadcast %cst_189 : f32 to vector<8x256xf32>
    %517 = arith.addf %516, %515 : vector<8x256xf32>
    %518 = arith.divf %516, %517 : vector<8x256xf32>
    %519 = vector.extract_strided_slice %506 {offsets = [0, 512], sizes = [8, 256], strides = [1, 1]} : vector<8x1024xf32> to vector<8x256xf32>
    %520 = math.tanh %519 : vector<8x256xf32>
    %521 = vector.extract_strided_slice %506 {offsets = [0, 768], sizes = [8, 256], strides = [1, 1]} : vector<8x1024xf32> to vector<8x256xf32>
    %522 = arith.negf %521 : vector<8x256xf32>
    %523 = math.exp %522 : vector<8x256xf32>
    %cst_190 = arith.constant 1.000000e+00 : f32
    %524 = vector.broadcast %cst_190 : f32 to vector<8x256xf32>
    %525 = arith.addf %524, %523 : vector<8x256xf32>
    %526 = arith.divf %524, %525 : vector<8x256xf32>
    %527 = arith.mulf %518, %496 : vector<8x256xf32>
    %528 = arith.mulf %512, %520 : vector<8x256xf32>
    %529 = arith.addf %527, %528 : vector<8x256xf32>
    %530 = math.tanh %529 : vector<8x256xf32>
    %531 = arith.mulf %526, %530 : vector<8x256xf32>
    %532 = arith.addf %499, %531 : vector<8x256xf32>
    %c48_191 = arith.constant 48 : index
    %c0_192 = arith.constant 0 : index
    %533 = vector.load %arg11[%c48_191, %c0_192] : memref<64x1024xf32, #tpu.memory_space<vmem>>, vector<8x1024xf32>
    %c8_193 = arith.constant 8 : index
    %c0_194 = arith.constant 0 : index
    %534 = vector.load %arg11[%c8_193, %c0_194] : memref<64x1024xf32, #tpu.memory_space<vmem>>, vector<8x1024xf32>
    %535 = arith.select %26, %533, %534 : vector<8x1024xi1>, vector<8x1024xf32>
    %536 = arith.truncf %531 : vector<8x256xf32> to vector<8x256xbf16>
    %c0_195 = arith.constant 0 : index
    %c0_196 = arith.constant 0 : index
    %537 = vector.load %arg7[%c0_195, %c0_196] : memref<256x1024xbf16, #tpu.memory_space<vmem>>, vector<256x1024xbf16>
    %cst_197 = arith.constant dense<0.000000e+00> : vector<8x1024xf32>
    %538 = tpu.matmul %536, %537, %cst_197 {dimension_numbers = #tpu.dot_dimension_numbers<[1], [0], [0], [1], [0, 0, 1, 1], [], []>} : vector<8x256xbf16>, vector<256x1024xbf16>, vector<8x1024xf32> -> vector<8x1024xf32>
    %539 = arith.addf %535, %538 : vector<8x1024xf32>
    %540 = vector.extract_strided_slice %539 {offsets = [0, 0], sizes = [8, 256], strides = [1, 1]} : vector<8x1024xf32> to vector<8x256xf32>
    %541 = arith.negf %540 : vector<8x256xf32>
    %542 = math.exp %541 : vector<8x256xf32>
    %cst_198 = arith.constant 1.000000e+00 : f32
    %543 = vector.broadcast %cst_198 : f32 to vector<8x256xf32>
    %544 = arith.addf %543, %542 : vector<8x256xf32>
    %545 = arith.divf %543, %544 : vector<8x256xf32>
    %546 = vector.extract_strided_slice %539 {offsets = [0, 256], sizes = [8, 256], strides = [1, 1]} : vector<8x1024xf32> to vector<8x256xf32>
    %547 = arith.negf %546 : vector<8x256xf32>
    %548 = math.exp %547 : vector<8x256xf32>
    %cst_199 = arith.constant 1.000000e+00 : f32
    %549 = vector.broadcast %cst_199 : f32 to vector<8x256xf32>
    %550 = arith.addf %549, %548 : vector<8x256xf32>
    %551 = arith.divf %549, %550 : vector<8x256xf32>
    %552 = vector.extract_strided_slice %539 {offsets = [0, 512], sizes = [8, 256], strides = [1, 1]} : vector<8x1024xf32> to vector<8x256xf32>
    %553 = math.tanh %552 : vector<8x256xf32>
    %554 = vector.extract_strided_slice %539 {offsets = [0, 768], sizes = [8, 256], strides = [1, 1]} : vector<8x1024xf32> to vector<8x256xf32>
    %555 = arith.negf %554 : vector<8x256xf32>
    %556 = math.exp %555 : vector<8x256xf32>
    %cst_200 = arith.constant 1.000000e+00 : f32
    %557 = vector.broadcast %cst_200 : f32 to vector<8x256xf32>
    %558 = arith.addf %557, %556 : vector<8x256xf32>
    %559 = arith.divf %557, %558 : vector<8x256xf32>
    %560 = arith.mulf %551, %529 : vector<8x256xf32>
    %561 = arith.mulf %545, %553 : vector<8x256xf32>
    %562 = arith.addf %560, %561 : vector<8x256xf32>
    %563 = math.tanh %562 : vector<8x256xf32>
    %564 = arith.mulf %559, %563 : vector<8x256xf32>
    %565 = arith.addf %532, %564 : vector<8x256xf32>
    %c56_201 = arith.constant 56 : index
    %c0_202 = arith.constant 0 : index
    %566 = vector.load %arg11[%c56_201, %c0_202] : memref<64x1024xf32, #tpu.memory_space<vmem>>, vector<8x1024xf32>
    %c0_203 = arith.constant 0 : index
    %c0_204 = arith.constant 0 : index
    %567 = vector.load %arg11[%c0_203, %c0_204] : memref<64x1024xf32, #tpu.memory_space<vmem>>, vector<8x1024xf32>
    %568 = arith.select %26, %566, %567 : vector<8x1024xi1>, vector<8x1024xf32>
    %569 = arith.truncf %564 : vector<8x256xf32> to vector<8x256xbf16>
    %c0_205 = arith.constant 0 : index
    %c0_206 = arith.constant 0 : index
    %570 = vector.load %arg7[%c0_205, %c0_206] : memref<256x1024xbf16, #tpu.memory_space<vmem>>, vector<256x1024xbf16>
    %cst_207 = arith.constant dense<0.000000e+00> : vector<8x1024xf32>
    %571 = tpu.matmul %569, %570, %cst_207 {dimension_numbers = #tpu.dot_dimension_numbers<[1], [0], [0], [1], [0, 0, 1, 1], [], []>} : vector<8x256xbf16>, vector<256x1024xbf16>, vector<8x1024xf32> -> vector<8x1024xf32>
    %572 = arith.addf %568, %571 : vector<8x1024xf32>
    %573 = vector.extract_strided_slice %572 {offsets = [0, 0], sizes = [8, 256], strides = [1, 1]} : vector<8x1024xf32> to vector<8x256xf32>
    %574 = arith.negf %573 : vector<8x256xf32>
    %575 = math.exp %574 : vector<8x256xf32>
    %cst_208 = arith.constant 1.000000e+00 : f32
    %576 = vector.broadcast %cst_208 : f32 to vector<8x256xf32>
    %577 = arith.addf %576, %575 : vector<8x256xf32>
    %578 = arith.divf %576, %577 : vector<8x256xf32>
    %579 = vector.extract_strided_slice %572 {offsets = [0, 256], sizes = [8, 256], strides = [1, 1]} : vector<8x1024xf32> to vector<8x256xf32>
    %580 = arith.negf %579 : vector<8x256xf32>
    %581 = math.exp %580 : vector<8x256xf32>
    %cst_209 = arith.constant 1.000000e+00 : f32
    %582 = vector.broadcast %cst_209 : f32 to vector<8x256xf32>
    %583 = arith.addf %582, %581 : vector<8x256xf32>
    %584 = arith.divf %582, %583 : vector<8x256xf32>
    %585 = vector.extract_strided_slice %572 {offsets = [0, 512], sizes = [8, 256], strides = [1, 1]} : vector<8x1024xf32> to vector<8x256xf32>
    %586 = math.tanh %585 : vector<8x256xf32>
    %587 = vector.extract_strided_slice %572 {offsets = [0, 768], sizes = [8, 256], strides = [1, 1]} : vector<8x1024xf32> to vector<8x256xf32>
    %588 = arith.negf %587 : vector<8x256xf32>
    %589 = math.exp %588 : vector<8x256xf32>
    %cst_210 = arith.constant 1.000000e+00 : f32
    %590 = vector.broadcast %cst_210 : f32 to vector<8x256xf32>
    %591 = arith.addf %590, %589 : vector<8x256xf32>
    %592 = arith.divf %590, %591 : vector<8x256xf32>
    %593 = arith.mulf %584, %562 : vector<8x256xf32>
    %594 = arith.mulf %578, %586 : vector<8x256xf32>
    %595 = arith.addf %593, %594 : vector<8x256xf32>
    %596 = math.tanh %595 : vector<8x256xf32>
    %597 = arith.mulf %592, %596 : vector<8x256xf32>
    %598 = arith.addf %565, %597 : vector<8x256xf32>
    %cst_211 = arith.constant 1.250000e-01 : f32
    %599 = vector.broadcast %cst_211 : f32 to vector<8x256xf32>
    %600 = arith.mulf %598, %599 : vector<8x256xf32>
    %c0_212 = arith.constant 0 : index
    %c0_213 = arith.constant 0 : index
    %601 = vector.load %arg8[%c0_212, %c0_213] : memref<256x4xf32, #tpu.memory_space<vmem>>, vector<256x4xf32>
    %cst_214 = arith.constant dense<0.000000e+00> : vector<8x4xf32>
    %602 = tpu.matmul %600, %601, %cst_214 {dimension_numbers = #tpu.dot_dimension_numbers<[1], [0], [0], [1], [0, 0, 1, 1], [], []>} : vector<8x256xf32>, vector<256x4xf32>, vector<8x4xf32> -> vector<8x4xf32>
    %c0_215 = arith.constant 0 : index
    %c0_216 = arith.constant 0 : index
    %603 = vector.load %arg9[%c0_215, %c0_216] : memref<1x4xf32, #tpu.memory_space<vmem>>, vector<1x4xf32>
    %604 = vector.broadcast %603 : vector<1x4xf32> to vector<8x4xf32>
    %605 = arith.addf %602, %604 : vector<8x4xf32>
    %c0_217 = arith.constant 0 : index
    %c0_218 = arith.constant 0 : index
    %606 = vector.load %arg10[%c0_217, %c0_218] : memref<8x4xf32, #tpu.memory_space<vmem>>, vector<8x4xf32>
    tpu.vector_store %arg10[%c0_217, %c0_218], %605 {strides = array<i32>} : memref<8x4xf32, #tpu.memory_space<vmem>>, vector<8x4xf32>,
    return
  }
}

</mosaic_0001>

<llo_original>
// kernel: forward.1
$region0: #{forward.1}
  #allocation0 [shape = 'u32[]', space=smem, size = 0x4, offset = 0x4, fixed_abs, tag = 'smem constant byte address 0x4 - core index']
  #allocation1 [shape = 'u32[144,128]{1,0:T(1,128)}', space=vmem, size = 0x12000, scoped, tag = 'internal scratch']
  #allocation2 [shape = 'f32[64,1024]{1,0:T(8,128)}', space=vmem, size = 0x40000, scoped, tag = 'scratch operand']
  #allocation3 [shape = 'f32[64,256]{1,0:T(8,128)}', space=vmem, size = 0x10000, scoped, tag = 'scratch operand']
  %s0 = inlined_call_operand.vmem [shape: s32[64,1], index: 0, kind: input, shape index: {}]
  %s1 = inlined_call_operand.vmem [shape: f32[128,128], index: 1, kind: input, shape index: {}]
  %s2 = inlined_call_operand.vmem [shape: bf16[128,1024], index: 2, kind: input, shape index: {}]
  %s3 = inlined_call_operand.vmem [shape: f32[1,1024], index: 3, kind: input, shape index: {}]
  %s4 = inlined_call_operand.vmem [shape: bf16[256,1024], index: 4, kind: input, shape index: {}]
  %s5 = inlined_call_operand.vmem [shape: bf16[256,1024], index: 5, kind: input, shape index: {}]
  %s6 = inlined_call_operand.vmem [shape: f32[1,1024], index: 6, kind: input, shape index: {}]
  %s7 = inlined_call_operand.vmem [shape: bf16[256,1024], index: 7, kind: input, shape index: {}]
  %s8 = inlined_call_operand.vmem [shape: f32[256,4], index: 8, kind: input, shape index: {}]
  %s9 = inlined_call_operand.vmem [shape: f32[1,4], index: 9, kind: input, shape index: {}]
  %s10 = inlined_call_operand.vmem [shape: f32[8,4], index: 10, kind: output, shape index: {}]
  %s11 = sld [smem:[#allocation0]]
  $region50: #{forward.1} parent=0
    _
  %s13 = ssub.s32 1, %s11
  %s14 = scalar_select 0, %s13, %s11
  // Predicated region
  $region2: #{forward.1} parent=0 // pred_check
    _
  $region3: #{forward.1} parent=0 // pred_check_branch
    %16 = sbr.rel (0) target = $region5
  $region4: #{forward.1} parent=0 // pred_region
    _
  $region5: #{forward.1} parent=0 // pred_fallthru
    _
  // Predicated region
  $region6: #{forward.1} parent=0 // pred_check
    _
  $region7: #{forward.1} parent=0 // pred_check_branch
    %18 = sbr.rel (0) target = $region9
  $region8: #{forward.1} parent=0 // pred_region
    _
  $region9: #{forward.1} parent=0 // pred_fallthru
    _
  // Predicated region
  $region10: #{forward.1} parent=0 // pred_check
    _
  $region11: #{forward.1} parent=0 // pred_check_branch
    %20 = sbr.rel (0) target = $region13
  $region12: #{forward.1} parent=0 // pred_region
    _
  $region13: #{forward.1} parent=0 // pred_fallthru
    _
  // Predicated region
  $region14: #{forward.1} parent=0 // pred_check
    _
  $region15: #{forward.1} parent=0 // pred_check_branch
    %22 = sbr.rel (0) target = $region17
  $region16: #{forward.1} parent=0 // pred_region
    _
  $region17: #{forward.1} parent=0 // pred_fallthru
    _
  // Predicated region
  $region18: #{forward.1} parent=0 // pred_check
    _
  $region19: #{forward.1} parent=0 // pred_check_branch
    %24 = sbr.rel (0) target = $region21
  $region20: #{forward.1} parent=0 // pred_region
    _
  $region21: #{forward.1} parent=0 // pred_fallthru
    _
  // Predicated region
  $region22: #{forward.1} parent=0 // pred_check
    _
  $region23: #{forward.1} parent=0 // pred_check_branch
    %26 = sbr.rel (0) target = $region25
  $region24: #{forward.1} parent=0 // pred_region
    _
  $region25: #{forward.1} parent=0 // pred_fallthru
    _
  // Predicated region
  $region26: #{forward.1} parent=0 // pred_check
    _
  $region27: #{forward.1} parent=0 // pred_check_branch
    %28 = sbr.rel (0) target = $region29
  $region28: #{forward.1} parent=0 // pred_region
    _
  $region29: #{forward.1} parent=0 // pred_fallthru
    _
  // Predicated region
  $region30: #{forward.1} parent=0 // pred_check
    _
  $region31: #{forward.1} parent=0 // pred_check_branch
    %30 = sbr.rel (0) target = $region33
  $region32: #{forward.1} parent=0 // pred_region
    _
  $region33: #{forward.1} parent=0 // pred_fallthru
    _
  // Predicated region
  $region34: #{forward.1} parent=0 // pred_check
    _
  $region35: #{forward.1} parent=0 // pred_check_branch
    %32 = sbr.rel (0) target = $region37
  $region36: #{forward.1} parent=0 // pred_region
    _
  $region37: #{forward.1} parent=0 // pred_fallthru
    _
  // Predicated region
  $region38: #{forward.1} parent=0 // pred_check
    _
  $region39: #{forward.1} parent=0 // pred_check_branch
    %34 = sbr.rel (0) target = $region41
  $region40: #{forward.1} parent=0 // pred_region
    _
  $region41: #{forward.1} parent=0 // pred_fallthru
    _
  %v36 = vld [vmem:[%s0] sm:$0xff]
  %v37 = vld [vmem:[%s0 + $0x8] sm:$0xff]
  %v38 = vld [vmem:[%s0 + $0x10] sm:$0xff]
  %v39 = vld [vmem:[%s0 + $0x18] sm:$0xff]
  %v40 = vld [vmem:[%s0 + $0x20] sm:$0xff]
  %v41 = vld [vmem:[%s0 + $0x28] sm:$0xff]
  %v42 = vld [vmem:[%s0 + $0x30] sm:$0xff]
  %v43 = vld [vmem:[%s0 + $0x38] sm:$0xff]
  %v44 = vlaneseq
  %v45 = vand.u32 %v44, 127
  %46 = vset.pattern.permute.xlu0 0
  %47 = vperm.xlu0 %46, %v36
  %v48 = vpop.permute.xlu0 %47
  %49 = vset.pattern.permute.xlu0 0
  %50 = vperm.xlu0 %49, %v37
  %v51 = vpop.permute.xlu0 %50
  %52 = vset.pattern.permute.xlu0 0
  %53 = vperm.xlu0 %52, %v38
  %v54 = vpop.permute.xlu0 %53
  %55 = vset.pattern.permute.xlu0 0
  %56 = vperm.xlu0 %55, %v39
  %v57 = vpop.permute.xlu0 %56
  %58 = vset.pattern.permute.xlu0 0
  %59 = vperm.xlu0 %58, %v40
  %v60 = vpop.permute.xlu0 %59
  %61 = vset.pattern.permute.xlu0 0
  %62 = vperm.xlu0 %61, %v41
  %v63 = vpop.permute.xlu0 %62
  %64 = vset.pattern.permute.xlu0 0
  %65 = vperm.xlu0 %64, %v42
  %v66 = vpop.permute.xlu0 %65
  %67 = vset.pattern.permute.xlu0 0
  %68 = vperm.xlu0 %67, %v43
  %v69 = vpop.permute.xlu0 %68
  %vm70 = vcmp.eq.s32.totalorder %v45, %v48
  %vm71 = vcmp.eq.s32.totalorder %v45, %v51
  %vm72 = vcmp.eq.s32.totalorder %v45, %v54
  %vm73 = vcmp.eq.s32.totalorder %v45, %v57
  %vm74 = vcmp.eq.s32.totalorder %v45, %v60
  %vm75 = vcmp.eq.s32.totalorder %v45, %v63
  %vm76 = vcmp.eq.s32.totalorder %v45, %v66
  %vm77 = vcmp.eq.s32.totalorder %v45, %v69
  %v78 = vsel %vm70, 1, 0
  %v79 = vsel %vm71, 1, 0
  %v80 = vsel %vm72, 1, 0
  %v81 = vsel %vm73, 1, 0
  %v82 = vsel %vm74, 1, 0
  %v83 = vsel %vm75, 1, 0
  %v84 = vsel %vm76, 1, 0
  %v85 = vsel %vm77, 1, 0
  %v86 = vcvt.s32.f32 %v78
  %v87 = vcvt.s32.f32 %v79
  %v88 = vcvt.s32.f32 %v80
  %v89 = vcvt.s32.f32 %v81
  %v90 = vcvt.s32.f32 %v82
  %v91 = vcvt.s32.f32 %v83
  %v92 = vcvt.s32.f32 %v84
  %v93 = vcvt.s32.f32 %v85
  %v94 = vld [vmem:[%s1] sm:$0xff]
  %v95 = vld [vmem:[%s1 + $0x8] sm:$0xff]
  %v96 = vld [vmem:[%s1 + $0x10] sm:$0xff]
  %v97 = vld [vmem:[%s1 + $0x18] sm:$0xff]
  %v98 = vld [vmem:[%s1 + $0x20] sm:$0xff]
  %v99 = vld [vmem:[%s1 + $0x28] sm:$0xff]
  %v100 = vld [vmem:[%s1 + $0x30] sm:$0xff]
  %v101 = vld [vmem:[%s1 + $0x38] sm:$0xff]
  %v102 = vld [vmem:[%s1 + $0x40] sm:$0xff]
  %v103 = vld [vmem:[%s1 + $0x48] sm:$0xff]
  %v104 = vld [vmem:[%s1 + $0x50] sm:$0xff]
  %v105 = vld [vmem:[%s1 + $0x58] sm:$0xff]
  %v106 = vld [vmem:[%s1 + $0x60] sm:$0xff]
  %v107 = vld [vmem:[%s1 + $0x68] sm:$0xff]
  %v108 = vld [vmem:[%s1 + $0x70] sm:$0xff]
  %v109 = vld [vmem:[%s1 + $0x78] sm:$0xff]
  %110 = vmatprep.subr.mxu0 0.0
  %111 = vmatpush1.msra.mxu0 %v94
  %112 = vmatprep.subr.mxu0 0.0
  %113 = vmatpush1.msra.mxu0 %v95
  %114 = vmatprep.subr.mxu0 0.0
  %115 = vmatpush1.msra.mxu0 %v96
  %116 = vmatprep.subr.mxu0 0.0
  %117 = vmatpush1.msra.mxu0 %v97
  %118 = vmatprep.subr.mxu0 0.0
  %119 = vmatpush1.msra.mxu0 %v98
  %120 = vmatprep.subr.mxu0 0.0
  %121 = vmatpush1.msra.mxu0 %v99
  %122 = vmatprep.subr.mxu0 0.0
  %123 = vmatpush1.msra.mxu0 %v100
  %124 = vmatprep.subr.mxu0 0.0
  %125 = vmatpush1.msra.mxu0 %v101
  %126 = vmatprep.subr.mxu0 0.0
  %127 = vmatpush1.msra.mxu0 %v102
  %128 = vmatprep.subr.mxu0 0.0
  %129 = vmatpush1.msra.mxu0 %v103
  %130 = vmatprep.subr.mxu0 0.0
  %131 = vmatpush1.msra.mxu0 %v104
  %132 = vmatprep.subr.mxu0 0.0
  %133 = vmatpush1.msra.mxu0 %v105
  %134 = vmatprep.subr.mxu0 0.0
  %135 = vmatpush1.msra.mxu0 %v106
  %136 = vmatprep.subr.mxu0 0.0
  %137 = vmatpush1.msra.mxu0 %v107
  %138 = vmatprep.subr.mxu0 0.0
  %139 = vmatpush1.msra.mxu0 %v108
  %140 = vmatprep.subr.mxu0 0.0
  %141 = vmatpush1.msra.mxu0 %v109
  %142 = vmatprep.subr.mxu0 0.0
  %143 = vmatpush1.msra.mxu0 0.0
  %144 = vmatprep.subr.mxu0 0.0
  %145 = vmatpush1.msra.mxu0 0.0
  %146 = vmatprep.subr.mxu0 0.0
  %147 = vmatpush1.msra.mxu0 0.0
  %148 = vmatprep.subr.mxu0 0.0
  %149 = vmatpush1.msra.mxu0 0.0
  %150 = vmatprep.subr.mxu0 0.0
  %151 = vmatpush1.msra.mxu0 0.0
  %152 = vmatprep.subr.mxu0 0.0
  %153 = vmatpush1.msra.mxu0 0.0
  %154 = vmatprep.subr.mxu0 0.0
  %155 = vmatpush1.msra.mxu0 0.0
  %156 = vmatprep.subr.mxu0 0.0
  %157 = vmatpush1.msra.mxu0 0.0
  %158 = vmatprep.subr.mxu0 0.0
  %159 = vmatpush1.msra.mxu0 0.0
  %160 = vmatprep.subr.mxu0 0.0
  %161 = vmatpush1.msra.mxu0 0.0
  %162 = vmatprep.subr.mxu0 0.0
  %163 = vmatpush1.msra.mxu0 0.0
  %164 = vmatprep.subr.mxu0 0.0
  %165 = vmatpush1.msra.mxu0 0.0
  %166 = vmatprep.subr.mxu0 0.0
  %167 = vmatpush1.msra.mxu0 0.0
  %168 = vmatprep.subr.mxu0 0.0
  %169 = vmatpush1.msra.mxu0 0.0
  %170 = vmatprep.subr.mxu0 0.0
  %171 = vmatpush1.msra.mxu0 0.0
  %172 = vmatprep.subr.mxu0 0.0
  %173 = vmatpush1.msra.mxu0 0.0
  %174 = vmatprep.mubr.f32.mxu0 0.0
  %175 = vmatmul.mubr.f32.gmra.mrb[0].mxu0 %v86
  %v176 = vpop.f32.mrb[0].mxu0
  %v177 = vadd.f32 0.0, %v176
  %v178 = vpop.f32.mrb[0].mxu0
  %179 = vmatprep.mubr.f32.mxu0 0.0
  %180 = vmatmul.mubr.f32.gmra.mrb[0].mxu0 %v87
  %v181 = vpop.f32.mrb[0].mxu0
  %v182 = vadd.f32 0.0, %v181
  %v183 = vpop.f32.mrb[0].mxu0
  %184 = vmatprep.mubr.f32.mxu0 0.0
  %185 = vmatmul.mubr.f32.gmra.mrb[0].mxu0 %v88
  %v186 = vpop.f32.mrb[0].mxu0
  %v187 = vadd.f32 0.0, %v186
  %v188 = vpop.f32.mrb[0].mxu0
  %189 = vmatprep.mubr.f32.mxu0 0.0
  %190 = vmatmul.mubr.f32.gmra.mrb[0].mxu0 %v89
  %v191 = vpop.f32.mrb[0].mxu0
  %v192 = vadd.f32 0.0, %v191
  %v193 = vpop.f32.mrb[0].mxu0
  %194 = vmatprep.mubr.f32.mxu0 0.0
  %195 = vmatmul.mubr.f32.gmra.mrb[0].mxu0 %v90
  %v196 = vpop.f32.mrb[0].mxu0
  %v197 = vadd.f32 0.0, %v196
  %v198 = vpop.f32.mrb[0].mxu0
  %199 = vmatprep.mubr.f32.mxu0 0.0
  %200 = vmatmul.mubr.f32.gmra.mrb[0].mxu0 %v91
  %v201 = vpop.f32.mrb[0].mxu0
  %v202 = vadd.f32 0.0, %v201
  %v203 = vpop.f32.mrb[0].mxu0
  %204 = vmatprep.mubr.f32.mxu0 0.0
  %205 = vmatmul.mubr.f32.gmra.mrb[0].mxu0 %v92
  %v206 = vpop.f32.mrb[0].mxu0
  %v207 = vadd.f32 0.0, %v206
  %v208 = vpop.f32.mrb[0].mxu0
  %209 = vmatprep.mubr.f32.mxu0 0.0
  %210 = vmatmul.mubr.f32.gmra.mrb[0].mxu0 %v93
  %v211 = vpop.f32.mrb[0].mxu0
  %v212 = vadd.f32 0.0, %v211
  %v213 = vpop.f32.mrb[0].mxu0
  %214 = vdwg.mxu0
  %v215 = vadd.s32 %v45, 128
  %v216 = vadd.s32 %v45, 256
  %v217 = vadd.s32 %v45, 384
  %v218 = vadd.s32 %v45, 512
  %v219 = vadd.s32 %v45, 640
  %v220 = vadd.s32 %v45, 768
  %v221 = vadd.s32 %v45, 896
  %vm222 = vcmp.lt.s32.totalorder %v45, 0
  %v223 = vsub.s32 0, %v45
  %v224 = vsel %vm222, %v223, %v45
  %v225 = vshrl.u32 %v224, 8
  %v226 = vand.u32 %v224, 255
  %v227 = vsub.s32 0, %v226
  %v228 = vsel %vm222, %v227, %v226
  %vm229 = vcmp.lt.s32.totalorder %v215, 0
  %v230 = vsub.s32 0, %v215
  %v231 = vsel %vm229, %v230, %v215
  %v232 = vshrl.u32 %v231, 8
  %v233 = vand.u32 %v231, 255
  %v234 = vsub.s32 0, %v233
  %v235 = vsel %vm229, %v234, %v233
  %vm236 = vcmp.lt.s32.totalorder %v216, 0
  %v237 = vsub.s32 0, %v216
  %v238 = vsel %vm236, %v237, %v216
  %v239 = vshrl.u32 %v238, 8
  %v240 = vand.u32 %v238, 255
  %v241 = vsub.s32 0, %v240
  %v242 = vsel %vm236, %v241, %v240
  %vm243 = vcmp.lt.s32.totalorder %v217, 0
  %v244 = vsub.s32 0, %v217
  %v245 = vsel %vm243, %v244, %v217
  %v246 = vshrl.u32 %v245, 8
  %v247 = vand.u32 %v245, 255
  %v248 = vsub.s32 0, %v247
  %v249 = vsel %vm243, %v248, %v247
  %vm250 = vcmp.lt.s32.totalorder %v218, 0
  %v251 = vsub.s32 0, %v218
  %v252 = vsel %vm250, %v251, %v218
  %v253 = vshrl.u32 %v252, 8
  %v254 = vand.u32 %v252, 255
  %v255 = vsub.s32 0, %v254
  %v256 = vsel %vm250, %v255, %v254
  %vm257 = vcmp.lt.s32.totalorder %v219, 0
  %v258 = vsub.s32 0, %v219
  %v259 = vsel %vm257, %v258, %v219
  %v260 = vshrl.u32 %v259, 8
  %v261 = vand.u32 %v259, 255
  %v262 = vsub.s32 0, %v261
  %v263 = vsel %vm257, %v262, %v261
  %vm264 = vcmp.lt.s32.totalorder %v220, 0
  %v265 = vsub.s32 0, %v220
  %v266 = vsel %vm264, %v265, %v220
  %v267 = vshrl.u32 %v266, 8
  %v268 = vand.u32 %v266, 255
  %v269 = vsub.s32 0, %v268
  %v270 = vsel %vm264, %v269, %v268
  %vm271 = vcmp.lt.s32.totalorder %v221, 0
  %v272 = vsub.s32 0, %v221
  %v273 = vsel %vm271, %v272, %v221
  %v274 = vshrl.u32 %v273, 8
  %v275 = vand.u32 %v273, 255
  %v276 = vsub.s32 0, %v275
  %v277 = vsel %vm271, %v276, %v275
  %vm278 = vcmp.ne.s32.totalorder %v228, 0
  %vm279 = vcmp.ne.s32.totalorder %v235, 0
  %vm280 = vcmp.ne.s32.totalorder %v242, 0
  %vm281 = vcmp.ne.s32.totalorder %v249, 0
  %vm282 = vcmp.ne.s32.totalorder %v256, 0
  %vm283 = vcmp.ne.s32.totalorder %v263, 0
  %vm284 = vcmp.ne.s32.totalorder %v270, 0
  %vm285 = vcmp.ne.s32.totalorder %v277, 0
  %vm286 = vcmp.lt.s32.totalorder %v228, 0
  %vm287 = vcmp.lt.s32.totalorder %v235, 0
  %vm288 = vcmp.lt.s32.totalorder %v242, 0
  %vm289 = vcmp.lt.s32.totalorder %v249, 0
  %vm290 = vcmp.lt.s32.totalorder %v256, 0
  %vm291 = vcmp.lt.s32.totalorder %v263, 0
  %vm292 = vcmp.lt.s32.totalorder %v270, 0
  %vm293 = vcmp.lt.s32.totalorder %v277, 0
  %vm294 = vmand %vm286, %vm278
  %vm295 = vmand %vm287, %vm279
  %vm296 = vmand %vm288, %vm280
  %vm297 = vmand %vm289, %vm281
  %vm298 = vmand %vm290, %vm282
  %vm299 = vmand %vm291, %vm283
  %vm300 = vmand %vm292, %vm284
  %vm301 = vmand %vm293, %vm285
  %v302 = vadd.s32 %v228, 256
  %v303 = vadd.s32 %v235, 256
  %v304 = vadd.s32 %v242, 256
  %v305 = vadd.s32 %v249, 256
  %v306 = vadd.s32 %v256, 256
  %v307 = vadd.s32 %v263, 256
  %v308 = vadd.s32 %v270, 256
  %v309 = vadd.s32 %v277, 256
  %v310 = vsel %vm294, %v302, %v228
  %v311 = vsel %vm295, %v303, %v235
  %v312 = vsel %vm296, %v304, %v242
  %v313 = vsel %vm297, %v305, %v249
  %v314 = vsel %vm298, %v306, %v256
  %v315 = vsel %vm299, %v307, %v263
  %v316 = vsel %vm300, %v308, %v270
  %v317 = vsel %vm301, %v309, %v277
  %vm318 = vcmp.lt.s32.totalorder %v310, 128
  %vm319 = vcmp.lt.s32.totalorder %v311, 128
  %vm320 = vcmp.lt.s32.totalorder %v312, 128
  %vm321 = vcmp.lt.s32.totalorder %v313, 128
  %vm322 = vcmp.lt.s32.totalorder %v314, 128
  %vm323 = vcmp.lt.s32.totalorder %v315, 128
  %vm324 = vcmp.lt.s32.totalorder %v316, 128
  %vm325 = vcmp.lt.s32.totalorder %v317, 128
  %v326 = vpack.c.bf16 %v182, %v177
  %v327 = vpack.c.bf16 %v192, %v187
  %v328 = vpack.c.bf16 %v202, %v197
  %v329 = vpack.c.bf16 %v212, %v207
  %v330 = vld [vmem:[%s2] sm:$0xff]
  %v331 = vld [vmem:[%s2 + $0x8] sm:$0xff]
  %v332 = vld [vmem:[%s2 + $0x10] sm:$0xff]
  %v333 = vld [vmem:[%s2 + $0x18] sm:$0xff]
  %v334 = vld [vmem:[%s2 + $0x20] sm:$0xff]
  %v335 = vld [vmem:[%s2 + $0x28] sm:$0xff]
  %v336 = vld [vmem:[%s2 + $0x30] sm:$0xff]
  %v337 = vld [vmem:[%s2 + $0x38] sm:$0xff]
  %v338 = vld [vmem:[%s2 + $0x40] sm:$0xff]
  %v339 = vld [vmem:[%s2 + $0x48] sm:$0xff]
  %v340 = vld [vmem:[%s2 + $0x50] sm:$0xff]
  %v341 = vld [vmem:[%s2 + $0x58] sm:$0xff]
  %v342 = vld [vmem:[%s2 + $0x60] sm:$0xff]
  %v343 = vld [vmem:[%s2 + $0x68] sm:$0xff]
  %v344 = vld [vmem:[%s2 + $0x70] sm:$0xff]
  %v345 = vld [vmem:[%s2 + $0x78] sm:$0xff]
  %v346 = vld [vmem:[%s2 + $0x80] sm:$0xff]
  %v347 = vld [vmem:[%s2 + $0x88] sm:$0xff]
  %v348 = vld [vmem:[%s2 + $0x90] sm:$0xff]
  %v349 = vld [vmem:[%s2 + $0x98] sm:$0xff]
  %v350 = vld [vmem:[%s2 + $0xa0] sm:$0xff]
  %v351 = vld [vmem:[%s2 + $0xa8] sm:$0xff]
  %v352 = vld [vmem:[%s2 + $0xb0] sm:$0xff]
  %v353 = vld [vmem:[%s2 + $0xb8] sm:$0xff]
  %v354 = vld [vmem:[%s2 + $0xc0] sm:$0xff]
  %v355 = vld [vmem:[%s2 + $0xc8] sm:$0xff]
  %v356 = vld [vmem:[%s2 + $0xd0] sm:$0xff]
  %v357 = vld [vmem:[%s2 + $0xd8] sm:$0xff]
  %v358 = vld [vmem:[%s2 + $0xe0] sm:$0xff]
  %v359 = vld [vmem:[%s2 + $0xe8] sm:$0xff]
  %v360 = vld [vmem:[%s2 + $0xf0] sm:$0xff]
  %v361 = vld [vmem:[%s2 + $0xf8] sm:$0xff]
  %v362 = vld [vmem:[%s2 + $0x100] sm:$0xff]
  %v363 = vld [vmem:[%s2 + $0x108] sm:$0xff]
  %v364 = vld [vmem:[%s2 + $0x110] sm:$0xff]
  %v365 = vld [vmem:[%s2 + $0x118] sm:$0xff]
  %v366 = vld [vmem:[%s2 + $0x120] sm:$0xff]
  %v367 = vld [vmem:[%s2 + $0x128] sm:$0xff]
  %v368 = vld [vmem:[%s2 + $0x130] sm:$0xff]
  %v369 = vld [vmem:[%s2 + $0x138] sm:$0xff]
  %v370 = vld [vmem:[%s2 + $0x140] sm:$0xff]
  %v371 = vld [vmem:[%s2 + $0x148] sm:$0xff]
  %v372 = vld [vmem:[%s2 + $0x150] sm:$0xff]
  %v373 = vld [vmem:[%s2 + $0x158] sm:$0xff]
  %v374 = vld [vmem:[%s2 + $0x160] sm:$0xff]
  %v375 = vld [vmem:[%s2 + $0x168] sm:$0xff]
  %v376 = vld [vmem:[%s2 + $0x170] sm:$0xff]
  %v377 = vld [vmem:[%s2 + $0x178] sm:$0xff]
  %v378 = vld [vmem:[%s2 + $0x180] sm:$0xff]
  %v379 = vld [vmem:[%s2 + $0x188] sm:$0xff]
  %v380 = vld [vmem:[%s2 + $0x190] sm:$0xff]
  %v381 = vld [vmem:[%s2 + $0x198] sm:$0xff]
  %v382 = vld [vmem:[%s2 + $0x1a0] sm:$0xff]
  %v383 = vld [vmem:[%s2 + $0x1a8] sm:$0xff]
  %v384 = vld [vmem:[%s2 + $0x1b0] sm:$0xff]
  %v385 = vld [vmem:[%s2 + $0x1b8] sm:$0xff]
  %v386 = vld [vmem:[%s2 + $0x1c0] sm:$0xff]
  %v387 = vld [vmem:[%s2 + $0x1c8] sm:$0xff]
  %v388 = vld [vmem:[%s2 + $0x1d0] sm:$0xff]
  %v389 = vld [vmem:[%s2 + $0x1d8] sm:$0xff]
  %v390 = vld [vmem:[%s2 + $0x1e0] sm:$0xff]
  %v391 = vld [vmem:[%s2 + $0x1e8] sm:$0xff]
  %v392 = vld [vmem:[%s2 + $0x1f0] sm:$0xff]
  %v393 = vld [vmem:[%s2 + $0x1f8] sm:$0xff]
  %v394 = vld [vmem:[%s3] sm:$0xff]
  %v396 = vlaneseq
  %v397 = vshrl.u32 %v396, 7
  %v398 = vsub.s32 0, %v397
  %v399 = vrot.slane %v394, %v398
  %v400 = vlaneseq
  %v401 = vshrl.u32 %v400, 7
  %v402 = vsub.s32 1, %v401
  %v403 = vrot.slane %v394, %v402
  %v404 = vlaneseq
  %v405 = vshrl.u32 %v404, 7
  %v406 = vsub.s32 2, %v405
  %v407 = vrot.slane %v394, %v406
  %v408 = vlaneseq
  %v409 = vshrl.u32 %v408, 7
  %v410 = vsub.s32 3, %v409
  %v411 = vrot.slane %v394, %v410
  %v412 = vlaneseq
  %v413 = vshrl.u32 %v412, 7
  %v414 = vsub.s32 4, %v413
  %v415 = vrot.slane %v394, %v414
  %v416 = vlaneseq
  %v417 = vshrl.u32 %v416, 7
  %v418 = vsub.s32 5, %v417
  %v419 = vrot.slane %v394, %v418
  %v420 = vlaneseq
  %v421 = vshrl.u32 %v420, 7
  %v422 = vsub.s32 6, %v421
  %v423 = vrot.slane %v394, %v422
  %v424 = vlaneseq
  %v425 = vshrl.u32 %v424, 7
  %v426 = vsub.s32 7, %v425
  %v427 = vrot.slane %v394, %v426
  %v500 = vunpack.c.l.b16 %v330
  %v501 = vunpack.c.h.b16 %v330
  %v502 = vunpack.c.l.b16 %v331
  %v503 = vunpack.c.h.b16 %v331
  %v504 = vunpack.c.l.b16 %v332
  %v505 = vunpack.c.h.b16 %v332
  %v506 = vunpack.c.l.b16 %v333
  %v507 = vunpack.c.h.b16 %v333
  %v508 = vunpack.c.l.b16 %v334
  %v509 = vunpack.c.h.b16 %v334
  %v510 = vunpack.c.l.b16 %v335
  %v511 = vunpack.c.h.b16 %v335
  %v512 = vunpack.c.l.b16 %v336
  %v513 = vunpack.c.h.b16 %v336
  %v514 = vunpack.c.l.b16 %v337
  %v515 = vunpack.c.h.b16 %v337
  %v516 = vunpack.c.l.b16 %v338
  %v517 = vunpack.c.h.b16 %v338
  %v518 = vunpack.c.l.b16 %v339
  %v519 = vunpack.c.h.b16 %v339
  %v520 = vunpack.c.l.b16 %v340
  %v521 = vunpack.c.h.b16 %v340
  %v522 = vunpack.c.l.b16 %v341
  %v523 = vunpack.c.h.b16 %v341
  %v524 = vunpack.c.l.b16 %v342
  %v525 = vunpack.c.h.b16 %v342
  %v526 = vunpack.c.l.b16 %v343
  %v527 = vunpack.c.h.b16 %v343
  %v528 = vunpack.c.l.b16 %v344
  %v529 = vunpack.c.h.b16 %v344
  %v530 = vunpack.c.l.b16 %v345
  %v531 = vunpack.c.h.b16 %v345
  %v532 = vunpack.c.l.b16 %v346
  %v533 = vunpack.c.h.b16 %v346
  %v534 = vunpack.c.l.b16 %v347
  %v535 = vunpack.c.h.b16 %v347
  %v536 = vunpack.c.l.b16 %v348
  %v537 = vunpack.c.h.b16 %v348
  %v538 = vunpack.c.l.b16 %v349
  %v539 = vunpack.c.h.b16 %v349
  %v540 = vunpack.c.l.b16 %v350
  %v541 = vunpack.c.h.b16 %v350
  %v542 = vunpack.c.l.b16 %v351
  %v543 = vunpack.c.h.b16 %v351
  %v544 = vunpack.c.l.b16 %v352
  %v545 = vunpack.c.h.b16 %v352
  %v546 = vunpack.c.l.b16 %v353
  %v547 = vunpack.c.h.b16 %v353
  %v548 = vunpack.c.l.b16 %v354
  %v549 = vunpack.c.h.b16 %v354
  %v550 = vunpack.c.l.b16 %v355
  %v551 = vunpack.c.h.b16 %v355
  %v552 = vunpack.c.l.b16 %v356
  %v553 = vunpack.c.h.b16 %v356
  %v554 = vunpack.c.l.b16 %v357
  %v555 = vunpack.c.h.b16 %v357
  %v556 = vunpack.c.l.b16 %v358
  %v557 = vunpack.c.h.b16 %v358
  %v558 = vunpack.c.l.b16 %v359
  %v559 = vunpack.c.h.b16 %v359
  %v560 = vunpack.c.l.b16 %v360
  %v561 = vunpack.c.h.b16 %v360
  %v562 = vunpack.c.l.b16 %v361
  %v563 = vunpack.c.h.b16 %v361
  %v564 = vunpack.c.l.b16 %v362
  %v565 = vunpack.c.h.b16 %v362
  %v566 = vunpack.c.l.b16 %v363
  %v567 = vunpack.c.h.b16 %v363
  %v568 = vunpack.c.l.b16 %v364
  %v569 = vunpack.c.h.b16 %v364
  %v570 = vunpack.c.l.b16 %v365
  %v571 = vunpack.c.h.b16 %v365
  %v572 = vunpack.c.l.b16 %v366
  %v573 = vunpack.c.h.b16 %v366
  %v574 = vunpack.c.l.b16 %v367
  %v575 = vunpack.c.h.b16 %v367
  %v576 = vunpack.c.l.b16 %v368
  %v577 = vunpack.c.h.b16 %v368
  %v578 = vunpack.c.l.b16 %v369
  %v579 = vunpack.c.h.b16 %v369
  %v580 = vunpack.c.l.b16 %v370
  %v581 = vunpack.c.h.b16 %v370
  %v582 = vunpack.c.l.b16 %v371
  %v583 = vunpack.c.h.b16 %v371
  %v584 = vunpack.c.l.b16 %v372
  %v585 = vunpack.c.h.b16 %v372
  %v586 = vunpack.c.l.b16 %v373
  %v587 = vunpack.c.h.b16 %v373
  %v588 = vunpack.c.l.b16 %v374
  %v589 = vunpack.c.h.b16 %v374
  %v590 = vunpack.c.l.b16 %v375
  %v591 = vunpack.c.h.b16 %v375
  %v592 = vunpack.c.l.b16 %v376
  %v593 = vunpack.c.h.b16 %v376
  %v594 = vunpack.c.l.b16 %v377
  %v595 = vunpack.c.h.b16 %v377
  %v596 = vunpack.c.l.b16 %v378
  %v597 = vunpack.c.h.b16 %v378
  %v598 = vunpack.c.l.b16 %v379
  %v599 = vunpack.c.h.b16 %v379
  %v600 = vunpack.c.l.b16 %v380
  %v601 = vunpack.c.h.b16 %v380
  %v602 = vunpack.c.l.b16 %v381
  %v603 = vunpack.c.h.b16 %v381
  %v604 = vunpack.c.l.b16 %v382
  %v605 = vunpack.c.h.b16 %v382
  %v606 = vunpack.c.l.b16 %v383
  %v607 = vunpack.c.h.b16 %v383
  %v608 = vunpack.c.l.b16 %v384
  %v609 = vunpack.c.h.b16 %v384
  %v610 = vunpack.c.l.b16 %v385
  %v611 = vunpack.c.h.b16 %v385
  %v612 = vunpack.c.l.b16 %v386
  %v613 = vunpack.c.h.b16 %v386
  %v614 = vunpack.c.l.b16 %v387
  %v615 = vunpack.c.h.b16 %v387
  %v616 = vunpack.c.l.b16 %v388
  %v617 = vunpack.c.h.b16 %v388
  %v618 = vunpack.c.l.b16 %v389
  %v619 = vunpack.c.h.b16 %v389
  %v620 = vunpack.c.l.b16 %v390
  %v621 = vunpack.c.h.b16 %v390
  %v622 = vunpack.c.l.b16 %v391
  %v623 = vunpack.c.h.b16 %v391
  %v624 = vunpack.c.l.b16 %v392
  %v625 = vunpack.c.h.b16 %v392
  %v626 = vunpack.c.l.b16 %v393
  %v627 = vunpack.c.h.b16 %v393
  %v628 = vpack.c.b16 %v508, %v500
  %v629 = vpack.c.b16 %v509, %v501
  %v630 = vpack.c.b16 %v510, %v502
  %v631 = vpack.c.b16 %v511, %v503
  %v632 = vpack.c.b16 %v512, %v504
  %v633 = vpack.c.b16 %v513, %v505
  %v634 = vpack.c.b16 %v514, %v506
  %v635 = vpack.c.b16 %v515, %v507
  %v636 = vpack.c.b16 %v524, %v516
  %v637 = vpack.c.b16 %v525, %v517
  %v638 = vpack.c.b16 %v526, %v518
  %v639 = vpack.c.b16 %v527, %v519
  %v640 = vpack.c.b16 %v528, %v520
  %v641 = vpack.c.b16 %v529, %v521
  %v642 = vpack.c.b16 %v530, %v522
  %v643 = vpack.c.b16 %v531, %v523
  %v644 = vpack.c.b16 %v540, %v532
  %v645 = vpack.c.b16 %v541, %v533
  %v646 = vpack.c.b16 %v542, %v534
  %v647 = vpack.c.b16 %v543, %v535
  %v648 = vpack.c.b16 %v544, %v536
  %v649 = vpack.c.b16 %v545, %v537
  %v650 = vpack.c.b16 %v546, %v538
  %v651 = vpack.c.b16 %v547, %v539
  %v652 = vpack.c.b16 %v556, %v548
  %v653 = vpack.c.b16 %v557, %v549
  %v654 = vpack.c.b16 %v558, %v550
  %v655 = vpack.c.b16 %v559, %v551
  %v656 = vpack.c.b16 %v560, %v552
  %v657 = vpack.c.b16 %v561, %v553
  %v658 = vpack.c.b16 %v562, %v554
  %v659 = vpack.c.b16 %v563, %v555
  %v660 = vpack.c.b16 %v572, %v564
  %v661 = vpack.c.b16 %v573, %v565
  %v662 = vpack.c.b16 %v574, %v566
  %v663 = vpack.c.b16 %v575, %v567
  %v664 = vpack.c.b16 %v576, %v568
  %v665 = vpack.c.b16 %v577, %v569
  %v666 = vpack.c.b16 %v578, %v570
  %v667 = vpack.c.b16 %v579, %v571
  %v668 = vpack.c.b16 %v588, %v580
  %v669 = vpack.c.b16 %v589, %v581
  %v670 = vpack.c.b16 %v590, %v582
  %v671 = vpack.c.b16 %v591, %v583
  %v672 = vpack.c.b16 %v592, %v584
  %v673 = vpack.c.b16 %v593, %v585
  %v674 = vpack.c.b16 %v594, %v586
  %v675 = vpack.c.b16 %v595, %v587
  %v676 = vpack.c.b16 %v604, %v596
  %v677 = vpack.c.b16 %v605, %v597
  %v678 = vpack.c.b16 %v606, %v598
  %v679 = vpack.c.b16 %v607, %v599
  %v680 = vpack.c.b16 %v608, %v600
  %v681 = vpack.c.b16 %v609, %v601
  %v682 = vpack.c.b16 %v610, %v602
  %v683 = vpack.c.b16 %v611, %v603
  %v684 = vpack.c.b16 %v620, %v612
  %v685 = vpack.c.b16 %v621, %v613
  %v686 = vpack.c.b16 %v622, %v614
  %v687 = vpack.c.b16 %v623, %v615
  %v688 = vpack.c.b16 %v624, %v616
  %v689 = vpack.c.b16 %v625, %v617
  %v690 = vpack.c.b16 %v626, %v618
  %v691 = vpack.c.b16 %v627, %v619
  %756 = vmatprep.subr.bf16.mxu0 %v629
  %757 = vmatpush1.bf16.msra.mxu0 %v628
  %758 = vmatprep.subr.bf16.mxu0 %v637
  %759 = vmatpush1.bf16.msra.mxu0 %v636
  %760 = vmatprep.subr.bf16.mxu0 %v645
  %761 = vmatpush1.bf16.msra.mxu0 %v644
  %762 = vmatprep.subr.bf16.mxu0 %v653
  %763 = vmatpush1.bf16.msra.mxu0 %v652
  %764 = vmatprep.subr.bf16.mxu0 %v661
  %765 = vmatpush1.bf16.msra.mxu0 %v660
  %766 = vmatprep.subr.bf16.mxu0 %v669
  %767 = vmatpush1.bf16.msra.mxu0 %v668
  %768 = vmatprep.subr.bf16.mxu0 %v677
  %769 = vmatpush1.bf16.msra.mxu0 %v676
  %770 = vmatprep.subr.bf16.mxu0 %v685
  %771 = vmatpush1.bf16.msra.mxu0 %v684
  %772 = vmatprep.subr.bf16.mxu0 0
  %773 = vmatpush1.bf16.msra.mxu0 0
  %774 = vmatprep.subr.bf16.mxu0 0
  %775 = vmatpush1.bf16.msra.mxu0 0
  %776 = vmatprep.subr.bf16.mxu0 0
  %777 = vmatpush1.bf16.msra.mxu0 0
  %778 = vmatprep.subr.bf16.mxu0 0
  %779 = vmatpush1.bf16.msra.mxu0 0
  %780 = vmatprep.subr.bf16.mxu0 0
  %781 = vmatpush1.bf16.msra.mxu0 0
  %782 = vmatprep.subr.bf16.mxu0 0
  %783 = vmatpush1.bf16.msra.mxu0 0
  %784 = vmatprep.subr.bf16.mxu0 0
  %785 = vmatpush1.bf16.msra.mxu0 0
  %786 = vmatprep.subr.bf16.mxu0 0
  %787 = vmatpush1.bf16.msra.mxu0 0
  %788 = vmatprep.mubr.bf16.mxu0 0
  %789 = vmatmul.mubr.bf16.gmra.mrb[0].mxu0 %v326
  %v790 = vpop.f32.mrb[0].mxu0
  %v791 = vadd.f32 %v399, %v790
  %v792 = vpop.f32.mrb[0].mxu0
  %v793 = vadd.f32 %v403, %v792
  %v794 = vpop.f32.mrb[0].mxu0
  %v795 = vadd.f32 %v399, %v794
  %v796 = vpop.f32.mrb[0].mxu0
  %v797 = vadd.f32 %v403, %v796
  %798 = vmatprep.mubr.bf16.mxu0 0
  %799 = vmatmul.mubr.bf16.gmra.mrb[0].mxu0 %v327
  %v800 = vpop.f32.mrb[0].mxu0
  %v801 = vadd.f32 %v399, %v800
  %v802 = vpop.f32.mrb[0].mxu0
  %v803 = vadd.f32 %v403, %v802
  %v804 = vpop.f32.mrb[0].mxu0
  %v805 = vadd.f32 %v399, %v804
  %v806 = vpop.f32.mrb[0].mxu0
  %v807 = vadd.f32 %v403, %v806
  %808 = vmatprep.mubr.bf16.mxu0 0
  %809 = vmatmul.mubr.bf16.gmra.mrb[0].mxu0 %v328
  %v810 = vpop.f32.mrb[0].mxu0
  %v811 = vadd.f32 %v399, %v810
  %v812 = vpop.f32.mrb[0].mxu0
  %v813 = vadd.f32 %v403, %v812
  %v814 = vpop.f32.mrb[0].mxu0
  %v815 = vadd.f32 %v399, %v814
  %v816 = vpop.f32.mrb[0].mxu0
  %v817 = vadd.f32 %v403, %v816
  %818 = vmatprep.mubr.bf16.mxu0 0
  %819 = vmatmul.mubr.bf16.gmra.mrb[0].mxu0 %v329
  %v820 = vpop.f32.mrb[0].mxu0
  %v821 = vadd.f32 %v399, %v820
  %v822 = vpop.f32.mrb[0].mxu0
  %v823 = vadd.f32 %v403, %v822
  %v824 = vpop.f32.mrb[0].mxu0
  %v825 = vadd.f32 %v399, %v824
  %v826 = vpop.f32.mrb[0].mxu0
  %v827 = vadd.f32 %v403, %v826
  %828 = vdwg.mxu0
  %829 = vmatprep.subr.bf16.mxu0 %v631
  %830 = vmatpush1.bf16.msra.mxu0 %v630
  %831 = vmatprep.subr.bf16.mxu0 %v639
  %832 = vmatpush1.bf16.msra.mxu0 %v638
  %833 = vmatprep.subr.bf16.mxu0 %v647
  %834 = vmatpush1.bf16.msra.mxu0 %v646
  %835 = vmatprep.subr.bf16.mxu0 %v655
  %836 = vmatpush1.bf16.msra.mxu0 %v654
  %837 = vmatprep.subr.bf16.mxu0 %v663
  %838 = vmatpush1.bf16.msra.mxu0 %v662
  %839 = vmatprep.subr.bf16.mxu0 %v671
  %840 = vmatpush1.bf16.msra.mxu0 %v670
  %841 = vmatprep.subr.bf16.mxu0 %v679
  %842 = vmatpush1.bf16.msra.mxu0 %v678
  %843 = vmatprep.subr.bf16.mxu0 %v687
  %844 = vmatpush1.bf16.msra.mxu0 %v686
  %845 = vmatprep.subr.bf16.mxu0 0
  %846 = vmatpush1.bf16.msra.mxu0 0
  %847 = vmatprep.subr.bf16.mxu0 0
  %848 = vmatpush1.bf16.msra.mxu0 0
  %849 = vmatprep.subr.bf16.mxu0 0
  %850 = vmatpush1.bf16.msra.mxu0 0
  %851 = vmatprep.subr.bf16.mxu0 0
  %852 = vmatpush1.bf16.msra.mxu0 0
  %853 = vmatprep.subr.bf16.mxu0 0
  %854 = vmatpush1.bf16.msra.mxu0 0
  %855 = vmatprep.subr.bf16.mxu0 0
  %856 = vmatpush1.bf16.msra.mxu0 0
  %857 = vmatprep.subr.bf16.mxu0 0
  %858 = vmatpush1.bf16.msra.mxu0 0
  %859 = vmatprep.subr.bf16.mxu0 0
  %860 = vmatpush1.bf16.msra.mxu0 0
  %861 = vmatprep.mubr.bf16.mxu0 0
  %862 = vmatmul.mubr.bf16.gmra.mrb[0].mxu0 %v326
  %v863 = vpop.f32.mrb[0].mxu0
  %v864 = vadd.f32 %v407, %v863
  %v865 = vpop.f32.mrb[0].mxu0
  %v866 = vadd.f32 %v411, %v865
  %v867 = vpop.f32.mrb[0].mxu0
  %v868 = vadd.f32 %v407, %v867
  %v869 = vpop.f32.mrb[0].mxu0
  %v870 = vadd.f32 %v411, %v869
  %871 = vmatprep.mubr.bf16.mxu0 0
  %872 = vmatmul.mubr.bf16.gmra.mrb[0].mxu0 %v327
  %v873 = vpop.f32.mrb[0].mxu0
  %v874 = vadd.f32 %v407, %v873
  %v875 = vpop.f32.mrb[0].mxu0
  %v876 = vadd.f32 %v411, %v875
  %v877 = vpop.f32.mrb[0].mxu0
  %v878 = vadd.f32 %v407, %v877
  %v879 = vpop.f32.mrb[0].mxu0
  %v880 = vadd.f32 %v411, %v879
  %881 = vmatprep.mubr.bf16.mxu0 0
  %882 = vmatmul.mubr.bf16.gmra.mrb[0].mxu0 %v328
  %v883 = vpop.f32.mrb[0].mxu0
  %v884 = vadd.f32 %v407, %v883
  %v885 = vpop.f32.mrb[0].mxu0
  %v886 = vadd.f32 %v411, %v885
  %v887 = vpop.f32.mrb[0].mxu0
  %v888 = vadd.f32 %v407, %v887
  %v889 = vpop.f32.mrb[0].mxu0
  %v890 = vadd.f32 %v411, %v889
  %891 = vmatprep.mubr.bf16.mxu0 0
  %892 = vmatmul.mubr.bf16.gmra.mrb[0].mxu0 %v329
  %v893 = vpop.f32.mrb[0].mxu0
  %v894 = vadd.f32 %v407, %v893
  %v895 = vpop.f32.mrb[0].mxu0
  %v896 = vadd.f32 %v411, %v895
  %v897 = vpop.f32.mrb[0].mxu0
  %v898 = vadd.f32 %v407, %v897
  %v899 = vpop.f32.mrb[0].mxu0
  %v900 = vadd.f32 %v411, %v899
  %901 = vdwg.mxu0
  %902 = vmatprep.subr.bf16.mxu0 %v633
  %903 = vmatpush1.bf16.msra.mxu0 %v632
  %904 = vmatprep.subr.bf16.mxu0 %v641
  %905 = vmatpush1.bf16.msra.mxu0 %v640
  %906 = vmatprep.subr.bf16.mxu0 %v649
  %907 = vmatpush1.bf16.msra.mxu0 %v648
  %908 = vmatprep.subr.bf16.mxu0 %v657
  %909 = vmatpush1.bf16.msra.mxu0 %v656
  %910 = vmatprep.subr.bf16.mxu0 %v665
  %911 = vmatpush1.bf16.msra.mxu0 %v664
  %912 = vmatprep.subr.bf16.mxu0 %v673
  %913 = vmatpush1.bf16.msra.mxu0 %v672
  %914 = vmatprep.subr.bf16.mxu0 %v681
  %915 = vmatpush1.bf16.msra.mxu0 %v680
  %916 = vmatprep.subr.bf16.mxu0 %v689
  %917 = vmatpush1.bf16.msra.mxu0 %v688
  %918 = vmatprep.subr.bf16.mxu0 0
  %919 = vmatpush1.bf16.msra.mxu0 0
  %920 = vmatprep.subr.bf16.mxu0 0
  %921 = vmatpush1.bf16.msra.mxu0 0
  %922 = vmatprep.subr.bf16.mxu0 0
  %923 = vmatpush1.bf16.msra.mxu0 0
  %924 = vmatprep.subr.bf16.mxu0 0
  %925 = vmatpush1.bf16.msra.mxu0 0
  %926 = vmatprep.subr.bf16.mxu0 0
  %927 = vmatpush1.bf16.msra.mxu0 0
  %928 = vmatprep.subr.bf16.mxu0 0
  %929 = vmatpush1.bf16.msra.mxu0 0
  %930 = vmatprep.subr.bf16.mxu0 0
  %931 = vmatpush1.bf16.msra.mxu0 0
  %932 = vmatprep.subr.bf16.mxu0 0
  %933 = vmatpush1.bf16.msra.mxu0 0
  %934 = vmatprep.mubr.bf16.mxu0 0
  %935 = vmatmul.mubr.bf16.gmra.mrb[0].mxu0 %v326
  %v936 = vpop.f32.mrb[0].mxu0
  %v937 = vadd.f32 %v415, %v936
  %v938 = vpop.f32.mrb[0].mxu0
  %v939 = vadd.f32 %v419, %v938
  %v940 = vpop.f32.mrb[0].mxu0
  %v941 = vadd.f32 %v415, %v940
  %v942 = vpop.f32.mrb[0].mxu0
  %v943 = vadd.f32 %v419, %v942
  %944 = vmatprep.mubr.bf16.mxu0 0
  %945 = vmatmul.mubr.bf16.gmra.mrb[0].mxu0 %v327
  %v946 = vpop.f32.mrb[0].mxu0
  %v947 = vadd.f32 %v415, %v946
  %v948 = vpop.f32.mrb[0].mxu0
  %v949 = vadd.f32 %v419, %v948
  %v950 = vpop.f32.mrb[0].mxu0
  %v951 = vadd.f32 %v415, %v950
  %v952 = vpop.f32.mrb[0].mxu0
  %v953 = vadd.f32 %v419, %v952
  %954 = vmatprep.mubr.bf16.mxu0 0
  %955 = vmatmul.mubr.bf16.gmra.mrb[0].mxu0 %v328
  %v956 = vpop.f32.mrb[0].mxu0
  %v957 = vadd.f32 %v415, %v956
  %v958 = vpop.f32.mrb[0].mxu0
  %v959 = vadd.f32 %v419, %v958
  %v960 = vpop.f32.mrb[0].mxu0
  %v961 = vadd.f32 %v415, %v960
  %v962 = vpop.f32.mrb[0].mxu0
  %v963 = vadd.f32 %v419, %v962
  %964 = vmatprep.mubr.bf16.mxu0 0
  %965 = vmatmul.mubr.bf16.gmra.mrb[0].mxu0 %v329
  %v966 = vpop.f32.mrb[0].mxu0
  %v967 = vadd.f32 %v415, %v966
  %v968 = vpop.f32.mrb[0].mxu0
  %v969 = vadd.f32 %v419, %v968
  %v970 = vpop.f32.mrb[0].mxu0
  %v971 = vadd.f32 %v415, %v970
  %v972 = vpop.f32.mrb[0].mxu0
  %v973 = vadd.f32 %v419, %v972
  %974 = vdwg.mxu0
  %975 = vmatprep.subr.bf16.mxu0 %v635
  %976 = vmatpush1.bf16.msra.mxu0 %v634
  %977 = vmatprep.subr.bf16.mxu0 %v643
  %978 = vmatpush1.bf16.msra.mxu0 %v642
  %979 = vmatprep.subr.bf16.mxu0 %v651
  %980 = vmatpush1.bf16.msra.mxu0 %v650
  %981 = vmatprep.subr.bf16.mxu0 %v659
  %982 = vmatpush1.bf16.msra.mxu0 %v658
  %983 = vmatprep.subr.bf16.mxu0 %v667
  %984 = vmatpush1.bf16.msra.mxu0 %v666
  %985 = vmatprep.subr.bf16.mxu0 %v675
  %986 = vmatpush1.bf16.msra.mxu0 %v674
  %987 = vmatprep.subr.bf16.mxu0 %v683
  %988 = vmatpush1.bf16.msra.mxu0 %v682
  %989 = vmatprep.subr.bf16.mxu0 %v691
  %990 = vmatpush1.bf16.msra.mxu0 %v690
  %991 = vmatprep.subr.bf16.mxu0 0
  %992 = vmatpush1.bf16.msra.mxu0 0
  %993 = vmatprep.subr.bf16.mxu0 0
  %994 = vmatpush1.bf16.msra.mxu0 0
  %995 = vmatprep.subr.bf16.mxu0 0
  %996 = vmatpush1.bf16.msra.mxu0 0
  %997 = vmatprep.subr.bf16.mxu0 0
  %998 = vmatpush1.bf16.msra.mxu0 0
  %999 = vmatprep.subr.bf16.mxu0 0
  %1000 = vmatpush1.bf16.msra.mxu0 0
  %1001 = vmatprep.subr.bf16.mxu0 0
  %1002 = vmatpush1.bf16.msra.mxu0 0
  %1003 = vmatprep.subr.bf16.mxu0 0
  %1004 = vmatpush1.bf16.msra.mxu0 0
  %1005 = vmatprep.subr.bf16.mxu0 0
  %1006 = vmatpush1.bf16.msra.mxu0 0
  %1007 = vmatprep.mubr.bf16.mxu0 0
  %1008 = vmatmul.mubr.bf16.gmra.mrb[0].mxu0 %v326
  %v1009 = vpop.f32.mrb[0].mxu0
  %v1010 = vadd.f32 %v423, %v1009
  %v1011 = vpop.f32.mrb[0].mxu0
  %v1012 = vadd.f32 %v427, %v1011
  %v1013 = vpop.f32.mrb[0].mxu0
  %v1014 = vadd.f32 %v423, %v1013
  %v1015 = vpop.f32.mrb[0].mxu0
  %v1016 = vadd.f32 %v427, %v1015
  %1017 = vmatprep.mubr.bf16.mxu0 0
  %1018 = vmatmul.mubr.bf16.gmra.mrb[0].mxu0 %v327
  %v1019 = vpop.f32.mrb[0].mxu0
  %v1020 = vadd.f32 %v423, %v1019
  %v1021 = vpop.f32.mrb[0].mxu0
  %v1022 = vadd.f32 %v427, %v1021
  %v1023 = vpop.f32.mrb[0].mxu0
  %v1024 = vadd.f32 %v423, %v1023
  %v1025 = vpop.f32.mrb[0].mxu0
  %v1026 = vadd.f32 %v427, %v1025
  %1027 = vmatprep.mubr.bf16.mxu0 0
  %1028 = vmatmul.mubr.bf16.gmra.mrb[0].mxu0 %v328
  %v1029 = vpop.f32.mrb[0].mxu0
  %v1030 = vadd.f32 %v423, %v1029
  %v1031 = vpop.f32.mrb[0].mxu0
  %v1032 = vadd.f32 %v427, %v1031
  %v1033 = vpop.f32.mrb[0].mxu0
  %v1034 = vadd.f32 %v423, %v1033
  %v1035 = vpop.f32.mrb[0].mxu0
  %v1036 = vadd.f32 %v427, %v1035
  %1037 = vmatprep.mubr.bf16.mxu0 0
  %1038 = vmatmul.mubr.bf16.gmra.mrb[0].mxu0 %v329
  %v1039 = vpop.f32.mrb[0].mxu0
  %v1040 = vadd.f32 %v423, %v1039
  %v1041 = vpop.f32.mrb[0].mxu0
  %v1042 = vadd.f32 %v427, %v1041
  %v1043 = vpop.f32.mrb[0].mxu0
  %v1044 = vadd.f32 %v423, %v1043
  %v1045 = vpop.f32.mrb[0].mxu0
  %v1046 = vadd.f32 %v427, %v1045
  %1047 = vdwg.mxu0
  %1048 = vst [vmem:[#allocation2] sm:$0xff] %v791
  %1049 = vst [vmem:[#allocation2 + $0x8] sm:$0xff] %v793
  %1050 = vst [vmem:[#allocation2 + $0x10] sm:$0xff] %v864
  %1051 = vst [vmem:[#allocation2 + $0x18] sm:$0xff] %v866
  %1052 = vst [vmem:[#allocation2 + $0x20] sm:$0xff] %v937
  %1053 = vst [vmem:[#allocation2 + $0x28] sm:$0xff] %v939
  %1054 = vst [vmem:[#allocation2 + $0x30] sm:$0xff] %v1010
  %1055 = vst [vmem:[#allocation2 + $0x38] sm:$0xff] %v1012
  %1056 = vst [vmem:[#allocation2 + $0x40] sm:$0xff] %v795
  %1057 = vst [vmem:[#allocation2 + $0x48] sm:$0xff] %v797
  %1058 = vst [vmem:[#allocation2 + $0x50] sm:$0xff] %v868
  %1059 = vst [vmem:[#allocation2 + $0x58] sm:$0xff] %v870
  %1060 = vst [vmem:[#allocation2 + $0x60] sm:$0xff] %v941
  %1061 = vst [vmem:[#allocation2 + $0x68] sm:$0xff] %v943
  %1062 = vst [vmem:[#allocation2 + $0x70] sm:$0xff] %v1014
  %1063 = vst [vmem:[#allocation2 + $0x78] sm:$0xff] %v1016
  %1064 = vst [vmem:[#allocation2 + $0x80] sm:$0xff] %v801
  %1065 = vst [vmem:[#allocation2 + $0x88] sm:$0xff] %v803
  %1066 = vst [vmem:[#allocation2 + $0x90] sm:$0xff] %v874
  %1067 = vst [vmem:[#allocation2 + $0x98] sm:$0xff] %v876
  %1068 = vst [vmem:[#allocation2 + $0xa0] sm:$0xff] %v947
  %1069 = vst [vmem:[#allocation2 + $0xa8] sm:$0xff] %v949
  %1070 = vst [vmem:[#allocation2 + $0xb0] sm:$0xff] %v1020
  %1071 = vst [vmem:[#allocation2 + $0xb8] sm:$0xff] %v1022
  %1072 = vst [vmem:[#allocation2 + $0xc0] sm:$0xff] %v805
  %1073 = vst [vmem:[#allocation2 + $0xc8] sm:$0xff] %v807
  %1074 = vst [vmem:[#allocation2 + $0xd0] sm:$0xff] %v878
  %1075 = vst [vmem:[#allocation2 + $0xd8] sm:$0xff] %v880
  %1076 = vst [vmem:[#allocation2 + $0xe0] sm:$0xff] %v951
  %1077 = vst [vmem:[#allocation2 + $0xe8] sm:$0xff] %v953
  %1078 = vst [vmem:[#allocation2 + $0xf0] sm:$0xff] %v1024
  %1079 = vst [vmem:[#allocation2 + $0xf8] sm:$0xff] %v1026
  %1080 = vst [vmem:[#allocation2 + $0x100] sm:$0xff] %v811
  %1081 = vst [vmem:[#allocation2 + $0x108] sm:$0xff] %v813
  %1082 = vst [vmem:[#allocation2 + $0x110] sm:$0xff] %v884
  %1083 = vst [vmem:[#allocation2 + $0x118] sm:$0xff] %v886
  %1084 = vst [vmem:[#allocation2 + $0x120] sm:$0xff] %v957
  %1085 = vst [vmem:[#allocation2 + $0x128] sm:$0xff] %v959
  %1086 = vst [vmem:[#allocation2 + $0x130] sm:$0xff] %v1030
  %1087 = vst [vmem:[#allocation2 + $0x138] sm:$0xff] %v1032
  %1088 = vst [vmem:[#allocation2 + $0x140] sm:$0xff] %v815
  %1089 = vst [vmem:[#allocation2 + $0x148] sm:$0xff] %v817
  %1090 = vst [vmem:[#allocation2 + $0x150] sm:$0xff] %v888
  %1091 = vst [vmem:[#allocation2 + $0x158] sm:$0xff] %v890
  %1092 = vst [vmem:[#allocation2 + $0x160] sm:$0xff] %v961
  %1093 = vst [vmem:[#allocation2 + $0x168] sm:$0xff] %v963
  %1094 = vst [vmem:[#allocation2 + $0x170] sm:$0xff] %v1034
  %1095 = vst [vmem:[#allocation2 + $0x178] sm:$0xff] %v1036
  %1096 = vst [vmem:[#allocation2 + $0x180] sm:$0xff] %v821
  %1097 = vst [vmem:[#allocation2 + $0x188] sm:$0xff] %v823
  %1098 = vst [vmem:[#allocation2 + $0x190] sm:$0xff] %v894
  %1099 = vst [vmem:[#allocation2 + $0x198] sm:$0xff] %v896
  %1100 = vst [vmem:[#allocation2 + $0x1a0] sm:$0xff] %v967
  %1101 = vst [vmem:[#allocation2 + $0x1a8] sm:$0xff] %v969
  %1102 = vst [vmem:[#allocation2 + $0x1b0] sm:$0xff] %v1040
  %1103 = vst [vmem:[#allocation2 + $0x1b8] sm:$0xff] %v1042
  %1104 = vst [vmem:[#allocation2 + $0x1c0] sm:$0xff] %v825
  %1105 = vst [vmem:[#allocation2 + $0x1c8] sm:$0xff] %v827
  %1106 = vst [vmem:[#allocation2 + $0x1d0] sm:$0xff] %v898
  %1107 = vst [vmem:[#allocation2 + $0x1d8] sm:$0xff] %v900
  %1108 = vst [vmem:[#allocation2 + $0x1e0] sm:$0xff] %v971
  %1109 = vst [vmem:[#allocation2 + $0x1e8] sm:$0xff] %v973
  %1110 = vst [vmem:[#allocation2 + $0x1f0] sm:$0xff] %v1044
  %1111 = vst [vmem:[#allocation2 + $0x1f8] sm:$0xff] %v1046
  %v1112 = vld [vmem:[#allocation2] sm:$0xff]
  %v1113 = vld [vmem:[#allocation2 + $0x8] sm:$0xff]
  %v1114 = vld [vmem:[#allocation2 + $0x10] sm:$0xff]
  %v1115 = vld [vmem:[#allocation2 + $0x18] sm:$0xff]
  %v1116 = vld [vmem:[#allocation2 + $0x20] sm:$0xff]
  %v1117 = vld [vmem:[#allocation2 + $0x28] sm:$0xff]
  %v1118 = vld [vmem:[#allocation2 + $0x30] sm:$0xff]
  %v1119 = vld [vmem:[#allocation2 + $0x38] sm:$0xff]
  %v1120 = vld [vmem:[#allocation2 + $0x1c0] sm:$0xff]
  %v1121 = vld [vmem:[#allocation2 + $0x1c8] sm:$0xff]
  %v1122 = vld [vmem:[#allocation2 + $0x1d0] sm:$0xff]
  %v1123 = vld [vmem:[#allocation2 + $0x1d8] sm:$0xff]
  %v1124 = vld [vmem:[#allocation2 + $0x1e0] sm:$0xff]
  %v1125 = vld [vmem:[#allocation2 + $0x1e8] sm:$0xff]
  %v1126 = vld [vmem:[#allocation2 + $0x1f0] sm:$0xff]
  %v1127 = vld [vmem:[#allocation2 + $0x1f8] sm:$0xff]
  %v1128 = vsel %vm318, %v1112, %v1120
  %v1129 = vsel %vm319, %v1113, %v1121
  %v1130 = vsel %vm320, %v1114, %v1122
  %v1131 = vsel %vm321, %v1115, %v1123
  %v1132 = vsel %vm322, %v1116, %v1124
  %v1133 = vsel %vm323, %v1117, %v1125
  %v1134 = vsel %vm324, %v1118, %v1126
  %v1135 = vsel %vm325, %v1119, %v1127
  %v1136 = vld [vmem:[%s4] sm:$0xff]
  %v1137 = vld [vmem:[%s4 + $0x8] sm:$0xff]
  %v1138 = vld [vmem:[%s4 + $0x10] sm:$0xff]
  %v1139 = vld [vmem:[%s4 + $0x18] sm:$0xff]
  %v1140 = vld [vmem:[%s4 + $0x20] sm:$0xff]
  %v1141 = vld [vmem:[%s4 + $0x28] sm:$0xff]
  %v1142 = vld [vmem:[%s4 + $0x30] sm:$0xff]
  %v1143 = vld [vmem:[%s4 + $0x38] sm:$0xff]
  %v1144 = vld [vmem:[%s4 + $0x40] sm:$0xff]
  %v1145 = vld [vmem:[%s4 + $0x48] sm:$0xff]
  %v1146 = vld [vmem:[%s4 + $0x50] sm:$0xff]
  %v1147 = vld [vmem:[%s4 + $0x58] sm:$0xff]
  %v1148 = vld [vmem:[%s4 + $0x60] sm:$0xff]
  %v1149 = vld [vmem:[%s4 + $0x68] sm:$0xff]
  %v1150 = vld [vmem:[%s4 + $0x70] sm:$0xff]
  %v1151 = vld [vmem:[%s4 + $0x78] sm:$0xff]
  %v1152 = vld [vmem:[%s4 + $0x80] sm:$0xff]
  %v1153 = vld [vmem:[%s4 + $0x88] sm:$0xff]
  %v1154 = vld [vmem:[%s4 + $0x90] sm:$0xff]
  %v1155 = vld [vmem:[%s4 + $0x98] sm:$0xff]
  %v1156 = vld [vmem:[%s4 + $0xa0] sm:$0xff]
  %v1157 = vld [vmem:[%s4 + $0xa8] sm:$0xff]
  %v1158 = vld [vmem:[%s4 + $0xb0] sm:$0xff]
  %v1159 = vld [vmem:[%s4 + $0xb8] sm:$0xff]
  %v1160 = vld [vmem:[%s4 + $0xc0] sm:$0xff]
  %v1161 = vld [vmem:[%s4 + $0xc8] sm:$0xff]
  %v1162 = vld [vmem:[%s4 + $0xd0] sm:$0xff]
  %v1163 = vld [vmem:[%s4 + $0xd8] sm:$0xff]
  %v1164 = vld [vmem:[%s4 + $0xe0] sm:$0xff]
  %v1165 = vld [vmem:[%s4 + $0xe8] sm:$0xff]
  %v1166 = vld [vmem:[%s4 + $0xf0] sm:$0xff]
  %v1167 = vld [vmem:[%s4 + $0xf8] sm:$0xff]
  %v1168 = vld [vmem:[%s4 + $0x100] sm:$0xff]
  %v1169 = vld [vmem:[%s4 + $0x108] sm:$0xff]
  %v1170 = vld [vmem:[%s4 + $0x110] sm:$0xff]
  %v1171 = vld [vmem:[%s4 + $0x118] sm:$0xff]
  %v1172 = vld [vmem:[%s4 + $0x120] sm:$0xff]
  %v1173 = vld [vmem:[%s4 + $0x128] sm:$0xff]
  %v1174 = vld [vmem:[%s4 + $0x130] sm:$0xff]
  %v1175 = vld [vmem:[%s4 + $0x138] sm:$0xff]
  %v1176 = vld [vmem:[%s4 + $0x140] sm:$0xff]
  %v1177 = vld [vmem:[%s4 + $0x148] sm:$0xff]
  %v1178 = vld [vmem:[%s4 + $0x150] sm:$0xff]
  %v1179 = vld [vmem:[%s4 + $0x158] sm:$0xff]
  %v1180 = vld [vmem:[%s4 + $0x160] sm:$0xff]
  %v1181 = vld [vmem:[%s4 + $0x168] sm:$0xff]
  %v1182 = vld [vmem:[%s4 + $0x170] sm:$0xff]
  %v1183 = vld [vmem:[%s4 + $0x178] sm:$0xff]
  %v1184 = vld [vmem:[%s4 + $0x180] sm:$0xff]
  %v1185 = vld [vmem:[%s4 + $0x188] sm:$0xff]
  %v1186 = vld [vmem:[%s4 + $0x190] sm:$0xff]
  %v1187 = vld [vmem:[%s4 + $0x198] sm:$0xff]
  %v1188 = vld [vmem:[%s4 + $0x1a0] sm:$0xff]
  %v1189 = vld [vmem:[%s4 + $0x1a8] sm:$0xff]
  %v1190 = vld [vmem:[%s4 + $0x1b0] sm:$0xff]
  %v1191 = vld [vmem:[%s4 + $0x1b8] sm:$0xff]
  %v1192 = vld [vmem:[%s4 + $0x1c0] sm:$0xff]
  %v1193 = vld [vmem:[%s4 + $0x1c8] sm:$0xff]
  %v1194 = vld [vmem:[%s4 + $0x1d0] sm:$0xff]
  %v1195 = vld [vmem:[%s4 + $0x1d8] sm:$0xff]
  %v1196 = vld [vmem:[%s4 + $0x1e0] sm:$0xff]
  %v1197 = vld [vmem:[%s4 + $0x1e8] sm:$0xff]
  %v1198 = vld [vmem:[%s4 + $0x1f0] sm:$0xff]
  %v1199 = vld [vmem:[%s4 + $0x1f8] sm:$0xff]
  %v1200 = vld [vmem:[%s4 + $0x200] sm:$0xff]
  %v1201 = vld [vmem:[%s4 + $0x208] sm:$0xff]
  %v1202 = vld [vmem:[%s4 + $0x210] sm:$0xff]
  %v1203 = vld [vmem:[%s4 + $0x218] sm:$0xff]
  %v1204 = vld [vmem:[%s4 + $0x220] sm:$0xff]
  %v1205 = vld [vmem:[%s4 + $0x228] sm:$0xff]
  %v1206 = vld [vmem:[%s4 + $0x230] sm:$0xff]
  %v1207 = vld [vmem:[%s4 + $0x238] sm:$0xff]
  %v1208 = vld [vmem:[%s4 + $0x240] sm:$0xff]
  %v1209 = vld [vmem:[%s4 + $0x248] sm:$0xff]
  %v1210 = vld [vmem:[%s4 + $0x250] sm:$0xff]
  %v1211 = vld [vmem:[%s4 + $0x258] sm:$0xff]
  %v1212 = vld [vmem:[%s4 + $0x260] sm:$0xff]
  %v1213 = vld [vmem:[%s4 + $0x268] sm:$0xff]
  %v1214 = vld [vmem:[%s4 + $0x270] sm:$0xff]
  %v1215 = vld [vmem:[%s4 + $0x278] sm:$0xff]
  %v1216 = vld [vmem:[%s4 + $0x280] sm:$0xff]
  %v1217 = vld [vmem:[%s4 + $0x288] sm:$0xff]
  %v1218 = vld [vmem:[%s4 + $0x290] sm:$0xff]
  %v1219 = vld [vmem:[%s4 + $0x298] sm:$0xff]
  %v1220 = vld [vmem:[%s4 + $0x2a0] sm:$0xff]
  %v1221 = vld [vmem:[%s4 + $0x2a8] sm:$0xff]
  %v1222 = vld [vmem:[%s4 + $0x2b0] sm:$0xff]
  %v1223 = vld [vmem:[%s4 + $0x2b8] sm:$0xff]
  %v1224 = vld [vmem:[%s4 + $0x2c0] sm:$0xff]
  %v1225 = vld [vmem:[%s4 + $0x2c8] sm:$0xff]
  %v1226 = vld [vmem:[%s4 + $0x2d0] sm:$0xff]
  %v1227 = vld [vmem:[%s4 + $0x2d8] sm:$0xff]
  %v1228 = vld [vmem:[%s4 + $0x2e0] sm:$0xff]
  %v1229 = vld [vmem:[%s4 + $0x2e8] sm:$0xff]
  %v1230 = vld [vmem:[%s4 + $0x2f0] sm:$0xff]
  %v1231 = vld [vmem:[%s4 + $0x2f8] sm:$0xff]
  %v1232 = vld [vmem:[%s4 + $0x300] sm:$0xff]
  %v1233 = vld [vmem:[%s4 + $0x308] sm:$0xff]
  %v1234 = vld [vmem:[%s4 + $0x310] sm:$0xff]
  %v1235 = vld [vmem:[%s4 + $0x318] sm:$0xff]
  %v1236 = vld [vmem:[%s4 + $0x320] sm:$0xff]
  %v1237 = vld [vmem:[%s4 + $0x328] sm:$0xff]
  %v1238 = vld [vmem:[%s4 + $0x330] sm:$0xff]
  %v1239 = vld [vmem:[%s4 + $0x338] sm:$0xff]
  %v1240 = vld [vmem:[%s4 + $0x340] sm:$0xff]
  %v1241 = vld [vmem:[%s4 + $0x348] sm:$0xff]
  %v1242 = vld [vmem:[%s4 + $0x350] sm:$0xff]
  %v1243 = vld [vmem:[%s4 + $0x358] sm:$0xff]
  %v1244 = vld [vmem:[%s4 + $0x360] sm:$0xff]
  %v1245 = vld [vmem:[%s4 + $0x368] sm:$0xff]
  %v1246 = vld [vmem:[%s4 + $0x370] sm:$0xff]
  %v1247 = vld [vmem:[%s4 + $0x378] sm:$0xff]
  %v1248 = vld [vmem:[%s4 + $0x380] sm:$0xff]
  %v1249 = vld [vmem:[%s4 + $0x388] sm:$0xff]
  %v1250 = vld [vmem:[%s4 + $0x390] sm:$0xff]
  %v1251 = vld [vmem:[%s4 + $0x398] sm:$0xff]
  %v1252 = vld [vmem:[%s4 + $0x3a0] sm:$0xff]
  %v1253 = vld [vmem:[%s4 + $0x3a8] sm:$0xff]
  %v1254 = vld [vmem:[%s4 + $0x3b0] sm:$0xff]
  %v1255 = vld [vmem:[%s4 + $0x3b8] sm:$0xff]
  %v1256 = vld [vmem:[%s4 + $0x3c0] sm:$0xff]
  %v1257 = vld [vmem:[%s4 + $0x3c8] sm:$0xff]
  %v1258 = vld [vmem:[%s4 + $0x3d0] sm:$0xff]
  %v1259 = vld [vmem:[%s4 + $0x3d8] sm:$0xff]
  %v1260 = vld [vmem:[%s4 + $0x3e0] sm:$0xff]
  %v1261 = vld [vmem:[%s4 + $0x3e8] sm:$0xff]
  %v1262 = vld [vmem:[%s4 + $0x3f0] sm:$0xff]
  %v1263 = vld [vmem:[%s4 + $0x3f8] sm:$0xff]
  %v1392 = vunpack.c.l.b16 %v1136
  %v1393 = vunpack.c.h.b16 %v1136
  %v1394 = vunpack.c.l.b16 %v1137
  %v1395 = vunpack.c.h.b16 %v1137
  %v1396 = vunpack.c.l.b16 %v1138
  %v1397 = vunpack.c.h.b16 %v1138
  %v1398 = vunpack.c.l.b16 %v1139
  %v1399 = vunpack.c.h.b16 %v1139
  %v1400 = vunpack.c.l.b16 %v1140
  %v1401 = vunpack.c.h.b16 %v1140
  %v1402 = vunpack.c.l.b16 %v1141
  %v1403 = vunpack.c.h.b16 %v1141
  %v1404 = vunpack.c.l.b16 %v1142
  %v1405 = vunpack.c.h.b16 %v1142
  %v1406 = vunpack.c.l.b16 %v1143
  %v1407 = vunpack.c.h.b16 %v1143
  %v1408 = vunpack.c.l.b16 %v1144
  %v1409 = vunpack.c.h.b16 %v1144
  %v1410 = vunpack.c.l.b16 %v1145
  %v1411 = vunpack.c.h.b16 %v1145
  %v1412 = vunpack.c.l.b16 %v1146
  %v1413 = vunpack.c.h.b16 %v1146
  %v1414 = vunpack.c.l.b16 %v1147
  %v1415 = vunpack.c.h.b16 %v1147
  %v1416 = vunpack.c.l.b16 %v1148
  %v1417 = vunpack.c.h.b16 %v1148
  %v1418 = vunpack.c.l.b16 %v1149
  %v1419 = vunpack.c.h.b16 %v1149
  %v1420 = vunpack.c.l.b16 %v1150
  %v1421 = vunpack.c.h.b16 %v1150
  %v1422 = vunpack.c.l.b16 %v1151
  %v1423 = vunpack.c.h.b16 %v1151
  %v1424 = vunpack.c.l.b16 %v1152
  %v1425 = vunpack.c.h.b16 %v1152
  %v1426 = vunpack.c.l.b16 %v1153
  %v1427 = vunpack.c.h.b16 %v1153
  %v1428 = vunpack.c.l.b16 %v1154
  %v1429 = vunpack.c.h.b16 %v1154
  %v1430 = vunpack.c.l.b16 %v1155
  %v1431 = vunpack.c.h.b16 %v1155
  %v1432 = vunpack.c.l.b16 %v1156
  %v1433 = vunpack.c.h.b16 %v1156
  %v1434 = vunpack.c.l.b16 %v1157
  %v1435 = vunpack.c.h.b16 %v1157
  %v1436 = vunpack.c.l.b16 %v1158
  %v1437 = vunpack.c.h.b16 %v1158
  %v1438 = vunpack.c.l.b16 %v1159
  %v1439 = vunpack.c.h.b16 %v1159
  %v1440 = vunpack.c.l.b16 %v1160
  %v1441 = vunpack.c.h.b16 %v1160
  %v1442 = vunpack.c.l.b16 %v1161
  %v1443 = vunpack.c.h.b16 %v1161
  %v1444 = vunpack.c.l.b16 %v1162
  %v1445 = vunpack.c.h.b16 %v1162
  %v1446 = vunpack.c.l.b16 %v1163
  %v1447 = vunpack.c.h.b16 %v1163
  %v1448 = vunpack.c.l.b16 %v1164
  %v1449 = vunpack.c.h.b16 %v1164
  %v1450 = vunpack.c.l.b16 %v1165
  %v1451 = vunpack.c.h.b16 %v1165
  %v1452 = vunpack.c.l.b16 %v1166
  %v1453 = vunpack.c.h.b16 %v1166
  %v1454 = vunpack.c.l.b16 %v1167
  %v1455 = vunpack.c.h.b16 %v1167
  %v1456 = vunpack.c.l.b16 %v1168
  %v1457 = vunpack.c.h.b16 %v1168
  %v1458 = vunpack.c.l.b16 %v1169
  %v1459 = vunpack.c.h.b16 %v1169
  %v1460 = vunpack.c.l.b16 %v1170
  %v1461 = vunpack.c.h.b16 %v1170
  %v1462 = vunpack.c.l.b16 %v1171
  %v1463 = vunpack.c.h.b16 %v1171
  %v1464 = vunpack.c.l.b16 %v1172
  %v1465 = vunpack.c.h.b16 %v1172
  %v1466 = vunpack.c.l.b16 %v1173
  %v1467 = vunpack.c.h.b16 %v1173
  %v1468 = vunpack.c.l.b16 %v1174
  %v1469 = vunpack.c.h.b16 %v1174
  %v1470 = vunpack.c.l.b16 %v1175
  %v1471 = vunpack.c.h.b16 %v1175
  %v1472 = vunpack.c.l.b16 %v1176
  %v1473 = vunpack.c.h.b16 %v1176
  %v1474 = vunpack.c.l.b16 %v1177
  %v1475 = vunpack.c.h.b16 %v1177
  %v1476 = vunpack.c.l.b16 %v1178
  %v1477 = vunpack.c.h.b16 %v1178
  %v1478 = vunpack.c.l.b16 %v1179
  %v1479 = vunpack.c.h.b16 %v1179
  %v1480 = vunpack.c.l.b16 %v1180
  %v1481 = vunpack.c.h.b16 %v1180
  %v1482 = vunpack.c.l.b16 %v1181
  %v1483 = vunpack.c.h.b16 %v1181
  %v1484 = vunpack.c.l.b16 %v1182
  %v1485 = vunpack.c.h.b16 %v1182
  %v1486 = vunpack.c.l.b16 %v1183
  %v1487 = vunpack.c.h.b16 %v1183
  %v1488 = vunpack.c.l.b16 %v1184
  %v1489 = vunpack.c.h.b16 %v1184
  %v1490 = vunpack.c.l.b16 %v1185
  %v1491 = vunpack.c.h.b16 %v1185
  %v1492 = vunpack.c.l.b16 %v1186
  %v1493 = vunpack.c.h.b16 %v1186
  %v1494 = vunpack.c.l.b16 %v1187
  %v1495 = vunpack.c.h.b16 %v1187
  %v1496 = vunpack.c.l.b16 %v1188
  %v1497 = vunpack.c.h.b16 %v1188
  %v1498 = vunpack.c.l.b16 %v1189
  %v1499 = vunpack.c.h.b16 %v1189
  %v1500 = vunpack.c.l.b16 %v1190
  %v1501 = vunpack.c.h.b16 %v1190
  %v1502 = vunpack.c.l.b16 %v1191
  %v1503 = vunpack.c.h.b16 %v1191
  %v1504 = vunpack.c.l.b16 %v1192
  %v1505 = vunpack.c.h.b16 %v1192
  %v1506 = vunpack.c.l.b16 %v1193
  %v1507 = vunpack.c.h.b16 %v1193
  %v1508 = vunpack.c.l.b16 %v1194
  %v1509 = vunpack.c.h.b16 %v1194
  %v1510 = vunpack.c.l.b16 %v1195
  %v1511 = vunpack.c.h.b16 %v1195
  %v1512 = vunpack.c.l.b16 %v1196
  %v1513 = vunpack.c.h.b16 %v1196
  %v1514 = vunpack.c.l.b16 %v1197
  %v1515 = vunpack.c.h.b16 %v1197
  %v1516 = vunpack.c.l.b16 %v1198
  %v1517 = vunpack.c.h.b16 %v1198
  %v1518 = vunpack.c.l.b16 %v1199
  %v1519 = vunpack.c.h.b16 %v1199
  %v1520 = vunpack.c.l.b16 %v1200
  %v1521 = vunpack.c.h.b16 %v1200
  %v1522 = vunpack.c.l.b16 %v1201
  %v1523 = vunpack.c.h.b16 %v1201
  %v1524 = vunpack.c.l.b16 %v1202
  %v1525 = vunpack.c.h.b16 %v1202
  %v1526 = vunpack.c.l.b16 %v1203
  %v1527 = vunpack.c.h.b16 %v1203
  %v1528 = vunpack.c.l.b16 %v1204
  %v1529 = vunpack.c.h.b16 %v1204
  %v1530 = vunpack.c.l.b16 %v1205
  %v1531 = vunpack.c.h.b16 %v1205
  %v1532 = vunpack.c.l.b16 %v1206
  %v1533 = vunpack.c.h.b16 %v1206
  %v1534 = vunpack.c.l.b16 %v1207
  %v1535 = vunpack.c.h.b16 %v1207
  %v1536 = vunpack.c.l.b16 %v1208
  %v1537 = vunpack.c.h.b16 %v1208
  %v1538 = vunpack.c.l.b16 %v1209
  %v1539 = vunpack.c.h.b16 %v1209
  %v1540 = vunpack.c.l.b16 %v1210
  %v1541 = vunpack.c.h.b16 %v1210
  %v1542 = vunpack.c.l.b16 %v1211
  %v1543 = vunpack.c.h.b16 %v1211
  %v1544 = vunpack.c.l.b16 %v1212
  %v1545 = vunpack.c.h.b16 %v1212
  %v1546 = vunpack.c.l.b16 %v1213
  %v1547 = vunpack.c.h.b16 %v1213
  %v1548 = vunpack.c.l.b16 %v1214
  %v1549 = vunpack.c.h.b16 %v1214
  %v1550 = vunpack.c.l.b16 %v1215
  %v1551 = vunpack.c.h.b16 %v1215
  %v1552 = vunpack.c.l.b16 %v1216
  %v1553 = vunpack.c.h.b16 %v1216
  %v1554 = vunpack.c.l.b16 %v1217
  %v1555 = vunpack.c.h.b16 %v1217
  %v1556 = vunpack.c.l.b16 %v1218
  %v1557 = vunpack.c.h.b16 %v1218
  %v1558 = vunpack.c.l.b16 %v1219
  %v1559 = vunpack.c.h.b16 %v1219
  %v1560 = vunpack.c.l.b16 %v1220
  %v1561 = vunpack.c.h.b16 %v1220
  %v1562 = vunpack.c.l.b16 %v1221
  %v1563 = vunpack.c.h.b16 %v1221
  %v1564 = vunpack.c.l.b16 %v1222
  %v1565 = vunpack.c.h.b16 %v1222
  %v1566 = vunpack.c.l.b16 %v1223
  %v1567 = vunpack.c.h.b16 %v1223
  %v1568 = vunpack.c.l.b16 %v1224
  %v1569 = vunpack.c.h.b16 %v1224
  %v1570 = vunpack.c.l.b16 %v1225
  %v1571 = vunpack.c.h.b16 %v1225
  %v1572 = vunpack.c.l.b16 %v1226
  %v1573 = vunpack.c.h.b16 %v1226
  %v1574 = vunpack.c.l.b16 %v1227
  %v1575 = vunpack.c.h.b16 %v1227
  %v1576 = vunpack.c.l.b16 %v1228
  %v1577 = vunpack.c.h.b16 %v1228
  %v1578 = vunpack.c.l.b16 %v1229
  %v1579 = vunpack.c.h.b16 %v1229
  %v1580 = vunpack.c.l.b16 %v1230
  %v1581 = vunpack.c.h.b16 %v1230
  %v1582 = vunpack.c.l.b16 %v1231
  %v1583 = vunpack.c.h.b16 %v1231
  %v1584 = vunpack.c.l.b16 %v1232
  %v1585 = vunpack.c.h.b16 %v1232
  %v1586 = vunpack.c.l.b16 %v1233
  %v1587 = vunpack.c.h.b16 %v1233
  %v1588 = vunpack.c.l.b16 %v1234
  %v1589 = vunpack.c.h.b16 %v1234
  %v1590 = vunpack.c.l.b16 %v1235
  %v1591 = vunpack.c.h.b16 %v1235
  %v1592 = vunpack.c.l.b16 %v1236
  %v1593 = vunpack.c.h.b16 %v1236
  %v1594 = vunpack.c.l.b16 %v1237
  %v1595 = vunpack.c.h.b16 %v1237
  %v1596 = vunpack.c.l.b16 %v1238
  %v1597 = vunpack.c.h.b16 %v1238
  %v1598 = vunpack.c.l.b16 %v1239
  %v1599 = vunpack.c.h.b16 %v1239
  %v1600 = vunpack.c.l.b16 %v1240
  %v1601 = vunpack.c.h.b16 %v1240
  %v1602 = vunpack.c.l.b16 %v1241
  %v1603 = vunpack.c.h.b16 %v1241
  %v1604 = vunpack.c.l.b16 %v1242
  %v1605 = vunpack.c.h.b16 %v1242
  %v1606 = vunpack.c.l.b16 %v1243
  %v1607 = vunpack.c.h.b16 %v1243
  %v1608 = vunpack.c.l.b16 %v1244
  %v1609 = vunpack.c.h.b16 %v1244
  %v1610 = vunpack.c.l.b16 %v1245
  %v1611 = vunpack.c.h.b16 %v1245
  %v1612 = vunpack.c.l.b16 %v1246
  %v1613 = vunpack.c.h.b16 %v1246
  %v1614 = vunpack.c.l.b16 %v1247
  %v1615 = vunpack.c.h.b16 %v1247
  %v1616 = vunpack.c.l.b16 %v1248
  %v1617 = vunpack.c.h.b16 %v1248
  %v1618 = vunpack.c.l.b16 %v1249
  %v1619 = vunpack.c.h.b16 %v1249
  %v1620 = vunpack.c.l.b16 %v1250
  %v1621 = vunpack.c.h.b16 %v1250
  %v1622 = vunpack.c.l.b16 %v1251
  %v1623 = vunpack.c.h.b16 %v1251
  %v1624 = vunpack.c.l.b16 %v1252
  %v1625 = vunpack.c.h.b16 %v1252
  %v1626 = vunpack.c.l.b16 %v1253
  %v1627 = vunpack.c.h.b16 %v1253
  %v1628 = vunpack.c.l.b16 %v1254
  %v1629 = vunpack.c.h.b16 %v1254
  %v1630 = vunpack.c.l.b16 %v1255
  %v1631 = vunpack.c.h.b16 %v1255
  %v1632 = vunpack.c.l.b16 %v1256
  %v1633 = vunpack.c.h.b16 %v1256
  %v1634 = vunpack.c.l.b16 %v1257
  %v1635 = vunpack.c.h.b16 %v1257
  %v1636 = vunpack.c.l.b16 %v1258
  %v1637 = vunpack.c.h.b16 %v1258
  %v1638 = vunpack.c.l.b16 %v1259
  %v1639 = vunpack.c.h.b16 %v1259
  %v1640 = vunpack.c.l.b16 %v1260
  %v1641 = vunpack.c.h.b16 %v1260
  %v1642 = vunpack.c.l.b16 %v1261
  %v1643 = vunpack.c.h.b16 %v1261
  %v1644 = vunpack.c.l.b16 %v1262
  %v1645 = vunpack.c.h.b16 %v1262
  %v1646 = vunpack.c.l.b16 %v1263
  %v1647 = vunpack.c.h.b16 %v1263
  %v1648 = vpack.c.b16 %v1400, %v1392
  %v1649 = vpack.c.b16 %v1401, %v1393
  %v1650 = vpack.c.b16 %v1402, %v1394
  %v1651 = vpack.c.b16 %v1403, %v1395
  %v1652 = vpack.c.b16 %v1404, %v1396
  %v1653 = vpack.c.b16 %v1405, %v1397
  %v1654 = vpack.c.b16 %v1406, %v1398
  %v1655 = vpack.c.b16 %v1407, %v1399
  %v1656 = vpack.c.b16 %v1416, %v1408
  %v1657 = vpack.c.b16 %v1417, %v1409
  %v1658 = vpack.c.b16 %v1418, %v1410
  %v1659 = vpack.c.b16 %v1419, %v1411
  %v1660 = vpack.c.b16 %v1420, %v1412
  %v1661 = vpack.c.b16 %v1421, %v1413
  %v1662 = vpack.c.b16 %v1422, %v1414
  %v1663 = vpack.c.b16 %v1423, %v1415
  %v1664 = vpack.c.b16 %v1432, %v1424
  %v1665 = vpack.c.b16 %v1433, %v1425
  %v1666 = vpack.c.b16 %v1434, %v1426
  %v1667 = vpack.c.b16 %v1435, %v1427
  %v1668 = vpack.c.b16 %v1436, %v1428
  %v1669 = vpack.c.b16 %v1437, %v1429
  %v1670 = vpack.c.b16 %v1438, %v1430
  %v1671 = vpack.c.b16 %v1439, %v1431
  %v1672 = vpack.c.b16 %v1448, %v1440
  %v1673 = vpack.c.b16 %v1449, %v1441
  %v1674 = vpack.c.b16 %v1450, %v1442
  %v1675 = vpack.c.b16 %v1451, %v1443
  %v1676 = vpack.c.b16 %v1452, %v1444
  %v1677 = vpack.c.b16 %v1453, %v1445
  %v1678 = vpack.c.b16 %v1454, %v1446
  %v1679 = vpack.c.b16 %v1455, %v1447
  %v1680 = vpack.c.b16 %v1464, %v1456
  %v1681 = vpack.c.b16 %v1465, %v1457
  %v1682 = vpack.c.b16 %v1466, %v1458
  %v1683 = vpack.c.b16 %v1467, %v1459
  %v1684 = vpack.c.b16 %v1468, %v1460
  %v1685 = vpack.c.b16 %v1469, %v1461
  %v1686 = vpack.c.b16 %v1470, %v1462
  %v1687 = vpack.c.b16 %v1471, %v1463
  %v1688 = vpack.c.b16 %v1480, %v1472
  %v1689 = vpack.c.b16 %v1481, %v1473
  %v1690 = vpack.c.b16 %v1482, %v1474
  %v1691 = vpack.c.b16 %v1483, %v1475
  %v1692 = vpack.c.b16 %v1484, %v1476
  %v1693 = vpack.c.b16 %v1485, %v1477
  %v1694 = vpack.c.b16 %v1486, %v1478
  %v1695 = vpack.c.b16 %v1487, %v1479
  %v1696 = vpack.c.b16 %v1496, %v1488
  %v1697 = vpack.c.b16 %v1497, %v1489
  %v1698 = vpack.c.b16 %v1498, %v1490
  %v1699 = vpack.c.b16 %v1499, %v1491
  %v1700 = vpack.c.b16 %v1500, %v1492
  %v1701 = vpack.c.b16 %v1501, %v1493
  %v1702 = vpack.c.b16 %v1502, %v1494
  %v1703 = vpack.c.b16 %v1503, %v1495
  %v1704 = vpack.c.b16 %v1512, %v1504
  %v1705 = vpack.c.b16 %v1513, %v1505
  %v1706 = vpack.c.b16 %v1514, %v1506
  %v1707 = vpack.c.b16 %v1515, %v1507
  %v1708 = vpack.c.b16 %v1516, %v1508
  %v1709 = vpack.c.b16 %v1517, %v1509
  %v1710 = vpack.c.b16 %v1518, %v1510
  %v1711 = vpack.c.b16 %v1519, %v1511
  %v1712 = vpack.c.b16 %v1528, %v1520
  %v1713 = vpack.c.b16 %v1529, %v1521
  %v1714 = vpack.c.b16 %v1530, %v1522
  %v1715 = vpack.c.b16 %v1531, %v1523
  %v1716 = vpack.c.b16 %v1532, %v1524
  %v1717 = vpack.c.b16 %v1533, %v1525
  %v1718 = vpack.c.b16 %v1534, %v1526
  %v1719 = vpack.c.b16 %v1535, %v1527
  %v1720 = vpack.c.b16 %v1544, %v1536
  %v1721 = vpack.c.b16 %v1545, %v1537
  %v1722 = vpack.c.b16 %v1546, %v1538
  %v1723 = vpack.c.b16 %v1547, %v1539
  %v1724 = vpack.c.b16 %v1548, %v1540
  %v1725 = vpack.c.b16 %v1549, %v1541
  %v1726 = vpack.c.b16 %v1550, %v1542
  %v1727 = vpack.c.b16 %v1551, %v1543
  %v1728 = vpack.c.b16 %v1560, %v1552
  %v1729 = vpack.c.b16 %v1561, %v1553
  %v1730 = vpack.c.b16 %v1562, %v1554
  %v1731 = vpack.c.b16 %v1563, %v1555
  %v1732 = vpack.c.b16 %v1564, %v1556
  %v1733 = vpack.c.b16 %v1565, %v1557
  %v1734 = vpack.c.b16 %v1566, %v1558
  %v1735 = vpack.c.b16 %v1567, %v1559
  %v1736 = vpack.c.b16 %v1576, %v1568
  %v1737 = vpack.c.b16 %v1577, %v1569
  %v1738 = vpack.c.b16 %v1578, %v1570
  %v1739 = vpack.c.b16 %v1579, %v1571
  %v1740 = vpack.c.b16 %v1580, %v1572
  %v1741 = vpack.c.b16 %v1581, %v1573
  %v1742 = vpack.c.b16 %v1582, %v1574
  %v1743 = vpack.c.b16 %v1583, %v1575
  %v1744 = vpack.c.b16 %v1592, %v1584
  %v1745 = vpack.c.b16 %v1593, %v1585
  %v1746 = vpack.c.b16 %v1594, %v1586
  %v1747 = vpack.c.b16 %v1595, %v1587
  %v1748 = vpack.c.b16 %v1596, %v1588
  %v1749 = vpack.c.b16 %v1597, %v1589
  %v1750 = vpack.c.b16 %v1598, %v1590
  %v1751 = vpack.c.b16 %v1599, %v1591
  %v1752 = vpack.c.b16 %v1608, %v1600
  %v1753 = vpack.c.b16 %v1609, %v1601
  %v1754 = vpack.c.b16 %v1610, %v1602
  %v1755 = vpack.c.b16 %v1611, %v1603
  %v1756 = vpack.c.b16 %v1612, %v1604
  %v1757 = vpack.c.b16 %v1613, %v1605
  %v1758 = vpack.c.b16 %v1614, %v1606
  %v1759 = vpack.c.b16 %v1615, %v1607
  %v1760 = vpack.c.b16 %v1624, %v1616
  %v1761 = vpack.c.b16 %v1625, %v1617
  %v1762 = vpack.c.b16 %v1626, %v1618
  %v1763 = vpack.c.b16 %v1627, %v1619
  %v1764 = vpack.c.b16 %v1628, %v1620
  %v1765 = vpack.c.b16 %v1629, %v1621
  %v1766 = vpack.c.b16 %v1630, %v1622
  %v1767 = vpack.c.b16 %v1631, %v1623
  %v1768 = vpack.c.b16 %v1640, %v1632
  %v1769 = vpack.c.b16 %v1641, %v1633
  %v1770 = vpack.c.b16 %v1642, %v1634
  %v1771 = vpack.c.b16 %v1643, %v1635
  %v1772 = vpack.c.b16 %v1644, %v1636
  %v1773 = vpack.c.b16 %v1645, %v1637
  %v1774 = vpack.c.b16 %v1646, %v1638
  %v1775 = vpack.c.b16 %v1647, %v1639
  %1904 = vmatprep.subr.bf16.mxu0 %v1649
  %1905 = vmatpush1.bf16.msra.mxu0 %v1648
  %1906 = vmatprep.subr.bf16.mxu0 %v1657
  %1907 = vmatpush1.bf16.msra.mxu0 %v1656
  %1908 = vmatprep.subr.bf16.mxu0 %v1665
  %1909 = vmatpush1.bf16.msra.mxu0 %v1664
  %1910 = vmatprep.subr.bf16.mxu0 %v1673
  %1911 = vmatpush1.bf16.msra.mxu0 %v1672
  %1912 = vmatprep.subr.bf16.mxu0 %v1681
  %1913 = vmatpush1.bf16.msra.mxu0 %v1680
  %1914 = vmatprep.subr.bf16.mxu0 %v1689
  %1915 = vmatpush1.bf16.msra.mxu0 %v1688
  %1916 = vmatprep.subr.bf16.mxu0 %v1697
  %1917 = vmatpush1.bf16.msra.mxu0 %v1696
  %1918 = vmatprep.subr.bf16.mxu0 %v1705
  %1919 = vmatpush1.bf16.msra.mxu0 %v1704
  %1920 = vmatprep.subr.bf16.mxu0 %v1713
  %1921 = vmatpush1.bf16.msra.mxu0 %v1712
  %1922 = vmatprep.subr.bf16.mxu0 %v1721
  %1923 = vmatpush1.bf16.msra.mxu0 %v1720
  %1924 = vmatprep.subr.bf16.mxu0 %v1729
  %1925 = vmatpush1.bf16.msra.mxu0 %v1728
  %1926 = vmatprep.subr.bf16.mxu0 %v1737
  %1927 = vmatpush1.bf16.msra.mxu0 %v1736
  %1928 = vmatprep.subr.bf16.mxu0 %v1745
  %1929 = vmatpush1.bf16.msra.mxu0 %v1744
  %1930 = vmatprep.subr.bf16.mxu0 %v1753
  %1931 = vmatpush1.bf16.msra.mxu0 %v1752
  %1932 = vmatprep.subr.bf16.mxu0 %v1761
  %1933 = vmatpush1.bf16.msra.mxu0 %v1760
  %1934 = vmatprep.subr.bf16.mxu0 %v1769
  %1935 = vmatpush1.bf16.msra.mxu0 %v1768
  %1936 = vmatprep.mubr.bf16.mxu0 0
  %1937 = vmatmul.mubr.bf16.gmra.mrb[0].mxu0 0
  %v1938 = vpop.f32.mrb[0].mxu0
  %v1939 = vadd.f32 0.0, %v1938
  %v1940 = vpop.f32.mrb[0].mxu0
  %v1941 = vadd.f32 0.0, %v1940
  %v1942 = vpop.f32.mrb[0].mxu0
  %v1943 = vpop.f32.mrb[0].mxu0
  %1944 = vdwg.mxu0
  %1945 = vmatprep.subr.bf16.mxu0 %v1651
  %1946 = vmatpush1.bf16.msra.mxu0 %v1650
  %1947 = vmatprep.subr.bf16.mxu0 %v1659
  %1948 = vmatpush1.bf16.msra.mxu0 %v1658
  %1949 = vmatprep.subr.bf16.mxu0 %v1667
  %1950 = vmatpush1.bf16.msra.mxu0 %v1666
  %1951 = vmatprep.subr.bf16.mxu0 %v1675
  %1952 = vmatpush1.bf16.msra.mxu0 %v1674
  %1953 = vmatprep.subr.bf16.mxu0 %v1683
  %1954 = vmatpush1.bf16.msra.mxu0 %v1682
  %1955 = vmatprep.subr.bf16.mxu0 %v1691
  %1956 = vmatpush1.bf16.msra.mxu0 %v1690
  %1957 = vmatprep.subr.bf16.mxu0 %v1699
  %1958 = vmatpush1.bf16.msra.mxu0 %v1698
  %1959 = vmatprep.subr.bf16.mxu0 %v1707
  %1960 = vmatpush1.bf16.msra.mxu0 %v1706
  %1961 = vmatprep.subr.bf16.mxu0 %v1715
  %1962 = vmatpush1.bf16.msra.mxu0 %v1714
  %1963 = vmatprep.subr.bf16.mxu0 %v1723
  %1964 = vmatpush1.bf16.msra.mxu0 %v1722
  %1965 = vmatprep.subr.bf16.mxu0 %v1731
  %1966 = vmatpush1.bf16.msra.mxu0 %v1730
  %1967 = vmatprep.subr.bf16.mxu0 %v1739
  %1968 = vmatpush1.bf16.msra.mxu0 %v1738
  %1969 = vmatprep.subr.bf16.mxu0 %v1747
  %1970 = vmatpush1.bf16.msra.mxu0 %v1746
  %1971 = vmatprep.subr.bf16.mxu0 %v1755
  %1972 = vmatpush1.bf16.msra.mxu0 %v1754
  %1973 = vmatprep.subr.bf16.mxu0 %v1763
  %1974 = vmatpush1.bf16.msra.mxu0 %v1762
  %1975 = vmatprep.subr.bf16.mxu0 %v1771
  %1976 = vmatpush1.bf16.msra.mxu0 %v1770
  %1977 = vmatprep.mubr.bf16.mxu0 0
  %1978 = vmatmul.mubr.bf16.gmra.mrb[0].mxu0 0
  %v1979 = vpop.f32.mrb[0].mxu0
  %v1980 = vadd.f32 0.0, %v1979
  %v1981 = vpop.f32.mrb[0].mxu0
  %v1982 = vadd.f32 0.0, %v1981
  %v1983 = vpop.f32.mrb[0].mxu0
  %v1984 = vpop.f32.mrb[0].mxu0
  %1985 = vdwg.mxu0
  %1986 = vmatprep.subr.bf16.mxu0 %v1653
  %1987 = vmatpush1.bf16.msra.mxu0 %v1652
  %1988 = vmatprep.subr.bf16.mxu0 %v1661
  %1989 = vmatpush1.bf16.msra.mxu0 %v1660
  %1990 = vmatprep.subr.bf16.mxu0 %v1669
  %1991 = vmatpush1.bf16.msra.mxu0 %v1668
  %1992 = vmatprep.subr.bf16.mxu0 %v1677
  %1993 = vmatpush1.bf16.msra.mxu0 %v1676
  %1994 = vmatprep.subr.bf16.mxu0 %v1685
  %1995 = vmatpush1.bf16.msra.mxu0 %v1684
  %1996 = vmatprep.subr.bf16.mxu0 %v1693
  %1997 = vmatpush1.bf16.msra.mxu0 %v1692
  %1998 = vmatprep.subr.bf16.mxu0 %v1701
  %1999 = vmatpush1.bf16.msra.mxu0 %v1700
  %2000 = vmatprep.subr.bf16.mxu0 %v1709
  %2001 = vmatpush1.bf16.msra.mxu0 %v1708
  %2002 = vmatprep.subr.bf16.mxu0 %v1717
  %2003 = vmatpush1.bf16.msra.mxu0 %v1716
  %2004 = vmatprep.subr.bf16.mxu0 %v1725
  %2005 = vmatpush1.bf16.msra.mxu0 %v1724
  %2006 = vmatprep.subr.bf16.mxu0 %v1733
  %2007 = vmatpush1.bf16.msra.mxu0 %v1732
  %2008 = vmatprep.subr.bf16.mxu0 %v1741
  %2009 = vmatpush1.bf16.msra.mxu0 %v1740
  %2010 = vmatprep.subr.bf16.mxu0 %v1749
  %2011 = vmatpush1.bf16.msra.mxu0 %v1748
  %2012 = vmatprep.subr.bf16.mxu0 %v1757
  %2013 = vmatpush1.bf16.msra.mxu0 %v1756
  %2014 = vmatprep.subr.bf16.mxu0 %v1765
  %2015 = vmatpush1.bf16.msra.mxu0 %v1764
  %2016 = vmatprep.subr.bf16.mxu0 %v1773
  %2017 = vmatpush1.bf16.msra.mxu0 %v1772
  %2018 = vmatprep.mubr.bf16.mxu0 0
  %2019 = vmatmul.mubr.bf16.gmra.mrb[0].mxu0 0
  %v2020 = vpop.f32.mrb[0].mxu0
  %v2021 = vadd.f32 0.0, %v2020
  %v2022 = vpop.f32.mrb[0].mxu0
  %v2023 = vadd.f32 0.0, %v2022
  %v2024 = vpop.f32.mrb[0].mxu0
  %v2025 = vpop.f32.mrb[0].mxu0
  %2026 = vdwg.mxu0
  %2027 = vmatprep.subr.bf16.mxu0 %v1655
  %2028 = vmatpush1.bf16.msra.mxu0 %v1654
  %2029 = vmatprep.subr.bf16.mxu0 %v1663
  %2030 = vmatpush1.bf16.msra.mxu0 %v1662
  %2031 = vmatprep.subr.bf16.mxu0 %v1671
  %2032 = vmatpush1.bf16.msra.mxu0 %v1670
  %2033 = vmatprep.subr.bf16.mxu0 %v1679
  %2034 = vmatpush1.bf16.msra.mxu0 %v1678
  %2035 = vmatprep.subr.bf16.mxu0 %v1687
  %2036 = vmatpush1.bf16.msra.mxu0 %v1686
  %2037 = vmatprep.subr.bf16.mxu0 %v1695
  %2038 = vmatpush1.bf16.msra.mxu0 %v1694
  %2039 = vmatprep.subr.bf16.mxu0 %v1703
  %2040 = vmatpush1.bf16.msra.mxu0 %v1702
  %2041 = vmatprep.subr.bf16.mxu0 %v1711
  %2042 = vmatpush1.bf16.msra.mxu0 %v1710
  %2043 = vmatprep.subr.bf16.mxu0 %v1719
  %2044 = vmatpush1.bf16.msra.mxu0 %v1718
  %2045 = vmatprep.subr.bf16.mxu0 %v1727
  %2046 = vmatpush1.bf16.msra.mxu0 %v1726
  %2047 = vmatprep.subr.bf16.mxu0 %v1735
  %2048 = vmatpush1.bf16.msra.mxu0 %v1734
  %2049 = vmatprep.subr.bf16.mxu0 %v1743
  %2050 = vmatpush1.bf16.msra.mxu0 %v1742
  %2051 = vmatprep.subr.bf16.mxu0 %v1751
  %2052 = vmatpush1.bf16.msra.mxu0 %v1750
  %2053 = vmatprep.subr.bf16.mxu0 %v1759
  %2054 = vmatpush1.bf16.msra.mxu0 %v1758
  %2055 = vmatprep.subr.bf16.mxu0 %v1767
  %2056 = vmatpush1.bf16.msra.mxu0 %v1766
  %2057 = vmatprep.subr.bf16.mxu0 %v1775
  %2058 = vmatpush1.bf16.msra.mxu0 %v1774
  %2059 = vmatprep.mubr.bf16.mxu0 0
  %2060 = vmatmul.mubr.bf16.gmra.mrb[0].mxu0 0
  %v2061 = vpop.f32.mrb[0].mxu0
  %v2062 = vadd.f32 0.0, %v2061
  %v2063 = vpop.f32.mrb[0].mxu0
  %v2064 = vadd.f32 0.0, %v2063
  %v2065 = vpop.f32.mrb[0].mxu0
  %v2066 = vpop.f32.mrb[0].mxu0
  %2067 = vdwg.mxu0
  %v2068 = vadd.f32 %v1128, %v1939
  %v2069 = vadd.f32 %v1129, %v1941
  %v2070 = vadd.f32 %v1130, %v1980
  %v2071 = vadd.f32 %v1131, %v1982
  %v2072 = vadd.f32 %v1132, %v2021
  %v2073 = vadd.f32 %v1133, %v2023
  %v2074 = vadd.f32 %v1134, %v2062
  %v2075 = vadd.f32 %v1135, %v2064
  %v2076 = vxor.u32 %v2068, 2147483648
  %v2077 = vxor.u32 %v2069, 2147483648
  %v2078 = vmul.f32 %v2076, 1.442695
  %v2079 = vpow.pop %v2078
  %v2080 = vmul.f32 %v2077, 1.442695
  %v2081 = vpow.pop %v2080
  %v2082 = vadd.f32 %v2079, 1.0
  %v2083 = vadd.f32 %v2081, 1.0
  %v2084 = vrcp.pop %v2082
  %v2085 = vmul.f32 1.0, %v2084
  %v2086 = vrcp.pop %v2083
  %v2087 = vmul.f32 1.0, %v2086
  %v2088 = vxor.u32 %v2070, 2147483648
  %v2089 = vxor.u32 %v2071, 2147483648
  %v2090 = vmul.f32 %v2088, 1.442695
  %v2091 = vpow.pop %v2090
  %v2092 = vmul.f32 %v2089, 1.442695
  %v2093 = vpow.pop %v2092
  %v2094 = vadd.f32 %v2091, 1.0
  %v2095 = vadd.f32 %v2093, 1.0
  %v2096 = vrcp.pop %v2094
  %v2097 = vmul.f32 1.0, %v2096
  %v2098 = vrcp.pop %v2095
  %v2099 = vmul.f32 1.0, %v2098
  %v2100 = vtanh.pop %v2072
  %v2101 = vtanh.pop %v2073
  %v2102 = vxor.u32 %v2074, 2147483648
  %v2103 = vxor.u32 %v2075, 2147483648
  %v2104 = vmul.f32 %v2102, 1.442695
  %v2105 = vpow.pop %v2104
  %v2106 = vmul.f32 %v2103, 1.442695
  %v2107 = vpow.pop %v2106
  %v2108 = vadd.f32 %v2105, 1.0
  %v2109 = vadd.f32 %v2107, 1.0
  %v2110 = vrcp.pop %v2108
  %v2111 = vmul.f32 1.0, %v2110
  %v2112 = vrcp.pop %v2109
  %v2113 = vmul.f32 1.0, %v2112
  %v2114 = vmul.f32 %v2097, 0.0
  %v2115 = vmul.f32 %v2099, 0.0
  %v2116 = vmul.f32 %v2085, %v2100
  %v2117 = vmul.f32 %v2087, %v2101
  %v2118 = vadd.f32 %v2114, %v2116
  %v2119 = vadd.f32 %v2115, %v2117
  %v2120 = vtanh.pop %v2118
  %v2121 = vtanh.pop %v2119
  %v2122 = vmul.f32 %v2111, %v2120
  %v2123 = vmul.f32 %v2113, %v2121
  %2124 = vst [vmem:[#allocation3] sm:$0xff] %v2122
  %2125 = vst [vmem:[#allocation3 + $0x78] sm:$0xff] %v2123
  %v2126 = vld [vmem:[#allocation2 + $0x40] sm:$0xff]
  %v2127 = vld [vmem:[#allocation2 + $0x48] sm:$0xff]
  %v2128 = vld [vmem:[#allocation2 + $0x50] sm:$0xff]
  %v2129 = vld [vmem:[#allocation2 + $0x58] sm:$0xff]
  %v2130 = vld [vmem:[#allocation2 + $0x60] sm:$0xff]
  %v2131 = vld [vmem:[#allocation2 + $0x68] sm:$0xff]
  %v2132 = vld [vmem:[#allocation2 + $0x70] sm:$0xff]
  %v2133 = vld [vmem:[#allocation2 + $0x78] sm:$0xff]
  %v2134 = vld [vmem:[#allocation2 + $0x180] sm:$0xff]
  %v2135 = vld [vmem:[#allocation2 + $0x188] sm:$0xff]
  %v2136 = vld [vmem:[#allocation2 + $0x190] sm:$0xff]
  %v2137 = vld [vmem:[#allocation2 + $0x198] sm:$0xff]
  %v2138 = vld [vmem:[#allocation2 + $0x1a0] sm:$0xff]
  %v2139 = vld [vmem:[#allocation2 + $0x1a8] sm:$0xff]
  %v2140 = vld [vmem:[#allocation2 + $0x1b0] sm:$0xff]
  %v2141 = vld [vmem:[#allocation2 + $0x1b8] sm:$0xff]
  %v2142 = vsel %vm318, %v2126, %v2134
  %v2143 = vsel %vm319, %v2127, %v2135
  %v2144 = vsel %vm320, %v2128, %v2136
  %v2145 = vsel %vm321, %v2129, %v2137
  %v2146 = vsel %vm322, %v2130, %v2138
  %v2147 = vsel %vm323, %v2131, %v2139
  %v2148 = vsel %vm324, %v2132, %v2140
  %v2149 = vsel %vm325, %v2133, %v2141
  %v2150 = vpack.c.bf16 %v2122, %v2122
  %v2151 = vpack.c.bf16 %v2123, %v2123
  %v2152 = vld [vmem:[%s4] sm:$0xff]
  %v2153 = vld [vmem:[%s4 + $0x8] sm:$0xff]
  %v2154 = vld [vmem:[%s4 + $0x10] sm:$0xff]
  %v2155 = vld [vmem:[%s4 + $0x18] sm:$0xff]
  %v2156 = vld [vmem:[%s4 + $0x20] sm:$0xff]
  %v2157 = vld [vmem:[%s4 + $0x28] sm:$0xff]
  %v2158 = vld [vmem:[%s4 + $0x30] sm:$0xff]
  %v2159 = vld [vmem:[%s4 + $0x38] sm:$0xff]
  %v2160 = vld [vmem:[%s4 + $0x40] sm:$0xff]
  %v2161 = vld [vmem:[%s4 + $0x48] sm:$0xff]
  %v2162 = vld [vmem:[%s4 + $0x50] sm:$0xff]
  %v2163 = vld [vmem:[%s4 + $0x58] sm:$0xff]
  %v2164 = vld [vmem:[%s4 + $0x60] sm:$0xff]
  %v2165 = vld [vmem:[%s4 + $0x68] sm:$0xff]
  %v2166 = vld [vmem:[%s4 + $0x70] sm:$0xff]
  %v2167 = vld [vmem:[%s4 + $0x78] sm:$0xff]
  %v2168 = vld [vmem:[%s4 + $0x80] sm:$0xff]
  %v2169 = vld [vmem:[%s4 + $0x88] sm:$0xff]
  %v2170 = vld [vmem:[%s4 + $0x90] sm:$0xff]
  %v2171 = vld [vmem:[%s4 + $0x98] sm:$0xff]
  %v2172 = vld [vmem:[%s4 + $0xa0] sm:$0xff]
  %v2173 = vld [vmem:[%s4 + $0xa8] sm:$0xff]
  %v2174 = vld [vmem:[%s4 + $0xb0] sm:$0xff]
  %v2175 = vld [vmem:[%s4 + $0xb8] sm:$0xff]
  %v2176 = vld [vmem:[%s4 + $0xc0] sm:$0xff]
  %v2177 = vld [vmem:[%s4 + $0xc8] sm:$0xff]
  %v2178 = vld [vmem:[%s4 + $0xd0] sm:$0xff]
  %v2179 = vld [vmem:[%s4 + $0xd8] sm:$0xff]
  %v2180 = vld [vmem:[%s4 + $0xe0] sm:$0xff]
  %v2181 = vld [vmem:[%s4 + $0xe8] sm:$0xff]
  %v2182 = vld [vmem:[%s4 + $0xf0] sm:$0xff]
  %v2183 = vld [vmem:[%s4 + $0xf8] sm:$0xff]
  %v2184 = vld [vmem:[%s4 + $0x100] sm:$0xff]
  %v2185 = vld [vmem:[%s4 + $0x108] sm:$0xff]
  %v2186 = vld [vmem:[%s4 + $0x110] sm:$0xff]
  %v2187 = vld [vmem:[%s4 + $0x118] sm:$0xff]
  %v2188 = vld [vmem:[%s4 + $0x120] sm:$0xff]
  %v2189 = vld [vmem:[%s4 + $0x128] sm:$0xff]
  %v2190 = vld [vmem:[%s4 + $0x130] sm:$0xff]
  %v2191 = vld [vmem:[%s4 + $0x138] sm:$0xff]
  %v2192 = vld [vmem:[%s4 + $0x140] sm:$0xff]
  %v2193 = vld [vmem:[%s4 + $0x148] sm:$0xff]
  %v2194 = vld [vmem:[%s4 + $0x150] sm:$0xff]
  %v2195 = vld [vmem:[%s4 + $0x158] sm:$0xff]
  %v2196 = vld [vmem:[%s4 + $0x160] sm:$0xff]
  %v2197 = vld [vmem:[%s4 + $0x168] sm:$0xff]
  %v2198 = vld [vmem:[%s4 + $0x170] sm:$0xff]
  %v2199 = vld [vmem:[%s4 + $0x178] sm:$0xff]
  %v2200 = vld [vmem:[%s4 + $0x180] sm:$0xff]
  %v2201 = vld [vmem:[%s4 + $0x188] sm:$0xff]
  %v2202 = vld [vmem:[%s4 + $0x190] sm:$0xff]
  %v2203 = vld [vmem:[%s4 + $0x198] sm:$0xff]
  %v2204 = vld [vmem:[%s4 + $0x1a0] sm:$0xff]
  %v2205 = vld [vmem:[%s4 + $0x1a8] sm:$0xff]
  %v2206 = vld [vmem:[%s4 + $0x1b0] sm:$0xff]
  %v2207 = vld [vmem:[%s4 + $0x1b8] sm:$0xff]
  %v2208 = vld [vmem:[%s4 + $0x1c0] sm:$0xff]
  %v2209 = vld [vmem:[%s4 + $0x1c8] sm:$0xff]
  %v2210 = vld [vmem:[%s4 + $0x1d0] sm:$0xff]
  %v2211 = vld [vmem:[%s4 + $0x1d8] sm:$0xff]
  %v2212 = vld [vmem:[%s4 + $0x1e0] sm:$0xff]
  %v2213 = vld [vmem:[%s4 + $0x1e8] sm:$0xff]
  %v2214 = vld [vmem:[%s4 + $0x1f0] sm:$0xff]
  %v2215 = vld [vmem:[%s4 + $0x1f8] sm:$0xff]
  %v2216 = vld [vmem:[%s4 + $0x200] sm:$0xff]
  %v2217 = vld [vmem:[%s4 + $0x208] sm:$0xff]
  %v2218 = vld [vmem:[%s4 + $0x210] sm:$0xff]
  %v2219 = vld [vmem:[%s4 + $0x218] sm:$0xff]
  %v2220 = vld [vmem:[%s4 + $0x220] sm:$0xff]
  %v2221 = vld [vmem:[%s4 + $0x228] sm:$0xff]
  %v2222 = vld [vmem:[%s4 + $0x230] sm:$0xff]
  %v2223 = vld [vmem:[%s4 + $0x238] sm:$0xff]
  %v2224 = vld [vmem:[%s4 + $0x240] sm:$0xff]
  %v2225 = vld [vmem:[%s4 + $0x248] sm:$0xff]
  %v2226 = vld [vmem:[%s4 + $0x250] sm:$0xff]
  %v2227 = vld [vmem:[%s4 + $0x258] sm:$0xff]
  %v2228 = vld [vmem:[%s4 + $0x260] sm:$0xff]
  %v2229 = vld [vmem:[%s4 + $0x268] sm:$0xff]
  %v2230 = vld [vmem:[%s4 + $0x270] sm:$0xff]
  %v2231 = vld [vmem:[%s4 + $0x278] sm:$0xff]
  %v2232 = vld [vmem:[%s4 + $0x280] sm:$0xff]
  %v2233 = vld [vmem:[%s4 + $0x288] sm:$0xff]
  %v2234 = vld [vmem:[%s4 + $0x290] sm:$0xff]
  %v2235 = vld [vmem:[%s4 + $0x298] sm:$0xff]
  %v2236 = vld [vmem:[%s4 + $0x2a0] sm:$0xff]
  %v2237 = vld [vmem:[%s4 + $0x2a8] sm:$0xff]
  %v2238 = vld [vmem:[%s4 + $0x2b0] sm:$0xff]
  %v2239 = vld [vmem:[%s4 + $0x2b8] sm:$0xff]
  %v2240 = vld [vmem:[%s4 + $0x2c0] sm:$0xff]
  %v2241 = vld [vmem:[%s4 + $0x2c8] sm:$0xff]
  %v2242 = vld [vmem:[%s4 + $0x2d0] sm:$0xff]
  %v2243 = vld [vmem:[%s4 + $0x2d8] sm:$0xff]
  %v2244 = vld [vmem:[%s4 + $0x2e0] sm:$0xff]
  %v2245 = vld [vmem:[%s4 + $0x2e8] sm:$0xff]
  %v2246 = vld [vmem:[%s4 + $0x2f0] sm:$0xff]
  %v2247 = vld [vmem:[%s4 + $0x2f8] sm:$0xff]
  %v2248 = vld [vmem:[%s4 + $0x300] sm:$0xff]
  %v2249 = vld [vmem:[%s4 + $0x308] sm:$0xff]
  %v2250 = vld [vmem:[%s4 + $0x310] sm:$0xff]
  %v2251 = vld [vmem:[%s4 + $0x318] sm:$0xff]
  %v2252 = vld [vmem:[%s4 + $0x320] sm:$0xff]
  %v2253 = vld [vmem:[%s4 + $0x328] sm:$0xff]
  %v2254 = vld [vmem:[%s4 + $0x330] sm:$0xff]
  %v2255 = vld [vmem:[%s4 + $0x338] sm:$0xff]
  %v2256 = vld [vmem:[%s4 + $0x340] sm:$0xff]
  %v2257 = vld [vmem:[%s4 + $0x348] sm:$0xff]
  %v2258 = vld [vmem:[%s4 + $0x350] sm:$0xff]
  %v2259 = vld [vmem:[%s4 + $0x358] sm:$0xff]
  %v2260 = vld [vmem:[%s4 + $0x360] sm:$0xff]
  %v2261 = vld [vmem:[%s4 + $0x368] sm:$0xff]
  %v2262 = vld [vmem:[%s4 + $0x370] sm:$0xff]
  %v2263 = vld [vmem:[%s4 + $0x378] sm:$0xff]
  %v2264 = vld [vmem:[%s4 + $0x380] sm:$0xff]
  %v2265 = vld [vmem:[%s4 + $0x388] sm:$0xff]
  %v2266 = vld [vmem:[%s4 + $0x390] sm:$0xff]
  %v2267 = vld [vmem:[%s4 + $0x398] sm:$0xff]
  %v2268 = vld [vmem:[%s4 + $0x3a0] sm:$0xff]
  %v2269 = vld [vmem:[%s4 + $0x3a8] sm:$0xff]
  %v2270 = vld [vmem:[%s4 + $0x3b0] sm:$0xff]
  %v2271 = vld [vmem:[%s4 + $0x3b8] sm:$0xff]
  %v2272 = vld [vmem:[%s4 + $0x3c0] sm:$0xff]
  %v2273 = vld [vmem:[%s4 + $0x3c8] sm:$0xff]
  %v2274 = vld [vmem:[%s4 + $0x3d0] sm:$0xff]
  %v2275 = vld [vmem:[%s4 + $0x3d8] sm:$0xff]
  %v2276 = vld [vmem:[%s4 + $0x3e0] sm:$0xff]
  %v2277 = vld [vmem:[%s4 + $0x3e8] sm:$0xff]
  %v2278 = vld [vmem:[%s4 + $0x3f0] sm:$0xff]
  %v2279 = vld [vmem:[%s4 + $0x3f8] sm:$0xff]
  %v2408 = vunpack.c.l.b16 %v2152
  %v2409 = vunpack.c.h.b16 %v2152
  %v2410 = vunpack.c.l.b16 %v2153
  %v2411 = vunpack.c.h.b16 %v2153
  %v2412 = vunpack.c.l.b16 %v2154
  %v2413 = vunpack.c.h.b16 %v2154
  %v2414 = vunpack.c.l.b16 %v2155
  %v2415 = vunpack.c.h.b16 %v2155
  %v2416 = vunpack.c.l.b16 %v2156
  %v2417 = vunpack.c.h.b16 %v2156
  %v2418 = vunpack.c.l.b16 %v2157
  %v2419 = vunpack.c.h.b16 %v2157
  %v2420 = vunpack.c.l.b16 %v2158
  %v2421 = vunpack.c.h.b16 %v2158
  %v2422 = vunpack.c.l.b16 %v2159
  %v2423 = vunpack.c.h.b16 %v2159
  %v2424 = vunpack.c.l.b16 %v2160
  %v2425 = vunpack.c.h.b16 %v2160
  %v2426 = vunpack.c.l.b16 %v2161
  %v2427 = vunpack.c.h.b16 %v2161
  %v2428 = vunpack.c.l.b16 %v2162
  %v2429 = vunpack.c.h.b16 %v2162
  %v2430 = vunpack.c.l.b16 %v2163
  %v2431 = vunpack.c.h.b16 %v2163
  %v2432 = vunpack.c.l.b16 %v2164
  %v2433 = vunpack.c.h.b16 %v2164
  %v2434 = vunpack.c.l.b16 %v2165
  %v2435 = vunpack.c.h.b16 %v2165
  %v2436 = vunpack.c.l.b16 %v2166
  %v2437 = vunpack.c.h.b16 %v2166
  %v2438 = vunpack.c.l.b16 %v2167
  %v2439 = vunpack.c.h.b16 %v2167
  %v2440 = vunpack.c.l.b16 %v2168
  %v2441 = vunpack.c.h.b16 %v2168
  %v2442 = vunpack.c.l.b16 %v2169
  %v2443 = vunpack.c.h.b16 %v2169
  %v2444 = vunpack.c.l.b16 %v2170
  %v2445 = vunpack.c.h.b16 %v2170
  %v2446 = vunpack.c.l.b16 %v2171
  %v2447 = vunpack.c.h.b16 %v2171
  %v2448 = vunpack.c.l.b16 %v2172
  %v2449 = vunpack.c.h.b16 %v2172
  %v2450 = vunpack.c.l.b16 %v2173
  %v2451 = vunpack.c.h.b16 %v2173
  %v2452 = vunpack.c.l.b16 %v2174
  %v2453 = vunpack.c.h.b16 %v2174
  %v2454 = vunpack.c.l.b16 %v2175
  %v2455 = vunpack.c.h.b16 %v2175
  %v2456 = vunpack.c.l.b16 %v2176
  %v2457 = vunpack.c.h.b16 %v2176
  %v2458 = vunpack.c.l.b16 %v2177
  %v2459 = vunpack.c.h.b16 %v2177
  %v2460 = vunpack.c.l.b16 %v2178
  %v2461 = vunpack.c.h.b16 %v2178
  %v2462 = vunpack.c.l.b16 %v2179
  %v2463 = vunpack.c.h.b16 %v2179
  %v2464 = vunpack.c.l.b16 %v2180
  %v2465 = vunpack.c.h.b16 %v2180
  %v2466 = vunpack.c.l.b16 %v2181
  %v2467 = vunpack.c.h.b16 %v2181
  %v2468 = vunpack.c.l.b16 %v2182
  %v2469 = vunpack.c.h.b16 %v2182
  %v2470 = vunpack.c.l.b16 %v2183
  %v2471 = vunpack.c.h.b16 %v2183
  %v2472 = vunpack.c.l.b16 %v2184
  %v2473 = vunpack.c.h.b16 %v2184
  %v2474 = vunpack.c.l.b16 %v2185
  %v2475 = vunpack.c.h.b16 %v2185
  %v2476 = vunpack.c.l.b16 %v2186
  %v2477 = vunpack.c.h.b16 %v2186
  %v2478 = vunpack.c.l.b16 %v2187
  %v2479 = vunpack.c.h.b16 %v2187
  %v2480 = vunpack.c.l.b16 %v2188
  %v2481 = vunpack.c.h.b16 %v2188
  %v2482 = vunpack.c.l.b16 %v2189
  %v2483 = vunpack.c.h.b16 %v2189
  %v2484 = vunpack.c.l.b16 %v2190
  %v2485 = vunpack.c.h.b16 %v2190
  %v2486 = vunpack.c.l.b16 %v2191
  %v2487 = vunpack.c.h.b16 %v2191
  %v2488 = vunpack.c.l.b16 %v2192
  %v2489 = vunpack.c.h.b16 %v2192
  %v2490 = vunpack.c.l.b16 %v2193
  %v2491 = vunpack.c.h.b16 %v2193
  %v2492 = vunpack.c.l.b16 %v2194
  %v2493 = vunpack.c.h.b16 %v2194
  %v2494 = vunpack.c.l.b16 %v2195
  %v2495 = vunpack.c.h.b16 %v2195
  %v2496 = vunpack.c.l.b16 %v2196
  %v2497 = vunpack.c.h.b16 %v2196
  %v2498 = vunpack.c.l.b16 %v2197
  %v2499 = vunpack.c.h.b16 %v2197
  %v2500 = vunpack.c.l.b16 %v2198
  %v2501 = vunpack.c.h.b16 %v2198
  %v2502 = vunpack.c.l.b16 %v2199
  %v2503 = vunpack.c.h.b16 %v2199
  %v2504 = vunpack.c.l.b16 %v2200
  %v2505 = vunpack.c.h.b16 %v2200
  %v2506 = vunpack.c.l.b16 %v2201
  %v2507 = vunpack.c.h.b16 %v2201
  %v2508 = vunpack.c.l.b16 %v2202
  %v2509 = vunpack.c.h.b16 %v2202
  %v2510 = vunpack.c.l.b16 %v2203
  %v2511 = vunpack.c.h.b16 %v2203
  %v2512 = vunpack.c.l.b16 %v2204
  %v2513 = vunpack.c.h.b16 %v2204
  %v2514 = vunpack.c.l.b16 %v2205
  %v2515 = vunpack.c.h.b16 %v2205
  %v2516 = vunpack.c.l.b16 %v2206
  %v2517 = vunpack.c.h.b16 %v2206
  %v2518 = vunpack.c.l.b16 %v2207
  %v2519 = vunpack.c.h.b16 %v2207
  %v2520 = vunpack.c.l.b16 %v2208
  %v2521 = vunpack.c.h.b16 %v2208
  %v2522 = vunpack.c.l.b16 %v2209
  %v2523 = vunpack.c.h.b16 %v2209
  %v2524 = vunpack.c.l.b16 %v2210
  %v2525 = vunpack.c.h.b16 %v2210
  %v2526 = vunpack.c.l.b16 %v2211
  %v2527 = vunpack.c.h.b16 %v2211
  %v2528 = vunpack.c.l.b16 %v2212
  %v2529 = vunpack.c.h.b16 %v2212
  %v2530 = vunpack.c.l.b16 %v2213
  %v2531 = vunpack.c.h.b16 %v2213
  %v2532 = vunpack.c.l.b16 %v2214
  %v2533 = vunpack.c.h.b16 %v2214
  %v2534 = vunpack.c.l.b16 %v2215
  %v2535 = vunpack.c.h.b16 %v2215
  %v2536 = vunpack.c.l.b16 %v2216
  %v2537 = vunpack.c.h.b16 %v2216
  %v2538 = vunpack.c.l.b16 %v2217
  %v2539 = vunpack.c.h.b16 %v2217
  %v2540 = vunpack.c.l.b16 %v2218
  %v2541 = vunpack.c.h.b16 %v2218
  %v2542 = vunpack.c.l.b16 %v2219
  %v2543 = vunpack.c.h.b16 %v2219
  %v2544 = vunpack.c.l.b16 %v2220
  %v2545 = vunpack.c.h.b16 %v2220
  %v2546 = vunpack.c.l.b16 %v2221
  %v2547 = vunpack.c.h.b16 %v2221
  %v2548 = vunpack.c.l.b16 %v2222
  %v2549 = vunpack.c.h.b16 %v2222
  %v2550 = vunpack.c.l.b16 %v2223
  %v2551 = vunpack.c.h.b16 %v2223
  %v2552 = vunpack.c.l.b16 %v2224
  %v2553 = vunpack.c.h.b16 %v2224
  %v2554 = vunpack.c.l.b16 %v2225
  %v2555 = vunpack.c.h.b16 %v2225
  %v2556 = vunpack.c.l.b16 %v2226
  %v2557 = vunpack.c.h.b16 %v2226
  %v2558 = vunpack.c.l.b16 %v2227
  %v2559 = vunpack.c.h.b16 %v2227
  %v2560 = vunpack.c.l.b16 %v2228
  %v2561 = vunpack.c.h.b16 %v2228
  %v2562 = vunpack.c.l.b16 %v2229
  %v2563 = vunpack.c.h.b16 %v2229
  %v2564 = vunpack.c.l.b16 %v2230
  %v2565 = vunpack.c.h.b16 %v2230
  %v2566 = vunpack.c.l.b16 %v2231
  %v2567 = vunpack.c.h.b16 %v2231
  %v2568 = vunpack.c.l.b16 %v2232
  %v2569 = vunpack.c.h.b16 %v2232
  %v2570 = vunpack.c.l.b16 %v2233
  %v2571 = vunpack.c.h.b16 %v2233
  %v2572 = vunpack.c.l.b16 %v2234
  %v2573 = vunpack.c.h.b16 %v2234
  %v2574 = vunpack.c.l.b16 %v2235
  %v2575 = vunpack.c.h.b16 %v2235
  %v2576 = vunpack.c.l.b16 %v2236
  %v2577 = vunpack.c.h.b16 %v2236
  %v2578 = vunpack.c.l.b16 %v2237
  %v2579 = vunpack.c.h.b16 %v2237
  %v2580 = vunpack.c.l.b16 %v2238
  %v2581 = vunpack.c.h.b16 %v2238
  %v2582 = vunpack.c.l.b16 %v2239
  %v2583 = vunpack.c.h.b16 %v2239
  %v2584 = vunpack.c.l.b16 %v2240
  %v2585 = vunpack.c.h.b16 %v2240
  %v2586 = vunpack.c.l.b16 %v2241
  %v2587 = vunpack.c.h.b16 %v2241
  %v2588 = vunpack.c.l.b16 %v2242
  %v2589 = vunpack.c.h.b16 %v2242
  %v2590 = vunpack.c.l.b16 %v2243
  %v2591 = vunpack.c.h.b16 %v2243
  %v2592 = vunpack.c.l.b16 %v2244
  %v2593 = vunpack.c.h.b16 %v2244
  %v2594 = vunpack.c.l.b16 %v2245
  %v2595 = vunpack.c.h.b16 %v2245
  %v2596 = vunpack.c.l.b16 %v2246
  %v2597 = vunpack.c.h.b16 %v2246
  %v2598 = vunpack.c.l.b16 %v2247
  %v2599 = vunpack.c.h.b16 %v2247
  %v2600 = vunpack.c.l.b16 %v2248
  %v2601 = vunpack.c.h.b16 %v2248
  %v2602 = vunpack.c.l.b16 %v2249
  %v2603 = vunpack.c.h.b16 %v2249
  %v2604 = vunpack.c.l.b16 %v2250
  %v2605 = vunpack.c.h.b16 %v2250
  %v2606 = vunpack.c.l.b16 %v2251
  %v2607 = vunpack.c.h.b16 %v2251
  %v2608 = vunpack.c.l.b16 %v2252
  %v2609 = vunpack.c.h.b16 %v2252
  %v2610 = vunpack.c.l.b16 %v2253
  %v2611 = vunpack.c.h.b16 %v2253
  %v2612 = vunpack.c.l.b16 %v2254
  %v2613 = vunpack.c.h.b16 %v2254
  %v2614 = vunpack.c.l.b16 %v2255
  %v2615 = vunpack.c.h.b16 %v2255
  %v2616 = vunpack.c.l.b16 %v2256
  %v2617 = vunpack.c.h.b16 %v2256
  %v2618 = vunpack.c.l.b16 %v2257
  %v2619 = vunpack.c.h.b16 %v2257
  %v2620 = vunpack.c.l.b16 %v2258
  %v2621 = vunpack.c.h.b16 %v2258
  %v2622 = vunpack.c.l.b16 %v2259
  %v2623 = vunpack.c.h.b16 %v2259
  %v2624 = vunpack.c.l.b16 %v2260
  %v2625 = vunpack.c.h.b16 %v2260
  %v2626 = vunpack.c.l.b16 %v2261
  %v2627 = vunpack.c.h.b16 %v2261
  %v2628 = vunpack.c.l.b16 %v2262
  %v2629 = vunpack.c.h.b16 %v2262
  %v2630 = vunpack.c.l.b16 %v2263
  %v2631 = vunpack.c.h.b16 %v2263
  %v2632 = vunpack.c.l.b16 %v2264
  %v2633 = vunpack.c.h.b16 %v2264
  %v2634 = vunpack.c.l.b16 %v2265
  %v2635 = vunpack.c.h.b16 %v2265
  %v2636 = vunpack.c.l.b16 %v2266
  %v2637 = vunpack.c.h.b16 %v2266
  %v2638 = vunpack.c.l.b16 %v2267
  %v2639 = vunpack.c.h.b16 %v2267
  %v2640 = vunpack.c.l.b16 %v2268
  %v2641 = vunpack.c.h.b16 %v2268
  %v2642 = vunpack.c.l.b16 %v2269
  %v2643 = vunpack.c.h.b16 %v2269
  %v2644 = vunpack.c.l.b16 %v2270
  %v2645 = vunpack.c.h.b16 %v2270
  %v2646 = vunpack.c.l.b16 %v2271
  %v2647 = vunpack.c.h.b16 %v2271
  %v2648 = vunpack.c.l.b16 %v2272
  %v2649 = vunpack.c.h.b16 %v2272
  %v2650 = vunpack.c.l.b16 %v2273
  %v2651 = vunpack.c.h.b16 %v2273
  %v2652 = vunpack.c.l.b16 %v2274
  %v2653 = vunpack.c.h.b16 %v2274
  %v2654 = vunpack.c.l.b16 %v2275
  %v2655 = vunpack.c.h.b16 %v2275
  %v2656 = vunpack.c.l.b16 %v2276
  %v2657 = vunpack.c.h.b16 %v2276
  %v2658 = vunpack.c.l.b16 %v2277
  %v2659 = vunpack.c.h.b16 %v2277
  %v2660 = vunpack.c.l.b16 %v2278
  %v2661 = vunpack.c.h.b16 %v2278
  %v2662 = vunpack.c.l.b16 %v2279
  %v2663 = vunpack.c.h.b16 %v2279
  %v2664 = vpack.c.b16 %v2416, %v2408
  %v2665 = vpack.c.b16 %v2417, %v2409
  %v2666 = vpack.c.b16 %v2418, %v2410
  %v2667 = vpack.c.b16 %v2419, %v2411
  %v2668 = vpack.c.b16 %v2420, %v2412
  %v2669 = vpack.c.b16 %v2421, %v2413
  %v2670 = vpack.c.b16 %v2422, %v2414
  %v2671 = vpack.c.b16 %v2423, %v2415
  %v2672 = vpack.c.b16 %v2432, %v2424
  %v2673 = vpack.c.b16 %v2433, %v2425
  %v2674 = vpack.c.b16 %v2434, %v2426
  %v2675 = vpack.c.b16 %v2435, %v2427
  %v2676 = vpack.c.b16 %v2436, %v2428
  %v2677 = vpack.c.b16 %v2437, %v2429
  %v2678 = vpack.c.b16 %v2438, %v2430
  %v2679 = vpack.c.b16 %v2439, %v2431
  %v2680 = vpack.c.b16 %v2448, %v2440
  %v2681 = vpack.c.b16 %v2449, %v2441
  %v2682 = vpack.c.b16 %v2450, %v2442
  %v2683 = vpack.c.b16 %v2451, %v2443
  %v2684 = vpack.c.b16 %v2452, %v2444
  %v2685 = vpack.c.b16 %v2453, %v2445
  %v2686 = vpack.c.b16 %v2454, %v2446
  %v2687 = vpack.c.b16 %v2455, %v2447
  %v2688 = vpack.c.b16 %v2464, %v2456
  %v2689 = vpack.c.b16 %v2465, %v2457
  %v2690 = vpack.c.b16 %v2466, %v2458
  %v2691 = vpack.c.b16 %v2467, %v2459
  %v2692 = vpack.c.b16 %v2468, %v2460
  %v2693 = vpack.c.b16 %v2469, %v2461
  %v2694 = vpack.c.b16 %v2470, %v2462
  %v2695 = vpack.c.b16 %v2471, %v2463
  %v2696 = vpack.c.b16 %v2480, %v2472
  %v2697 = vpack.c.b16 %v2481, %v2473
  %v2698 = vpack.c.b16 %v2482, %v2474
  %v2699 = vpack.c.b16 %v2483, %v2475
  %v2700 = vpack.c.b16 %v2484, %v2476
  %v2701 = vpack.c.b16 %v2485, %v2477
  %v2702 = vpack.c.b16 %v2486, %v2478
  %v2703 = vpack.c.b16 %v2487, %v2479
  %v2704 = vpack.c.b16 %v2496, %v2488
  %v2705 = vpack.c.b16 %v2497, %v2489
  %v2706 = vpack.c.b16 %v2498, %v2490
  %v2707 = vpack.c.b16 %v2499, %v2491
  %v2708 = vpack.c.b16 %v2500, %v2492
  %v2709 = vpack.c.b16 %v2501, %v2493
  %v2710 = vpack.c.b16 %v2502, %v2494
  %v2711 = vpack.c.b16 %v2503, %v2495
  %v2712 = vpack.c.b16 %v2512, %v2504
  %v2713 = vpack.c.b16 %v2513, %v2505
  %v2714 = vpack.c.b16 %v2514, %v2506
  %v2715 = vpack.c.b16 %v2515, %v2507
  %v2716 = vpack.c.b16 %v2516, %v2508
  %v2717 = vpack.c.b16 %v2517, %v2509
  %v2718 = vpack.c.b16 %v2518, %v2510
  %v2719 = vpack.c.b16 %v2519, %v2511
  %v2720 = vpack.c.b16 %v2528, %v2520
  %v2721 = vpack.c.b16 %v2529, %v2521
  %v2722 = vpack.c.b16 %v2530, %v2522
  %v2723 = vpack.c.b16 %v2531, %v2523
  %v2724 = vpack.c.b16 %v2532, %v2524
  %v2725 = vpack.c.b16 %v2533, %v2525
  %v2726 = vpack.c.b16 %v2534, %v2526
  %v2727 = vpack.c.b16 %v2535, %v2527
  %v2728 = vpack.c.b16 %v2544, %v2536
  %v2729 = vpack.c.b16 %v2545, %v2537
  %v2730 = vpack.c.b16 %v2546, %v2538
  %v2731 = vpack.c.b16 %v2547, %v2539
  %v2732 = vpack.c.b16 %v2548, %v2540
  %v2733 = vpack.c.b16 %v2549, %v2541
  %v2734 = vpack.c.b16 %v2550, %v2542
  %v2735 = vpack.c.b16 %v2551, %v2543
  %v2736 = vpack.c.b16 %v2560, %v2552
  %v2737 = vpack.c.b16 %v2561, %v2553
  %v2738 = vpack.c.b16 %v2562, %v2554
  %v2739 = vpack.c.b16 %v2563, %v2555
  %v2740 = vpack.c.b16 %v2564, %v2556
  %v2741 = vpack.c.b16 %v2565, %v2557
  %v2742 = vpack.c.b16 %v2566, %v2558
  %v2743 = vpack.c.b16 %v2567, %v2559
  %v2744 = vpack.c.b16 %v2576, %v2568
  %v2745 = vpack.c.b16 %v2577, %v2569
  %v2746 = vpack.c.b16 %v2578, %v2570
  %v2747 = vpack.c.b16 %v2579, %v2571
  %v2748 = vpack.c.b16 %v2580, %v2572
  %v2749 = vpack.c.b16 %v2581, %v2573
  %v2750 = vpack.c.b16 %v2582, %v2574
  %v2751 = vpack.c.b16 %v2583, %v2575
  %v2752 = vpack.c.b16 %v2592, %v2584
  %v2753 = vpack.c.b16 %v2593, %v2585
  %v2754 = vpack.c.b16 %v2594, %v2586
  %v2755 = vpack.c.b16 %v2595, %v2587
  %v2756 = vpack.c.b16 %v2596, %v2588
  %v2757 = vpack.c.b16 %v2597, %v2589
  %v2758 = vpack.c.b16 %v2598, %v2590
  %v2759 = vpack.c.b16 %v2599, %v2591
  %v2760 = vpack.c.b16 %v2608, %v2600
  %v2761 = vpack.c.b16 %v2609, %v2601
  %v2762 = vpack.c.b16 %v2610, %v2602
  %v2763 = vpack.c.b16 %v2611, %v2603
  %v2764 = vpack.c.b16 %v2612, %v2604
  %v2765 = vpack.c.b16 %v2613, %v2605
  %v2766 = vpack.c.b16 %v2614, %v2606
  %v2767 = vpack.c.b16 %v2615, %v2607
  %v2768 = vpack.c.b16 %v2624, %v2616
  %v2769 = vpack.c.b16 %v2625, %v2617
  %v2770 = vpack.c.b16 %v2626, %v2618
  %v2771 = vpack.c.b16 %v2627, %v2619
  %v2772 = vpack.c.b16 %v2628, %v2620
  %v2773 = vpack.c.b16 %v2629, %v2621
  %v2774 = vpack.c.b16 %v2630, %v2622
  %v2775 = vpack.c.b16 %v2631, %v2623
  %v2776 = vpack.c.b16 %v2640, %v2632
  %v2777 = vpack.c.b16 %v2641, %v2633
  %v2778 = vpack.c.b16 %v2642, %v2634
  %v2779 = vpack.c.b16 %v2643, %v2635
  %v2780 = vpack.c.b16 %v2644, %v2636
  %v2781 = vpack.c.b16 %v2645, %v2637
  %v2782 = vpack.c.b16 %v2646, %v2638
  %v2783 = vpack.c.b16 %v2647, %v2639
  %v2784 = vpack.c.b16 %v2656, %v2648
  %v2785 = vpack.c.b16 %v2657, %v2649
  %v2786 = vpack.c.b16 %v2658, %v2650
  %v2787 = vpack.c.b16 %v2659, %v2651
  %v2788 = vpack.c.b16 %v2660, %v2652
  %v2789 = vpack.c.b16 %v2661, %v2653
  %v2790 = vpack.c.b16 %v2662, %v2654
  %v2791 = vpack.c.b16 %v2663, %v2655
  %2920 = vmatprep.subr.bf16.mxu0 %v2665
  %2921 = vmatpush1.bf16.msra.mxu0 %v2664
  %2922 = vmatprep.subr.bf16.mxu0 %v2673
  %2923 = vmatpush1.bf16.msra.mxu0 %v2672
  %2924 = vmatprep.subr.bf16.mxu0 %v2681
  %2925 = vmatpush1.bf16.msra.mxu0 %v2680
  %2926 = vmatprep.subr.bf16.mxu0 %v2689
  %2927 = vmatpush1.bf16.msra.mxu0 %v2688
  %2928 = vmatprep.subr.bf16.mxu0 %v2697
  %2929 = vmatpush1.bf16.msra.mxu0 %v2696
  %2930 = vmatprep.subr.bf16.mxu0 %v2705
  %2931 = vmatpush1.bf16.msra.mxu0 %v2704
  %2932 = vmatprep.subr.bf16.mxu0 %v2713
  %2933 = vmatpush1.bf16.msra.mxu0 %v2712
  %2934 = vmatprep.subr.bf16.mxu0 %v2721
  %2935 = vmatpush1.bf16.msra.mxu0 %v2720
  %2936 = vmatprep.subr.bf16.mxu0 %v2729
  %2937 = vmatpush1.bf16.msra.mxu0 %v2728
  %2938 = vmatprep.subr.bf16.mxu0 %v2737
  %2939 = vmatpush1.bf16.msra.mxu0 %v2736
  %2940 = vmatprep.subr.bf16.mxu0 %v2745
  %2941 = vmatpush1.bf16.msra.mxu0 %v2744
  %2942 = vmatprep.subr.bf16.mxu0 %v2753
  %2943 = vmatpush1.bf16.msra.mxu0 %v2752
  %2944 = vmatprep.subr.bf16.mxu0 %v2761
  %2945 = vmatpush1.bf16.msra.mxu0 %v2760
  %2946 = vmatprep.subr.bf16.mxu0 %v2769
  %2947 = vmatpush1.bf16.msra.mxu0 %v2768
  %2948 = vmatprep.subr.bf16.mxu0 %v2777
  %2949 = vmatpush1.bf16.msra.mxu0 %v2776
  %2950 = vmatprep.subr.bf16.mxu0 %v2785
  %2951 = vmatpush1.bf16.msra.mxu0 %v2784
  %2952 = vmatprep.mubr.bf16.mxu0 %v2151
  %2953 = vmatmul.mubr.bf16.gmra.mrb[0].mxu0 %v2150
  %v2954 = vpop.f32.mrb[0].mxu0
  %v2955 = vadd.f32 0.0, %v2954
  %v2956 = vpop.f32.mrb[0].mxu0
  %v2957 = vadd.f32 0.0, %v2956
  %v2958 = vpop.f32.mrb[0].mxu0
  %v2959 = vpop.f32.mrb[0].mxu0
  %2960 = vdwg.mxu0
  %2961 = vmatprep.subr.bf16.mxu0 %v2667
  %2962 = vmatpush1.bf16.msra.mxu0 %v2666
  %2963 = vmatprep.subr.bf16.mxu0 %v2675
  %2964 = vmatpush1.bf16.msra.mxu0 %v2674
  %2965 = vmatprep.subr.bf16.mxu0 %v2683
  %2966 = vmatpush1.bf16.msra.mxu0 %v2682
  %2967 = vmatprep.subr.bf16.mxu0 %v2691
  %2968 = vmatpush1.bf16.msra.mxu0 %v2690
  %2969 = vmatprep.subr.bf16.mxu0 %v2699
  %2970 = vmatpush1.bf16.msra.mxu0 %v2698
  %2971 = vmatprep.subr.bf16.mxu0 %v2707
  %2972 = vmatpush1.bf16.msra.mxu0 %v2706
  %2973 = vmatprep.subr.bf16.mxu0 %v2715
  %2974 = vmatpush1.bf16.msra.mxu0 %v2714
  %2975 = vmatprep.subr.bf16.mxu0 %v2723
  %2976 = vmatpush1.bf16.msra.mxu0 %v2722
  %2977 = vmatprep.subr.bf16.mxu0 %v2731
  %2978 = vmatpush1.bf16.msra.mxu0 %v2730
  %2979 = vmatprep.subr.bf16.mxu0 %v2739
  %2980 = vmatpush1.bf16.msra.mxu0 %v2738
  %2981 = vmatprep.subr.bf16.mxu0 %v2747
  %2982 = vmatpush1.bf16.msra.mxu0 %v2746
  %2983 = vmatprep.subr.bf16.mxu0 %v2755
  %2984 = vmatpush1.bf16.msra.mxu0 %v2754
  %2985 = vmatprep.subr.bf16.mxu0 %v2763
  %2986 = vmatpush1.bf16.msra.mxu0 %v2762
  %2987 = vmatprep.subr.bf16.mxu0 %v2771
  %2988 = vmatpush1.bf16.msra.mxu0 %v2770
  %2989 = vmatprep.subr.bf16.mxu0 %v2779
  %2990 = vmatpush1.bf16.msra.mxu0 %v2778
  %2991 = vmatprep.subr.bf16.mxu0 %v2787
  %2992 = vmatpush1.bf16.msra.mxu0 %v2786
  %2993 = vmatprep.mubr.bf16.mxu0 %v2151
  %2994 = vmatmul.mubr.bf16.gmra.mrb[0].mxu0 %v2150
  %v2995 = vpop.f32.mrb[0].mxu0
  %v2996 = vadd.f32 0.0, %v2995
  %v2997 = vpop.f32.mrb[0].mxu0
  %v2998 = vadd.f32 0.0, %v2997
  %v2999 = vpop.f32.mrb[0].mxu0
  %v3000 = vpop.f32.mrb[0].mxu0
  %3001 = vdwg.mxu0
  %3002 = vmatprep.subr.bf16.mxu0 %v2669
  %3003 = vmatpush1.bf16.msra.mxu0 %v2668
  %3004 = vmatprep.subr.bf16.mxu0 %v2677
  %3005 = vmatpush1.bf16.msra.mxu0 %v2676
  %3006 = vmatprep.subr.bf16.mxu0 %v2685
  %3007 = vmatpush1.bf16.msra.mxu0 %v2684
  %3008 = vmatprep.subr.bf16.mxu0 %v2693
  %3009 = vmatpush1.bf16.msra.mxu0 %v2692
  %3010 = vmatprep.subr.bf16.mxu0 %v2701
  %3011 = vmatpush1.bf16.msra.mxu0 %v2700
  %3012 = vmatprep.subr.bf16.mxu0 %v2709
  %3013 = vmatpush1.bf16.msra.mxu0 %v2708
  %3014 = vmatprep.subr.bf16.mxu0 %v2717
  %3015 = vmatpush1.bf16.msra.mxu0 %v2716
  %3016 = vmatprep.subr.bf16.mxu0 %v2725
  %3017 = vmatpush1.bf16.msra.mxu0 %v2724
  %3018 = vmatprep.subr.bf16.mxu0 %v2733
  %3019 = vmatpush1.bf16.msra.mxu0 %v2732
  %3020 = vmatprep.subr.bf16.mxu0 %v2741
  %3021 = vmatpush1.bf16.msra.mxu0 %v2740
  %3022 = vmatprep.subr.bf16.mxu0 %v2749
  %3023 = vmatpush1.bf16.msra.mxu0 %v2748
  %3024 = vmatprep.subr.bf16.mxu0 %v2757
  %3025 = vmatpush1.bf16.msra.mxu0 %v2756
  %3026 = vmatprep.subr.bf16.mxu0 %v2765
  %3027 = vmatpush1.bf16.msra.mxu0 %v2764
  %3028 = vmatprep.subr.bf16.mxu0 %v2773
  %3029 = vmatpush1.bf16.msra.mxu0 %v2772
  %3030 = vmatprep.subr.bf16.mxu0 %v2781
  %3031 = vmatpush1.bf16.msra.mxu0 %v2780
  %3032 = vmatprep.subr.bf16.mxu0 %v2789
  %3033 = vmatpush1.bf16.msra.mxu0 %v2788
  %3034 = vmatprep.mubr.bf16.mxu0 %v2151
  %3035 = vmatmul.mubr.bf16.gmra.mrb[0].mxu0 %v2150
  %v3036 = vpop.f32.mrb[0].mxu0
  %v3037 = vadd.f32 0.0, %v3036
  %v3038 = vpop.f32.mrb[0].mxu0
  %v3039 = vadd.f32 0.0, %v3038
  %v3040 = vpop.f32.mrb[0].mxu0
  %v3041 = vpop.f32.mrb[0].mxu0
  %3042 = vdwg.mxu0
  %3043 = vmatprep.subr.bf16.mxu0 %v2671
  %3044 = vmatpush1.bf16.msra.mxu0 %v2670
  %3045 = vmatprep.subr.bf16.mxu0 %v2679
  %3046 = vmatpush1.bf16.msra.mxu0 %v2678
  %3047 = vmatprep.subr.bf16.mxu0 %v2687
  %3048 = vmatpush1.bf16.msra.mxu0 %v2686
  %3049 = vmatprep.subr.bf16.mxu0 %v2695
  %3050 = vmatpush1.bf16.msra.mxu0 %v2694
  %3051 = vmatprep.subr.bf16.mxu0 %v2703
  %3052 = vmatpush1.bf16.msra.mxu0 %v2702
  %3053 = vmatprep.subr.bf16.mxu0 %v2711
  %3054 = vmatpush1.bf16.msra.mxu0 %v2710
  %3055 = vmatprep.subr.bf16.mxu0 %v2719
  %3056 = vmatpush1.bf16.msra.mxu0 %v2718
  %3057 = vmatprep.subr.bf16.mxu0 %v2727
  %3058 = vmatpush1.bf16.msra.mxu0 %v2726
  %3059 = vmatprep.subr.bf16.mxu0 %v2735
  %3060 = vmatpush1.bf16.msra.mxu0 %v2734
  %3061 = vmatprep.subr.bf16.mxu0 %v2743
  %3062 = vmatpush1.bf16.msra.mxu0 %v2742
  %3063 = vmatprep.subr.bf16.mxu0 %v2751
  %3064 = vmatpush1.bf16.msra.mxu0 %v2750
  %3065 = vmatprep.subr.bf16.mxu0 %v2759
  %3066 = vmatpush1.bf16.msra.mxu0 %v2758
  %3067 = vmatprep.subr.bf16.mxu0 %v2767
  %3068 = vmatpush1.bf16.msra.mxu0 %v2766
  %3069 = vmatprep.subr.bf16.mxu0 %v2775
  %3070 = vmatpush1.bf16.msra.mxu0 %v2774
  %3071 = vmatprep.subr.bf16.mxu0 %v2783
  %3072 = vmatpush1.bf16.msra.mxu0 %v2782
  %3073 = vmatprep.subr.bf16.mxu0 %v2791
  %3074 = vmatpush1.bf16.msra.mxu0 %v2790
  %3075 = vmatprep.mubr.bf16.mxu0 %v2151
  %3076 = vmatmul.mubr.bf16.gmra.mrb[0].mxu0 %v2150
  %v3077 = vpop.f32.mrb[0].mxu0
  %v3078 = vadd.f32 0.0, %v3077
  %v3079 = vpop.f32.mrb[0].mxu0
  %v3080 = vadd.f32 0.0, %v3079
  %v3081 = vpop.f32.mrb[0].mxu0
  %v3082 = vpop.f32.mrb[0].mxu0
  %3083 = vdwg.mxu0
  %v3084 = vadd.f32 %v2142, %v2955
  %v3085 = vadd.f32 %v2143, %v2957
  %v3086 = vadd.f32 %v2144, %v2996
  %v3087 = vadd.f32 %v2145, %v2998
  %v3088 = vadd.f32 %v2146, %v3037
  %v3089 = vadd.f32 %v2147, %v3039
  %v3090 = vadd.f32 %v2148, %v3078
  %v3091 = vadd.f32 %v2149, %v3080
  %v3092 = vxor.u32 %v3084, 2147483648
  %v3093 = vxor.u32 %v3085, 2147483648
  %v3094 = vmul.f32 %v3092, 1.442695
  %v3095 = vpow.pop %v3094
  %v3096 = vmul.f32 %v3093, 1.442695
  %v3097 = vpow.pop %v3096
  %v3098 = vadd.f32 %v3095, 1.0
  %v3099 = vadd.f32 %v3097, 1.0
  %v3100 = vrcp.pop %v3098
  %v3101 = vmul.f32 1.0, %v3100
  %v3102 = vrcp.pop %v3099
  %v3103 = vmul.f32 1.0, %v3102
  %v3104 = vxor.u32 %v3086, 2147483648
  %v3105 = vxor.u32 %v3087, 2147483648
  %v3106 = vmul.f32 %v3104, 1.442695
  %v3107 = vpow.pop %v3106
  %v3108 = vmul.f32 %v3105, 1.442695
  %v3109 = vpow.pop %v3108
  %v3110 = vadd.f32 %v3107, 1.0
  %v3111 = vadd.f32 %v3109, 1.0
  %v3112 = vrcp.pop %v3110
  %v3113 = vmul.f32 1.0, %v3112
  %v3114 = vrcp.pop %v3111
  %v3115 = vmul.f32 1.0, %v3114
  %v3116 = vtanh.pop %v3088
  %v3117 = vtanh.pop %v3089
  %v3118 = vxor.u32 %v3090, 2147483648
  %v3119 = vxor.u32 %v3091, 2147483648
  %v3120 = vmul.f32 %v3118, 1.442695
  %v3121 = vpow.pop %v3120
  %v3122 = vmul.f32 %v3119, 1.442695
  %v3123 = vpow.pop %v3122
  %v3124 = vadd.f32 %v3121, 1.0
  %v3125 = vadd.f32 %v3123, 1.0
  %v3126 = vrcp.pop %v3124
  %v3127 = vmul.f32 1.0, %v3126
  %v3128 = vrcp.pop %v3125
  %v3129 = vmul.f32 1.0, %v3128
  %v3130 = vmul.f32 %v3113, %v2118
  %v3131 = vmul.f32 %v3115, %v2119
  %v3132 = vmul.f32 %v3101, %v3116
  %v3133 = vmul.f32 %v3103, %v3117
  %v3134 = vadd.f32 %v3130, %v3132
  %v3135 = vadd.f32 %v3131, %v3133
  %v3136 = vtanh.pop %v3134
  %v3137 = vtanh.pop %v3135
  %v3138 = vmul.f32 %v3127, %v3136
  %v3139 = vmul.f32 %v3129, %v3137
  %3140 = vst [vmem:[#allocation3 + $0x10] sm:$0xff] %v3138
  %3141 = vst [vmem:[#allocation3 + $0x68] sm:$0xff] %v3139
  %v3142 = vld [vmem:[#allocation2 + $0x80] sm:$0xff]
  %v3143 = vld [vmem:[#allocation2 + $0x88] sm:$0xff]
  %v3144 = vld [vmem:[#allocation2 + $0x90] sm:$0xff]
  %v3145 = vld [vmem:[#allocation2 + $0x98] sm:$0xff]
  %v3146 = vld [vmem:[#allocation2 + $0xa0] sm:$0xff]
  %v3147 = vld [vmem:[#allocation2 + $0xa8] sm:$0xff]
  %v3148 = vld [vmem:[#allocation2 + $0xb0] sm:$0xff]
  %v3149 = vld [vmem:[#allocation2 + $0xb8] sm:$0xff]
  %v3150 = vld [vmem:[#allocation2 + $0x140] sm:$0xff]
  %v3151 = vld [vmem:[#allocation2 + $0x148] sm:$0xff]
  %v3152 = vld [vmem:[#allocation2 + $0x150] sm:$0xff]
  %v3153 = vld [vmem:[#allocation2 + $0x158] sm:$0xff]
  %v3154 = vld [vmem:[#allocation2 + $0x160] sm:$0xff]
  %v3155 = vld [vmem:[#allocation2 + $0x168] sm:$0xff]
  %v3156 = vld [vmem:[#allocation2 + $0x170] sm:$0xff]
  %v3157 = vld [vmem:[#allocation2 + $0x178] sm:$0xff]
  %v3158 = vsel %vm318, %v3142, %v3150
  %v3159 = vsel %vm319, %v3143, %v3151
  %v3160 = vsel %vm320, %v3144, %v3152
  %v3161 = vsel %vm321, %v3145, %v3153
  %v3162 = vsel %vm322, %v3146, %v3154
  %v3163 = vsel %vm323, %v3147, %v3155
  %v3164 = vsel %vm324, %v3148, %v3156
  %v3165 = vsel %vm325, %v3149, %v3157
  %v3166 = vpack.c.bf16 %v3138, %v3138
  %v3167 = vpack.c.bf16 %v3139, %v3139
  %v3168 = vld [vmem:[%s4] sm:$0xff]
  %v3169 = vld [vmem:[%s4 + $0x8] sm:$0xff]
  %v3170 = vld [vmem:[%s4 + $0x10] sm:$0xff]
  %v3171 = vld [vmem:[%s4 + $0x18] sm:$0xff]
  %v3172 = vld [vmem:[%s4 + $0x20] sm:$0xff]
  %v3173 = vld [vmem:[%s4 + $0x28] sm:$0xff]
  %v3174 = vld [vmem:[%s4 + $0x30] sm:$0xff]
  %v3175 = vld [vmem:[%s4 + $0x38] sm:$0xff]
  %v3176 = vld [vmem:[%s4 + $0x40] sm:$0xff]
  %v3177 = vld [vmem:[%s4 + $0x48] sm:$0xff]
  %v3178 = vld [vmem:[%s4 + $0x50] sm:$0xff]
  %v3179 = vld [vmem:[%s4 + $0x58] sm:$0xff]
  %v3180 = vld [vmem:[%s4 + $0x60] sm:$0xff]
  %v3181 = vld [vmem:[%s4 + $0x68] sm:$0xff]
  %v3182 = vld [vmem:[%s4 + $0x70] sm:$0xff]
  %v3183 = vld [vmem:[%s4 + $0x78] sm:$0xff]
  %v3184 = vld [vmem:[%s4 + $0x80] sm:$0xff]
  %v3185 = vld [vmem:[%s4 + $0x88] sm:$0xff]
  %v3186 = vld [vmem:[%s4 + $0x90] sm:$0xff]
  %v3187 = vld [vmem:[%s4 + $0x98] sm:$0xff]
  %v3188 = vld [vmem:[%s4 + $0xa0] sm:$0xff]
  %v3189 = vld [vmem:[%s4 + $0xa8] sm:$0xff]
  %v3190 = vld [vmem:[%s4 + $0xb0] sm:$0xff]
  %v3191 = vld [vmem:[%s4 + $0xb8] sm:$0xff]
  %v3192 = vld [vmem:[%s4 + $0xc0] sm:$0xff]
  %v3193 = vld [vmem:[%s4 + $0xc8] sm:$0xff]
  %v3194 = vld [vmem:[%s4 + $0xd0] sm:$0xff]
  %v3195 = vld [vmem:[%s4 + $0xd8] sm:$0xff]
  %v3196 = vld [vmem:[%s4 + $0xe0] sm:$0xff]
  %v3197 = vld [vmem:[%s4 + $0xe8] sm:$0xff]
  %v3198 = vld [vmem:[%s4 + $0xf0] sm:$0xff]
  %v3199 = vld [vmem:[%s4 + $0xf8] sm:$0xff]
  %v3200 = vld [vmem:[%s4 + $0x100] sm:$0xff]
  %v3201 = vld [vmem:[%s4 + $0x108] sm:$0xff]
  %v3202 = vld [vmem:[%s4 + $0x110] sm:$0xff]
  %v3203 = vld [vmem:[%s4 + $0x118] sm:$0xff]
  %v3204 = vld [vmem:[%s4 + $0x120] sm:$0xff]
  %v3205 = vld [vmem:[%s4 + $0x128] sm:$0xff]
  %v3206 = vld [vmem:[%s4 + $0x130] sm:$0xff]
  %v3207 = vld [vmem:[%s4 + $0x138] sm:$0xff]
  %v3208 = vld [vmem:[%s4 + $0x140] sm:$0xff]
  %v3209 = vld [vmem:[%s4 + $0x148] sm:$0xff]
  %v3210 = vld [vmem:[%s4 + $0x150] sm:$0xff]
  %v3211 = vld [vmem:[%s4 + $0x158] sm:$0xff]
  %v3212 = vld [vmem:[%s4 + $0x160] sm:$0xff]
  %v3213 = vld [vmem:[%s4 + $0x168] sm:$0xff]
  %v3214 = vld [vmem:[%s4 + $0x170] sm:$0xff]
  %v3215 = vld [vmem:[%s4 + $0x178] sm:$0xff]
  %v3216 = vld [vmem:[%s4 + $0x180] sm:$0xff]
  %v3217 = vld [vmem:[%s4 + $0x188] sm:$0xff]
  %v3218 = vld [vmem:[%s4 + $0x190] sm:$0xff]
  %v3219 = vld [vmem:[%s4 + $0x198] sm:$0xff]
  %v3220 = vld [vmem:[%s4 + $0x1a0] sm:$0xff]
  %v3221 = vld [vmem:[%s4 + $0x1a8] sm:$0xff]
  %v3222 = vld [vmem:[%s4 + $0x1b0] sm:$0xff]
  %v3223 = vld [vmem:[%s4 + $0x1b8] sm:$0xff]
  %v3224 = vld [vmem:[%s4 + $0x1c0] sm:$0xff]
  %v3225 = vld [vmem:[%s4 + $0x1c8] sm:$0xff]
  %v3226 = vld [vmem:[%s4 + $0x1d0] sm:$0xff]
  %v3227 = vld [vmem:[%s4 + $0x1d8] sm:$0xff]
  %v3228 = vld [vmem:[%s4 + $0x1e0] sm:$0xff]
  %v3229 = vld [vmem:[%s4 + $0x1e8] sm:$0xff]
  %v3230 = vld [vmem:[%s4 + $0x1f0] sm:$0xff]
  %v3231 = vld [vmem:[%s4 + $0x1f8] sm:$0xff]
  %v3232 = vld [vmem:[%s4 + $0x200] sm:$0xff]
  %v3233 = vld [vmem:[%s4 + $0x208] sm:$0xff]
  %v3234 = vld [vmem:[%s4 + $0x210] sm:$0xff]
  %v3235 = vld [vmem:[%s4 + $0x218] sm:$0xff]
  %v3236 = vld [vmem:[%s4 + $0x220] sm:$0xff]
  %v3237 = vld [vmem:[%s4 + $0x228] sm:$0xff]
  %v3238 = vld [vmem:[%s4 + $0x230] sm:$0xff]
  %v3239 = vld [vmem:[%s4 + $0x238] sm:$0xff]
  %v3240 = vld [vmem:[%s4 + $0x240] sm:$0xff]
  %v3241 = vld [vmem:[%s4 + $0x248] sm:$0xff]
  %v3242 = vld [vmem:[%s4 + $0x250] sm:$0xff]
  %v3243 = vld [vmem:[%s4 + $0x258] sm:$0xff]
  %v3244 = vld [vmem:[%s4 + $0x260] sm:$0xff]
  %v3245 = vld [vmem:[%s4 + $0x268] sm:$0xff]
  %v3246 = vld [vmem:[%s4 + $0x270] sm:$0xff]
  %v3247 = vld [vmem:[%s4 + $0x278] sm:$0xff]
  %v3248 = vld [vmem:[%s4 + $0x280] sm:$0xff]
  %v3249 = vld [vmem:[%s4 + $0x288] sm:$0xff]
  %v3250 = vld [vmem:[%s4 + $0x290] sm:$0xff]
  %v3251 = vld [vmem:[%s4 + $0x298] sm:$0xff]
  %v3252 = vld [vmem:[%s4 + $0x2a0] sm:$0xff]
  %v3253 = vld [vmem:[%s4 + $0x2a8] sm:$0xff]
  %v3254 = vld [vmem:[%s4 + $0x2b0] sm:$0xff]
  %v3255 = vld [vmem:[%s4 + $0x2b8] sm:$0xff]
  %v3256 = vld [vmem:[%s4 + $0x2c0] sm:$0xff]
  %v3257 = vld [vmem:[%s4 + $0x2c8] sm:$0xff]
  %v3258 = vld [vmem:[%s4 + $0x2d0] sm:$0xff]
  %v3259 = vld [vmem:[%s4 + $0x2d8] sm:$0xff]
  %v3260 = vld [vmem:[%s4 + $0x2e0] sm:$0xff]
  %v3261 = vld [vmem:[%s4 + $0x2e8] sm:$0xff]
  %v3262 = vld [vmem:[%s4 + $0x2f0] sm:$0xff]
  %v3263 = vld [vmem:[%s4 + $0x2f8] sm:$0xff]
  %v3264 = vld [vmem:[%s4 + $0x300] sm:$0xff]
  %v3265 = vld [vmem:[%s4 + $0x308] sm:$0xff]
  %v3266 = vld [vmem:[%s4 + $0x310] sm:$0xff]
  %v3267 = vld [vmem:[%s4 + $0x318] sm:$0xff]
  %v3268 = vld [vmem:[%s4 + $0x320] sm:$0xff]
  %v3269 = vld [vmem:[%s4 + $0x328] sm:$0xff]
  %v3270 = vld [vmem:[%s4 + $0x330] sm:$0xff]
  %v3271 = vld [vmem:[%s4 + $0x338] sm:$0xff]
  %v3272 = vld [vmem:[%s4 + $0x340] sm:$0xff]
  %v3273 = vld [vmem:[%s4 + $0x348] sm:$0xff]
  %v3274 = vld [vmem:[%s4 + $0x350] sm:$0xff]
  %v3275 = vld [vmem:[%s4 + $0x358] sm:$0xff]
  %v3276 = vld [vmem:[%s4 + $0x360] sm:$0xff]
  %v3277 = vld [vmem:[%s4 + $0x368] sm:$0xff]
  %v3278 = vld [vmem:[%s4 + $0x370] sm:$0xff]
  %v3279 = vld [vmem:[%s4 + $0x378] sm:$0xff]
  %v3280 = vld [vmem:[%s4 + $0x380] sm:$0xff]
  %v3281 = vld [vmem:[%s4 + $0x388] sm:$0xff]
  %v3282 = vld [vmem:[%s4 + $0x390] sm:$0xff]
  %v3283 = vld [vmem:[%s4 + $0x398] sm:$0xff]
  %v3284 = vld [vmem:[%s4 + $0x3a0] sm:$0xff]
  %v3285 = vld [vmem:[%s4 + $0x3a8] sm:$0xff]
  %v3286 = vld [vmem:[%s4 + $0x3b0] sm:$0xff]
  %v3287 = vld [vmem:[%s4 + $0x3b8] sm:$0xff]
  %v3288 = vld [vmem:[%s4 + $0x3c0] sm:$0xff]
  %v3289 = vld [vmem:[%s4 + $0x3c8] sm:$0xff]
  %v3290 = vld [vmem:[%s4 + $0x3d0] sm:$0xff]
  %v3291 = vld [vmem:[%s4 + $0x3d8] sm:$0xff]
  %v3292 = vld [vmem:[%s4 + $0x3e0] sm:$0xff]
  %v3293 = vld [vmem:[%s4 + $0x3e8] sm:$0xff]
  %v3294 = vld [vmem:[%s4 + $0x3f0] sm:$0xff]
  %v3295 = vld [vmem:[%s4 + $0x3f8] sm:$0xff]
  %v3424 = vunpack.c.l.b16 %v3168
  %v3425 = vunpack.c.h.b16 %v3168
  %v3426 = vunpack.c.l.b16 %v3169
  %v3427 = vunpack.c.h.b16 %v3169
  %v3428 = vunpack.c.l.b16 %v3170
  %v3429 = vunpack.c.h.b16 %v3170
  %v3430 = vunpack.c.l.b16 %v3171
  %v3431 = vunpack.c.h.b16 %v3171
  %v3432 = vunpack.c.l.b16 %v3172
  %v3433 = vunpack.c.h.b16 %v3172
  %v3434 = vunpack.c.l.b16 %v3173
  %v3435 = vunpack.c.h.b16 %v3173
  %v3436 = vunpack.c.l.b16 %v3174
  %v3437 = vunpack.c.h.b16 %v3174
  %v3438 = vunpack.c.l.b16 %v3175
  %v3439 = vunpack.c.h.b16 %v3175
  %v3440 = vunpack.c.l.b16 %v3176
  %v3441 = vunpack.c.h.b16 %v3176
  %v3442 = vunpack.c.l.b16 %v3177
  %v3443 = vunpack.c.h.b16 %v3177
  %v3444 = vunpack.c.l.b16 %v3178
  %v3445 = vunpack.c.h.b16 %v3178
  %v3446 = vunpack.c.l.b16 %v3179
  %v3447 = vunpack.c.h.b16 %v3179
  %v3448 = vunpack.c.l.b16 %v3180
  %v3449 = vunpack.c.h.b16 %v3180
  %v3450 = vunpack.c.l.b16 %v3181
  %v3451 = vunpack.c.h.b16 %v3181
  %v3452 = vunpack.c.l.b16 %v3182
  %v3453 = vunpack.c.h.b16 %v3182
  %v3454 = vunpack.c.l.b16 %v3183
  %v3455 = vunpack.c.h.b16 %v3183
  %v3456 = vunpack.c.l.b16 %v3184
  %v3457 = vunpack.c.h.b16 %v3184
  %v3458 = vunpack.c.l.b16 %v3185
  %v3459 = vunpack.c.h.b16 %v3185
  %v3460 = vunpack.c.l.b16 %v3186
  %v3461 = vunpack.c.h.b16 %v3186
  %v3462 = vunpack.c.l.b16 %v3187
  %v3463 = vunpack.c.h.b16 %v3187
  %v3464 = vunpack.c.l.b16 %v3188
  %v3465 = vunpack.c.h.b16 %v3188
  %v3466 = vunpack.c.l.b16 %v3189
  %v3467 = vunpack.c.h.b16 %v3189
  %v3468 = vunpack.c.l.b16 %v3190
  %v3469 = vunpack.c.h.b16 %v3190
  %v3470 = vunpack.c.l.b16 %v3191
  %v3471 = vunpack.c.h.b16 %v3191
  %v3472 = vunpack.c.l.b16 %v3192
  %v3473 = vunpack.c.h.b16 %v3192
  %v3474 = vunpack.c.l.b16 %v3193
  %v3475 = vunpack.c.h.b16 %v3193
  %v3476 = vunpack.c.l.b16 %v3194
  %v3477 = vunpack.c.h.b16 %v3194
  %v3478 = vunpack.c.l.b16 %v3195
  %v3479 = vunpack.c.h.b16 %v3195
  %v3480 = vunpack.c.l.b16 %v3196
  %v3481 = vunpack.c.h.b16 %v3196
  %v3482 = vunpack.c.l.b16 %v3197
  %v3483 = vunpack.c.h.b16 %v3197
  %v3484 = vunpack.c.l.b16 %v3198
  %v3485 = vunpack.c.h.b16 %v3198
  %v3486 = vunpack.c.l.b16 %v3199
  %v3487 = vunpack.c.h.b16 %v3199
  %v3488 = vunpack.c.l.b16 %v3200
  %v3489 = vunpack.c.h.b16 %v3200
  %v3490 = vunpack.c.l.b16 %v3201
  %v3491 = vunpack.c.h.b16 %v3201
  %v3492 = vunpack.c.l.b16 %v3202
  %v3493 = vunpack.c.h.b16 %v3202
  %v3494 = vunpack.c.l.b16 %v3203
  %v3495 = vunpack.c.h.b16 %v3203
  %v3496 = vunpack.c.l.b16 %v3204
  %v3497 = vunpack.c.h.b16 %v3204
  %v3498 = vunpack.c.l.b16 %v3205
  %v3499 = vunpack.c.h.b16 %v3205
  %v3500 = vunpack.c.l.b16 %v3206
  %v3501 = vunpack.c.h.b16 %v3206
  %v3502 = vunpack.c.l.b16 %v3207
  %v3503 = vunpack.c.h.b16 %v3207
  %v3504 = vunpack.c.l.b16 %v3208
  %v3505 = vunpack.c.h.b16 %v3208
  %v3506 = vunpack.c.l.b16 %v3209
  %v3507 = vunpack.c.h.b16 %v3209
  %v3508 = vunpack.c.l.b16 %v3210
  %v3509 = vunpack.c.h.b16 %v3210
  %v3510 = vunpack.c.l.b16 %v3211
  %v3511 = vunpack.c.h.b16 %v3211
  %v3512 = vunpack.c.l.b16 %v3212
  %v3513 = vunpack.c.h.b16 %v3212
  %v3514 = vunpack.c.l.b16 %v3213
  %v3515 = vunpack.c.h.b16 %v3213
  %v3516 = vunpack.c.l.b16 %v3214
  %v3517 = vunpack.c.h.b16 %v3214
  %v3518 = vunpack.c.l.b16 %v3215
  %v3519 = vunpack.c.h.b16 %v3215
  %v3520 = vunpack.c.l.b16 %v3216
  %v3521 = vunpack.c.h.b16 %v3216
  %v3522 = vunpack.c.l.b16 %v3217
  %v3523 = vunpack.c.h.b16 %v3217
  %v3524 = vunpack.c.l.b16 %v3218
  %v3525 = vunpack.c.h.b16 %v3218
  %v3526 = vunpack.c.l.b16 %v3219
  %v3527 = vunpack.c.h.b16 %v3219
  %v3528 = vunpack.c.l.b16 %v3220
  %v3529 = vunpack.c.h.b16 %v3220
  %v3530 = vunpack.c.l.b16 %v3221
  %v3531 = vunpack.c.h.b16 %v3221
  %v3532 = vunpack.c.l.b16 %v3222
  %v3533 = vunpack.c.h.b16 %v3222
  %v3534 = vunpack.c.l.b16 %v3223
  %v3535 = vunpack.c.h.b16 %v3223
  %v3536 = vunpack.c.l.b16 %v3224
  %v3537 = vunpack.c.h.b16 %v3224
  %v3538 = vunpack.c.l.b16 %v3225
  %v3539 = vunpack.c.h.b16 %v3225
  %v3540 = vunpack.c.l.b16 %v3226
  %v3541 = vunpack.c.h.b16 %v3226
  %v3542 = vunpack.c.l.b16 %v3227
  %v3543 = vunpack.c.h.b16 %v3227
  %v3544 = vunpack.c.l.b16 %v3228
  %v3545 = vunpack.c.h.b16 %v3228
  %v3546 = vunpack.c.l.b16 %v3229
  %v3547 = vunpack.c.h.b16 %v3229
  %v3548 = vunpack.c.l.b16 %v3230
  %v3549 = vunpack.c.h.b16 %v3230
  %v3550 = vunpack.c.l.b16 %v3231
  %v3551 = vunpack.c.h.b16 %v3231
  %v3552 = vunpack.c.l.b16 %v3232
  %v3553 = vunpack.c.h.b16 %v3232
  %v3554 = vunpack.c.l.b16 %v3233
  %v3555 = vunpack.c.h.b16 %v3233
  %v3556 = vunpack.c.l.b16 %v3234
  %v3557 = vunpack.c.h.b16 %v3234
  %v3558 = vunpack.c.l.b16 %v3235
  %v3559 = vunpack.c.h.b16 %v3235
  %v3560 = vunpack.c.l.b16 %v3236
  %v3561 = vunpack.c.h.b16 %v3236
  %v3562 = vunpack.c.l.b16 %v3237
  %v3563 = vunpack.c.h.b16 %v3237
  %v3564 = vunpack.c.l.b16 %v3238
  %v3565 = vunpack.c.h.b16 %v3238
  %v3566 = vunpack.c.l.b16 %v3239
  %v3567 = vunpack.c.h.b16 %v3239
  %v3568 = vunpack.c.l.b16 %v3240
  %v3569 = vunpack.c.h.b16 %v3240
  %v3570 = vunpack.c.l.b16 %v3241
  %v3571 = vunpack.c.h.b16 %v3241
  %v3572 = vunpack.c.l.b16 %v3242
  %v3573 = vunpack.c.h.b16 %v3242
  %v3574 = vunpack.c.l.b16 %v3243
  %v3575 = vunpack.c.h.b16 %v3243
  %v3576 = vunpack.c.l.b16 %v3244
  %v3577 = vunpack.c.h.b16 %v3244
  %v3578 = vunpack.c.l.b16 %v3245
  %v3579 = vunpack.c.h.b16 %v3245
  %v3580 = vunpack.c.l.b16 %v3246
  %v3581 = vunpack.c.h.b16 %v3246
  %v3582 = vunpack.c.l.b16 %v3247
  %v3583 = vunpack.c.h.b16 %v3247
  %v3584 = vunpack.c.l.b16 %v3248
  %v3585 = vunpack.c.h.b16 %v3248
  %v3586 = vunpack.c.l.b16 %v3249
  %v3587 = vunpack.c.h.b16 %v3249
  %v3588 = vunpack.c.l.b16 %v3250
  %v3589 = vunpack.c.h.b16 %v3250
  %v3590 = vunpack.c.l.b16 %v3251
  %v3591 = vunpack.c.h.b16 %v3251
  %v3592 = vunpack.c.l.b16 %v3252
  %v3593 = vunpack.c.h.b16 %v3252
  %v3594 = vunpack.c.l.b16 %v3253
  %v3595 = vunpack.c.h.b16 %v3253
  %v3596 = vunpack.c.l.b16 %v3254
  %v3597 = vunpack.c.h.b16 %v3254
  %v3598 = vunpack.c.l.b16 %v3255
  %v3599 = vunpack.c.h.b16 %v3255
  %v3600 = vunpack.c.l.b16 %v3256
  %v3601 = vunpack.c.h.b16 %v3256
  %v3602 = vunpack.c.l.b16 %v3257
  %v3603 = vunpack.c.h.b16 %v3257
  %v3604 = vunpack.c.l.b16 %v3258
  %v3605 = vunpack.c.h.b16 %v3258
  %v3606 = vunpack.c.l.b16 %v3259
  %v3607 = vunpack.c.h.b16 %v3259
  %v3608 = vunpack.c.l.b16 %v3260
  %v3609 = vunpack.c.h.b16 %v3260
  %v3610 = vunpack.c.l.b16 %v3261
  %v3611 = vunpack.c.h.b16 %v3261
  %v3612 = vunpack.c.l.b16 %v3262
  %v3613 = vunpack.c.h.b16 %v3262
  %v3614 = vunpack.c.l.b16 %v3263
  %v3615 = vunpack.c.h.b16 %v3263
  %v3616 = vunpack.c.l.b16 %v3264
  %v3617 = vunpack.c.h.b16 %v3264
  %v3618 = vunpack.c.l.b16 %v3265
  %v3619 = vunpack.c.h.b16 %v3265
  %v3620 = vunpack.c.l.b16 %v3266
  %v3621 = vunpack.c.h.b16 %v3266
  %v3622 = vunpack.c.l.b16 %v3267
  %v3623 = vunpack.c.h.b16 %v3267
  %v3624 = vunpack.c.l.b16 %v3268
  %v3625 = vunpack.c.h.b16 %v3268
  %v3626 = vunpack.c.l.b16 %v3269
  %v3627 = vunpack.c.h.b16 %v3269
  %v3628 = vunpack.c.l.b16 %v3270
  %v3629 = vunpack.c.h.b16 %v3270
  %v3630 = vunpack.c.l.b16 %v3271
  %v3631 = vunpack.c.h.b16 %v3271
  %v3632 = vunpack.c.l.b16 %v3272
  %v3633 = vunpack.c.h.b16 %v3272
  %v3634 = vunpack.c.l.b16 %v3273
  %v3635 = vunpack.c.h.b16 %v3273
  %v3636 = vunpack.c.l.b16 %v3274
  %v3637 = vunpack.c.h.b16 %v3274
  %v3638 = vunpack.c.l.b16 %v3275
  %v3639 = vunpack.c.h.b16 %v3275
  %v3640 = vunpack.c.l.b16 %v3276
  %v3641 = vunpack.c.h.b16 %v3276
  %v3642 = vunpack.c.l.b16 %v3277
  %v3643 = vunpack.c.h.b16 %v3277
  %v3644 = vunpack.c.l.b16 %v3278
  %v3645 = vunpack.c.h.b16 %v3278
  %v3646 = vunpack.c.l.b16 %v3279
  %v3647 = vunpack.c.h.b16 %v3279
  %v3648 = vunpack.c.l.b16 %v3280
  %v3649 = vunpack.c.h.b16 %v3280
  %v3650 = vunpack.c.l.b16 %v3281
  %v3651 = vunpack.c.h.b16 %v3281
  %v3652 = vunpack.c.l.b16 %v3282
  %v3653 = vunpack.c.h.b16 %v3282
  %v3654 = vunpack.c.l.b16 %v3283
  %v3655 = vunpack.c.h.b16 %v3283
  %v3656 = vunpack.c.l.b16 %v3284
  %v3657 = vunpack.c.h.b16 %v3284
  %v3658 = vunpack.c.l.b16 %v3285
  %v3659 = vunpack.c.h.b16 %v3285
  %v3660 = vunpack.c.l.b16 %v3286
  %v3661 = vunpack.c.h.b16 %v3286
  %v3662 = vunpack.c.l.b16 %v3287
  %v3663 = vunpack.c.h.b16 %v3287
  %v3664 = vunpack.c.l.b16 %v3288
  %v3665 = vunpack.c.h.b16 %v3288
  %v3666 = vunpack.c.l.b16 %v3289
  %v3667 = vunpack.c.h.b16 %v3289
  %v3668 = vunpack.c.l.b16 %v3290
  %v3669 = vunpack.c.h.b16 %v3290
  %v3670 = vunpack.c.l.b16 %v3291
  %v3671 = vunpack.c.h.b16 %v3291
  %v3672 = vunpack.c.l.b16 %v3292
  %v3673 = vunpack.c.h.b16 %v3292
  %v3674 = vunpack.c.l.b16 %v3293
  %v3675 = vunpack.c.h.b16 %v3293
  %v3676 = vunpack.c.l.b16 %v3294
  %v3677 = vunpack.c.h.b16 %v3294
  %v3678 = vunpack.c.l.b16 %v3295
  %v3679 = vunpack.c.h.b16 %v3295
  %v3680 = vpack.c.b16 %v3432, %v3424
  %v3681 = vpack.c.b16 %v3433, %v3425
  %v3682 = vpack.c.b16 %v3434, %v3426
  %v3683 = vpack.c.b16 %v3435, %v3427
  %v3684 = vpack.c.b16 %v3436, %v3428
  %v3685 = vpack.c.b16 %v3437, %v3429
  %v3686 = vpack.c.b16 %v3438, %v3430
  %v3687 = vpack.c.b16 %v3439, %v3431
  %v3688 = vpack.c.b16 %v3448, %v3440
  %v3689 = vpack.c.b16 %v3449, %v3441
  %v3690 = vpack.c.b16 %v3450, %v3442
  %v3691 = vpack.c.b16 %v3451, %v3443
  %v3692 = vpack.c.b16 %v3452, %v3444
  %v3693 = vpack.c.b16 %v3453, %v3445
  %v3694 = vpack.c.b16 %v3454, %v3446
  %v3695 = vpack.c.b16 %v3455, %v3447
  %v3696 = vpack.c.b16 %v3464, %v3456
  %v3697 = vpack.c.b16 %v3465, %v3457
  %v3698 = vpack.c.b16 %v3466, %v3458
  %v3699 = vpack.c.b16 %v3467, %v3459
  %v3700 = vpack.c.b16 %v3468, %v3460
  %v3701 = vpack.c.b16 %v3469, %v3461
  %v3702 = vpack.c.b16 %v3470, %v3462
  %v3703 = vpack.c.b16 %v3471, %v3463
  %v3704 = vpack.c.b16 %v3480, %v3472
  %v3705 = vpack.c.b16 %v3481, %v3473
  %v3706 = vpack.c.b16 %v3482, %v3474
  %v3707 = vpack.c.b16 %v3483, %v3475
  %v3708 = vpack.c.b16 %v3484, %v3476
  %v3709 = vpack.c.b16 %v3485, %v3477
  %v3710 = vpack.c.b16 %v3486, %v3478
  %v3711 = vpack.c.b16 %v3487, %v3479
  %v3712 = vpack.c.b16 %v3496, %v3488
  %v3713 = vpack.c.b16 %v3497, %v3489
  %v3714 = vpack.c.b16 %v3498, %v3490
  %v3715 = vpack.c.b16 %v3499, %v3491
  %v3716 = vpack.c.b16 %v3500, %v3492
  %v3717 = vpack.c.b16 %v3501, %v3493
  %v3718 = vpack.c.b16 %v3502, %v3494
  %v3719 = vpack.c.b16 %v3503, %v3495
  %v3720 = vpack.c.b16 %v3512, %v3504
  %v3721 = vpack.c.b16 %v3513, %v3505
  %v3722 = vpack.c.b16 %v3514, %v3506
  %v3723 = vpack.c.b16 %v3515, %v3507
  %v3724 = vpack.c.b16 %v3516, %v3508
  %v3725 = vpack.c.b16 %v3517, %v3509
  %v3726 = vpack.c.b16 %v3518, %v3510
  %v3727 = vpack.c.b16 %v3519, %v3511
  %v3728 = vpack.c.b16 %v3528, %v3520
  %v3729 = vpack.c.b16 %v3529, %v3521
  %v3730 = vpack.c.b16 %v3530, %v3522
  %v3731 = vpack.c.b16 %v3531, %v3523
  %v3732 = vpack.c.b16 %v3532, %v3524
  %v3733 = vpack.c.b16 %v3533, %v3525
  %v3734 = vpack.c.b16 %v3534, %v3526
  %v3735 = vpack.c.b16 %v3535, %v3527
  %v3736 = vpack.c.b16 %v3544, %v3536
  %v3737 = vpack.c.b16 %v3545, %v3537
  %v3738 = vpack.c.b16 %v3546, %v3538
  %v3739 = vpack.c.b16 %v3547, %v3539
  %v3740 = vpack.c.b16 %v3548, %v3540
  %v3741 = vpack.c.b16 %v3549, %v3541
  %v3742 = vpack.c.b16 %v3550, %v3542
  %v3743 = vpack.c.b16 %v3551, %v3543
  %v3744 = vpack.c.b16 %v3560, %v3552
  %v3745 = vpack.c.b16 %v3561, %v3553
  %v3746 = vpack.c.b16 %v3562, %v3554
  %v3747 = vpack.c.b16 %v3563, %v3555
  %v3748 = vpack.c.b16 %v3564, %v3556
  %v3749 = vpack.c.b16 %v3565, %v3557
  %v3750 = vpack.c.b16 %v3566, %v3558
  %v3751 = vpack.c.b16 %v3567, %v3559
  %v3752 = vpack.c.b16 %v3576, %v3568
  %v3753 = vpack.c.b16 %v3577, %v3569
  %v3754 = vpack.c.b16 %v3578, %v3570
  %v3755 = vpack.c.b16 %v3579, %v3571
  %v3756 = vpack.c.b16 %v3580, %v3572
  %v3757 = vpack.c.b16 %v3581, %v3573
  %v3758 = vpack.c.b16 %v3582, %v3574
  %v3759 = vpack.c.b16 %v3583, %v3575
  %v3760 = vpack.c.b16 %v3592, %v3584
  %v3761 = vpack.c.b16 %v3593, %v3585
  %v3762 = vpack.c.b16 %v3594, %v3586
  %v3763 = vpack.c.b16 %v3595, %v3587
  %v3764 = vpack.c.b16 %v3596, %v3588
  %v3765 = vpack.c.b16 %v3597, %v3589
  %v3766 = vpack.c.b16 %v3598, %v3590
  %v3767 = vpack.c.b16 %v3599, %v3591
  %v3768 = vpack.c.b16 %v3608, %v3600
  %v3769 = vpack.c.b16 %v3609, %v3601
  %v3770 = vpack.c.b16 %v3610, %v3602
  %v3771 = vpack.c.b16 %v3611, %v3603
  %v3772 = vpack.c.b16 %v3612, %v3604
  %v3773 = vpack.c.b16 %v3613, %v3605
  %v3774 = vpack.c.b16 %v3614, %v3606
  %v3775 = vpack.c.b16 %v3615, %v3607
  %v3776 = vpack.c.b16 %v3624, %v3616
  %v3777 = vpack.c.b16 %v3625, %v3617
  %v3778 = vpack.c.b16 %v3626, %v3618
  %v3779 = vpack.c.b16 %v3627, %v3619
  %v3780 = vpack.c.b16 %v3628, %v3620
  %v3781 = vpack.c.b16 %v3629, %v3621
  %v3782 = vpack.c.b16 %v3630, %v3622
  %v3783 = vpack.c.b16 %v3631, %v3623
  %v3784 = vpack.c.b16 %v3640, %v3632
  %v3785 = vpack.c.b16 %v3641, %v3633
  %v3786 = vpack.c.b16 %v3642, %v3634
  %v3787 = vpack.c.b16 %v3643, %v3635
  %v3788 = vpack.c.b16 %v3644, %v3636
  %v3789 = vpack.c.b16 %v3645, %v3637
  %v3790 = vpack.c.b16 %v3646, %v3638
  %v3791 = vpack.c.b16 %v3647, %v3639
  %v3792 = vpack.c.b16 %v3656, %v3648
  %v3793 = vpack.c.b16 %v3657, %v3649
  %v3794 = vpack.c.b16 %v3658, %v3650
  %v3795 = vpack.c.b16 %v3659, %v3651
  %v3796 = vpack.c.b16 %v3660, %v3652
  %v3797 = vpack.c.b16 %v3661, %v3653
  %v3798 = vpack.c.b16 %v3662, %v3654
  %v3799 = vpack.c.b16 %v3663, %v3655
  %v3800 = vpack.c.b16 %v3672, %v3664
  %v3801 = vpack.c.b16 %v3673, %v3665
  %v3802 = vpack.c.b16 %v3674, %v3666
  %v3803 = vpack.c.b16 %v3675, %v3667
  %v3804 = vpack.c.b16 %v3676, %v3668
  %v3805 = vpack.c.b16 %v3677, %v3669
  %v3806 = vpack.c.b16 %v3678, %v3670
  %v3807 = vpack.c.b16 %v3679, %v3671
  %3936 = vmatprep.subr.bf16.mxu0 %v3681
  %3937 = vmatpush1.bf16.msra.mxu0 %v3680
  %3938 = vmatprep.subr.bf16.mxu0 %v3689
  %3939 = vmatpush1.bf16.msra.mxu0 %v3688
  %3940 = vmatprep.subr.bf16.mxu0 %v3697
  %3941 = vmatpush1.bf16.msra.mxu0 %v3696
  %3942 = vmatprep.subr.bf16.mxu0 %v3705
  %3943 = vmatpush1.bf16.msra.mxu0 %v3704
  %3944 = vmatprep.subr.bf16.mxu0 %v3713
  %3945 = vmatpush1.bf16.msra.mxu0 %v3712
  %3946 = vmatprep.subr.bf16.mxu0 %v3721
  %3947 = vmatpush1.bf16.msra.mxu0 %v3720
  %3948 = vmatprep.subr.bf16.mxu0 %v3729
  %3949 = vmatpush1.bf16.msra.mxu0 %v3728
  %3950 = vmatprep.subr.bf16.mxu0 %v3737
  %3951 = vmatpush1.bf16.msra.mxu0 %v3736
  %3952 = vmatprep.subr.bf16.mxu0 %v3745
  %3953 = vmatpush1.bf16.msra.mxu0 %v3744
  %3954 = vmatprep.subr.bf16.mxu0 %v3753
  %3955 = vmatpush1.bf16.msra.mxu0 %v3752
  %3956 = vmatprep.subr.bf16.mxu0 %v3761
  %3957 = vmatpush1.bf16.msra.mxu0 %v3760
  %3958 = vmatprep.subr.bf16.mxu0 %v3769
  %3959 = vmatpush1.bf16.msra.mxu0 %v3768
  %3960 = vmatprep.subr.bf16.mxu0 %v3777
  %3961 = vmatpush1.bf16.msra.mxu0 %v3776
  %3962 = vmatprep.subr.bf16.mxu0 %v3785
  %3963 = vmatpush1.bf16.msra.mxu0 %v3784
  %3964 = vmatprep.subr.bf16.mxu0 %v3793
  %3965 = vmatpush1.bf16.msra.mxu0 %v3792
  %3966 = vmatprep.subr.bf16.mxu0 %v3801
  %3967 = vmatpush1.bf16.msra.mxu0 %v3800
  %3968 = vmatprep.mubr.bf16.mxu0 %v3167
  %3969 = vmatmul.mubr.bf16.gmra.mrb[0].mxu0 %v3166
  %v3970 = vpop.f32.mrb[0].mxu0
  %v3971 = vadd.f32 0.0, %v3970
  %v3972 = vpop.f32.mrb[0].mxu0
  %v3973 = vadd.f32 0.0, %v3972
  %v3974 = vpop.f32.mrb[0].mxu0
  %v3975 = vpop.f32.mrb[0].mxu0
  %3976 = vdwg.mxu0
  %3977 = vmatprep.subr.bf16.mxu0 %v3683
  %3978 = vmatpush1.bf16.msra.mxu0 %v3682
  %3979 = vmatprep.subr.bf16.mxu0 %v3691
  %3980 = vmatpush1.bf16.msra.mxu0 %v3690
  %3981 = vmatprep.subr.bf16.mxu0 %v3699
  %3982 = vmatpush1.bf16.msra.mxu0 %v3698
  %3983 = vmatprep.subr.bf16.mxu0 %v3707
  %3984 = vmatpush1.bf16.msra.mxu0 %v3706
  %3985 = vmatprep.subr.bf16.mxu0 %v3715
  %3986 = vmatpush1.bf16.msra.mxu0 %v3714
  %3987 = vmatprep.subr.bf16.mxu0 %v3723
  %3988 = vmatpush1.bf16.msra.mxu0 %v3722
  %3989 = vmatprep.subr.bf16.mxu0 %v3731
  %3990 = vmatpush1.bf16.msra.mxu0 %v3730
  %3991 = vmatprep.subr.bf16.mxu0 %v3739
  %3992 = vmatpush1.bf16.msra.mxu0 %v3738
  %3993 = vmatprep.subr.bf16.mxu0 %v3747
  %3994 = vmatpush1.bf16.msra.mxu0 %v3746
  %3995 = vmatprep.subr.bf16.mxu0 %v3755
  %3996 = vmatpush1.bf16.msra.mxu0 %v3754
  %3997 = vmatprep.subr.bf16.mxu0 %v3763
  %3998 = vmatpush1.bf16.msra.mxu0 %v3762
  %3999 = vmatprep.subr.bf16.mxu0 %v3771
  %4000 = vmatpush1.bf16.msra.mxu0 %v3770
  %4001 = vmatprep.subr.bf16.mxu0 %v3779
  %4002 = vmatpush1.bf16.msra.mxu0 %v3778
  %4003 = vmatprep.subr.bf16.mxu0 %v3787
  %4004 = vmatpush1.bf16.msra.mxu0 %v3786
  %4005 = vmatprep.subr.bf16.mxu0 %v3795
  %4006 = vmatpush1.bf16.msra.mxu0 %v3794
  %4007 = vmatprep.subr.bf16.mxu0 %v3803
  %4008 = vmatpush1.bf16.msra.mxu0 %v3802
  %4009 = vmatprep.mubr.bf16.mxu0 %v3167
  %4010 = vmatmul.mubr.bf16.gmra.mrb[0].mxu0 %v3166
  %v4011 = vpop.f32.mrb[0].mxu0
  %v4012 = vadd.f32 0.0, %v4011
  %v4013 = vpop.f32.mrb[0].mxu0
  %v4014 = vadd.f32 0.0, %v4013
  %v4015 = vpop.f32.mrb[0].mxu0
  %v4016 = vpop.f32.mrb[0].mxu0
  %4017 = vdwg.mxu0
  %4018 = vmatprep.subr.bf16.mxu0 %v3685
  %4019 = vmatpush1.bf16.msra.mxu0 %v3684
  %4020 = vmatprep.subr.bf16.mxu0 %v3693
  %4021 = vmatpush1.bf16.msra.mxu0 %v3692
  %4022 = vmatprep.subr.bf16.mxu0 %v3701
  %4023 = vmatpush1.bf16.msra.mxu0 %v3700
  %4024 = vmatprep.subr.bf16.mxu0 %v3709
  %4025 = vmatpush1.bf16.msra.mxu0 %v3708
  %4026 = vmatprep.subr.bf16.mxu0 %v3717
  %4027 = vmatpush1.bf16.msra.mxu0 %v3716
  %4028 = vmatprep.subr.bf16.mxu0 %v3725
  %4029 = vmatpush1.bf16.msra.mxu0 %v3724
  %4030 = vmatprep.subr.bf16.mxu0 %v3733
  %4031 = vmatpush1.bf16.msra.mxu0 %v3732
  %4032 = vmatprep.subr.bf16.mxu0 %v3741
  %4033 = vmatpush1.bf16.msra.mxu0 %v3740
  %4034 = vmatprep.subr.bf16.mxu0 %v3749
  %4035 = vmatpush1.bf16.msra.mxu0 %v3748
  %4036 = vmatprep.subr.bf16.mxu0 %v3757
  %4037 = vmatpush1.bf16.msra.mxu0 %v3756
  %4038 = vmatprep.subr.bf16.mxu0 %v3765
  %4039 = vmatpush1.bf16.msra.mxu0 %v3764
  %4040 = vmatprep.subr.bf16.mxu0 %v3773
  %4041 = vmatpush1.bf16.msra.mxu0 %v3772
  %4042 = vmatprep.subr.bf16.mxu0 %v3781
  %4043 = vmatpush1.bf16.msra.mxu0 %v3780
  %4044 = vmatprep.subr.bf16.mxu0 %v3789
  %4045 = vmatpush1.bf16.msra.mxu0 %v3788
  %4046 = vmatprep.subr.bf16.mxu0 %v3797
  %4047 = vmatpush1.bf16.msra.mxu0 %v3796
  %4048 = vmatprep.subr.bf16.mxu0 %v3805
  %4049 = vmatpush1.bf16.msra.mxu0 %v3804
  %4050 = vmatprep.mubr.bf16.mxu0 %v3167
  %4051 = vmatmul.mubr.bf16.gmra.mrb[0].mxu0 %v3166
  %v4052 = vpop.f32.mrb[0].mxu0
  %v4053 = vadd.f32 0.0, %v4052
  %v4054 = vpop.f32.mrb[0].mxu0
  %v4055 = vadd.f32 0.0, %v4054
  %v4056 = vpop.f32.mrb[0].mxu0
  %v4057 = vpop.f32.mrb[0].mxu0
  %4058 = vdwg.mxu0
  %4059 = vmatprep.subr.bf16.mxu0 %v3687
  %4060 = vmatpush1.bf16.msra.mxu0 %v3686
  %4061 = vmatprep.subr.bf16.mxu0 %v3695
  %4062 = vmatpush1.bf16.msra.mxu0 %v3694
  %4063 = vmatprep.subr.bf16.mxu0 %v3703
  %4064 = vmatpush1.bf16.msra.mxu0 %v3702
  %4065 = vmatprep.subr.bf16.mxu0 %v3711
  %4066 = vmatpush1.bf16.msra.mxu0 %v3710
  %4067 = vmatprep.subr.bf16.mxu0 %v3719
  %4068 = vmatpush1.bf16.msra.mxu0 %v3718
  %4069 = vmatprep.subr.bf16.mxu0 %v3727
  %4070 = vmatpush1.bf16.msra.mxu0 %v3726
  %4071 = vmatprep.subr.bf16.mxu0 %v3735
  %4072 = vmatpush1.bf16.msra.mxu0 %v3734
  %4073 = vmatprep.subr.bf16.mxu0 %v3743
  %4074 = vmatpush1.bf16.msra.mxu0 %v3742
  %4075 = vmatprep.subr.bf16.mxu0 %v3751
  %4076 = vmatpush1.bf16.msra.mxu0 %v3750
  %4077 = vmatprep.subr.bf16.mxu0 %v3759
  %4078 = vmatpush1.bf16.msra.mxu0 %v3758
  %4079 = vmatprep.subr.bf16.mxu0 %v3767
  %4080 = vmatpush1.bf16.msra.mxu0 %v3766
  %4081 = vmatprep.subr.bf16.mxu0 %v3775
  %4082 = vmatpush1.bf16.msra.mxu0 %v3774
  %4083 = vmatprep.subr.bf16.mxu0 %v3783
  %4084 = vmatpush1.bf16.msra.mxu0 %v3782
  %4085 = vmatprep.subr.bf16.mxu0 %v3791
  %4086 = vmatpush1.bf16.msra.mxu0 %v3790
  %4087 = vmatprep.subr.bf16.mxu0 %v3799
  %4088 = vmatpush1.bf16.msra.mxu0 %v3798
  %4089 = vmatprep.subr.bf16.mxu0 %v3807
  %4090 = vmatpush1.bf16.msra.mxu0 %v3806
  %4091 = vmatprep.mubr.bf16.mxu0 %v3167
  %4092 = vmatmul.mubr.bf16.gmra.mrb[0].mxu0 %v3166
  %v4093 = vpop.f32.mrb[0].mxu0
  %v4094 = vadd.f32 0.0, %v4093
  %v4095 = vpop.f32.mrb[0].mxu0
  %v4096 = vadd.f32 0.0, %v4095
  %v4097 = vpop.f32.mrb[0].mxu0
  %v4098 = vpop.f32.mrb[0].mxu0
  %4099 = vdwg.mxu0
  %v4100 = vadd.f32 %v3158, %v3971
  %v4101 = vadd.f32 %v3159, %v3973
  %v4102 = vadd.f32 %v3160, %v4012
  %v4103 = vadd.f32 %v3161, %v4014
  %v4104 = vadd.f32 %v3162, %v4053
  %v4105 = vadd.f32 %v3163, %v4055
  %v4106 = vadd.f32 %v3164, %v4094
  %v4107 = vadd.f32 %v3165, %v4096
  %v4108 = vxor.u32 %v4100, 2147483648
  %v4109 = vxor.u32 %v4101, 2147483648
  %v4110 = vmul.f32 %v4108, 1.442695
  %v4111 = vpow.pop %v4110
  %v4112 = vmul.f32 %v4109, 1.442695
  %v4113 = vpow.pop %v4112
  %v4114 = vadd.f32 %v4111, 1.0
  %v4115 = vadd.f32 %v4113, 1.0
  %v4116 = vrcp.pop %v4114
  %v4117 = vmul.f32 1.0, %v4116
  %v4118 = vrcp.pop %v4115
  %v4119 = vmul.f32 1.0, %v4118
  %v4120 = vxor.u32 %v4102, 2147483648
  %v4121 = vxor.u32 %v4103, 2147483648
  %v4122 = vmul.f32 %v4120, 1.442695
  %v4123 = vpow.pop %v4122
  %v4124 = vmul.f32 %v4121, 1.442695
  %v4125 = vpow.pop %v4124
  %v4126 = vadd.f32 %v4123, 1.0
  %v4127 = vadd.f32 %v4125, 1.0
  %v4128 = vrcp.pop %v4126
  %v4129 = vmul.f32 1.0, %v4128
  %v4130 = vrcp.pop %v4127
  %v4131 = vmul.f32 1.0, %v4130
  %v4132 = vtanh.pop %v4104
  %v4133 = vtanh.pop %v4105
  %v4134 = vxor.u32 %v4106, 2147483648
  %v4135 = vxor.u32 %v4107, 2147483648
  %v4136 = vmul.f32 %v4134, 1.442695
  %v4137 = vpow.pop %v4136
  %v4138 = vmul.f32 %v4135, 1.442695
  %v4139 = vpow.pop %v4138
  %v4140 = vadd.f32 %v4137, 1.0
  %v4141 = vadd.f32 %v4139, 1.0
  %v4142 = vrcp.pop %v4140
  %v4143 = vmul.f32 1.0, %v4142
  %v4144 = vrcp.pop %v4141
  %v4145 = vmul.f32 1.0, %v4144
  %v4146 = vmul.f32 %v4129, %v3134
  %v4147 = vmul.f32 %v4131, %v3135
  %v4148 = vmul.f32 %v4117, %v4132
  %v4149 = vmul.f32 %v4119, %v4133
  %v4150 = vadd.f32 %v4146, %v4148
  %v4151 = vadd.f32 %v4147, %v4149
  %v4152 = vtanh.pop %v4150
  %v4153 = vtanh.pop %v4151
  %v4154 = vmul.f32 %v4143, %v4152
  %v4155 = vmul.f32 %v4145, %v4153
  %4156 = vst [vmem:[#allocation3 + $0x20] sm:$0xff] %v4154
  %4157 = vst [vmem:[#allocation3 + $0x58] sm:$0xff] %v4155
  %v4158 = vld [vmem:[#allocation2 + $0xc0] sm:$0xff]
  %v4159 = vld [vmem:[#allocation2 + $0xc8] sm:$0xff]
  %v4160 = vld [vmem:[#allocation2 + $0xd0] sm:$0xff]
  %v4161 = vld [vmem:[#allocation2 + $0xd8] sm:$0xff]
  %v4162 = vld [vmem:[#allocation2 + $0xe0] sm:$0xff]
  %v4163 = vld [vmem:[#allocation2 + $0xe8] sm:$0xff]
  %v4164 = vld [vmem:[#allocation2 + $0xf0] sm:$0xff]
  %v4165 = vld [vmem:[#allocation2 + $0xf8] sm:$0xff]
  %v4166 = vld [vmem:[#allocation2 + $0x100] sm:$0xff]
  %v4167 = vld [vmem:[#allocation2 + $0x108] sm:$0xff]
  %v4168 = vld [vmem:[#allocation2 + $0x110] sm:$0xff]
  %v4169 = vld [vmem:[#allocation2 + $0x118] sm:$0xff]
  %v4170 = vld [vmem:[#allocation2 + $0x120] sm:$0xff]
  %v4171 = vld [vmem:[#allocation2 + $0x128] sm:$0xff]
  %v4172 = vld [vmem:[#allocation2 + $0x130] sm:$0xff]
  %v4173 = vld [vmem:[#allocation2 + $0x138] sm:$0xff]
  %v4174 = vsel %vm318, %v4158, %v4166
  %v4175 = vsel %vm319, %v4159, %v4167
  %v4176 = vsel %vm320, %v4160, %v4168
  %v4177 = vsel %vm321, %v4161, %v4169
  %v4178 = vsel %vm322, %v4162, %v4170
  %v4179 = vsel %vm323, %v4163, %v4171
  %v4180 = vsel %vm324, %v4164, %v4172
  %v4181 = vsel %vm325, %v4165, %v4173
  %v4182 = vpack.c.bf16 %v4154, %v4154
  %v4183 = vpack.c.bf16 %v4155, %v4155
  %v4184 = vld [vmem:[%s4] sm:$0xff]
  %v4185 = vld [vmem:[%s4 + $0x8] sm:$0xff]
  %v4186 = vld [vmem:[%s4 + $0x10] sm:$0xff]
  %v4187 = vld [vmem:[%s4 + $0x18] sm:$0xff]
  %v4188 = vld [vmem:[%s4 + $0x20] sm:$0xff]
  %v4189 = vld [vmem:[%s4 + $0x28] sm:$0xff]
  %v4190 = vld [vmem:[%s4 + $0x30] sm:$0xff]
  %v4191 = vld [vmem:[%s4 + $0x38] sm:$0xff]
  %v4192 = vld [vmem:[%s4 + $0x40] sm:$0xff]
  %v4193 = vld [vmem:[%s4 + $0x48] sm:$0xff]
  %v4194 = vld [vmem:[%s4 + $0x50] sm:$0xff]
  %v4195 = vld [vmem:[%s4 + $0x58] sm:$0xff]
  %v4196 = vld [vmem:[%s4 + $0x60] sm:$0xff]
  %v4197 = vld [vmem:[%s4 + $0x68] sm:$0xff]
  %v4198 = vld [vmem:[%s4 + $0x70] sm:$0xff]
  %v4199 = vld [vmem:[%s4 + $0x78] sm:$0xff]
  %v4200 = vld [vmem:[%s4 + $0x80] sm:$0xff]
  %v4201 = vld [vmem:[%s4 + $0x88] sm:$0xff]
  %v4202 = vld [vmem:[%s4 + $0x90] sm:$0xff]
  %v4203 = vld [vmem:[%s4 + $0x98] sm:$0xff]
  %v4204 = vld [vmem:[%s4 + $0xa0] sm:$0xff]
  %v4205 = vld [vmem:[%s4 + $0xa8] sm:$0xff]
  %v4206 = vld [vmem:[%s4 + $0xb0] sm:$0xff]
  %v4207 = vld [vmem:[%s4 + $0xb8] sm:$0xff]
  %v4208 = vld [vmem:[%s4 + $0xc0] sm:$0xff]
  %v4209 = vld [vmem:[%s4 + $0xc8] sm:$0xff]
  %v4210 = vld [vmem:[%s4 + $0xd0] sm:$0xff]
  %v4211 = vld [vmem:[%s4 + $0xd8] sm:$0xff]
  %v4212 = vld [vmem:[%s4 + $0xe0] sm:$0xff]
  %v4213 = vld [vmem:[%s4 + $0xe8] sm:$0xff]
  %v4214 = vld [vmem:[%s4 + $0xf0] sm:$0xff]
  %v4215 = vld [vmem:[%s4 + $0xf8] sm:$0xff]
  %v4216 = vld [vmem:[%s4 + $0x100] sm:$0xff]
  %v4217 = vld [vmem:[%s4 + $0x108] sm:$0xff]
  %v4218 = vld [vmem:[%s4 + $0x110] sm:$0xff]
  %v4219 = vld [vmem:[%s4 + $0x118] sm:$0xff]
  %v4220 = vld [vmem:[%s4 + $0x120] sm:$0xff]
  %v4221 = vld [vmem:[%s4 + $0x128] sm:$0xff]
  %v4222 = vld [vmem:[%s4 + $0x130] sm:$0xff]
  %v4223 = vld [vmem:[%s4 + $0x138] sm:$0xff]
  %v4224 = vld [vmem:[%s4 + $0x140] sm:$0xff]
  %v4225 = vld [vmem:[%s4 + $0x148] sm:$0xff]
  %v4226 = vld [vmem:[%s4 + $0x150] sm:$0xff]
  %v4227 = vld [vmem:[%s4 + $0x158] sm:$0xff]
  %v4228 = vld [vmem:[%s4 + $0x160] sm:$0xff]
  %v4229 = vld [vmem:[%s4 + $0x168] sm:$0xff]
  %v4230 = vld [vmem:[%s4 + $0x170] sm:$0xff]
  %v4231 = vld [vmem:[%s4 + $0x178] sm:$0xff]
  %v4232 = vld [vmem:[%s4 + $0x180] sm:$0xff]
  %v4233 = vld [vmem:[%s4 + $0x188] sm:$0xff]
  %v4234 = vld [vmem:[%s4 + $0x190] sm:$0xff]
  %v4235 = vld [vmem:[%s4 + $0x198] sm:$0xff]
  %v4236 = vld [vmem:[%s4 + $0x1a0] sm:$0xff]
  %v4237 = vld [vmem:[%s4 + $0x1a8] sm:$0xff]
  %v4238 = vld [vmem:[%s4 + $0x1b0] sm:$0xff]
  %v4239 = vld [vmem:[%s4 + $0x1b8] sm:$0xff]
  %v4240 = vld [vmem:[%s4 + $0x1c0] sm:$0xff]
  %v4241 = vld [vmem:[%s4 + $0x1c8] sm:$0xff]
  %v4242 = vld [vmem:[%s4 + $0x1d0] sm:$0xff]
  %v4243 = vld [vmem:[%s4 + $0x1d8] sm:$0xff]
  %v4244 = vld [vmem:[%s4 + $0x1e0] sm:$0xff]
  %v4245 = vld [vmem:[%s4 + $0x1e8] sm:$0xff]
  %v4246 = vld [vmem:[%s4 + $0x1f0] sm:$0xff]
  %v4247 = vld [vmem:[%s4 + $0x1f8] sm:$0xff]
  %v4248 = vld [vmem:[%s4 + $0x200] sm:$0xff]
  %v4249 = vld [vmem:[%s4 + $0x208] sm:$0xff]
  %v4250 = vld [vmem:[%s4 + $0x210] sm:$0xff]
  %v4251 = vld [vmem:[%s4 + $0x218] sm:$0xff]
  %v4252 = vld [vmem:[%s4 + $0x220] sm:$0xff]
  %v4253 = vld [vmem:[%s4 + $0x228] sm:$0xff]
  %v4254 = vld [vmem:[%s4 + $0x230] sm:$0xff]
  %v4255 = vld [vmem:[%s4 + $0x238] sm:$0xff]
  %v4256 = vld [vmem:[%s4 + $0x240] sm:$0xff]
  %v4257 = vld [vmem:[%s4 + $0x248] sm:$0xff]
  %v4258 = vld [vmem:[%s4 + $0x250] sm:$0xff]
  %v4259 = vld [vmem:[%s4 + $0x258] sm:$0xff]
  %v4260 = vld [vmem:[%s4 + $0x260] sm:$0xff]
  %v4261 = vld [vmem:[%s4 + $0x268] sm:$0xff]
  %v4262 = vld [vmem:[%s4 + $0x270] sm:$0xff]
  %v4263 = vld [vmem:[%s4 + $0x278] sm:$0xff]
  %v4264 = vld [vmem:[%s4 + $0x280] sm:$0xff]
  %v4265 = vld [vmem:[%s4 + $0x288] sm:$0xff]
  %v4266 = vld [vmem:[%s4 + $0x290] sm:$0xff]
  %v4267 = vld [vmem:[%s4 + $0x298] sm:$0xff]
  %v4268 = vld [vmem:[%s4 + $0x2a0] sm:$0xff]
  %v4269 = vld [vmem:[%s4 + $0x2a8] sm:$0xff]
  %v4270 = vld [vmem:[%s4 + $0x2b0] sm:$0xff]
  %v4271 = vld [vmem:[%s4 + $0x2b8] sm:$0xff]
  %v4272 = vld [vmem:[%s4 + $0x2c0] sm:$0xff]
  %v4273 = vld [vmem:[%s4 + $0x2c8] sm:$0xff]
  %v4274 = vld [vmem:[%s4 + $0x2d0] sm:$0xff]
  %v4275 = vld [vmem:[%s4 + $0x2d8] sm:$0xff]
  %v4276 = vld [vmem:[%s4 + $0x2e0] sm:$0xff]
  %v4277 = vld [vmem:[%s4 + $0x2e8] sm:$0xff]
  %v4278 = vld [vmem:[%s4 + $0x2f0] sm:$0xff]
  %v4279 = vld [vmem:[%s4 + $0x2f8] sm:$0xff]
  %v4280 = vld [vmem:[%s4 + $0x300] sm:$0xff]
  %v4281 = vld [vmem:[%s4 + $0x308] sm:$0xff]
  %v4282 = vld [vmem:[%s4 + $0x310] sm:$0xff]
  %v4283 = vld [vmem:[%s4 + $0x318] sm:$0xff]
  %v4284 = vld [vmem:[%s4 + $0x320] sm:$0xff]
  %v4285 = vld [vmem:[%s4 + $0x328] sm:$0xff]
  %v4286 = vld [vmem:[%s4 + $0x330] sm:$0xff]
  %v4287 = vld [vmem:[%s4 + $0x338] sm:$0xff]
  %v4288 = vld [vmem:[%s4 + $0x340] sm:$0xff]
  %v4289 = vld [vmem:[%s4 + $0x348] sm:$0xff]
  %v4290 = vld [vmem:[%s4 + $0x350] sm:$0xff]
  %v4291 = vld [vmem:[%s4 + $0x358] sm:$0xff]
  %v4292 = vld [vmem:[%s4 + $0x360] sm:$0xff]
  %v4293 = vld [vmem:[%s4 + $0x368] sm:$0xff]
  %v4294 = vld [vmem:[%s4 + $0x370] sm:$0xff]
  %v4295 = vld [vmem:[%s4 + $0x378] sm:$0xff]
  %v4296 = vld [vmem:[%s4 + $0x380] sm:$0xff]
  %v4297 = vld [vmem:[%s4 + $0x388] sm:$0xff]
  %v4298 = vld [vmem:[%s4 + $0x390] sm:$0xff]
  %v4299 = vld [vmem:[%s4 + $0x398] sm:$0xff]
  %v4300 = vld [vmem:[%s4 + $0x3a0] sm:$0xff]
  %v4301 = vld [vmem:[%s4 + $0x3a8] sm:$0xff]
  %v4302 = vld [vmem:[%s4 + $0x3b0] sm:$0xff]
  %v4303 = vld [vmem:[%s4 + $0x3b8] sm:$0xff]
  %v4304 = vld [vmem:[%s4 + $0x3c0] sm:$0xff]
  %v4305 = vld [vmem:[%s4 + $0x3c8] sm:$0xff]
  %v4306 = vld [vmem:[%s4 + $0x3d0] sm:$0xff]
  %v4307 = vld [vmem:[%s4 + $0x3d8] sm:$0xff]
  %v4308 = vld [vmem:[%s4 + $0x3e0] sm:$0xff]
  %v4309 = vld [vmem:[%s4 + $0x3e8] sm:$0xff]
  %v4310 = vld [vmem:[%s4 + $0x3f0] sm:$0xff]
  %v4311 = vld [vmem:[%s4 + $0x3f8] sm:$0xff]
  %v4440 = vunpack.c.l.b16 %v4184
  %v4441 = vunpack.c.h.b16 %v4184
  %v4442 = vunpack.c.l.b16 %v4185
  %v4443 = vunpack.c.h.b16 %v4185
  %v4444 = vunpack.c.l.b16 %v4186
  %v4445 = vunpack.c.h.b16 %v4186
  %v4446 = vunpack.c.l.b16 %v4187
  %v4447 = vunpack.c.h.b16 %v4187
  %v4448 = vunpack.c.l.b16 %v4188
  %v4449 = vunpack.c.h.b16 %v4188
  %v4450 = vunpack.c.l.b16 %v4189
  %v4451 = vunpack.c.h.b16 %v4189
  %v4452 = vunpack.c.l.b16 %v4190
  %v4453 = vunpack.c.h.b16 %v4190
  %v4454 = vunpack.c.l.b16 %v4191
  %v4455 = vunpack.c.h.b16 %v4191
  %v4456 = vunpack.c.l.b16 %v4192
  %v4457 = vunpack.c.h.b16 %v4192
  %v4458 = vunpack.c.l.b16 %v4193
  %v4459 = vunpack.c.h.b16 %v4193
  %v4460 = vunpack.c.l.b16 %v4194
  %v4461 = vunpack.c.h.b16 %v4194
  %v4462 = vunpack.c.l.b16 %v4195
  %v4463 = vunpack.c.h.b16 %v4195
  %v4464 = vunpack.c.l.b16 %v4196
  %v4465 = vunpack.c.h.b16 %v4196
  %v4466 = vunpack.c.l.b16 %v4197
  %v4467 = vunpack.c.h.b16 %v4197
  %v4468 = vunpack.c.l.b16 %v4198
  %v4469 = vunpack.c.h.b16 %v4198
  %v4470 = vunpack.c.l.b16 %v4199
  %v4471 = vunpack.c.h.b16 %v4199
  %v4472 = vunpack.c.l.b16 %v4200
  %v4473 = vunpack.c.h.b16 %v4200
  %v4474 = vunpack.c.l.b16 %v4201
  %v4475 = vunpack.c.h.b16 %v4201
  %v4476 = vunpack.c.l.b16 %v4202
  %v4477 = vunpack.c.h.b16 %v4202
  %v4478 = vunpack.c.l.b16 %v4203
  %v4479 = vunpack.c.h.b16 %v4203
  %v4480 = vunpack.c.l.b16 %v4204
  %v4481 = vunpack.c.h.b16 %v4204
  %v4482 = vunpack.c.l.b16 %v4205
  %v4483 = vunpack.c.h.b16 %v4205
  %v4484 = vunpack.c.l.b16 %v4206
  %v4485 = vunpack.c.h.b16 %v4206
  %v4486 = vunpack.c.l.b16 %v4207
  %v4487 = vunpack.c.h.b16 %v4207
  %v4488 = vunpack.c.l.b16 %v4208
  %v4489 = vunpack.c.h.b16 %v4208
  %v4490 = vunpack.c.l.b16 %v4209
  %v4491 = vunpack.c.h.b16 %v4209
  %v4492 = vunpack.c.l.b16 %v4210
  %v4493 = vunpack.c.h.b16 %v4210
  %v4494 = vunpack.c.l.b16 %v4211
  %v4495 = vunpack.c.h.b16 %v4211
  %v4496 = vunpack.c.l.b16 %v4212
  %v4497 = vunpack.c.h.b16 %v4212
  %v4498 = vunpack.c.l.b16 %v4213
  %v4499 = vunpack.c.h.b16 %v4213
  %v4500 = vunpack.c.l.b16 %v4214
  %v4501 = vunpack.c.h.b16 %v4214
  %v4502 = vunpack.c.l.b16 %v4215
  %v4503 = vunpack.c.h.b16 %v4215
  %v4504 = vunpack.c.l.b16 %v4216
  %v4505 = vunpack.c.h.b16 %v4216
  %v4506 = vunpack.c.l.b16 %v4217
  %v4507 = vunpack.c.h.b16 %v4217
  %v4508 = vunpack.c.l.b16 %v4218
  %v4509 = vunpack.c.h.b16 %v4218
  %v4510 = vunpack.c.l.b16 %v4219
  %v4511 = vunpack.c.h.b16 %v4219
  %v4512 = vunpack.c.l.b16 %v4220
  %v4513 = vunpack.c.h.b16 %v4220
  %v4514 = vunpack.c.l.b16 %v4221
  %v4515 = vunpack.c.h.b16 %v4221
  %v4516 = vunpack.c.l.b16 %v4222
  %v4517 = vunpack.c.h.b16 %v4222
  %v4518 = vunpack.c.l.b16 %v4223
  %v4519 = vunpack.c.h.b16 %v4223
  %v4520 = vunpack.c.l.b16 %v4224
  %v4521 = vunpack.c.h.b16 %v4224
  %v4522 = vunpack.c.l.b16 %v4225
  %v4523 = vunpack.c.h.b16 %v4225
  %v4524 = vunpack.c.l.b16 %v4226
  %v4525 = vunpack.c.h.b16 %v4226
  %v4526 = vunpack.c.l.b16 %v4227
  %v4527 = vunpack.c.h.b16 %v4227
  %v4528 = vunpack.c.l.b16 %v4228
  %v4529 = vunpack.c.h.b16 %v4228
  %v4530 = vunpack.c.l.b16 %v4229
  %v4531 = vunpack.c.h.b16 %v4229
  %v4532 = vunpack.c.l.b16 %v4230
  %v4533 = vunpack.c.h.b16 %v4230
  %v4534 = vunpack.c.l.b16 %v4231
  %v4535 = vunpack.c.h.b16 %v4231
  %v4536 = vunpack.c.l.b16 %v4232
  %v4537 = vunpack.c.h.b16 %v4232
  %v4538 = vunpack.c.l.b16 %v4233
  %v4539 = vunpack.c.h.b16 %v4233
  %v4540 = vunpack.c.l.b16 %v4234
  %v4541 = vunpack.c.h.b16 %v4234
  %v4542 = vunpack.c.l.b16 %v4235
  %v4543 = vunpack.c.h.b16 %v4235
  %v4544 = vunpack.c.l.b16 %v4236
  %v4545 = vunpack.c.h.b16 %v4236
  %v4546 = vunpack.c.l.b16 %v4237
  %v4547 = vunpack.c.h.b16 %v4237
  %v4548 = vunpack.c.l.b16 %v4238
  %v4549 = vunpack.c.h.b16 %v4238
  %v4550 = vunpack.c.l.b16 %v4239
  %v4551 = vunpack.c.h.b16 %v4239
  %v4552 = vunpack.c.l.b16 %v4240
  %v4553 = vunpack.c.h.b16 %v4240
  %v4554 = vunpack.c.l.b16 %v4241
  %v4555 = vunpack.c.h.b16 %v4241
  %v4556 = vunpack.c.l.b16 %v4242
  %v4557 = vunpack.c.h.b16 %v4242
  %v4558 = vunpack.c.l.b16 %v4243
  %v4559 = vunpack.c.h.b16 %v4243
  %v4560 = vunpack.c.l.b16 %v4244
  %v4561 = vunpack.c.h.b16 %v4244
  %v4562 = vunpack.c.l.b16 %v4245
  %v4563 = vunpack.c.h.b16 %v4245
  %v4564 = vunpack.c.l.b16 %v4246
  %v4565 = vunpack.c.h.b16 %v4246
  %v4566 = vunpack.c.l.b16 %v4247
  %v4567 = vunpack.c.h.b16 %v4247
  %v4568 = vunpack.c.l.b16 %v4248
  %v4569 = vunpack.c.h.b16 %v4248
  %v4570 = vunpack.c.l.b16 %v4249
  %v4571 = vunpack.c.h.b16 %v4249
  %v4572 = vunpack.c.l.b16 %v4250
  %v4573 = vunpack.c.h.b16 %v4250
  %v4574 = vunpack.c.l.b16 %v4251
  %v4575 = vunpack.c.h.b16 %v4251
  %v4576 = vunpack.c.l.b16 %v4252
  %v4577 = vunpack.c.h.b16 %v4252
  %v4578 = vunpack.c.l.b16 %v4253
  %v4579 = vunpack.c.h.b16 %v4253
  %v4580 = vunpack.c.l.b16 %v4254
  %v4581 = vunpack.c.h.b16 %v4254
  %v4582 = vunpack.c.l.b16 %v4255
  %v4583 = vunpack.c.h.b16 %v4255
  %v4584 = vunpack.c.l.b16 %v4256
  %v4585 = vunpack.c.h.b16 %v4256
  %v4586 = vunpack.c.l.b16 %v4257
  %v4587 = vunpack.c.h.b16 %v4257
  %v4588 = vunpack.c.l.b16 %v4258
  %v4589 = vunpack.c.h.b16 %v4258
  %v4590 = vunpack.c.l.b16 %v4259
  %v4591 = vunpack.c.h.b16 %v4259
  %v4592 = vunpack.c.l.b16 %v4260
  %v4593 = vunpack.c.h.b16 %v4260
  %v4594 = vunpack.c.l.b16 %v4261
  %v4595 = vunpack.c.h.b16 %v4261
  %v4596 = vunpack.c.l.b16 %v4262
  %v4597 = vunpack.c.h.b16 %v4262
  %v4598 = vunpack.c.l.b16 %v4263
  %v4599 = vunpack.c.h.b16 %v4263
  %v4600 = vunpack.c.l.b16 %v4264
  %v4601 = vunpack.c.h.b16 %v4264
  %v4602 = vunpack.c.l.b16 %v4265
  %v4603 = vunpack.c.h.b16 %v4265
  %v4604 = vunpack.c.l.b16 %v4266
  %v4605 = vunpack.c.h.b16 %v4266
  %v4606 = vunpack.c.l.b16 %v4267
  %v4607 = vunpack.c.h.b16 %v4267
  %v4608 = vunpack.c.l.b16 %v4268
  %v4609 = vunpack.c.h.b16 %v4268
  %v4610 = vunpack.c.l.b16 %v4269
  %v4611 = vunpack.c.h.b16 %v4269
  %v4612 = vunpack.c.l.b16 %v4270
  %v4613 = vunpack.c.h.b16 %v4270
  %v4614 = vunpack.c.l.b16 %v4271
  %v4615 = vunpack.c.h.b16 %v4271
  %v4616 = vunpack.c.l.b16 %v4272
  %v4617 = vunpack.c.h.b16 %v4272
  %v4618 = vunpack.c.l.b16 %v4273
  %v4619 = vunpack.c.h.b16 %v4273
  %v4620 = vunpack.c.l.b16 %v4274
  %v4621 = vunpack.c.h.b16 %v4274
  %v4622 = vunpack.c.l.b16 %v4275
  %v4623 = vunpack.c.h.b16 %v4275
  %v4624 = vunpack.c.l.b16 %v4276
  %v4625 = vunpack.c.h.b16 %v4276
  %v4626 = vunpack.c.l.b16 %v4277
  %v4627 = vunpack.c.h.b16 %v4277
  %v4628 = vunpack.c.l.b16 %v4278
  %v4629 = vunpack.c.h.b16 %v4278
  %v4630 = vunpack.c.l.b16 %v4279
  %v4631 = vunpack.c.h.b16 %v4279
  %v4632 = vunpack.c.l.b16 %v4280
  %v4633 = vunpack.c.h.b16 %v4280
  %v4634 = vunpack.c.l.b16 %v4281
  %v4635 = vunpack.c.h.b16 %v4281
  %v4636 = vunpack.c.l.b16 %v4282
  %v4637 = vunpack.c.h.b16 %v4282
  %v4638 = vunpack.c.l.b16 %v4283
  %v4639 = vunpack.c.h.b16 %v4283
  %v4640 = vunpack.c.l.b16 %v4284
  %v4641 = vunpack.c.h.b16 %v4284
  %v4642 = vunpack.c.l.b16 %v4285
  %v4643 = vunpack.c.h.b16 %v4285
  %v4644 = vunpack.c.l.b16 %v4286
  %v4645 = vunpack.c.h.b16 %v4286
  %v4646 = vunpack.c.l.b16 %v4287
  %v4647 = vunpack.c.h.b16 %v4287
  %v4648 = vunpack.c.l.b16 %v4288
  %v4649 = vunpack.c.h.b16 %v4288
  %v4650 = vunpack.c.l.b16 %v4289
  %v4651 = vunpack.c.h.b16 %v4289
  %v4652 = vunpack.c.l.b16 %v4290
  %v4653 = vunpack.c.h.b16 %v4290
  %v4654 = vunpack.c.l.b16 %v4291
  %v4655 = vunpack.c.h.b16 %v4291
  %v4656 = vunpack.c.l.b16 %v4292
  %v4657 = vunpack.c.h.b16 %v4292
  %v4658 = vunpack.c.l.b16 %v4293
  %v4659 = vunpack.c.h.b16 %v4293
  %v4660 = vunpack.c.l.b16 %v4294
  %v4661 = vunpack.c.h.b16 %v4294
  %v4662 = vunpack.c.l.b16 %v4295
  %v4663 = vunpack.c.h.b16 %v4295
  %v4664 = vunpack.c.l.b16 %v4296
  %v4665 = vunpack.c.h.b16 %v4296
  %v4666 = vunpack.c.l.b16 %v4297
  %v4667 = vunpack.c.h.b16 %v4297
  %v4668 = vunpack.c.l.b16 %v4298
  %v4669 = vunpack.c.h.b16 %v4298
  %v4670 = vunpack.c.l.b16 %v4299
  %v4671 = vunpack.c.h.b16 %v4299
  %v4672 = vunpack.c.l.b16 %v4300
  %v4673 = vunpack.c.h.b16 %v4300
  %v4674 = vunpack.c.l.b16 %v4301
  %v4675 = vunpack.c.h.b16 %v4301
  %v4676 = vunpack.c.l.b16 %v4302
  %v4677 = vunpack.c.h.b16 %v4302
  %v4678 = vunpack.c.l.b16 %v4303
  %v4679 = vunpack.c.h.b16 %v4303
  %v4680 = vunpack.c.l.b16 %v4304
  %v4681 = vunpack.c.h.b16 %v4304
  %v4682 = vunpack.c.l.b16 %v4305
  %v4683 = vunpack.c.h.b16 %v4305
  %v4684 = vunpack.c.l.b16 %v4306
  %v4685 = vunpack.c.h.b16 %v4306
  %v4686 = vunpack.c.l.b16 %v4307
  %v4687 = vunpack.c.h.b16 %v4307
  %v4688 = vunpack.c.l.b16 %v4308
  %v4689 = vunpack.c.h.b16 %v4308
  %v4690 = vunpack.c.l.b16 %v4309
  %v4691 = vunpack.c.h.b16 %v4309
  %v4692 = vunpack.c.l.b16 %v4310
  %v4693 = vunpack.c.h.b16 %v4310
  %v4694 = vunpack.c.l.b16 %v4311
  %v4695 = vunpack.c.h.b16 %v4311
  %v4696 = vpack.c.b16 %v4448, %v4440
  %v4697 = vpack.c.b16 %v4449, %v4441
  %v4698 = vpack.c.b16 %v4450, %v4442
  %v4699 = vpack.c.b16 %v4451, %v4443
  %v4700 = vpack.c.b16 %v4452, %v4444
  %v4701 = vpack.c.b16 %v4453, %v4445
  %v4702 = vpack.c.b16 %v4454, %v4446
  %v4703 = vpack.c.b16 %v4455, %v4447
  %v4704 = vpack.c.b16 %v4464, %v4456
  %v4705 = vpack.c.b16 %v4465, %v4457
  %v4706 = vpack.c.b16 %v4466, %v4458
  %v4707 = vpack.c.b16 %v4467, %v4459
  %v4708 = vpack.c.b16 %v4468, %v4460
  %v4709 = vpack.c.b16 %v4469, %v4461
  %v4710 = vpack.c.b16 %v4470, %v4462
  %v4711 = vpack.c.b16 %v4471, %v4463
  %v4712 = vpack.c.b16 %v4480, %v4472
  %v4713 = vpack.c.b16 %v4481, %v4473
  %v4714 = vpack.c.b16 %v4482, %v4474
  %v4715 = vpack.c.b16 %v4483, %v4475
  %v4716 = vpack.c.b16 %v4484, %v4476
  %v4717 = vpack.c.b16 %v4485, %v4477
  %v4718 = vpack.c.b16 %v4486, %v4478
  %v4719 = vpack.c.b16 %v4487, %v4479
  %v4720 = vpack.c.b16 %v4496, %v4488
  %v4721 = vpack.c.b16 %v4497, %v4489
  %v4722 = vpack.c.b16 %v4498, %v4490
  %v4723 = vpack.c.b16 %v4499, %v4491
  %v4724 = vpack.c.b16 %v4500, %v4492
  %v4725 = vpack.c.b16 %v4501, %v4493
  %v4726 = vpack.c.b16 %v4502, %v4494
  %v4727 = vpack.c.b16 %v4503, %v4495
  %v4728 = vpack.c.b16 %v4512, %v4504
  %v4729 = vpack.c.b16 %v4513, %v4505
  %v4730 = vpack.c.b16 %v4514, %v4506
  %v4731 = vpack.c.b16 %v4515, %v4507
  %v4732 = vpack.c.b16 %v4516, %v4508
  %v4733 = vpack.c.b16 %v4517, %v4509
  %v4734 = vpack.c.b16 %v4518, %v4510
  %v4735 = vpack.c.b16 %v4519, %v4511
  %v4736 = vpack.c.b16 %v4528, %v4520
  %v4737 = vpack.c.b16 %v4529, %v4521
  %v4738 = vpack.c.b16 %v4530, %v4522
  %v4739 = vpack.c.b16 %v4531, %v4523
  %v4740 = vpack.c.b16 %v4532, %v4524
  %v4741 = vpack.c.b16 %v4533, %v4525
  %v4742 = vpack.c.b16 %v4534, %v4526
  %v4743 = vpack.c.b16 %v4535, %v4527
  %v4744 = vpack.c.b16 %v4544, %v4536
  %v4745 = vpack.c.b16 %v4545, %v4537
  %v4746 = vpack.c.b16 %v4546, %v4538
  %v4747 = vpack.c.b16 %v4547, %v4539
  %v4748 = vpack.c.b16 %v4548, %v4540
  %v4749 = vpack.c.b16 %v4549, %v4541
  %v4750 = vpack.c.b16 %v4550, %v4542
  %v4751 = vpack.c.b16 %v4551, %v4543
  %v4752 = vpack.c.b16 %v4560, %v4552
  %v4753 = vpack.c.b16 %v4561, %v4553
  %v4754 = vpack.c.b16 %v4562, %v4554
  %v4755 = vpack.c.b16 %v4563, %v4555
  %v4756 = vpack.c.b16 %v4564, %v4556
  %v4757 = vpack.c.b16 %v4565, %v4557
  %v4758 = vpack.c.b16 %v4566, %v4558
  %v4759 = vpack.c.b16 %v4567, %v4559
  %v4760 = vpack.c.b16 %v4576, %v4568
  %v4761 = vpack.c.b16 %v4577, %v4569
  %v4762 = vpack.c.b16 %v4578, %v4570
  %v4763 = vpack.c.b16 %v4579, %v4571
  %v4764 = vpack.c.b16 %v4580, %v4572
  %v4765 = vpack.c.b16 %v4581, %v4573
  %v4766 = vpack.c.b16 %v4582, %v4574
  %v4767 = vpack.c.b16 %v4583, %v4575
  %v4768 = vpack.c.b16 %v4592, %v4584
  %v4769 = vpack.c.b16 %v4593, %v4585
  %v4770 = vpack.c.b16 %v4594, %v4586
  %v4771 = vpack.c.b16 %v4595, %v4587
  %v4772 = vpack.c.b16 %v4596, %v4588
  %v4773 = vpack.c.b16 %v4597, %v4589
  %v4774 = vpack.c.b16 %v4598, %v4590
  %v4775 = vpack.c.b16 %v4599, %v4591
  %v4776 = vpack.c.b16 %v4608, %v4600
  %v4777 = vpack.c.b16 %v4609, %v4601
  %v4778 = vpack.c.b16 %v4610, %v4602
  %v4779 = vpack.c.b16 %v4611, %v4603
  %v4780 = vpack.c.b16 %v4612, %v4604
  %v4781 = vpack.c.b16 %v4613, %v4605
  %v4782 = vpack.c.b16 %v4614, %v4606
  %v4783 = vpack.c.b16 %v4615, %v4607
  %v4784 = vpack.c.b16 %v4624, %v4616
  %v4785 = vpack.c.b16 %v4625, %v4617
  %v4786 = vpack.c.b16 %v4626, %v4618
  %v4787 = vpack.c.b16 %v4627, %v4619
  %v4788 = vpack.c.b16 %v4628, %v4620
  %v4789 = vpack.c.b16 %v4629, %v4621
  %v4790 = vpack.c.b16 %v4630, %v4622
  %v4791 = vpack.c.b16 %v4631, %v4623
  %v4792 = vpack.c.b16 %v4640, %v4632
  %v4793 = vpack.c.b16 %v4641, %v4633
  %v4794 = vpack.c.b16 %v4642, %v4634
  %v4795 = vpack.c.b16 %v4643, %v4635
  %v4796 = vpack.c.b16 %v4644, %v4636
  %v4797 = vpack.c.b16 %v4645, %v4637
  %v4798 = vpack.c.b16 %v4646, %v4638
  %v4799 = vpack.c.b16 %v4647, %v4639
  %v4800 = vpack.c.b16 %v4656, %v4648
  %v4801 = vpack.c.b16 %v4657, %v4649
  %v4802 = vpack.c.b16 %v4658, %v4650
  %v4803 = vpack.c.b16 %v4659, %v4651
  %v4804 = vpack.c.b16 %v4660, %v4652
  %v4805 = vpack.c.b16 %v4661, %v4653
  %v4806 = vpack.c.b16 %v4662, %v4654
  %v4807 = vpack.c.b16 %v4663, %v4655
  %v4808 = vpack.c.b16 %v4672, %v4664
  %v4809 = vpack.c.b16 %v4673, %v4665
  %v4810 = vpack.c.b16 %v4674, %v4666
  %v4811 = vpack.c.b16 %v4675, %v4667
  %v4812 = vpack.c.b16 %v4676, %v4668
  %v4813 = vpack.c.b16 %v4677, %v4669
  %v4814 = vpack.c.b16 %v4678, %v4670
  %v4815 = vpack.c.b16 %v4679, %v4671
  %v4816 = vpack.c.b16 %v4688, %v4680
  %v4817 = vpack.c.b16 %v4689, %v4681
  %v4818 = vpack.c.b16 %v4690, %v4682
  %v4819 = vpack.c.b16 %v4691, %v4683
  %v4820 = vpack.c.b16 %v4692, %v4684
  %v4821 = vpack.c.b16 %v4693, %v4685
  %v4822 = vpack.c.b16 %v4694, %v4686
  %v4823 = vpack.c.b16 %v4695, %v4687
  %4952 = vmatprep.subr.bf16.mxu0 %v4697
  %4953 = vmatpush1.bf16.msra.mxu0 %v4696
  %4954 = vmatprep.subr.bf16.mxu0 %v4705
  %4955 = vmatpush1.bf16.msra.mxu0 %v4704
  %4956 = vmatprep.subr.bf16.mxu0 %v4713
  %4957 = vmatpush1.bf16.msra.mxu0 %v4712
  %4958 = vmatprep.subr.bf16.mxu0 %v4721
  %4959 = vmatpush1.bf16.msra.mxu0 %v4720
  %4960 = vmatprep.subr.bf16.mxu0 %v4729
  %4961 = vmatpush1.bf16.msra.mxu0 %v4728
  %4962 = vmatprep.subr.bf16.mxu0 %v4737
  %4963 = vmatpush1.bf16.msra.mxu0 %v4736
  %4964 = vmatprep.subr.bf16.mxu0 %v4745
  %4965 = vmatpush1.bf16.msra.mxu0 %v4744
  %4966 = vmatprep.subr.bf16.mxu0 %v4753
  %4967 = vmatpush1.bf16.msra.mxu0 %v4752
  %4968 = vmatprep.subr.bf16.mxu0 %v4761
  %4969 = vmatpush1.bf16.msra.mxu0 %v4760
  %4970 = vmatprep.subr.bf16.mxu0 %v4769
  %4971 = vmatpush1.bf16.msra.mxu0 %v4768
  %4972 = vmatprep.subr.bf16.mxu0 %v4777
  %4973 = vmatpush1.bf16.msra.mxu0 %v4776
  %4974 = vmatprep.subr.bf16.mxu0 %v4785
  %4975 = vmatpush1.bf16.msra.mxu0 %v4784
  %4976 = vmatprep.subr.bf16.mxu0 %v4793
  %4977 = vmatpush1.bf16.msra.mxu0 %v4792
  %4978 = vmatprep.subr.bf16.mxu0 %v4801
  %4979 = vmatpush1.bf16.msra.mxu0 %v4800
  %4980 = vmatprep.subr.bf16.mxu0 %v4809
  %4981 = vmatpush1.bf16.msra.mxu0 %v4808
  %4982 = vmatprep.subr.bf16.mxu0 %v4817
  %4983 = vmatpush1.bf16.msra.mxu0 %v4816
  %4984 = vmatprep.mubr.bf16.mxu0 %v4183
  %4985 = vmatmul.mubr.bf16.gmra.mrb[0].mxu0 %v4182
  %v4986 = vpop.f32.mrb[0].mxu0
  %v4987 = vadd.f32 0.0, %v4986
  %v4988 = vpop.f32.mrb[0].mxu0
  %v4989 = vadd.f32 0.0, %v4988
  %v4990 = vpop.f32.mrb[0].mxu0
  %v4991 = vpop.f32.mrb[0].mxu0
  %4992 = vdwg.mxu0
  %4993 = vmatprep.subr.bf16.mxu0 %v4699
  %4994 = vmatpush1.bf16.msra.mxu0 %v4698
  %4995 = vmatprep.subr.bf16.mxu0 %v4707
  %4996 = vmatpush1.bf16.msra.mxu0 %v4706
  %4997 = vmatprep.subr.bf16.mxu0 %v4715
  %4998 = vmatpush1.bf16.msra.mxu0 %v4714
  %4999 = vmatprep.subr.bf16.mxu0 %v4723
  %5000 = vmatpush1.bf16.msra.mxu0 %v4722
  %5001 = vmatprep.subr.bf16.mxu0 %v4731
  %5002 = vmatpush1.bf16.msra.mxu0 %v4730
  %5003 = vmatprep.subr.bf16.mxu0 %v4739
  %5004 = vmatpush1.bf16.msra.mxu0 %v4738
  %5005 = vmatprep.subr.bf16.mxu0 %v4747
  %5006 = vmatpush1.bf16.msra.mxu0 %v4746
  %5007 = vmatprep.subr.bf16.mxu0 %v4755
  %5008 = vmatpush1.bf16.msra.mxu0 %v4754
  %5009 = vmatprep.subr.bf16.mxu0 %v4763
  %5010 = vmatpush1.bf16.msra.mxu0 %v4762
  %5011 = vmatprep.subr.bf16.mxu0 %v4771
  %5012 = vmatpush1.bf16.msra.mxu0 %v4770
  %5013 = vmatprep.subr.bf16.mxu0 %v4779
  %5014 = vmatpush1.bf16.msra.mxu0 %v4778
  %5015 = vmatprep.subr.bf16.mxu0 %v4787
  %5016 = vmatpush1.bf16.msra.mxu0 %v4786
  %5017 = vmatprep.subr.bf16.mxu0 %v4795
  %5018 = vmatpush1.bf16.msra.mxu0 %v4794
  %5019 = vmatprep.subr.bf16.mxu0 %v4803
  %5020 = vmatpush1.bf16.msra.mxu0 %v4802
  %5021 = vmatprep.subr.bf16.mxu0 %v4811
  %5022 = vmatpush1.bf16.msra.mxu0 %v4810
  %5023 = vmatprep.subr.bf16.mxu0 %v4819
  %5024 = vmatpush1.bf16.msra.mxu0 %v4818
  %5025 = vmatprep.mubr.bf16.mxu0 %v4183
  %5026 = vmatmul.mubr.bf16.gmra.mrb[0].mxu0 %v4182
  %v5027 = vpop.f32.mrb[0].mxu0
  %v5028 = vadd.f32 0.0, %v5027
  %v5029 = vpop.f32.mrb[0].mxu0
  %v5030 = vadd.f32 0.0, %v5029
  %v5031 = vpop.f32.mrb[0].mxu0
  %v5032 = vpop.f32.mrb[0].mxu0
  %5033 = vdwg.mxu0
  %5034 = vmatprep.subr.bf16.mxu0 %v4701
  %5035 = vmatpush1.bf16.msra.mxu0 %v4700
  %5036 = vmatprep.subr.bf16.mxu0 %v4709
  %5037 = vmatpush1.bf16.msra.mxu0 %v4708
  %5038 = vmatprep.subr.bf16.mxu0 %v4717
  %5039 = vmatpush1.bf16.msra.mxu0 %v4716
  %5040 = vmatprep.subr.bf16.mxu0 %v4725
  %5041 = vmatpush1.bf16.msra.mxu0 %v4724
  %5042 = vmatprep.subr.bf16.mxu0 %v4733
  %5043 = vmatpush1.bf16.msra.mxu0 %v4732
  %5044 = vmatprep.subr.bf16.mxu0 %v4741
  %5045 = vmatpush1.bf16.msra.mxu0 %v4740
  %5046 = vmatprep.subr.bf16.mxu0 %v4749
  %5047 = vmatpush1.bf16.msra.mxu0 %v4748
  %5048 = vmatprep.subr.bf16.mxu0 %v4757
  %5049 = vmatpush1.bf16.msra.mxu0 %v4756
  %5050 = vmatprep.subr.bf16.mxu0 %v4765
  %5051 = vmatpush1.bf16.msra.mxu0 %v4764
  %5052 = vmatprep.subr.bf16.mxu0 %v4773
  %5053 = vmatpush1.bf16.msra.mxu0 %v4772
  %5054 = vmatprep.subr.bf16.mxu0 %v4781
  %5055 = vmatpush1.bf16.msra.mxu0 %v4780
  %5056 = vmatprep.subr.bf16.mxu0 %v4789
  %5057 = vmatpush1.bf16.msra.mxu0 %v4788
  %5058 = vmatprep.subr.bf16.mxu0 %v4797
  %5059 = vmatpush1.bf16.msra.mxu0 %v4796
  %5060 = vmatprep.subr.bf16.mxu0 %v4805
  %5061 = vmatpush1.bf16.msra.mxu0 %v4804
  %5062 = vmatprep.subr.bf16.mxu0 %v4813
  %5063 = vmatpush1.bf16.msra.mxu0 %v4812
  %5064 = vmatprep.subr.bf16.mxu0 %v4821
  %5065 = vmatpush1.bf16.msra.mxu0 %v4820
  %5066 = vmatprep.mubr.bf16.mxu0 %v4183
  %5067 = vmatmul.mubr.bf16.gmra.mrb[0].mxu0 %v4182
  %v5068 = vpop.f32.mrb[0].mxu0
  %v5069 = vadd.f32 0.0, %v5068
  %v5070 = vpop.f32.mrb[0].mxu0
  %v5071 = vadd.f32 0.0, %v5070
  %v5072 = vpop.f32.mrb[0].mxu0
  %v5073 = vpop.f32.mrb[0].mxu0
  %5074 = vdwg.mxu0
  %5075 = vmatprep.subr.bf16.mxu0 %v4703
  %5076 = vmatpush1.bf16.msra.mxu0 %v4702
  %5077 = vmatprep.subr.bf16.mxu0 %v4711
  %5078 = vmatpush1.bf16.msra.mxu0 %v4710
  %5079 = vmatprep.subr.bf16.mxu0 %v4719
  %5080 = vmatpush1.bf16.msra.mxu0 %v4718
  %5081 = vmatprep.subr.bf16.mxu0 %v4727
  %5082 = vmatpush1.bf16.msra.mxu0 %v4726
  %5083 = vmatprep.subr.bf16.mxu0 %v4735
  %5084 = vmatpush1.bf16.msra.mxu0 %v4734
  %5085 = vmatprep.subr.bf16.mxu0 %v4743
  %5086 = vmatpush1.bf16.msra.mxu0 %v4742
  %5087 = vmatprep.subr.bf16.mxu0 %v4751
  %5088 = vmatpush1.bf16.msra.mxu0 %v4750
  %5089 = vmatprep.subr.bf16.mxu0 %v4759
  %5090 = vmatpush1.bf16.msra.mxu0 %v4758
  %5091 = vmatprep.subr.bf16.mxu0 %v4767
  %5092 = vmatpush1.bf16.msra.mxu0 %v4766
  %5093 = vmatprep.subr.bf16.mxu0 %v4775
  %5094 = vmatpush1.bf16.msra.mxu0 %v4774
  %5095 = vmatprep.subr.bf16.mxu0 %v4783
  %5096 = vmatpush1.bf16.msra.mxu0 %v4782
  %5097 = vmatprep.subr.bf16.mxu0 %v4791
  %5098 = vmatpush1.bf16.msra.mxu0 %v4790
  %5099 = vmatprep.subr.bf16.mxu0 %v4799
  %5100 = vmatpush1.bf16.msra.mxu0 %v4798
  %5101 = vmatprep.subr.bf16.mxu0 %v4807
  %5102 = vmatpush1.bf16.msra.mxu0 %v4806
  %5103 = vmatprep.subr.bf16.mxu0 %v4815
  %5104 = vmatpush1.bf16.msra.mxu0 %v4814
  %5105 = vmatprep.subr.bf16.mxu0 %v4823
  %5106 = vmatpush1.bf16.msra.mxu0 %v4822
  %5107 = vmatprep.mubr.bf16.mxu0 %v4183
  %5108 = vmatmul.mubr.bf16.gmra.mrb[0].mxu0 %v4182
  %v5109 = vpop.f32.mrb[0].mxu0
  %v5110 = vadd.f32 0.0, %v5109
  %v5111 = vpop.f32.mrb[0].mxu0
  %v5112 = vadd.f32 0.0, %v5111
  %v5113 = vpop.f32.mrb[0].mxu0
  %v5114 = vpop.f32.mrb[0].mxu0
  %5115 = vdwg.mxu0
  %v5116 = vadd.f32 %v4174, %v4987
  %v5117 = vadd.f32 %v4175, %v4989
  %v5118 = vadd.f32 %v4176, %v5028
  %v5119 = vadd.f32 %v4177, %v5030
  %v5120 = vadd.f32 %v4178, %v5069
  %v5121 = vadd.f32 %v4179, %v5071
  %v5122 = vadd.f32 %v4180, %v5110
  %v5123 = vadd.f32 %v4181, %v5112
  %v5124 = vxor.u32 %v5116, 2147483648
  %v5125 = vxor.u32 %v5117, 2147483648
  %v5126 = vmul.f32 %v5124, 1.442695
  %v5127 = vpow.pop %v5126
  %v5128 = vmul.f32 %v5125, 1.442695
  %v5129 = vpow.pop %v5128
  %v5130 = vadd.f32 %v5127, 1.0
  %v5131 = vadd.f32 %v5129, 1.0
  %v5132 = vrcp.pop %v5130
  %v5133 = vmul.f32 1.0, %v5132
  %v5134 = vrcp.pop %v5131
  %v5135 = vmul.f32 1.0, %v5134
  %v5136 = vxor.u32 %v5118, 2147483648
  %v5137 = vxor.u32 %v5119, 2147483648
  %v5138 = vmul.f32 %v5136, 1.442695
  %v5139 = vpow.pop %v5138
  %v5140 = vmul.f32 %v5137, 1.442695
  %v5141 = vpow.pop %v5140
  %v5142 = vadd.f32 %v5139, 1.0
  %v5143 = vadd.f32 %v5141, 1.0
  %v5144 = vrcp.pop %v5142
  %v5145 = vmul.f32 1.0, %v5144
  %v5146 = vrcp.pop %v5143
  %v5147 = vmul.f32 1.0, %v5146
  %v5148 = vtanh.pop %v5120
  %v5149 = vtanh.pop %v5121
  %v5150 = vxor.u32 %v5122, 2147483648
  %v5151 = vxor.u32 %v5123, 2147483648
  %v5152 = vmul.f32 %v5150, 1.442695
  %v5153 = vpow.pop %v5152
  %v5154 = vmul.f32 %v5151, 1.442695
  %v5155 = vpow.pop %v5154
  %v5156 = vadd.f32 %v5153, 1.0
  %v5157 = vadd.f32 %v5155, 1.0
  %v5158 = vrcp.pop %v5156
  %v5159 = vmul.f32 1.0, %v5158
  %v5160 = vrcp.pop %v5157
  %v5161 = vmul.f32 1.0, %v5160
  %v5162 = vmul.f32 %v5145, %v4150
  %v5163 = vmul.f32 %v5147, %v4151
  %v5164 = vmul.f32 %v5133, %v5148
  %v5165 = vmul.f32 %v5135, %v5149
  %v5166 = vadd.f32 %v5162, %v5164
  %v5167 = vadd.f32 %v5163, %v5165
  %v5168 = vtanh.pop %v5166
  %v5169 = vtanh.pop %v5167
  %v5170 = vmul.f32 %v5159, %v5168
  %v5171 = vmul.f32 %v5161, %v5169
  %5172 = vst [vmem:[#allocation3 + $0x30] sm:$0xff] %v5170
  %5173 = vst [vmem:[#allocation3 + $0x48] sm:$0xff] %v5171
  %v5174 = vld [vmem:[#allocation2 + $0x100] sm:$0xff]
  %v5175 = vld [vmem:[#allocation2 + $0x108] sm:$0xff]
  %v5176 = vld [vmem:[#allocation2 + $0x110] sm:$0xff]
  %v5177 = vld [vmem:[#allocation2 + $0x118] sm:$0xff]
  %v5178 = vld [vmem:[#allocation2 + $0x120] sm:$0xff]
  %v5179 = vld [vmem:[#allocation2 + $0x128] sm:$0xff]
  %v5180 = vld [vmem:[#allocation2 + $0x130] sm:$0xff]
  %v5181 = vld [vmem:[#allocation2 + $0x138] sm:$0xff]
  %v5182 = vld [vmem:[#allocation2 + $0xc0] sm:$0xff]
  %v5183 = vld [vmem:[#allocation2 + $0xc8] sm:$0xff]
  %v5184 = vld [vmem:[#allocation2 + $0xd0] sm:$0xff]
  %v5185 = vld [vmem:[#allocation2 + $0xd8] sm:$0xff]
  %v5186 = vld [vmem:[#allocation2 + $0xe0] sm:$0xff]
  %v5187 = vld [vmem:[#allocation2 + $0xe8] sm:$0xff]
  %v5188 = vld [vmem:[#allocation2 + $0xf0] sm:$0xff]
  %v5189 = vld [vmem:[#allocation2 + $0xf8] sm:$0xff]
  %v5190 = vsel %vm318, %v5174, %v5182
  %v5191 = vsel %vm319, %v5175, %v5183
  %v5192 = vsel %vm320, %v5176, %v5184
  %v5193 = vsel %vm321, %v5177, %v5185
  %v5194 = vsel %vm322, %v5178, %v5186
  %v5195 = vsel %vm323, %v5179, %v5187
  %v5196 = vsel %vm324, %v5180, %v5188
  %v5197 = vsel %vm325, %v5181, %v5189
  %v5198 = vpack.c.bf16 %v5170, %v5170
  %v5199 = vpack.c.bf16 %v5171, %v5171
  %v5200 = vld [vmem:[%s4] sm:$0xff]
  %v5201 = vld [vmem:[%s4 + $0x8] sm:$0xff]
  %v5202 = vld [vmem:[%s4 + $0x10] sm:$0xff]
  %v5203 = vld [vmem:[%s4 + $0x18] sm:$0xff]
  %v5204 = vld [vmem:[%s4 + $0x20] sm:$0xff]
  %v5205 = vld [vmem:[%s4 + $0x28] sm:$0xff]
  %v5206 = vld [vmem:[%s4 + $0x30] sm:$0xff]
  %v5207 = vld [vmem:[%s4 + $0x38] sm:$0xff]
  %v5208 = vld [vmem:[%s4 + $0x40] sm:$0xff]
  %v5209 = vld [vmem:[%s4 + $0x48] sm:$0xff]
  %v5210 = vld [vmem:[%s4 + $0x50] sm:$0xff]
  %v5211 = vld [vmem:[%s4 + $0x58] sm:$0xff]
  %v5212 = vld [vmem:[%s4 + $0x60] sm:$0xff]
  %v5213 = vld [vmem:[%s4 + $0x68] sm:$0xff]
  %v5214 = vld [vmem:[%s4 + $0x70] sm:$0xff]
  %v5215 = vld [vmem:[%s4 + $0x78] sm:$0xff]
  %v5216 = vld [vmem:[%s4 + $0x80] sm:$0xff]
  %v5217 = vld [vmem:[%s4 + $0x88] sm:$0xff]
  %v5218 = vld [vmem:[%s4 + $0x90] sm:$0xff]
  %v5219 = vld [vmem:[%s4 + $0x98] sm:$0xff]
  %v5220 = vld [vmem:[%s4 + $0xa0] sm:$0xff]
  %v5221 = vld [vmem:[%s4 + $0xa8] sm:$0xff]
  %v5222 = vld [vmem:[%s4 + $0xb0] sm:$0xff]
  %v5223 = vld [vmem:[%s4 + $0xb8] sm:$0xff]
  %v5224 = vld [vmem:[%s4 + $0xc0] sm:$0xff]
  %v5225 = vld [vmem:[%s4 + $0xc8] sm:$0xff]
  %v5226 = vld [vmem:[%s4 + $0xd0] sm:$0xff]
  %v5227 = vld [vmem:[%s4 + $0xd8] sm:$0xff]
  %v5228 = vld [vmem:[%s4 + $0xe0] sm:$0xff]
  %v5229 = vld [vmem:[%s4 + $0xe8] sm:$0xff]
  %v5230 = vld [vmem:[%s4 + $0xf0] sm:$0xff]
  %v5231 = vld [vmem:[%s4 + $0xf8] sm:$0xff]
  %v5232 = vld [vmem:[%s4 + $0x100] sm:$0xff]
  %v5233 = vld [vmem:[%s4 + $0x108] sm:$0xff]
  %v5234 = vld [vmem:[%s4 + $0x110] sm:$0xff]
  %v5235 = vld [vmem:[%s4 + $0x118] sm:$0xff]
  %v5236 = vld [vmem:[%s4 + $0x120] sm:$0xff]
  %v5237 = vld [vmem:[%s4 + $0x128] sm:$0xff]
  %v5238 = vld [vmem:[%s4 + $0x130] sm:$0xff]
  %v5239 = vld [vmem:[%s4 + $0x138] sm:$0xff]
  %v5240 = vld [vmem:[%s4 + $0x140] sm:$0xff]
  %v5241 = vld [vmem:[%s4 + $0x148] sm:$0xff]
  %v5242 = vld [vmem:[%s4 + $0x150] sm:$0xff]
  %v5243 = vld [vmem:[%s4 + $0x158] sm:$0xff]
  %v5244 = vld [vmem:[%s4 + $0x160] sm:$0xff]
  %v5245 = vld [vmem:[%s4 + $0x168] sm:$0xff]
  %v5246 = vld [vmem:[%s4 + $0x170] sm:$0xff]
  %v5247 = vld [vmem:[%s4 + $0x178] sm:$0xff]
  %v5248 = vld [vmem:[%s4 + $0x180] sm:$0xff]
  %v5249 = vld [vmem:[%s4 + $0x188] sm:$0xff]
  %v5250 = vld [vmem:[%s4 + $0x190] sm:$0xff]
  %v5251 = vld [vmem:[%s4 + $0x198] sm:$0xff]
  %v5252 = vld [vmem:[%s4 + $0x1a0] sm:$0xff]
  %v5253 = vld [vmem:[%s4 + $0x1a8] sm:$0xff]
  %v5254 = vld [vmem:[%s4 + $0x1b0] sm:$0xff]
  %v5255 = vld [vmem:[%s4 + $0x1b8] sm:$0xff]
  %v5256 = vld [vmem:[%s4 + $0x1c0] sm:$0xff]
  %v5257 = vld [vmem:[%s4 + $0x1c8] sm:$0xff]
  %v5258 = vld [vmem:[%s4 + $0x1d0] sm:$0xff]
  %v5259 = vld [vmem:[%s4 + $0x1d8] sm:$0xff]
  %v5260 = vld [vmem:[%s4 + $0x1e0] sm:$0xff]
  %v5261 = vld [vmem:[%s4 + $0x1e8] sm:$0xff]
  %v5262 = vld [vmem:[%s4 + $0x1f0] sm:$0xff]
  %v5263 = vld [vmem:[%s4 + $0x1f8] sm:$0xff]
  %v5264 = vld [vmem:[%s4 + $0x200] sm:$0xff]
  %v5265 = vld [vmem:[%s4 + $0x208] sm:$0xff]
  %v5266 = vld [vmem:[%s4 + $0x210] sm:$0xff]
  %v5267 = vld [vmem:[%s4 + $0x218] sm:$0xff]
  %v5268 = vld [vmem:[%s4 + $0x220] sm:$0xff]
  %v5269 = vld [vmem:[%s4 + $0x228] sm:$0xff]
  %v5270 = vld [vmem:[%s4 + $0x230] sm:$0xff]
  %v5271 = vld [vmem:[%s4 + $0x238] sm:$0xff]
  %v5272 = vld [vmem:[%s4 + $0x240] sm:$0xff]
  %v5273 = vld [vmem:[%s4 + $0x248] sm:$0xff]
  %v5274 = vld [vmem:[%s4 + $0x250] sm:$0xff]
  %v5275 = vld [vmem:[%s4 + $0x258] sm:$0xff]
  %v5276 = vld [vmem:[%s4 + $0x260] sm:$0xff]
  %v5277 = vld [vmem:[%s4 + $0x268] sm:$0xff]
  %v5278 = vld [vmem:[%s4 + $0x270] sm:$0xff]
  %v5279 = vld [vmem:[%s4 + $0x278] sm:$0xff]
  %v5280 = vld [vmem:[%s4 + $0x280] sm:$0xff]
  %v5281 = vld [vmem:[%s4 + $0x288] sm:$0xff]
  %v5282 = vld [vmem:[%s4 + $0x290] sm:$0xff]
  %v5283 = vld [vmem:[%s4 + $0x298] sm:$0xff]
  %v5284 = vld [vmem:[%s4 + $0x2a0] sm:$0xff]
  %v5285 = vld [vmem:[%s4 + $0x2a8] sm:$0xff]
  %v5286 = vld [vmem:[%s4 + $0x2b0] sm:$0xff]
  %v5287 = vld [vmem:[%s4 + $0x2b8] sm:$0xff]
  %v5288 = vld [vmem:[%s4 + $0x2c0] sm:$0xff]
  %v5289 = vld [vmem:[%s4 + $0x2c8] sm:$0xff]
  %v5290 = vld [vmem:[%s4 + $0x2d0] sm:$0xff]
  %v5291 = vld [vmem:[%s4 + $0x2d8] sm:$0xff]
  %v5292 = vld [vmem:[%s4 + $0x2e0] sm:$0xff]
  %v5293 = vld [vmem:[%s4 + $0x2e8] sm:$0xff]
  %v5294 = vld [vmem:[%s4 + $0x2f0] sm:$0xff]
  %v5295 = vld [vmem:[%s4 + $0x2f8] sm:$0xff]
  %v5296 = vld [vmem:[%s4 + $0x300] sm:$0xff]
  %v5297 = vld [vmem:[%s4 + $0x308] sm:$0xff]
  %v5298 = vld [vmem:[%s4 + $0x310] sm:$0xff]
  %v5299 = vld [vmem:[%s4 + $0x318] sm:$0xff]
  %v5300 = vld [vmem:[%s4 + $0x320] sm:$0xff]
  %v5301 = vld [vmem:[%s4 + $0x328] sm:$0xff]
  %v5302 = vld [vmem:[%s4 + $0x330] sm:$0xff]
  %v5303 = vld [vmem:[%s4 + $0x338] sm:$0xff]
  %v5304 = vld [vmem:[%s4 + $0x340] sm:$0xff]
  %v5305 = vld [vmem:[%s4 + $0x348] sm:$0xff]
  %v5306 = vld [vmem:[%s4 + $0x350] sm:$0xff]
  %v5307 = vld [vmem:[%s4 + $0x358] sm:$0xff]
  %v5308 = vld [vmem:[%s4 + $0x360] sm:$0xff]
  %v5309 = vld [vmem:[%s4 + $0x368] sm:$0xff]
  %v5310 = vld [vmem:[%s4 + $0x370] sm:$0xff]
  %v5311 = vld [vmem:[%s4 + $0x378] sm:$0xff]
  %v5312 = vld [vmem:[%s4 + $0x380] sm:$0xff]
  %v5313 = vld [vmem:[%s4 + $0x388] sm:$0xff]
  %v5314 = vld [vmem:[%s4 + $0x390] sm:$0xff]
  %v5315 = vld [vmem:[%s4 + $0x398] sm:$0xff]
  %v5316 = vld [vmem:[%s4 + $0x3a0] sm:$0xff]
  %v5317 = vld [vmem:[%s4 + $0x3a8] sm:$0xff]
  %v5318 = vld [vmem:[%s4 + $0x3b0] sm:$0xff]
  %v5319 = vld [vmem:[%s4 + $0x3b8] sm:$0xff]
  %v5320 = vld [vmem:[%s4 + $0x3c0] sm:$0xff]
  %v5321 = vld [vmem:[%s4 + $0x3c8] sm:$0xff]
  %v5322 = vld [vmem:[%s4 + $0x3d0] sm:$0xff]
  %v5323 = vld [vmem:[%s4 + $0x3d8] sm:$0xff]
  %v5324 = vld [vmem:[%s4 + $0x3e0] sm:$0xff]
  %v5325 = vld [vmem:[%s4 + $0x3e8] sm:$0xff]
  %v5326 = vld [vmem:[%s4 + $0x3f0] sm:$0xff]
  %v5327 = vld [vmem:[%s4 + $0x3f8] sm:$0xff]
  %v5456 = vunpack.c.l.b16 %v5200
  %v5457 = vunpack.c.h.b16 %v5200
  %v5458 = vunpack.c.l.b16 %v5201
  %v5459 = vunpack.c.h.b16 %v5201
  %v5460 = vunpack.c.l.b16 %v5202
  %v5461 = vunpack.c.h.b16 %v5202
  %v5462 = vunpack.c.l.b16 %v5203
  %v5463 = vunpack.c.h.b16 %v5203
  %v5464 = vunpack.c.l.b16 %v5204
  %v5465 = vunpack.c.h.b16 %v5204
  %v5466 = vunpack.c.l.b16 %v5205
  %v5467 = vunpack.c.h.b16 %v5205
  %v5468 = vunpack.c.l.b16 %v5206
  %v5469 = vunpack.c.h.b16 %v5206
  %v5470 = vunpack.c.l.b16 %v5207
  %v5471 = vunpack.c.h.b16 %v5207
  %v5472 = vunpack.c.l.b16 %v5208
  %v5473 = vunpack.c.h.b16 %v5208
  %v5474 = vunpack.c.l.b16 %v5209
  %v5475 = vunpack.c.h.b16 %v5209
  %v5476 = vunpack.c.l.b16 %v5210
  %v5477 = vunpack.c.h.b16 %v5210
  %v5478 = vunpack.c.l.b16 %v5211
  %v5479 = vunpack.c.h.b16 %v5211
  %v5480 = vunpack.c.l.b16 %v5212
  %v5481 = vunpack.c.h.b16 %v5212
  %v5482 = vunpack.c.l.b16 %v5213
  %v5483 = vunpack.c.h.b16 %v5213
  %v5484 = vunpack.c.l.b16 %v5214
  %v5485 = vunpack.c.h.b16 %v5214
  %v5486 = vunpack.c.l.b16 %v5215
  %v5487 = vunpack.c.h.b16 %v5215
  %v5488 = vunpack.c.l.b16 %v5216
  %v5489 = vunpack.c.h.b16 %v5216
  %v5490 = vunpack.c.l.b16 %v5217
  %v5491 = vunpack.c.h.b16 %v5217
  %v5492 = vunpack.c.l.b16 %v5218
  %v5493 = vunpack.c.h.b16 %v5218
  %v5494 = vunpack.c.l.b16 %v5219
  %v5495 = vunpack.c.h.b16 %v5219
  %v5496 = vunpack.c.l.b16 %v5220
  %v5497 = vunpack.c.h.b16 %v5220
  %v5498 = vunpack.c.l.b16 %v5221
  %v5499 = vunpack.c.h.b16 %v5221
  %v5500 = vunpack.c.l.b16 %v5222
  %v5501 = vunpack.c.h.b16 %v5222
  %v5502 = vunpack.c.l.b16 %v5223
  %v5503 = vunpack.c.h.b16 %v5223
  %v5504 = vunpack.c.l.b16 %v5224
  %v5505 = vunpack.c.h.b16 %v5224
  %v5506 = vunpack.c.l.b16 %v5225
  %v5507 = vunpack.c.h.b16 %v5225
  %v5508 = vunpack.c.l.b16 %v5226
  %v5509 = vunpack.c.h.b16 %v5226
  %v5510 = vunpack.c.l.b16 %v5227
  %v5511 = vunpack.c.h.b16 %v5227
  %v5512 = vunpack.c.l.b16 %v5228
  %v5513 = vunpack.c.h.b16 %v5228
  %v5514 = vunpack.c.l.b16 %v5229
  %v5515 = vunpack.c.h.b16 %v5229
  %v5516 = vunpack.c.l.b16 %v5230
  %v5517 = vunpack.c.h.b16 %v5230
  %v5518 = vunpack.c.l.b16 %v5231
  %v5519 = vunpack.c.h.b16 %v5231
  %v5520 = vunpack.c.l.b16 %v5232
  %v5521 = vunpack.c.h.b16 %v5232
  %v5522 = vunpack.c.l.b16 %v5233
  %v5523 = vunpack.c.h.b16 %v5233
  %v5524 = vunpack.c.l.b16 %v5234
  %v5525 = vunpack.c.h.b16 %v5234
  %v5526 = vunpack.c.l.b16 %v5235
  %v5527 = vunpack.c.h.b16 %v5235
  %v5528 = vunpack.c.l.b16 %v5236
  %v5529 = vunpack.c.h.b16 %v5236
  %v5530 = vunpack.c.l.b16 %v5237
  %v5531 = vunpack.c.h.b16 %v5237
  %v5532 = vunpack.c.l.b16 %v5238
  %v5533 = vunpack.c.h.b16 %v5238
  %v5534 = vunpack.c.l.b16 %v5239
  %v5535 = vunpack.c.h.b16 %v5239
  %v5536 = vunpack.c.l.b16 %v5240
  %v5537 = vunpack.c.h.b16 %v5240
  %v5538 = vunpack.c.l.b16 %v5241
  %v5539 = vunpack.c.h.b16 %v5241
  %v5540 = vunpack.c.l.b16 %v5242
  %v5541 = vunpack.c.h.b16 %v5242
  %v5542 = vunpack.c.l.b16 %v5243
  %v5543 = vunpack.c.h.b16 %v5243
  %v5544 = vunpack.c.l.b16 %v5244
  %v5545 = vunpack.c.h.b16 %v5244
  %v5546 = vunpack.c.l.b16 %v5245
  %v5547 = vunpack.c.h.b16 %v5245
  %v5548 = vunpack.c.l.b16 %v5246
  %v5549 = vunpack.c.h.b16 %v5246
  %v5550 = vunpack.c.l.b16 %v5247
  %v5551 = vunpack.c.h.b16 %v5247
  %v5552 = vunpack.c.l.b16 %v5248
  %v5553 = vunpack.c.h.b16 %v5248
  %v5554 = vunpack.c.l.b16 %v5249
  %v5555 = vunpack.c.h.b16 %v5249
  %v5556 = vunpack.c.l.b16 %v5250
  %v5557 = vunpack.c.h.b16 %v5250
  %v5558 = vunpack.c.l.b16 %v5251
  %v5559 = vunpack.c.h.b16 %v5251
  %v5560 = vunpack.c.l.b16 %v5252
  %v5561 = vunpack.c.h.b16 %v5252
  %v5562 = vunpack.c.l.b16 %v5253
  %v5563 = vunpack.c.h.b16 %v5253
  %v5564 = vunpack.c.l.b16 %v5254
  %v5565 = vunpack.c.h.b16 %v5254
  %v5566 = vunpack.c.l.b16 %v5255
  %v5567 = vunpack.c.h.b16 %v5255
  %v5568 = vunpack.c.l.b16 %v5256
  %v5569 = vunpack.c.h.b16 %v5256
  %v5570 = vunpack.c.l.b16 %v5257
  %v5571 = vunpack.c.h.b16 %v5257
  %v5572 = vunpack.c.l.b16 %v5258
  %v5573 = vunpack.c.h.b16 %v5258
  %v5574 = vunpack.c.l.b16 %v5259
  %v5575 = vunpack.c.h.b16 %v5259
  %v5576 = vunpack.c.l.b16 %v5260
  %v5577 = vunpack.c.h.b16 %v5260
  %v5578 = vunpack.c.l.b16 %v5261
  %v5579 = vunpack.c.h.b16 %v5261
  %v5580 = vunpack.c.l.b16 %v5262
  %v5581 = vunpack.c.h.b16 %v5262
  %v5582 = vunpack.c.l.b16 %v5263
  %v5583 = vunpack.c.h.b16 %v5263
  %v5584 = vunpack.c.l.b16 %v5264
  %v5585 = vunpack.c.h.b16 %v5264
  %v5586 = vunpack.c.l.b16 %v5265
  %v5587 = vunpack.c.h.b16 %v5265
  %v5588 = vunpack.c.l.b16 %v5266
  %v5589 = vunpack.c.h.b16 %v5266
  %v5590 = vunpack.c.l.b16 %v5267
  %v5591 = vunpack.c.h.b16 %v5267
  %v5592 = vunpack.c.l.b16 %v5268
  %v5593 = vunpack.c.h.b16 %v5268
  %v5594 = vunpack.c.l.b16 %v5269
  %v5595 = vunpack.c.h.b16 %v5269
  %v5596 = vunpack.c.l.b16 %v5270
  %v5597 = vunpack.c.h.b16 %v5270
  %v5598 = vunpack.c.l.b16 %v5271
  %v5599 = vunpack.c.h.b16 %v5271
  %v5600 = vunpack.c.l.b16 %v5272
  %v5601 = vunpack.c.h.b16 %v5272
  %v5602 = vunpack.c.l.b16 %v5273
  %v5603 = vunpack.c.h.b16 %v5273
  %v5604 = vunpack.c.l.b16 %v5274
  %v5605 = vunpack.c.h.b16 %v5274
  %v5606 = vunpack.c.l.b16 %v5275
  %v5607 = vunpack.c.h.b16 %v5275
  %v5608 = vunpack.c.l.b16 %v5276
  %v5609 = vunpack.c.h.b16 %v5276
  %v5610 = vunpack.c.l.b16 %v5277
  %v5611 = vunpack.c.h.b16 %v5277
  %v5612 = vunpack.c.l.b16 %v5278
  %v5613 = vunpack.c.h.b16 %v5278
  %v5614 = vunpack.c.l.b16 %v5279
  %v5615 = vunpack.c.h.b16 %v5279
  %v5616 = vunpack.c.l.b16 %v5280
  %v5617 = vunpack.c.h.b16 %v5280
  %v5618 = vunpack.c.l.b16 %v5281
  %v5619 = vunpack.c.h.b16 %v5281
  %v5620 = vunpack.c.l.b16 %v5282
  %v5621 = vunpack.c.h.b16 %v5282
  %v5622 = vunpack.c.l.b16 %v5283
  %v5623 = vunpack.c.h.b16 %v5283
  %v5624 = vunpack.c.l.b16 %v5284
  %v5625 = vunpack.c.h.b16 %v5284
  %v5626 = vunpack.c.l.b16 %v5285
  %v5627 = vunpack.c.h.b16 %v5285
  %v5628 = vunpack.c.l.b16 %v5286
  %v5629 = vunpack.c.h.b16 %v5286
  %v5630 = vunpack.c.l.b16 %v5287
  %v5631 = vunpack.c.h.b16 %v5287
  %v5632 = vunpack.c.l.b16 %v5288
  %v5633 = vunpack.c.h.b16 %v5288
  %v5634 = vunpack.c.l.b16 %v5289
  %v5635 = vunpack.c.h.b16 %v5289
  %v5636 = vunpack.c.l.b16 %v5290
  %v5637 = vunpack.c.h.b16 %v5290
  %v5638 = vunpack.c.l.b16 %v5291
  %v5639 = vunpack.c.h.b16 %v5291
  %v5640 = vunpack.c.l.b16 %v5292
  %v5641 = vunpack.c.h.b16 %v5292
  %v5642 = vunpack.c.l.b16 %v5293
  %v5643 = vunpack.c.h.b16 %v5293
  %v5644 = vunpack.c.l.b16 %v5294
  %v5645 = vunpack.c.h.b16 %v5294
  %v5646 = vunpack.c.l.b16 %v5295
  %v5647 = vunpack.c.h.b16 %v5295
  %v5648 = vunpack.c.l.b16 %v5296
  %v5649 = vunpack.c.h.b16 %v5296
  %v5650 = vunpack.c.l.b16 %v5297
  %v5651 = vunpack.c.h.b16 %v5297
  %v5652 = vunpack.c.l.b16 %v5298
  %v5653 = vunpack.c.h.b16 %v5298
  %v5654 = vunpack.c.l.b16 %v5299
  %v5655 = vunpack.c.h.b16 %v5299
  %v5656 = vunpack.c.l.b16 %v5300
  %v5657 = vunpack.c.h.b16 %v5300
  %v5658 = vunpack.c.l.b16 %v5301
  %v5659 = vunpack.c.h.b16 %v5301
  %v5660 = vunpack.c.l.b16 %v5302
  %v5661 = vunpack.c.h.b16 %v5302
  %v5662 = vunpack.c.l.b16 %v5303
  %v5663 = vunpack.c.h.b16 %v5303
  %v5664 = vunpack.c.l.b16 %v5304
  %v5665 = vunpack.c.h.b16 %v5304
  %v5666 = vunpack.c.l.b16 %v5305
  %v5667 = vunpack.c.h.b16 %v5305
  %v5668 = vunpack.c.l.b16 %v5306
  %v5669 = vunpack.c.h.b16 %v5306
  %v5670 = vunpack.c.l.b16 %v5307
  %v5671 = vunpack.c.h.b16 %v5307
  %v5672 = vunpack.c.l.b16 %v5308
  %v5673 = vunpack.c.h.b16 %v5308
  %v5674 = vunpack.c.l.b16 %v5309
  %v5675 = vunpack.c.h.b16 %v5309
  %v5676 = vunpack.c.l.b16 %v5310
  %v5677 = vunpack.c.h.b16 %v5310
  %v5678 = vunpack.c.l.b16 %v5311
  %v5679 = vunpack.c.h.b16 %v5311
  %v5680 = vunpack.c.l.b16 %v5312
  %v5681 = vunpack.c.h.b16 %v5312
  %v5682 = vunpack.c.l.b16 %v5313
  %v5683 = vunpack.c.h.b16 %v5313
  %v5684 = vunpack.c.l.b16 %v5314
  %v5685 = vunpack.c.h.b16 %v5314
  %v5686 = vunpack.c.l.b16 %v5315
  %v5687 = vunpack.c.h.b16 %v5315
  %v5688 = vunpack.c.l.b16 %v5316
  %v5689 = vunpack.c.h.b16 %v5316
  %v5690 = vunpack.c.l.b16 %v5317
  %v5691 = vunpack.c.h.b16 %v5317
  %v5692 = vunpack.c.l.b16 %v5318
  %v5693 = vunpack.c.h.b16 %v5318
  %v5694 = vunpack.c.l.b16 %v5319
  %v5695 = vunpack.c.h.b16 %v5319
  %v5696 = vunpack.c.l.b16 %v5320
  %v5697 = vunpack.c.h.b16 %v5320
  %v5698 = vunpack.c.l.b16 %v5321
  %v5699 = vunpack.c.h.b16 %v5321
  %v5700 = vunpack.c.l.b16 %v5322
  %v5701 = vunpack.c.h.b16 %v5322
  %v5702 = vunpack.c.l.b16 %v5323
  %v5703 = vunpack.c.h.b16 %v5323
  %v5704 = vunpack.c.l.b16 %v5324
  %v5705 = vunpack.c.h.b16 %v5324
  %v5706 = vunpack.c.l.b16 %v5325
  %v5707 = vunpack.c.h.b16 %v5325
  %v5708 = vunpack.c.l.b16 %v5326
  %v5709 = vunpack.c.h.b16 %v5326
  %v5710 = vunpack.c.l.b16 %v5327
  %v5711 = vunpack.c.h.b16 %v5327
  %v5712 = vpack.c.b16 %v5464, %v5456
  %v5713 = vpack.c.b16 %v5465, %v5457
  %v5714 = vpack.c.b16 %v5466, %v5458
  %v5715 = vpack.c.b16 %v5467, %v5459
  %v5716 = vpack.c.b16 %v5468, %v5460
  %v5717 = vpack.c.b16 %v5469, %v5461
  %v5718 = vpack.c.b16 %v5470, %v5462
  %v5719 = vpack.c.b16 %v5471, %v5463
  %v5720 = vpack.c.b16 %v5480, %v5472
  %v5721 = vpack.c.b16 %v5481, %v5473
  %v5722 = vpack.c.b16 %v5482, %v5474
  %v5723 = vpack.c.b16 %v5483, %v5475
  %v5724 = vpack.c.b16 %v5484, %v5476
  %v5725 = vpack.c.b16 %v5485, %v5477
  %v5726 = vpack.c.b16 %v5486, %v5478
  %v5727 = vpack.c.b16 %v5487, %v5479
  %v5728 = vpack.c.b16 %v5496, %v5488
  %v5729 = vpack.c.b16 %v5497, %v5489
  %v5730 = vpack.c.b16 %v5498, %v5490
  %v5731 = vpack.c.b16 %v5499, %v5491
  %v5732 = vpack.c.b16 %v5500, %v5492
  %v5733 = vpack.c.b16 %v5501, %v5493
  %v5734 = vpack.c.b16 %v5502, %v5494
  %v5735 = vpack.c.b16 %v5503, %v5495
  %v5736 = vpack.c.b16 %v5512, %v5504
  %v5737 = vpack.c.b16 %v5513, %v5505
  %v5738 = vpack.c.b16 %v5514, %v5506
  %v5739 = vpack.c.b16 %v5515, %v5507
  %v5740 = vpack.c.b16 %v5516, %v5508
  %v5741 = vpack.c.b16 %v5517, %v5509
  %v5742 = vpack.c.b16 %v5518, %v5510
  %v5743 = vpack.c.b16 %v5519, %v5511
  %v5744 = vpack.c.b16 %v5528, %v5520
  %v5745 = vpack.c.b16 %v5529, %v5521
  %v5746 = vpack.c.b16 %v5530, %v5522
  %v5747 = vpack.c.b16 %v5531, %v5523
  %v5748 = vpack.c.b16 %v5532, %v5524
  %v5749 = vpack.c.b16 %v5533, %v5525
  %v5750 = vpack.c.b16 %v5534, %v5526
  %v5751 = vpack.c.b16 %v5535, %v5527
  %v5752 = vpack.c.b16 %v5544, %v5536
  %v5753 = vpack.c.b16 %v5545, %v5537
  %v5754 = vpack.c.b16 %v5546, %v5538
  %v5755 = vpack.c.b16 %v5547, %v5539
  %v5756 = vpack.c.b16 %v5548, %v5540
  %v5757 = vpack.c.b16 %v5549, %v5541
  %v5758 = vpack.c.b16 %v5550, %v5542
  %v5759 = vpack.c.b16 %v5551, %v5543
  %v5760 = vpack.c.b16 %v5560, %v5552
  %v5761 = vpack.c.b16 %v5561, %v5553
  %v5762 = vpack.c.b16 %v5562, %v5554
  %v5763 = vpack.c.b16 %v5563, %v5555
  %v5764 = vpack.c.b16 %v5564, %v5556
  %v5765 = vpack.c.b16 %v5565, %v5557
  %v5766 = vpack.c.b16 %v5566, %v5558
  %v5767 = vpack.c.b16 %v5567, %v5559
  %v5768 = vpack.c.b16 %v5576, %v5568
  %v5769 = vpack.c.b16 %v5577, %v5569
  %v5770 = vpack.c.b16 %v5578, %v5570
  %v5771 = vpack.c.b16 %v5579, %v5571
  %v5772 = vpack.c.b16 %v5580, %v5572
  %v5773 = vpack.c.b16 %v5581, %v5573
  %v5774 = vpack.c.b16 %v5582, %v5574
  %v5775 = vpack.c.b16 %v5583, %v5575
  %v5776 = vpack.c.b16 %v5592, %v5584
  %v5777 = vpack.c.b16 %v5593, %v5585
  %v5778 = vpack.c.b16 %v5594, %v5586
  %v5779 = vpack.c.b16 %v5595, %v5587
  %v5780 = vpack.c.b16 %v5596, %v5588
  %v5781 = vpack.c.b16 %v5597, %v5589
  %v5782 = vpack.c.b16 %v5598, %v5590
  %v5783 = vpack.c.b16 %v5599, %v5591
  %v5784 = vpack.c.b16 %v5608, %v5600
  %v5785 = vpack.c.b16 %v5609, %v5601
  %v5786 = vpack.c.b16 %v5610, %v5602
  %v5787 = vpack.c.b16 %v5611, %v5603
  %v5788 = vpack.c.b16 %v5612, %v5604
  %v5789 = vpack.c.b16 %v5613, %v5605
  %v5790 = vpack.c.b16 %v5614, %v5606
  %v5791 = vpack.c.b16 %v5615, %v5607
  %v5792 = vpack.c.b16 %v5624, %v5616
  %v5793 = vpack.c.b16 %v5625, %v5617
  %v5794 = vpack.c.b16 %v5626, %v5618
  %v5795 = vpack.c.b16 %v5627, %v5619
  %v5796 = vpack.c.b16 %v5628, %v5620
  %v5797 = vpack.c.b16 %v5629, %v5621
  %v5798 = vpack.c.b16 %v5630, %v5622
  %v5799 = vpack.c.b16 %v5631, %v5623
  %v5800 = vpack.c.b16 %v5640, %v5632
  %v5801 = vpack.c.b16 %v5641, %v5633
  %v5802 = vpack.c.b16 %v5642, %v5634
  %v5803 = vpack.c.b16 %v5643, %v5635
  %v5804 = vpack.c.b16 %v5644, %v5636
  %v5805 = vpack.c.b16 %v5645, %v5637
  %v5806 = vpack.c.b16 %v5646, %v5638
  %v5807 = vpack.c.b16 %v5647, %v5639
  %v5808 = vpack.c.b16 %v5656, %v5648
  %v5809 = vpack.c.b16 %v5657, %v5649
  %v5810 = vpack.c.b16 %v5658, %v5650
  %v5811 = vpack.c.b16 %v5659, %v5651
  %v5812 = vpack.c.b16 %v5660, %v5652
  %v5813 = vpack.c.b16 %v5661, %v5653
  %v5814 = vpack.c.b16 %v5662, %v5654
  %v5815 = vpack.c.b16 %v5663, %v5655
  %v5816 = vpack.c.b16 %v5672, %v5664
  %v5817 = vpack.c.b16 %v5673, %v5665
  %v5818 = vpack.c.b16 %v5674, %v5666
  %v5819 = vpack.c.b16 %v5675, %v5667
  %v5820 = vpack.c.b16 %v5676, %v5668
  %v5821 = vpack.c.b16 %v5677, %v5669
  %v5822 = vpack.c.b16 %v5678, %v5670
  %v5823 = vpack.c.b16 %v5679, %v5671
  %v5824 = vpack.c.b16 %v5688, %v5680
  %v5825 = vpack.c.b16 %v5689, %v5681
  %v5826 = vpack.c.b16 %v5690, %v5682
  %v5827 = vpack.c.b16 %v5691, %v5683
  %v5828 = vpack.c.b16 %v5692, %v5684
  %v5829 = vpack.c.b16 %v5693, %v5685
  %v5830 = vpack.c.b16 %v5694, %v5686
  %v5831 = vpack.c.b16 %v5695, %v5687
  %v5832 = vpack.c.b16 %v5704, %v5696
  %v5833 = vpack.c.b16 %v5705, %v5697
  %v5834 = vpack.c.b16 %v5706, %v5698
  %v5835 = vpack.c.b16 %v5707, %v5699
  %v5836 = vpack.c.b16 %v5708, %v5700
  %v5837 = vpack.c.b16 %v5709, %v5701
  %v5838 = vpack.c.b16 %v5710, %v5702
  %v5839 = vpack.c.b16 %v5711, %v5703
  %5968 = vmatprep.subr.bf16.mxu0 %v5713
  %5969 = vmatpush1.bf16.msra.mxu0 %v5712
  %5970 = vmatprep.subr.bf16.mxu0 %v5721
  %5971 = vmatpush1.bf16.msra.mxu0 %v5720
  %5972 = vmatprep.subr.bf16.mxu0 %v5729
  %5973 = vmatpush1.bf16.msra.mxu0 %v5728
  %5974 = vmatprep.subr.bf16.mxu0 %v5737
  %5975 = vmatpush1.bf16.msra.mxu0 %v5736
  %5976 = vmatprep.subr.bf16.mxu0 %v5745
  %5977 = vmatpush1.bf16.msra.mxu0 %v5744
  %5978 = vmatprep.subr.bf16.mxu0 %v5753
  %5979 = vmatpush1.bf16.msra.mxu0 %v5752
  %5980 = vmatprep.subr.bf16.mxu0 %v5761
  %5981 = vmatpush1.bf16.msra.mxu0 %v5760
  %5982 = vmatprep.subr.bf16.mxu0 %v5769
  %5983 = vmatpush1.bf16.msra.mxu0 %v5768
  %5984 = vmatprep.subr.bf16.mxu0 %v5777
  %5985 = vmatpush1.bf16.msra.mxu0 %v5776
  %5986 = vmatprep.subr.bf16.mxu0 %v5785
  %5987 = vmatpush1.bf16.msra.mxu0 %v5784
  %5988 = vmatprep.subr.bf16.mxu0 %v5793
  %5989 = vmatpush1.bf16.msra.mxu0 %v5792
  %5990 = vmatprep.subr.bf16.mxu0 %v5801
  %5991 = vmatpush1.bf16.msra.mxu0 %v5800
  %5992 = vmatprep.subr.bf16.mxu0 %v5809
  %5993 = vmatpush1.bf16.msra.mxu0 %v5808
  %5994 = vmatprep.subr.bf16.mxu0 %v5817
  %5995 = vmatpush1.bf16.msra.mxu0 %v5816
  %5996 = vmatprep.subr.bf16.mxu0 %v5825
  %5997 = vmatpush1.bf16.msra.mxu0 %v5824
  %5998 = vmatprep.subr.bf16.mxu0 %v5833
  %5999 = vmatpush1.bf16.msra.mxu0 %v5832
  %6000 = vmatprep.mubr.bf16.mxu0 %v5199
  %6001 = vmatmul.mubr.bf16.gmra.mrb[0].mxu0 %v5198
  %v6002 = vpop.f32.mrb[0].mxu0
  %v6003 = vadd.f32 0.0, %v6002
  %v6004 = vpop.f32.mrb[0].mxu0
  %v6005 = vadd.f32 0.0, %v6004
  %v6006 = vpop.f32.mrb[0].mxu0
  %v6007 = vpop.f32.mrb[0].mxu0
  %6008 = vdwg.mxu0
  %6009 = vmatprep.subr.bf16.mxu0 %v5715
  %6010 = vmatpush1.bf16.msra.mxu0 %v5714
  %6011 = vmatprep.subr.bf16.mxu0 %v5723
  %6012 = vmatpush1.bf16.msra.mxu0 %v5722
  %6013 = vmatprep.subr.bf16.mxu0 %v5731
  %6014 = vmatpush1.bf16.msra.mxu0 %v5730
  %6015 = vmatprep.subr.bf16.mxu0 %v5739
  %6016 = vmatpush1.bf16.msra.mxu0 %v5738
  %6017 = vmatprep.subr.bf16.mxu0 %v5747
  %6018 = vmatpush1.bf16.msra.mxu0 %v5746
  %6019 = vmatprep.subr.bf16.mxu0 %v5755
  %6020 = vmatpush1.bf16.msra.mxu0 %v5754
  %6021 = vmatprep.subr.bf16.mxu0 %v5763
  %6022 = vmatpush1.bf16.msra.mxu0 %v5762
  %6023 = vmatprep.subr.bf16.mxu0 %v5771
  %6024 = vmatpush1.bf16.msra.mxu0 %v5770
  %6025 = vmatprep.subr.bf16.mxu0 %v5779
  %6026 = vmatpush1.bf16.msra.mxu0 %v5778
  %6027 = vmatprep.subr.bf16.mxu0 %v5787
  %6028 = vmatpush1.bf16.msra.mxu0 %v5786
  %6029 = vmatprep.subr.bf16.mxu0 %v5795
  %6030 = vmatpush1.bf16.msra.mxu0 %v5794
  %6031 = vmatprep.subr.bf16.mxu0 %v5803
  %6032 = vmatpush1.bf16.msra.mxu0 %v5802
  %6033 = vmatprep.subr.bf16.mxu0 %v5811
  %6034 = vmatpush1.bf16.msra.mxu0 %v5810
  %6035 = vmatprep.subr.bf16.mxu0 %v5819
  %6036 = vmatpush1.bf16.msra.mxu0 %v5818
  %6037 = vmatprep.subr.bf16.mxu0 %v5827
  %6038 = vmatpush1.bf16.msra.mxu0 %v5826
  %6039 = vmatprep.subr.bf16.mxu0 %v5835
  %6040 = vmatpush1.bf16.msra.mxu0 %v5834
  %6041 = vmatprep.mubr.bf16.mxu0 %v5199
  %6042 = vmatmul.mubr.bf16.gmra.mrb[0].mxu0 %v5198
  %v6043 = vpop.f32.mrb[0].mxu0
  %v6044 = vadd.f32 0.0, %v6043
  %v6045 = vpop.f32.mrb[0].mxu0
  %v6046 = vadd.f32 0.0, %v6045
  %v6047 = vpop.f32.mrb[0].mxu0
  %v6048 = vpop.f32.mrb[0].mxu0
  %6049 = vdwg.mxu0
  %6050 = vmatprep.subr.bf16.mxu0 %v5717
  %6051 = vmatpush1.bf16.msra.mxu0 %v5716
  %6052 = vmatprep.subr.bf16.mxu0 %v5725
  %6053 = vmatpush1.bf16.msra.mxu0 %v5724
  %6054 = vmatprep.subr.bf16.mxu0 %v5733
  %6055 = vmatpush1.bf16.msra.mxu0 %v5732
  %6056 = vmatprep.subr.bf16.mxu0 %v5741
  %6057 = vmatpush1.bf16.msra.mxu0 %v5740
  %6058 = vmatprep.subr.bf16.mxu0 %v5749
  %6059 = vmatpush1.bf16.msra.mxu0 %v5748
  %6060 = vmatprep.subr.bf16.mxu0 %v5757
  %6061 = vmatpush1.bf16.msra.mxu0 %v5756
  %6062 = vmatprep.subr.bf16.mxu0 %v5765
  %6063 = vmatpush1.bf16.msra.mxu0 %v5764
  %6064 = vmatprep.subr.bf16.mxu0 %v5773
  %6065 = vmatpush1.bf16.msra.mxu0 %v5772
  %6066 = vmatprep.subr.bf16.mxu0 %v5781
  %6067 = vmatpush1.bf16.msra.mxu0 %v5780
  %6068 = vmatprep.subr.bf16.mxu0 %v5789
  %6069 = vmatpush1.bf16.msra.mxu0 %v5788
  %6070 = vmatprep.subr.bf16.mxu0 %v5797
  %6071 = vmatpush1.bf16.msra.mxu0 %v5796
  %6072 = vmatprep.subr.bf16.mxu0 %v5805
  %6073 = vmatpush1.bf16.msra.mxu0 %v5804
  %6074 = vmatprep.subr.bf16.mxu0 %v5813
  %6075 = vmatpush1.bf16.msra.mxu0 %v5812
  %6076 = vmatprep.subr.bf16.mxu0 %v5821
  %6077 = vmatpush1.bf16.msra.mxu0 %v5820
  %6078 = vmatprep.subr.bf16.mxu0 %v5829
  %6079 = vmatpush1.bf16.msra.mxu0 %v5828
  %6080 = vmatprep.subr.bf16.mxu0 %v5837
  %6081 = vmatpush1.bf16.msra.mxu0 %v5836
  %6082 = vmatprep.mubr.bf16.mxu0 %v5199
  %6083 = vmatmul.mubr.bf16.gmra.mrb[0].mxu0 %v5198
  %v6084 = vpop.f32.mrb[0].mxu0
  %v6085 = vadd.f32 0.0, %v6084
  %v6086 = vpop.f32.mrb[0].mxu0
  %v6087 = vadd.f32 0.0, %v6086
  %v6088 = vpop.f32.mrb[0].mxu0
  %v6089 = vpop.f32.mrb[0].mxu0
  %6090 = vdwg.mxu0
  %6091 = vmatprep.subr.bf16.mxu0 %v5719
  %6092 = vmatpush1.bf16.msra.mxu0 %v5718
  %6093 = vmatprep.subr.bf16.mxu0 %v5727
  %6094 = vmatpush1.bf16.msra.mxu0 %v5726
  %6095 = vmatprep.subr.bf16.mxu0 %v5735
  %6096 = vmatpush1.bf16.msra.mxu0 %v5734
  %6097 = vmatprep.subr.bf16.mxu0 %v5743
  %6098 = vmatpush1.bf16.msra.mxu0 %v5742
  %6099 = vmatprep.subr.bf16.mxu0 %v5751
  %6100 = vmatpush1.bf16.msra.mxu0 %v5750
  %6101 = vmatprep.subr.bf16.mxu0 %v5759
  %6102 = vmatpush1.bf16.msra.mxu0 %v5758
  %6103 = vmatprep.subr.bf16.mxu0 %v5767
  %6104 = vmatpush1.bf16.msra.mxu0 %v5766
  %6105 = vmatprep.subr.bf16.mxu0 %v5775
  %6106 = vmatpush1.bf16.msra.mxu0 %v5774
  %6107 = vmatprep.subr.bf16.mxu0 %v5783
  %6108 = vmatpush1.bf16.msra.mxu0 %v5782
  %6109 = vmatprep.subr.bf16.mxu0 %v5791
  %6110 = vmatpush1.bf16.msra.mxu0 %v5790
  %6111 = vmatprep.subr.bf16.mxu0 %v5799
  %6112 = vmatpush1.bf16.msra.mxu0 %v5798
  %6113 = vmatprep.subr.bf16.mxu0 %v5807
  %6114 = vmatpush1.bf16.msra.mxu0 %v5806
  %6115 = vmatprep.subr.bf16.mxu0 %v5815
  %6116 = vmatpush1.bf16.msra.mxu0 %v5814
  %6117 = vmatprep.subr.bf16.mxu0 %v5823
  %6118 = vmatpush1.bf16.msra.mxu0 %v5822
  %6119 = vmatprep.subr.bf16.mxu0 %v5831
  %6120 = vmatpush1.bf16.msra.mxu0 %v5830
  %6121 = vmatprep.subr.bf16.mxu0 %v5839
  %6122 = vmatpush1.bf16.msra.mxu0 %v5838
  %6123 = vmatprep.mubr.bf16.mxu0 %v5199
  %6124 = vmatmul.mubr.bf16.gmra.mrb[0].mxu0 %v5198
  %v6125 = vpop.f32.mrb[0].mxu0
  %v6126 = vadd.f32 0.0, %v6125
  %v6127 = vpop.f32.mrb[0].mxu0
  %v6128 = vadd.f32 0.0, %v6127
  %v6129 = vpop.f32.mrb[0].mxu0
  %v6130 = vpop.f32.mrb[0].mxu0
  %6131 = vdwg.mxu0
  %v6132 = vadd.f32 %v5190, %v6003
  %v6133 = vadd.f32 %v5191, %v6005
  %v6134 = vadd.f32 %v5192, %v6044
  %v6135 = vadd.f32 %v5193, %v6046
  %v6136 = vadd.f32 %v5194, %v6085
  %v6137 = vadd.f32 %v5195, %v6087
  %v6138 = vadd.f32 %v5196, %v6126
  %v6139 = vadd.f32 %v5197, %v6128
  %v6140 = vxor.u32 %v6132, 2147483648
  %v6141 = vxor.u32 %v6133, 2147483648
  %v6142 = vmul.f32 %v6140, 1.442695
  %v6143 = vpow.pop %v6142
  %v6144 = vmul.f32 %v6141, 1.442695
  %v6145 = vpow.pop %v6144
  %v6146 = vadd.f32 %v6143, 1.0
  %v6147 = vadd.f32 %v6145, 1.0
  %v6148 = vrcp.pop %v6146
  %v6149 = vmul.f32 1.0, %v6148
  %v6150 = vrcp.pop %v6147
  %v6151 = vmul.f32 1.0, %v6150
  %v6152 = vxor.u32 %v6134, 2147483648
  %v6153 = vxor.u32 %v6135, 2147483648
  %v6154 = vmul.f32 %v6152, 1.442695
  %v6155 = vpow.pop %v6154
  %v6156 = vmul.f32 %v6153, 1.442695
  %v6157 = vpow.pop %v6156
  %v6158 = vadd.f32 %v6155, 1.0
  %v6159 = vadd.f32 %v6157, 1.0
  %v6160 = vrcp.pop %v6158
  %v6161 = vmul.f32 1.0, %v6160
  %v6162 = vrcp.pop %v6159
  %v6163 = vmul.f32 1.0, %v6162
  %v6164 = vtanh.pop %v6136
  %v6165 = vtanh.pop %v6137
  %v6166 = vxor.u32 %v6138, 2147483648
  %v6167 = vxor.u32 %v6139, 2147483648
  %v6168 = vmul.f32 %v6166, 1.442695
  %v6169 = vpow.pop %v6168
  %v6170 = vmul.f32 %v6167, 1.442695
  %v6171 = vpow.pop %v6170
  %v6172 = vadd.f32 %v6169, 1.0
  %v6173 = vadd.f32 %v6171, 1.0
  %v6174 = vrcp.pop %v6172
  %v6175 = vmul.f32 1.0, %v6174
  %v6176 = vrcp.pop %v6173
  %v6177 = vmul.f32 1.0, %v6176
  %v6178 = vmul.f32 %v6161, %v5166
  %v6179 = vmul.f32 %v6163, %v5167
  %v6180 = vmul.f32 %v6149, %v6164
  %v6181 = vmul.f32 %v6151, %v6165
  %v6182 = vadd.f32 %v6178, %v6180
  %v6183 = vadd.f32 %v6179, %v6181
  %v6184 = vtanh.pop %v6182
  %v6185 = vtanh.pop %v6183
  %v6186 = vmul.f32 %v6175, %v6184
  %v6187 = vmul.f32 %v6177, %v6185
  %6188 = vst [vmem:[#allocation3 + $0x40] sm:$0xff] %v6186
  %6189 = vst [vmem:[#allocation3 + $0x38] sm:$0xff] %v6187
  %v6190 = vld [vmem:[#allocation2 + $0x140] sm:$0xff]
  %v6191 = vld [vmem:[#allocation2 + $0x148] sm:$0xff]
  %v6192 = vld [vmem:[#allocation2 + $0x150] sm:$0xff]
  %v6193 = vld [vmem:[#allocation2 + $0x158] sm:$0xff]
  %v6194 = vld [vmem:[#allocation2 + $0x160] sm:$0xff]
  %v6195 = vld [vmem:[#allocation2 + $0x168] sm:$0xff]
  %v6196 = vld [vmem:[#allocation2 + $0x170] sm:$0xff]
  %v6197 = vld [vmem:[#allocation2 + $0x178] sm:$0xff]
  %v6198 = vld [vmem:[#allocation2 + $0x80] sm:$0xff]
  %v6199 = vld [vmem:[#allocation2 + $0x88] sm:$0xff]
  %v6200 = vld [vmem:[#allocation2 + $0x90] sm:$0xff]
  %v6201 = vld [vmem:[#allocation2 + $0x98] sm:$0xff]
  %v6202 = vld [vmem:[#allocation2 + $0xa0] sm:$0xff]
  %v6203 = vld [vmem:[#allocation2 + $0xa8] sm:$0xff]
  %v6204 = vld [vmem:[#allocation2 + $0xb0] sm:$0xff]
  %v6205 = vld [vmem:[#allocation2 + $0xb8] sm:$0xff]
  %v6206 = vsel %vm318, %v6190, %v6198
  %v6207 = vsel %vm319, %v6191, %v6199
  %v6208 = vsel %vm320, %v6192, %v6200
  %v6209 = vsel %vm321, %v6193, %v6201
  %v6210 = vsel %vm322, %v6194, %v6202
  %v6211 = vsel %vm323, %v6195, %v6203
  %v6212 = vsel %vm324, %v6196, %v6204
  %v6213 = vsel %vm325, %v6197, %v6205
  %v6214 = vpack.c.bf16 %v6186, %v6186
  %v6215 = vpack.c.bf16 %v6187, %v6187
  %v6216 = vld [vmem:[%s4] sm:$0xff]
  %v6217 = vld [vmem:[%s4 + $0x8] sm:$0xff]
  %v6218 = vld [vmem:[%s4 + $0x10] sm:$0xff]
  %v6219 = vld [vmem:[%s4 + $0x18] sm:$0xff]
  %v6220 = vld [vmem:[%s4 + $0x20] sm:$0xff]
  %v6221 = vld [vmem:[%s4 + $0x28] sm:$0xff]
  %v6222 = vld [vmem:[%s4 + $0x30] sm:$0xff]
  %v6223 = vld [vmem:[%s4 + $0x38] sm:$0xff]
  %v6224 = vld [vmem:[%s4 + $0x40] sm:$0xff]
  %v6225 = vld [vmem:[%s4 + $0x48] sm:$0xff]
  %v6226 = vld [vmem:[%s4 + $0x50] sm:$0xff]
  %v6227 = vld [vmem:[%s4 + $0x58] sm:$0xff]
  %v6228 = vld [vmem:[%s4 + $0x60] sm:$0xff]
  %v6229 = vld [vmem:[%s4 + $0x68] sm:$0xff]
  %v6230 = vld [vmem:[%s4 + $0x70] sm:$0xff]
  %v6231 = vld [vmem:[%s4 + $0x78] sm:$0xff]
  %v6232 = vld [vmem:[%s4 + $0x80] sm:$0xff]
  %v6233 = vld [vmem:[%s4 + $0x88] sm:$0xff]
  %v6234 = vld [vmem:[%s4 + $0x90] sm:$0xff]
  %v6235 = vld [vmem:[%s4 + $0x98] sm:$0xff]
  %v6236 = vld [vmem:[%s4 + $0xa0] sm:$0xff]
  %v6237 = vld [vmem:[%s4 + $0xa8] sm:$0xff]
  %v6238 = vld [vmem:[%s4 + $0xb0] sm:$0xff]
  %v6239 = vld [vmem:[%s4 + $0xb8] sm:$0xff]
  %v6240 = vld [vmem:[%s4 + $0xc0] sm:$0xff]
  %v6241 = vld [vmem:[%s4 + $0xc8] sm:$0xff]
  %v6242 = vld [vmem:[%s4 + $0xd0] sm:$0xff]
  %v6243 = vld [vmem:[%s4 + $0xd8] sm:$0xff]
  %v6244 = vld [vmem:[%s4 + $0xe0] sm:$0xff]
  %v6245 = vld [vmem:[%s4 + $0xe8] sm:$0xff]
  %v6246 = vld [vmem:[%s4 + $0xf0] sm:$0xff]
  %v6247 = vld [vmem:[%s4 + $0xf8] sm:$0xff]
  %v6248 = vld [vmem:[%s4 + $0x100] sm:$0xff]
  %v6249 = vld [vmem:[%s4 + $0x108] sm:$0xff]
  %v6250 = vld [vmem:[%s4 + $0x110] sm:$0xff]
  %v6251 = vld [vmem:[%s4 + $0x118] sm:$0xff]
  %v6252 = vld [vmem:[%s4 + $0x120] sm:$0xff]
  %v6253 = vld [vmem:[%s4 + $0x128] sm:$0xff]
  %v6254 = vld [vmem:[%s4 + $0x130] sm:$0xff]
  %v6255 = vld [vmem:[%s4 + $0x138] sm:$0xff]
  %v6256 = vld [vmem:[%s4 + $0x140] sm:$0xff]
  %v6257 = vld [vmem:[%s4 + $0x148] sm:$0xff]
  %v6258 = vld [vmem:[%s4 + $0x150] sm:$0xff]
  %v6259 = vld [vmem:[%s4 + $0x158] sm:$0xff]
  %v6260 = vld [vmem:[%s4 + $0x160] sm:$0xff]
  %v6261 = vld [vmem:[%s4 + $0x168] sm:$0xff]
  %v6262 = vld [vmem:[%s4 + $0x170] sm:$0xff]
  %v6263 = vld [vmem:[%s4 + $0x178] sm:$0xff]
  %v6264 = vld [vmem:[%s4 + $0x180] sm:$0xff]
  %v6265 = vld [vmem:[%s4 + $0x188] sm:$0xff]
  %v6266 = vld [vmem:[%s4 + $0x190] sm:$0xff]
  %v6267 = vld [vmem:[%s4 + $0x198] sm:$0xff]
  %v6268 = vld [vmem:[%s4 + $0x1a0] sm:$0xff]
  %v6269 = vld [vmem:[%s4 + $0x1a8] sm:$0xff]
  %v6270 = vld [vmem:[%s4 + $0x1b0] sm:$0xff]
  %v6271 = vld [vmem:[%s4 + $0x1b8] sm:$0xff]
  %v6272 = vld [vmem:[%s4 + $0x1c0] sm:$0xff]
  %v6273 = vld [vmem:[%s4 + $0x1c8] sm:$0xff]
  %v6274 = vld [vmem:[%s4 + $0x1d0] sm:$0xff]
  %v6275 = vld [vmem:[%s4 + $0x1d8] sm:$0xff]
  %v6276 = vld [vmem:[%s4 + $0x1e0] sm:$0xff]
  %v6277 = vld [vmem:[%s4 + $0x1e8] sm:$0xff]
  %v6278 = vld [vmem:[%s4 + $0x1f0] sm:$0xff]
  %v6279 = vld [vmem:[%s4 + $0x1f8] sm:$0xff]
  %v6280 = vld [vmem:[%s4 + $0x200] sm:$0xff]
  %v6281 = vld [vmem:[%s4 + $0x208] sm:$0xff]
  %v6282 = vld [vmem:[%s4 + $0x210] sm:$0xff]
  %v6283 = vld [vmem:[%s4 + $0x218] sm:$0xff]
  %v6284 = vld [vmem:[%s4 + $0x220] sm:$0xff]
  %v6285 = vld [vmem:[%s4 + $0x228] sm:$0xff]
  %v6286 = vld [vmem:[%s4 + $0x230] sm:$0xff]
  %v6287 = vld [vmem:[%s4 + $0x238] sm:$0xff]
  %v6288 = vld [vmem:[%s4 + $0x240] sm:$0xff]
  %v6289 = vld [vmem:[%s4 + $0x248] sm:$0xff]
  %v6290 = vld [vmem:[%s4 + $0x250] sm:$0xff]
  %v6291 = vld [vmem:[%s4 + $0x258] sm:$0xff]
  %v6292 = vld [vmem:[%s4 + $0x260] sm:$0xff]
  %v6293 = vld [vmem:[%s4 + $0x268] sm:$0xff]
  %v6294 = vld [vmem:[%s4 + $0x270] sm:$0xff]
  %v6295 = vld [vmem:[%s4 + $0x278] sm:$0xff]
  %v6296 = vld [vmem:[%s4 + $0x280] sm:$0xff]
  %v6297 = vld [vmem:[%s4 + $0x288] sm:$0xff]
  %v6298 = vld [vmem:[%s4 + $0x290] sm:$0xff]
  %v6299 = vld [vmem:[%s4 + $0x298] sm:$0xff]
  %v6300 = vld [vmem:[%s4 + $0x2a0] sm:$0xff]
  %v6301 = vld [vmem:[%s4 + $0x2a8] sm:$0xff]
  %v6302 = vld [vmem:[%s4 + $0x2b0] sm:$0xff]
  %v6303 = vld [vmem:[%s4 + $0x2b8] sm:$0xff]
  %v6304 = vld [vmem:[%s4 + $0x2c0] sm:$0xff]
  %v6305 = vld [vmem:[%s4 + $0x2c8] sm:$0xff]
  %v6306 = vld [vmem:[%s4 + $0x2d0] sm:$0xff]
  %v6307 = vld [vmem:[%s4 + $0x2d8] sm:$0xff]
  %v6308 = vld [vmem:[%s4 + $0x2e0] sm:$0xff]
  %v6309 = vld [vmem:[%s4 + $0x2e8] sm:$0xff]
  %v6310 = vld [vmem:[%s4 + $0x2f0] sm:$0xff]
  %v6311 = vld [vmem:[%s4 + $0x2f8] sm:$0xff]
  %v6312 = vld [vmem:[%s4 + $0x300] sm:$0xff]
  %v6313 = vld [vmem:[%s4 + $0x308] sm:$0xff]
  %v6314 = vld [vmem:[%s4 + $0x310] sm:$0xff]
  %v6315 = vld [vmem:[%s4 + $0x318] sm:$0xff]
  %v6316 = vld [vmem:[%s4 + $0x320] sm:$0xff]
  %v6317 = vld [vmem:[%s4 + $0x328] sm:$0xff]
  %v6318 = vld [vmem:[%s4 + $0x330] sm:$0xff]
  %v6319 = vld [vmem:[%s4 + $0x338] sm:$0xff]
  %v6320 = vld [vmem:[%s4 + $0x340] sm:$0xff]
  %v6321 = vld [vmem:[%s4 + $0x348] sm:$0xff]
  %v6322 = vld [vmem:[%s4 + $0x350] sm:$0xff]
  %v6323 = vld [vmem:[%s4 + $0x358] sm:$0xff]
  %v6324 = vld [vmem:[%s4 + $0x360] sm:$0xff]
  %v6325 = vld [vmem:[%s4 + $0x368] sm:$0xff]
  %v6326 = vld [vmem:[%s4 + $0x370] sm:$0xff]
  %v6327 = vld [vmem:[%s4 + $0x378] sm:$0xff]
  %v6328 = vld [vmem:[%s4 + $0x380] sm:$0xff]
  %v6329 = vld [vmem:[%s4 + $0x388] sm:$0xff]
  %v6330 = vld [vmem:[%s4 + $0x390] sm:$0xff]
  %v6331 = vld [vmem:[%s4 + $0x398] sm:$0xff]
  %v6332 = vld [vmem:[%s4 + $0x3a0] sm:$0xff]
  %v6333 = vld [vmem:[%s4 + $0x3a8] sm:$0xff]
  %v6334 = vld [vmem:[%s4 + $0x3b0] sm:$0xff]
  %v6335 = vld [vmem:[%s4 + $0x3b8] sm:$0xff]
  %v6336 = vld [vmem:[%s4 + $0x3c0] sm:$0xff]
  %v6337 = vld [vmem:[%s4 + $0x3c8] sm:$0xff]
  %v6338 = vld [vmem:[%s4 + $0x3d0] sm:$0xff]
  %v6339 = vld [vmem:[%s4 + $0x3d8] sm:$0xff]
  %v6340 = vld [vmem:[%s4 + $0x3e0] sm:$0xff]
  %v6341 = vld [vmem:[%s4 + $0x3e8] sm:$0xff]
  %v6342 = vld [vmem:[%s4 + $0x3f0] sm:$0xff]
  %v6343 = vld [vmem:[%s4 + $0x3f8] sm:$0xff]
  %v6472 = vunpack.c.l.b16 %v6216
  %v6473 = vunpack.c.h.b16 %v6216
  %v6474 = vunpack.c.l.b16 %v6217
  %v6475 = vunpack.c.h.b16 %v6217
  %v6476 = vunpack.c.l.b16 %v6218
  %v6477 = vunpack.c.h.b16 %v6218
  %v6478 = vunpack.c.l.b16 %v6219
  %v6479 = vunpack.c.h.b16 %v6219
  %v6480 = vunpack.c.l.b16 %v6220
  %v6481 = vunpack.c.h.b16 %v6220
  %v6482 = vunpack.c.l.b16 %v6221
  %v6483 = vunpack.c.h.b16 %v6221
  %v6484 = vunpack.c.l.b16 %v6222
  %v6485 = vunpack.c.h.b16 %v6222
  %v6486 = vunpack.c.l.b16 %v6223
  %v6487 = vunpack.c.h.b16 %v6223
  %v6488 = vunpack.c.l.b16 %v6224
  %v6489 = vunpack.c.h.b16 %v6224
  %v6490 = vunpack.c.l.b16 %v6225
  %v6491 = vunpack.c.h.b16 %v6225
  %v6492 = vunpack.c.l.b16 %v6226
  %v6493 = vunpack.c.h.b16 %v6226
  %v6494 = vunpack.c.l.b16 %v6227
  %v6495 = vunpack.c.h.b16 %v6227
  %v6496 = vunpack.c.l.b16 %v6228
  %v6497 = vunpack.c.h.b16 %v6228
  %v6498 = vunpack.c.l.b16 %v6229
  %v6499 = vunpack.c.h.b16 %v6229
  %v6500 = vunpack.c.l.b16 %v6230
  %v6501 = vunpack.c.h.b16 %v6230
  %v6502 = vunpack.c.l.b16 %v6231
  %v6503 = vunpack.c.h.b16 %v6231
  %v6504 = vunpack.c.l.b16 %v6232
  %v6505 = vunpack.c.h.b16 %v6232
  %v6506 = vunpack.c.l.b16 %v6233
  %v6507 = vunpack.c.h.b16 %v6233
  %v6508 = vunpack.c.l.b16 %v6234
  %v6509 = vunpack.c.h.b16 %v6234
  %v6510 = vunpack.c.l.b16 %v6235
  %v6511 = vunpack.c.h.b16 %v6235
  %v6512 = vunpack.c.l.b16 %v6236
  %v6513 = vunpack.c.h.b16 %v6236
  %v6514 = vunpack.c.l.b16 %v6237
  %v6515 = vunpack.c.h.b16 %v6237
  %v6516 = vunpack.c.l.b16 %v6238
  %v6517 = vunpack.c.h.b16 %v6238
  %v6518 = vunpack.c.l.b16 %v6239
  %v6519 = vunpack.c.h.b16 %v6239
  %v6520 = vunpack.c.l.b16 %v6240
  %v6521 = vunpack.c.h.b16 %v6240
  %v6522 = vunpack.c.l.b16 %v6241
  %v6523 = vunpack.c.h.b16 %v6241
  %v6524 = vunpack.c.l.b16 %v6242
  %v6525 = vunpack.c.h.b16 %v6242
  %v6526 = vunpack.c.l.b16 %v6243
  %v6527 = vunpack.c.h.b16 %v6243
  %v6528 = vunpack.c.l.b16 %v6244
  %v6529 = vunpack.c.h.b16 %v6244
  %v6530 = vunpack.c.l.b16 %v6245
  %v6531 = vunpack.c.h.b16 %v6245
  %v6532 = vunpack.c.l.b16 %v6246
  %v6533 = vunpack.c.h.b16 %v6246
  %v6534 = vunpack.c.l.b16 %v6247
  %v6535 = vunpack.c.h.b16 %v6247
  %v6536 = vunpack.c.l.b16 %v6248
  %v6537 = vunpack.c.h.b16 %v6248
  %v6538 = vunpack.c.l.b16 %v6249
  %v6539 = vunpack.c.h.b16 %v6249
  %v6540 = vunpack.c.l.b16 %v6250
  %v6541 = vunpack.c.h.b16 %v6250
  %v6542 = vunpack.c.l.b16 %v6251
  %v6543 = vunpack.c.h.b16 %v6251
  %v6544 = vunpack.c.l.b16 %v6252
  %v6545 = vunpack.c.h.b16 %v6252
  %v6546 = vunpack.c.l.b16 %v6253
  %v6547 = vunpack.c.h.b16 %v6253
  %v6548 = vunpack.c.l.b16 %v6254
  %v6549 = vunpack.c.h.b16 %v6254
  %v6550 = vunpack.c.l.b16 %v6255
  %v6551 = vunpack.c.h.b16 %v6255
  %v6552 = vunpack.c.l.b16 %v6256
  %v6553 = vunpack.c.h.b16 %v6256
  %v6554 = vunpack.c.l.b16 %v6257
  %v6555 = vunpack.c.h.b16 %v6257
  %v6556 = vunpack.c.l.b16 %v6258
  %v6557 = vunpack.c.h.b16 %v6258
  %v6558 = vunpack.c.l.b16 %v6259
  %v6559 = vunpack.c.h.b16 %v6259
  %v6560 = vunpack.c.l.b16 %v6260
  %v6561 = vunpack.c.h.b16 %v6260
  %v6562 = vunpack.c.l.b16 %v6261
  %v6563 = vunpack.c.h.b16 %v6261
  %v6564 = vunpack.c.l.b16 %v6262
  %v6565 = vunpack.c.h.b16 %v6262
  %v6566 = vunpack.c.l.b16 %v6263
  %v6567 = vunpack.c.h.b16 %v6263
  %v6568 = vunpack.c.l.b16 %v6264
  %v6569 = vunpack.c.h.b16 %v6264
  %v6570 = vunpack.c.l.b16 %v6265
  %v6571 = vunpack.c.h.b16 %v6265
  %v6572 = vunpack.c.l.b16 %v6266
  %v6573 = vunpack.c.h.b16 %v6266
  %v6574 = vunpack.c.l.b16 %v6267
  %v6575 = vunpack.c.h.b16 %v6267
  %v6576 = vunpack.c.l.b16 %v6268
  %v6577 = vunpack.c.h.b16 %v6268
  %v6578 = vunpack.c.l.b16 %v6269
  %v6579 = vunpack.c.h.b16 %v6269
  %v6580 = vunpack.c.l.b16 %v6270
  %v6581 = vunpack.c.h.b16 %v6270
  %v6582 = vunpack.c.l.b16 %v6271
  %v6583 = vunpack.c.h.b16 %v6271
  %v6584 = vunpack.c.l.b16 %v6272
  %v6585 = vunpack.c.h.b16 %v6272
  %v6586 = vunpack.c.l.b16 %v6273
  %v6587 = vunpack.c.h.b16 %v6273
  %v6588 = vunpack.c.l.b16 %v6274
  %v6589 = vunpack.c.h.b16 %v6274
  %v6590 = vunpack.c.l.b16 %v6275
  %v6591 = vunpack.c.h.b16 %v6275
  %v6592 = vunpack.c.l.b16 %v6276
  %v6593 = vunpack.c.h.b16 %v6276
  %v6594 = vunpack.c.l.b16 %v6277
  %v6595 = vunpack.c.h.b16 %v6277
  %v6596 = vunpack.c.l.b16 %v6278
  %v6597 = vunpack.c.h.b16 %v6278
  %v6598 = vunpack.c.l.b16 %v6279
  %v6599 = vunpack.c.h.b16 %v6279
  %v6600 = vunpack.c.l.b16 %v6280
  %v6601 = vunpack.c.h.b16 %v6280
  %v6602 = vunpack.c.l.b16 %v6281
  %v6603 = vunpack.c.h.b16 %v6281
  %v6604 = vunpack.c.l.b16 %v6282
  %v6605 = vunpack.c.h.b16 %v6282
  %v6606 = vunpack.c.l.b16 %v6283
  %v6607 = vunpack.c.h.b16 %v6283
  %v6608 = vunpack.c.l.b16 %v6284
  %v6609 = vunpack.c.h.b16 %v6284
  %v6610 = vunpack.c.l.b16 %v6285
  %v6611 = vunpack.c.h.b16 %v6285
  %v6612 = vunpack.c.l.b16 %v6286
  %v6613 = vunpack.c.h.b16 %v6286
  %v6614 = vunpack.c.l.b16 %v6287
  %v6615 = vunpack.c.h.b16 %v6287
  %v6616 = vunpack.c.l.b16 %v6288
  %v6617 = vunpack.c.h.b16 %v6288
  %v6618 = vunpack.c.l.b16 %v6289
  %v6619 = vunpack.c.h.b16 %v6289
  %v6620 = vunpack.c.l.b16 %v6290
  %v6621 = vunpack.c.h.b16 %v6290
  %v6622 = vunpack.c.l.b16 %v6291
  %v6623 = vunpack.c.h.b16 %v6291
  %v6624 = vunpack.c.l.b16 %v6292
  %v6625 = vunpack.c.h.b16 %v6292
  %v6626 = vunpack.c.l.b16 %v6293
  %v6627 = vunpack.c.h.b16 %v6293
  %v6628 = vunpack.c.l.b16 %v6294
  %v6629 = vunpack.c.h.b16 %v6294
  %v6630 = vunpack.c.l.b16 %v6295
  %v6631 = vunpack.c.h.b16 %v6295
  %v6632 = vunpack.c.l.b16 %v6296
  %v6633 = vunpack.c.h.b16 %v6296
  %v6634 = vunpack.c.l.b16 %v6297
  %v6635 = vunpack.c.h.b16 %v6297
  %v6636 = vunpack.c.l.b16 %v6298
  %v6637 = vunpack.c.h.b16 %v6298
  %v6638 = vunpack.c.l.b16 %v6299
  %v6639 = vunpack.c.h.b16 %v6299
  %v6640 = vunpack.c.l.b16 %v6300
  %v6641 = vunpack.c.h.b16 %v6300
  %v6642 = vunpack.c.l.b16 %v6301
  %v6643 = vunpack.c.h.b16 %v6301
  %v6644 = vunpack.c.l.b16 %v6302
  %v6645 = vunpack.c.h.b16 %v6302
  %v6646 = vunpack.c.l.b16 %v6303
  %v6647 = vunpack.c.h.b16 %v6303
  %v6648 = vunpack.c.l.b16 %v6304
  %v6649 = vunpack.c.h.b16 %v6304
  %v6650 = vunpack.c.l.b16 %v6305
  %v6651 = vunpack.c.h.b16 %v6305
  %v6652 = vunpack.c.l.b16 %v6306
  %v6653 = vunpack.c.h.b16 %v6306
  %v6654 = vunpack.c.l.b16 %v6307
  %v6655 = vunpack.c.h.b16 %v6307
  %v6656 = vunpack.c.l.b16 %v6308
  %v6657 = vunpack.c.h.b16 %v6308
  %v6658 = vunpack.c.l.b16 %v6309
  %v6659 = vunpack.c.h.b16 %v6309
  %v6660 = vunpack.c.l.b16 %v6310
  %v6661 = vunpack.c.h.b16 %v6310
  %v6662 = vunpack.c.l.b16 %v6311
  %v6663 = vunpack.c.h.b16 %v6311
  %v6664 = vunpack.c.l.b16 %v6312
  %v6665 = vunpack.c.h.b16 %v6312
  %v6666 = vunpack.c.l.b16 %v6313
  %v6667 = vunpack.c.h.b16 %v6313
  %v6668 = vunpack.c.l.b16 %v6314
  %v6669 = vunpack.c.h.b16 %v6314
  %v6670 = vunpack.c.l.b16 %v6315
  %v6671 = vunpack.c.h.b16 %v6315
  %v6672 = vunpack.c.l.b16 %v6316
  %v6673 = vunpack.c.h.b16 %v6316
  %v6674 = vunpack.c.l.b16 %v6317
  %v6675 = vunpack.c.h.b16 %v6317
  %v6676 = vunpack.c.l.b16 %v6318
  %v6677 = vunpack.c.h.b16 %v6318
  %v6678 = vunpack.c.l.b16 %v6319
  %v6679 = vunpack.c.h.b16 %v6319
  %v6680 = vunpack.c.l.b16 %v6320
  %v6681 = vunpack.c.h.b16 %v6320
  %v6682 = vunpack.c.l.b16 %v6321
  %v6683 = vunpack.c.h.b16 %v6321
  %v6684 = vunpack.c.l.b16 %v6322
  %v6685 = vunpack.c.h.b16 %v6322
  %v6686 = vunpack.c.l.b16 %v6323
  %v6687 = vunpack.c.h.b16 %v6323
  %v6688 = vunpack.c.l.b16 %v6324
  %v6689 = vunpack.c.h.b16 %v6324
  %v6690 = vunpack.c.l.b16 %v6325
  %v6691 = vunpack.c.h.b16 %v6325
  %v6692 = vunpack.c.l.b16 %v6326
  %v6693 = vunpack.c.h.b16 %v6326
  %v6694 = vunpack.c.l.b16 %v6327
  %v6695 = vunpack.c.h.b16 %v6327
  %v6696 = vunpack.c.l.b16 %v6328
  %v6697 = vunpack.c.h.b16 %v6328
  %v6698 = vunpack.c.l.b16 %v6329
  %v6699 = vunpack.c.h.b16 %v6329
  %v6700 = vunpack.c.l.b16 %v6330
  %v6701 = vunpack.c.h.b16 %v6330
  %v6702 = vunpack.c.l.b16 %v6331
  %v6703 = vunpack.c.h.b16 %v6331
  %v6704 = vunpack.c.l.b16 %v6332
  %v6705 = vunpack.c.h.b16 %v6332
  %v6706 = vunpack.c.l.b16 %v6333
  %v6707 = vunpack.c.h.b16 %v6333
  %v6708 = vunpack.c.l.b16 %v6334
  %v6709 = vunpack.c.h.b16 %v6334
  %v6710 = vunpack.c.l.b16 %v6335
  %v6711 = vunpack.c.h.b16 %v6335
  %v6712 = vunpack.c.l.b16 %v6336
  %v6713 = vunpack.c.h.b16 %v6336
  %v6714 = vunpack.c.l.b16 %v6337
  %v6715 = vunpack.c.h.b16 %v6337
  %v6716 = vunpack.c.l.b16 %v6338
  %v6717 = vunpack.c.h.b16 %v6338
  %v6718 = vunpack.c.l.b16 %v6339
  %v6719 = vunpack.c.h.b16 %v6339
  %v6720 = vunpack.c.l.b16 %v6340
  %v6721 = vunpack.c.h.b16 %v6340
  %v6722 = vunpack.c.l.b16 %v6341
  %v6723 = vunpack.c.h.b16 %v6341
  %v6724 = vunpack.c.l.b16 %v6342
  %v6725 = vunpack.c.h.b16 %v6342
  %v6726 = vunpack.c.l.b16 %v6343
  %v6727 = vunpack.c.h.b16 %v6343
  %v6728 = vpack.c.b16 %v6480, %v6472
  %v6729 = vpack.c.b16 %v6481, %v6473
  %v6730 = vpack.c.b16 %v6482, %v6474
  %v6731 = vpack.c.b16 %v6483, %v6475
  %v6732 = vpack.c.b16 %v6484, %v6476
  %v6733 = vpack.c.b16 %v6485, %v6477
  %v6734 = vpack.c.b16 %v6486, %v6478
  %v6735 = vpack.c.b16 %v6487, %v6479
  %v6736 = vpack.c.b16 %v6496, %v6488
  %v6737 = vpack.c.b16 %v6497, %v6489
  %v6738 = vpack.c.b16 %v6498, %v6490
  %v6739 = vpack.c.b16 %v6499, %v6491
  %v6740 = vpack.c.b16 %v6500, %v6492
  %v6741 = vpack.c.b16 %v6501, %v6493
  %v6742 = vpack.c.b16 %v6502, %v6494
  %v6743 = vpack.c.b16 %v6503, %v6495
  %v6744 = vpack.c.b16 %v6512, %v6504
  %v6745 = vpack.c.b16 %v6513, %v6505
  %v6746 = vpack.c.b16 %v6514, %v6506
  %v6747 = vpack.c.b16 %v6515, %v6507
  %v6748 = vpack.c.b16 %v6516, %v6508
  %v6749 = vpack.c.b16 %v6517, %v6509
  %v6750 = vpack.c.b16 %v6518, %v6510
  %v6751 = vpack.c.b16 %v6519, %v6511
  %v6752 = vpack.c.b16 %v6528, %v6520
  %v6753 = vpack.c.b16 %v6529, %v6521
  %v6754 = vpack.c.b16 %v6530, %v6522
  %v6755 = vpack.c.b16 %v6531, %v6523
  %v6756 = vpack.c.b16 %v6532, %v6524
  %v6757 = vpack.c.b16 %v6533, %v6525
  %v6758 = vpack.c.b16 %v6534, %v6526
  %v6759 = vpack.c.b16 %v6535, %v6527
  %v6760 = vpack.c.b16 %v6544, %v6536
  %v6761 = vpack.c.b16 %v6545, %v6537
  %v6762 = vpack.c.b16 %v6546, %v6538
  %v6763 = vpack.c.b16 %v6547, %v6539
  %v6764 = vpack.c.b16 %v6548, %v6540
  %v6765 = vpack.c.b16 %v6549, %v6541
  %v6766 = vpack.c.b16 %v6550, %v6542
  %v6767 = vpack.c.b16 %v6551, %v6543
  %v6768 = vpack.c.b16 %v6560, %v6552
  %v6769 = vpack.c.b16 %v6561, %v6553
  %v6770 = vpack.c.b16 %v6562, %v6554
  %v6771 = vpack.c.b16 %v6563, %v6555
  %v6772 = vpack.c.b16 %v6564, %v6556
  %v6773 = vpack.c.b16 %v6565, %v6557
  %v6774 = vpack.c.b16 %v6566, %v6558
  %v6775 = vpack.c.b16 %v6567, %v6559
  %v6776 = vpack.c.b16 %v6576, %v6568
  %v6777 = vpack.c.b16 %v6577, %v6569
  %v6778 = vpack.c.b16 %v6578, %v6570
  %v6779 = vpack.c.b16 %v6579, %v6571
  %v6780 = vpack.c.b16 %v6580, %v6572
  %v6781 = vpack.c.b16 %v6581, %v6573
  %v6782 = vpack.c.b16 %v6582, %v6574
  %v6783 = vpack.c.b16 %v6583, %v6575
  %v6784 = vpack.c.b16 %v6592, %v6584
  %v6785 = vpack.c.b16 %v6593, %v6585
  %v6786 = vpack.c.b16 %v6594, %v6586
  %v6787 = vpack.c.b16 %v6595, %v6587
  %v6788 = vpack.c.b16 %v6596, %v6588
  %v6789 = vpack.c.b16 %v6597, %v6589
  %v6790 = vpack.c.b16 %v6598, %v6590
  %v6791 = vpack.c.b16 %v6599, %v6591
  %v6792 = vpack.c.b16 %v6608, %v6600
  %v6793 = vpack.c.b16 %v6609, %v6601
  %v6794 = vpack.c.b16 %v6610, %v6602
  %v6795 = vpack.c.b16 %v6611, %v6603
  %v6796 = vpack.c.b16 %v6612, %v6604
  %v6797 = vpack.c.b16 %v6613, %v6605
  %v6798 = vpack.c.b16 %v6614, %v6606
  %v6799 = vpack.c.b16 %v6615, %v6607
  %v6800 = vpack.c.b16 %v6624, %v6616
  %v6801 = vpack.c.b16 %v6625, %v6617
  %v6802 = vpack.c.b16 %v6626, %v6618
  %v6803 = vpack.c.b16 %v6627, %v6619
  %v6804 = vpack.c.b16 %v6628, %v6620
  %v6805 = vpack.c.b16 %v6629, %v6621
  %v6806 = vpack.c.b16 %v6630, %v6622
  %v6807 = vpack.c.b16 %v6631, %v6623
  %v6808 = vpack.c.b16 %v6640, %v6632
  %v6809 = vpack.c.b16 %v6641, %v6633
  %v6810 = vpack.c.b16 %v6642, %v6634
  %v6811 = vpack.c.b16 %v6643, %v6635
  %v6812 = vpack.c.b16 %v6644, %v6636
  %v6813 = vpack.c.b16 %v6645, %v6637
  %v6814 = vpack.c.b16 %v6646, %v6638
  %v6815 = vpack.c.b16 %v6647, %v6639
  %v6816 = vpack.c.b16 %v6656, %v6648
  %v6817 = vpack.c.b16 %v6657, %v6649
  %v6818 = vpack.c.b16 %v6658, %v6650
  %v6819 = vpack.c.b16 %v6659, %v6651
  %v6820 = vpack.c.b16 %v6660, %v6652
  %v6821 = vpack.c.b16 %v6661, %v6653
  %v6822 = vpack.c.b16 %v6662, %v6654
  %v6823 = vpack.c.b16 %v6663, %v6655
  %v6824 = vpack.c.b16 %v6672, %v6664
  %v6825 = vpack.c.b16 %v6673, %v6665
  %v6826 = vpack.c.b16 %v6674, %v6666
  %v6827 = vpack.c.b16 %v6675, %v6667
  %v6828 = vpack.c.b16 %v6676, %v6668
  %v6829 = vpack.c.b16 %v6677, %v6669
  %v6830 = vpack.c.b16 %v6678, %v6670
  %v6831 = vpack.c.b16 %v6679, %v6671
  %v6832 = vpack.c.b16 %v6688, %v6680
  %v6833 = vpack.c.b16 %v6689, %v6681
  %v6834 = vpack.c.b16 %v6690, %v6682
  %v6835 = vpack.c.b16 %v6691, %v6683
  %v6836 = vpack.c.b16 %v6692, %v6684
  %v6837 = vpack.c.b16 %v6693, %v6685
  %v6838 = vpack.c.b16 %v6694, %v6686
  %v6839 = vpack.c.b16 %v6695, %v6687
  %v6840 = vpack.c.b16 %v6704, %v6696
  %v6841 = vpack.c.b16 %v6705, %v6697
  %v6842 = vpack.c.b16 %v6706, %v6698
  %v6843 = vpack.c.b16 %v6707, %v6699
  %v6844 = vpack.c.b16 %v6708, %v6700
  %v6845 = vpack.c.b16 %v6709, %v6701
  %v6846 = vpack.c.b16 %v6710, %v6702
  %v6847 = vpack.c.b16 %v6711, %v6703
  %v6848 = vpack.c.b16 %v6720, %v6712
  %v6849 = vpack.c.b16 %v6721, %v6713
  %v6850 = vpack.c.b16 %v6722, %v6714
  %v6851 = vpack.c.b16 %v6723, %v6715
  %v6852 = vpack.c.b16 %v6724, %v6716
  %v6853 = vpack.c.b16 %v6725, %v6717
  %v6854 = vpack.c.b16 %v6726, %v6718
  %v6855 = vpack.c.b16 %v6727, %v6719
  %6984 = vmatprep.subr.bf16.mxu0 %v6729
  %6985 = vmatpush1.bf16.msra.mxu0 %v6728
  %6986 = vmatprep.subr.bf16.mxu0 %v6737
  %6987 = vmatpush1.bf16.msra.mxu0 %v6736
  %6988 = vmatprep.subr.bf16.mxu0 %v6745
  %6989 = vmatpush1.bf16.msra.mxu0 %v6744
  %6990 = vmatprep.subr.bf16.mxu0 %v6753
  %6991 = vmatpush1.bf16.msra.mxu0 %v6752
  %6992 = vmatprep.subr.bf16.mxu0 %v6761
  %6993 = vmatpush1.bf16.msra.mxu0 %v6760
  %6994 = vmatprep.subr.bf16.mxu0 %v6769
  %6995 = vmatpush1.bf16.msra.mxu0 %v6768
  %6996 = vmatprep.subr.bf16.mxu0 %v6777
  %6997 = vmatpush1.bf16.msra.mxu0 %v6776
  %6998 = vmatprep.subr.bf16.mxu0 %v6785
  %6999 = vmatpush1.bf16.msra.mxu0 %v6784
  %7000 = vmatprep.subr.bf16.mxu0 %v6793
  %7001 = vmatpush1.bf16.msra.mxu0 %v6792
  %7002 = vmatprep.subr.bf16.mxu0 %v6801
  %7003 = vmatpush1.bf16.msra.mxu0 %v6800
  %7004 = vmatprep.subr.bf16.mxu0 %v6809
  %7005 = vmatpush1.bf16.msra.mxu0 %v6808
  %7006 = vmatprep.subr.bf16.mxu0 %v6817
  %7007 = vmatpush1.bf16.msra.mxu0 %v6816
  %7008 = vmatprep.subr.bf16.mxu0 %v6825
  %7009 = vmatpush1.bf16.msra.mxu0 %v6824
  %7010 = vmatprep.subr.bf16.mxu0 %v6833
  %7011 = vmatpush1.bf16.msra.mxu0 %v6832
  %7012 = vmatprep.subr.bf16.mxu0 %v6841
  %7013 = vmatpush1.bf16.msra.mxu0 %v6840
  %7014 = vmatprep.subr.bf16.mxu0 %v6849
  %7015 = vmatpush1.bf16.msra.mxu0 %v6848
  %7016 = vmatprep.mubr.bf16.mxu0 %v6215
  %7017 = vmatmul.mubr.bf16.gmra.mrb[0].mxu0 %v6214
  %v7018 = vpop.f32.mrb[0].mxu0
  %v7019 = vadd.f32 0.0, %v7018
  %v7020 = vpop.f32.mrb[0].mxu0
  %v7021 = vadd.f32 0.0, %v7020
  %v7022 = vpop.f32.mrb[0].mxu0
  %v7023 = vpop.f32.mrb[0].mxu0
  %7024 = vdwg.mxu0
  %7025 = vmatprep.subr.bf16.mxu0 %v6731
  %7026 = vmatpush1.bf16.msra.mxu0 %v6730
  %7027 = vmatprep.subr.bf16.mxu0 %v6739
  %7028 = vmatpush1.bf16.msra.mxu0 %v6738
  %7029 = vmatprep.subr.bf16.mxu0 %v6747
  %7030 = vmatpush1.bf16.msra.mxu0 %v6746
  %7031 = vmatprep.subr.bf16.mxu0 %v6755
  %7032 = vmatpush1.bf16.msra.mxu0 %v6754
  %7033 = vmatprep.subr.bf16.mxu0 %v6763
  %7034 = vmatpush1.bf16.msra.mxu0 %v6762
  %7035 = vmatprep.subr.bf16.mxu0 %v6771
  %7036 = vmatpush1.bf16.msra.mxu0 %v6770
  %7037 = vmatprep.subr.bf16.mxu0 %v6779
  %7038 = vmatpush1.bf16.msra.mxu0 %v6778
  %7039 = vmatprep.subr.bf16.mxu0 %v6787
  %7040 = vmatpush1.bf16.msra.mxu0 %v6786
  %7041 = vmatprep.subr.bf16.mxu0 %v6795
  %7042 = vmatpush1.bf16.msra.mxu0 %v6794
  %7043 = vmatprep.subr.bf16.mxu0 %v6803
  %7044 = vmatpush1.bf16.msra.mxu0 %v6802
  %7045 = vmatprep.subr.bf16.mxu0 %v6811
  %7046 = vmatpush1.bf16.msra.mxu0 %v6810
  %7047 = vmatprep.subr.bf16.mxu0 %v6819
  %7048 = vmatpush1.bf16.msra.mxu0 %v6818
  %7049 = vmatprep.subr.bf16.mxu0 %v6827
  %7050 = vmatpush1.bf16.msra.mxu0 %v6826
  %7051 = vmatprep.subr.bf16.mxu0 %v6835
  %7052 = vmatpush1.bf16.msra.mxu0 %v6834
  %7053 = vmatprep.subr.bf16.mxu0 %v6843
  %7054 = vmatpush1.bf16.msra.mxu0 %v6842
  %7055 = vmatprep.subr.bf16.mxu0 %v6851
  %7056 = vmatpush1.bf16.msra.mxu0 %v6850
  %7057 = vmatprep.mubr.bf16.mxu0 %v6215
  %7058 = vmatmul.mubr.bf16.gmra.mrb[0].mxu0 %v6214
  %v7059 = vpop.f32.mrb[0].mxu0
  %v7060 = vadd.f32 0.0, %v7059
  %v7061 = vpop.f32.mrb[0].mxu0
  %v7062 = vadd.f32 0.0, %v7061
  %v7063 = vpop.f32.mrb[0].mxu0
  %v7064 = vpop.f32.mrb[0].mxu0
  %7065 = vdwg.mxu0
  %7066 = vmatprep.subr.bf16.mxu0 %v6733
  %7067 = vmatpush1.bf16.msra.mxu0 %v6732
  %7068 = vmatprep.subr.bf16.mxu0 %v6741
  %7069 = vmatpush1.bf16.msra.mxu0 %v6740
  %7070 = vmatprep.subr.bf16.mxu0 %v6749
  %7071 = vmatpush1.bf16.msra.mxu0 %v6748
  %7072 = vmatprep.subr.bf16.mxu0 %v6757
  %7073 = vmatpush1.bf16.msra.mxu0 %v6756
  %7074 = vmatprep.subr.bf16.mxu0 %v6765
  %7075 = vmatpush1.bf16.msra.mxu0 %v6764
  %7076 = vmatprep.subr.bf16.mxu0 %v6773
  %7077 = vmatpush1.bf16.msra.mxu0 %v6772
  %7078 = vmatprep.subr.bf16.mxu0 %v6781
  %7079 = vmatpush1.bf16.msra.mxu0 %v6780
  %7080 = vmatprep.subr.bf16.mxu0 %v6789
  %7081 = vmatpush1.bf16.msra.mxu0 %v6788
  %7082 = vmatprep.subr.bf16.mxu0 %v6797
  %7083 = vmatpush1.bf16.msra.mxu0 %v6796
  %7084 = vmatprep.subr.bf16.mxu0 %v6805
  %7085 = vmatpush1.bf16.msra.mxu0 %v6804
  %7086 = vmatprep.subr.bf16.mxu0 %v6813
  %7087 = vmatpush1.bf16.msra.mxu0 %v6812
  %7088 = vmatprep.subr.bf16.mxu0 %v6821
  %7089 = vmatpush1.bf16.msra.mxu0 %v6820
  %7090 = vmatprep.subr.bf16.mxu0 %v6829
  %7091 = vmatpush1.bf16.msra.mxu0 %v6828
  %7092 = vmatprep.subr.bf16.mxu0 %v6837
  %7093 = vmatpush1.bf16.msra.mxu0 %v6836
  %7094 = vmatprep.subr.bf16.mxu0 %v6845
  %7095 = vmatpush1.bf16.msra.mxu0 %v6844
  %7096 = vmatprep.subr.bf16.mxu0 %v6853
  %7097 = vmatpush1.bf16.msra.mxu0 %v6852
  %7098 = vmatprep.mubr.bf16.mxu0 %v6215
  %7099 = vmatmul.mubr.bf16.gmra.mrb[0].mxu0 %v6214
  %v7100 = vpop.f32.mrb[0].mxu0
  %v7101 = vadd.f32 0.0, %v7100
  %v7102 = vpop.f32.mrb[0].mxu0
  %v7103 = vadd.f32 0.0, %v7102
  %v7104 = vpop.f32.mrb[0].mxu0
  %v7105 = vpop.f32.mrb[0].mxu0
  %7106 = vdwg.mxu0
  %7107 = vmatprep.subr.bf16.mxu0 %v6735
  %7108 = vmatpush1.bf16.msra.mxu0 %v6734
  %7109 = vmatprep.subr.bf16.mxu0 %v6743
  %7110 = vmatpush1.bf16.msra.mxu0 %v6742
  %7111 = vmatprep.subr.bf16.mxu0 %v6751
  %7112 = vmatpush1.bf16.msra.mxu0 %v6750
  %7113 = vmatprep.subr.bf16.mxu0 %v6759
  %7114 = vmatpush1.bf16.msra.mxu0 %v6758
  %7115 = vmatprep.subr.bf16.mxu0 %v6767
  %7116 = vmatpush1.bf16.msra.mxu0 %v6766
  %7117 = vmatprep.subr.bf16.mxu0 %v6775
  %7118 = vmatpush1.bf16.msra.mxu0 %v6774
  %7119 = vmatprep.subr.bf16.mxu0 %v6783
  %7120 = vmatpush1.bf16.msra.mxu0 %v6782
  %7121 = vmatprep.subr.bf16.mxu0 %v6791
  %7122 = vmatpush1.bf16.msra.mxu0 %v6790
  %7123 = vmatprep.subr.bf16.mxu0 %v6799
  %7124 = vmatpush1.bf16.msra.mxu0 %v6798
  %7125 = vmatprep.subr.bf16.mxu0 %v6807
  %7126 = vmatpush1.bf16.msra.mxu0 %v6806
  %7127 = vmatprep.subr.bf16.mxu0 %v6815
  %7128 = vmatpush1.bf16.msra.mxu0 %v6814
  %7129 = vmatprep.subr.bf16.mxu0 %v6823
  %7130 = vmatpush1.bf16.msra.mxu0 %v6822
  %7131 = vmatprep.subr.bf16.mxu0 %v6831
  %7132 = vmatpush1.bf16.msra.mxu0 %v6830
  %7133 = vmatprep.subr.bf16.mxu0 %v6839
  %7134 = vmatpush1.bf16.msra.mxu0 %v6838
  %7135 = vmatprep.subr.bf16.mxu0 %v6847
  %7136 = vmatpush1.bf16.msra.mxu0 %v6846
  %7137 = vmatprep.subr.bf16.mxu0 %v6855
  %7138 = vmatpush1.bf16.msra.mxu0 %v6854
  %7139 = vmatprep.mubr.bf16.mxu0 %v6215
  %7140 = vmatmul.mubr.bf16.gmra.mrb[0].mxu0 %v6214
  %v7141 = vpop.f32.mrb[0].mxu0
  %v7142 = vadd.f32 0.0, %v7141
  %v7143 = vpop.f32.mrb[0].mxu0
  %v7144 = vadd.f32 0.0, %v7143
  %v7145 = vpop.f32.mrb[0].mxu0
  %v7146 = vpop.f32.mrb[0].mxu0
  %7147 = vdwg.mxu0
  %v7148 = vadd.f32 %v6206, %v7019
  %v7149 = vadd.f32 %v6207, %v7021
  %v7150 = vadd.f32 %v6208, %v7060
  %v7151 = vadd.f32 %v6209, %v7062
  %v7152 = vadd.f32 %v6210, %v7101
  %v7153 = vadd.f32 %v6211, %v7103
  %v7154 = vadd.f32 %v6212, %v7142
  %v7155 = vadd.f32 %v6213, %v7144
  %v7156 = vxor.u32 %v7148, 2147483648
  %v7157 = vxor.u32 %v7149, 2147483648
  %v7158 = vmul.f32 %v7156, 1.442695
  %v7159 = vpow.pop %v7158
  %v7160 = vmul.f32 %v7157, 1.442695
  %v7161 = vpow.pop %v7160
  %v7162 = vadd.f32 %v7159, 1.0
  %v7163 = vadd.f32 %v7161, 1.0
  %v7164 = vrcp.pop %v7162
  %v7165 = vmul.f32 1.0, %v7164
  %v7166 = vrcp.pop %v7163
  %v7167 = vmul.f32 1.0, %v7166
  %v7168 = vxor.u32 %v7150, 2147483648
  %v7169 = vxor.u32 %v7151, 2147483648
  %v7170 = vmul.f32 %v7168, 1.442695
  %v7171 = vpow.pop %v7170
  %v7172 = vmul.f32 %v7169, 1.442695
  %v7173 = vpow.pop %v7172
  %v7174 = vadd.f32 %v7171, 1.0
  %v7175 = vadd.f32 %v7173, 1.0
  %v7176 = vrcp.pop %v7174
  %v7177 = vmul.f32 1.0, %v7176
  %v7178 = vrcp.pop %v7175
  %v7179 = vmul.f32 1.0, %v7178
  %v7180 = vtanh.pop %v7152
  %v7181 = vtanh.pop %v7153
  %v7182 = vxor.u32 %v7154, 2147483648
  %v7183 = vxor.u32 %v7155, 2147483648
  %v7184 = vmul.f32 %v7182, 1.442695
  %v7185 = vpow.pop %v7184
  %v7186 = vmul.f32 %v7183, 1.442695
  %v7187 = vpow.pop %v7186
  %v7188 = vadd.f32 %v7185, 1.0
  %v7189 = vadd.f32 %v7187, 1.0
  %v7190 = vrcp.pop %v7188
  %v7191 = vmul.f32 1.0, %v7190
  %v7192 = vrcp.pop %v7189
  %v7193 = vmul.f32 1.0, %v7192
  %v7194 = vmul.f32 %v7177, %v6182
  %v7195 = vmul.f32 %v7179, %v6183
  %v7196 = vmul.f32 %v7165, %v7180
  %v7197 = vmul.f32 %v7167, %v7181
  %v7198 = vadd.f32 %v7194, %v7196
  %v7199 = vadd.f32 %v7195, %v7197
  %v7200 = vtanh.pop %v7198
  %v7201 = vtanh.pop %v7199
  %v7202 = vmul.f32 %v7191, %v7200
  %v7203 = vmul.f32 %v7193, %v7201
  %7204 = vst [vmem:[#allocation3 + $0x50] sm:$0xff] %v7202
  %7205 = vst [vmem:[#allocation3 + $0x28] sm:$0xff] %v7203
  %v7206 = vld [vmem:[#allocation2 + $0x180] sm:$0xff]
  %v7207 = vld [vmem:[#allocation2 + $0x188] sm:$0xff]
  %v7208 = vld [vmem:[#allocation2 + $0x190] sm:$0xff]
  %v7209 = vld [vmem:[#allocation2 + $0x198] sm:$0xff]
  %v7210 = vld [vmem:[#allocation2 + $0x1a0] sm:$0xff]
  %v7211 = vld [vmem:[#allocation2 + $0x1a8] sm:$0xff]
  %v7212 = vld [vmem:[#allocation2 + $0x1b0] sm:$0xff]
  %v7213 = vld [vmem:[#allocation2 + $0x1b8] sm:$0xff]
  %v7214 = vld [vmem:[#allocation2 + $0x40] sm:$0xff]
  %v7215 = vld [vmem:[#allocation2 + $0x48] sm:$0xff]
  %v7216 = vld [vmem:[#allocation2 + $0x50] sm:$0xff]
  %v7217 = vld [vmem:[#allocation2 + $0x58] sm:$0xff]
  %v7218 = vld [vmem:[#allocation2 + $0x60] sm:$0xff]
  %v7219 = vld [vmem:[#allocation2 + $0x68] sm:$0xff]
  %v7220 = vld [vmem:[#allocation2 + $0x70] sm:$0xff]
  %v7221 = vld [vmem:[#allocation2 + $0x78] sm:$0xff]
  %v7222 = vsel %vm318, %v7206, %v7214
  %v7223 = vsel %vm319, %v7207, %v7215
  %v7224 = vsel %vm320, %v7208, %v7216
  %v7225 = vsel %vm321, %v7209, %v7217
  %v7226 = vsel %vm322, %v7210, %v7218
  %v7227 = vsel %vm323, %v7211, %v7219
  %v7228 = vsel %vm324, %v7212, %v7220
  %v7229 = vsel %vm325, %v7213, %v7221
  %v7230 = vpack.c.bf16 %v7202, %v7202
  %v7231 = vpack.c.bf16 %v7203, %v7203
  %v7232 = vld [vmem:[%s4] sm:$0xff]
  %v7233 = vld [vmem:[%s4 + $0x8] sm:$0xff]
  %v7234 = vld [vmem:[%s4 + $0x10] sm:$0xff]
  %v7235 = vld [vmem:[%s4 + $0x18] sm:$0xff]
  %v7236 = vld [vmem:[%s4 + $0x20] sm:$0xff]
  %v7237 = vld [vmem:[%s4 + $0x28] sm:$0xff]
  %v7238 = vld [vmem:[%s4 + $0x30] sm:$0xff]
  %v7239 = vld [vmem:[%s4 + $0x38] sm:$0xff]
  %v7240 = vld [vmem:[%s4 + $0x40] sm:$0xff]
  %v7241 = vld [vmem:[%s4 + $0x48] sm:$0xff]
  %v7242 = vld [vmem:[%s4 + $0x50] sm:$0xff]
  %v7243 = vld [vmem:[%s4 + $0x58] sm:$0xff]
  %v7244 = vld [vmem:[%s4 + $0x60] sm:$0xff]
  %v7245 = vld [vmem:[%s4 + $0x68] sm:$0xff]
  %v7246 = vld [vmem:[%s4 + $0x70] sm:$0xff]
  %v7247 = vld [vmem:[%s4 + $0x78] sm:$0xff]
  %v7248 = vld [vmem:[%s4 + $0x80] sm:$0xff]
  %v7249 = vld [vmem:[%s4 + $0x88] sm:$0xff]
  %v7250 = vld [vmem:[%s4 + $0x90] sm:$0xff]
  %v7251 = vld [vmem:[%s4 + $0x98] sm:$0xff]
  %v7252 = vld [vmem:[%s4 + $0xa0] sm:$0xff]
  %v7253 = vld [vmem:[%s4 + $0xa8] sm:$0xff]
  %v7254 = vld [vmem:[%s4 + $0xb0] sm:$0xff]
  %v7255 = vld [vmem:[%s4 + $0xb8] sm:$0xff]
  %v7256 = vld [vmem:[%s4 + $0xc0] sm:$0xff]
  %v7257 = vld [vmem:[%s4 + $0xc8] sm:$0xff]
  %v7258 = vld [vmem:[%s4 + $0xd0] sm:$0xff]
  %v7259 = vld [vmem:[%s4 + $0xd8] sm:$0xff]
  %v7260 = vld [vmem:[%s4 + $0xe0] sm:$0xff]
  %v7261 = vld [vmem:[%s4 + $0xe8] sm:$0xff]
  %v7262 = vld [vmem:[%s4 + $0xf0] sm:$0xff]
  %v7263 = vld [vmem:[%s4 + $0xf8] sm:$0xff]
  %v7264 = vld [vmem:[%s4 + $0x100] sm:$0xff]
  %v7265 = vld [vmem:[%s4 + $0x108] sm:$0xff]
  %v7266 = vld [vmem:[%s4 + $0x110] sm:$0xff]
  %v7267 = vld [vmem:[%s4 + $0x118] sm:$0xff]
  %v7268 = vld [vmem:[%s4 + $0x120] sm:$0xff]
  %v7269 = vld [vmem:[%s4 + $0x128] sm:$0xff]
  %v7270 = vld [vmem:[%s4 + $0x130] sm:$0xff]
  %v7271 = vld [vmem:[%s4 + $0x138] sm:$0xff]
  %v7272 = vld [vmem:[%s4 + $0x140] sm:$0xff]
  %v7273 = vld [vmem:[%s4 + $0x148] sm:$0xff]
  %v7274 = vld [vmem:[%s4 + $0x150] sm:$0xff]
  %v7275 = vld [vmem:[%s4 + $0x158] sm:$0xff]
  %v7276 = vld [vmem:[%s4 + $0x160] sm:$0xff]
  %v7277 = vld [vmem:[%s4 + $0x168] sm:$0xff]
  %v7278 = vld [vmem:[%s4 + $0x170] sm:$0xff]
  %v7279 = vld [vmem:[%s4 + $0x178] sm:$0xff]
  %v7280 = vld [vmem:[%s4 + $0x180] sm:$0xff]
  %v7281 = vld [vmem:[%s4 + $0x188] sm:$0xff]
  %v7282 = vld [vmem:[%s4 + $0x190] sm:$0xff]
  %v7283 = vld [vmem:[%s4 + $0x198] sm:$0xff]
  %v7284 = vld [vmem:[%s4 + $0x1a0] sm:$0xff]
  %v7285 = vld [vmem:[%s4 + $0x1a8] sm:$0xff]
  %v7286 = vld [vmem:[%s4 + $0x1b0] sm:$0xff]
  %v7287 = vld [vmem:[%s4 + $0x1b8] sm:$0xff]
  %v7288 = vld [vmem:[%s4 + $0x1c0] sm:$0xff]
  %v7289 = vld [vmem:[%s4 + $0x1c8] sm:$0xff]
  %v7290 = vld [vmem:[%s4 + $0x1d0] sm:$0xff]
  %v7291 = vld [vmem:[%s4 + $0x1d8] sm:$0xff]
  %v7292 = vld [vmem:[%s4 + $0x1e0] sm:$0xff]
  %v7293 = vld [vmem:[%s4 + $0x1e8] sm:$0xff]
  %v7294 = vld [vmem:[%s4 + $0x1f0] sm:$0xff]
  %v7295 = vld [vmem:[%s4 + $0x1f8] sm:$0xff]
  %v7296 = vld [vmem:[%s4 + $0x200] sm:$0xff]
  %v7297 = vld [vmem:[%s4 + $0x208] sm:$0xff]
  %v7298 = vld [vmem:[%s4 + $0x210] sm:$0xff]
  %v7299 = vld [vmem:[%s4 + $0x218] sm:$0xff]
  %v7300 = vld [vmem:[%s4 + $0x220] sm:$0xff]
  %v7301 = vld [vmem:[%s4 + $0x228] sm:$0xff]
  %v7302 = vld [vmem:[%s4 + $0x230] sm:$0xff]
  %v7303 = vld [vmem:[%s4 + $0x238] sm:$0xff]
  %v7304 = vld [vmem:[%s4 + $0x240] sm:$0xff]
  %v7305 = vld [vmem:[%s4 + $0x248] sm:$0xff]
  %v7306 = vld [vmem:[%s4 + $0x250] sm:$0xff]
  %v7307 = vld [vmem:[%s4 + $0x258] sm:$0xff]
  %v7308 = vld [vmem:[%s4 + $0x260] sm:$0xff]
  %v7309 = vld [vmem:[%s4 + $0x268] sm:$0xff]
  %v7310 = vld [vmem:[%s4 + $0x270] sm:$0xff]
  %v7311 = vld [vmem:[%s4 + $0x278] sm:$0xff]
  %v7312 = vld [vmem:[%s4 + $0x280] sm:$0xff]
  %v7313 = vld [vmem:[%s4 + $0x288] sm:$0xff]
  %v7314 = vld [vmem:[%s4 + $0x290] sm:$0xff]
  %v7315 = vld [vmem:[%s4 + $0x298] sm:$0xff]
  %v7316 = vld [vmem:[%s4 + $0x2a0] sm:$0xff]
  %v7317 = vld [vmem:[%s4 + $0x2a8] sm:$0xff]
  %v7318 = vld [vmem:[%s4 + $0x2b0] sm:$0xff]
  %v7319 = vld [vmem:[%s4 + $0x2b8] sm:$0xff]
  %v7320 = vld [vmem:[%s4 + $0x2c0] sm:$0xff]
  %v7321 = vld [vmem:[%s4 + $0x2c8] sm:$0xff]
  %v7322 = vld [vmem:[%s4 + $0x2d0] sm:$0xff]
  %v7323 = vld [vmem:[%s4 + $0x2d8] sm:$0xff]
  %v7324 = vld [vmem:[%s4 + $0x2e0] sm:$0xff]
  %v7325 = vld [vmem:[%s4 + $0x2e8] sm:$0xff]
  %v7326 = vld [vmem:[%s4 + $0x2f0] sm:$0xff]
  %v7327 = vld [vmem:[%s4 + $0x2f8] sm:$0xff]
  %v7328 = vld [vmem:[%s4 + $0x300] sm:$0xff]
  %v7329 = vld [vmem:[%s4 + $0x308] sm:$0xff]
  %v7330 = vld [vmem:[%s4 + $0x310] sm:$0xff]
  %v7331 = vld [vmem:[%s4 + $0x318] sm:$0xff]
  %v7332 = vld [vmem:[%s4 + $0x320] sm:$0xff]
  %v7333 = vld [vmem:[%s4 + $0x328] sm:$0xff]
  %v7334 = vld [vmem:[%s4 + $0x330] sm:$0xff]
  %v7335 = vld [vmem:[%s4 + $0x338] sm:$0xff]
  %v7336 = vld [vmem:[%s4 + $0x340] sm:$0xff]
  %v7337 = vld [vmem:[%s4 + $0x348] sm:$0xff]
  %v7338 = vld [vmem:[%s4 + $0x350] sm:$0xff]
  %v7339 = vld [vmem:[%s4 + $0x358] sm:$0xff]
  %v7340 = vld [vmem:[%s4 + $0x360] sm:$0xff]
  %v7341 = vld [vmem:[%s4 + $0x368] sm:$0xff]
  %v7342 = vld [vmem:[%s4 + $0x370] sm:$0xff]
  %v7343 = vld [vmem:[%s4 + $0x378] sm:$0xff]
  %v7344 = vld [vmem:[%s4 + $0x380] sm:$0xff]
  %v7345 = vld [vmem:[%s4 + $0x388] sm:$0xff]
  %v7346 = vld [vmem:[%s4 + $0x390] sm:$0xff]
  %v7347 = vld [vmem:[%s4 + $0x398] sm:$0xff]
  %v7348 = vld [vmem:[%s4 + $0x3a0] sm:$0xff]
  %v7349 = vld [vmem:[%s4 + $0x3a8] sm:$0xff]
  %v7350 = vld [vmem:[%s4 + $0x3b0] sm:$0xff]
  %v7351 = vld [vmem:[%s4 + $0x3b8] sm:$0xff]
  %v7352 = vld [vmem:[%s4 + $0x3c0] sm:$0xff]
  %v7353 = vld [vmem:[%s4 + $0x3c8] sm:$0xff]
  %v7354 = vld [vmem:[%s4 + $0x3d0] sm:$0xff]
  %v7355 = vld [vmem:[%s4 + $0x3d8] sm:$0xff]
  %v7356 = vld [vmem:[%s4 + $0x3e0] sm:$0xff]
  %v7357 = vld [vmem:[%s4 + $0x3e8] sm:$0xff]
  %v7358 = vld [vmem:[%s4 + $0x3f0] sm:$0xff]
  %v7359 = vld [vmem:[%s4 + $0x3f8] sm:$0xff]
  %v7488 = vunpack.c.l.b16 %v7232
  %v7489 = vunpack.c.h.b16 %v7232
  %v7490 = vunpack.c.l.b16 %v7233
  %v7491 = vunpack.c.h.b16 %v7233
  %v7492 = vunpack.c.l.b16 %v7234
  %v7493 = vunpack.c.h.b16 %v7234
  %v7494 = vunpack.c.l.b16 %v7235
  %v7495 = vunpack.c.h.b16 %v7235
  %v7496 = vunpack.c.l.b16 %v7236
  %v7497 = vunpack.c.h.b16 %v7236
  %v7498 = vunpack.c.l.b16 %v7237
  %v7499 = vunpack.c.h.b16 %v7237
  %v7500 = vunpack.c.l.b16 %v7238
  %v7501 = vunpack.c.h.b16 %v7238
  %v7502 = vunpack.c.l.b16 %v7239
  %v7503 = vunpack.c.h.b16 %v7239
  %v7504 = vunpack.c.l.b16 %v7240
  %v7505 = vunpack.c.h.b16 %v7240
  %v7506 = vunpack.c.l.b16 %v7241
  %v7507 = vunpack.c.h.b16 %v7241
  %v7508 = vunpack.c.l.b16 %v7242
  %v7509 = vunpack.c.h.b16 %v7242
  %v7510 = vunpack.c.l.b16 %v7243
  %v7511 = vunpack.c.h.b16 %v7243
  %v7512 = vunpack.c.l.b16 %v7244
  %v7513 = vunpack.c.h.b16 %v7244
  %v7514 = vunpack.c.l.b16 %v7245
  %v7515 = vunpack.c.h.b16 %v7245
  %v7516 = vunpack.c.l.b16 %v7246
  %v7517 = vunpack.c.h.b16 %v7246
  %v7518 = vunpack.c.l.b16 %v7247
  %v7519 = vunpack.c.h.b16 %v7247
  %v7520 = vunpack.c.l.b16 %v7248
  %v7521 = vunpack.c.h.b16 %v7248
  %v7522 = vunpack.c.l.b16 %v7249
  %v7523 = vunpack.c.h.b16 %v7249
  %v7524 = vunpack.c.l.b16 %v7250
  %v7525 = vunpack.c.h.b16 %v7250
  %v7526 = vunpack.c.l.b16 %v7251
  %v7527 = vunpack.c.h.b16 %v7251
  %v7528 = vunpack.c.l.b16 %v7252
  %v7529 = vunpack.c.h.b16 %v7252
  %v7530 = vunpack.c.l.b16 %v7253
  %v7531 = vunpack.c.h.b16 %v7253
  %v7532 = vunpack.c.l.b16 %v7254
  %v7533 = vunpack.c.h.b16 %v7254
  %v7534 = vunpack.c.l.b16 %v7255
  %v7535 = vunpack.c.h.b16 %v7255
  %v7536 = vunpack.c.l.b16 %v7256
  %v7537 = vunpack.c.h.b16 %v7256
  %v7538 = vunpack.c.l.b16 %v7257
  %v7539 = vunpack.c.h.b16 %v7257
  %v7540 = vunpack.c.l.b16 %v7258
  %v7541 = vunpack.c.h.b16 %v7258
  %v7542 = vunpack.c.l.b16 %v7259
  %v7543 = vunpack.c.h.b16 %v7259
  %v7544 = vunpack.c.l.b16 %v7260
  %v7545 = vunpack.c.h.b16 %v7260
  %v7546 = vunpack.c.l.b16 %v7261
  %v7547 = vunpack.c.h.b16 %v7261
  %v7548 = vunpack.c.l.b16 %v7262
  %v7549 = vunpack.c.h.b16 %v7262
  %v7550 = vunpack.c.l.b16 %v7263
  %v7551 = vunpack.c.h.b16 %v7263
  %v7552 = vunpack.c.l.b16 %v7264
  %v7553 = vunpack.c.h.b16 %v7264
  %v7554 = vunpack.c.l.b16 %v7265
  %v7555 = vunpack.c.h.b16 %v7265
  %v7556 = vunpack.c.l.b16 %v7266
  %v7557 = vunpack.c.h.b16 %v7266
  %v7558 = vunpack.c.l.b16 %v7267
  %v7559 = vunpack.c.h.b16 %v7267
  %v7560 = vunpack.c.l.b16 %v7268
  %v7561 = vunpack.c.h.b16 %v7268
  %v7562 = vunpack.c.l.b16 %v7269
  %v7563 = vunpack.c.h.b16 %v7269
  %v7564 = vunpack.c.l.b16 %v7270
  %v7565 = vunpack.c.h.b16 %v7270
  %v7566 = vunpack.c.l.b16 %v7271
  %v7567 = vunpack.c.h.b16 %v7271
  %v7568 = vunpack.c.l.b16 %v7272
  %v7569 = vunpack.c.h.b16 %v7272
  %v7570 = vunpack.c.l.b16 %v7273
  %v7571 = vunpack.c.h.b16 %v7273
  %v7572 = vunpack.c.l.b16 %v7274
  %v7573 = vunpack.c.h.b16 %v7274
  %v7574 = vunpack.c.l.b16 %v7275
  %v7575 = vunpack.c.h.b16 %v7275
  %v7576 = vunpack.c.l.b16 %v7276
  %v7577 = vunpack.c.h.b16 %v7276
  %v7578 = vunpack.c.l.b16 %v7277
  %v7579 = vunpack.c.h.b16 %v7277
  %v7580 = vunpack.c.l.b16 %v7278
  %v7581 = vunpack.c.h.b16 %v7278
  %v7582 = vunpack.c.l.b16 %v7279
  %v7583 = vunpack.c.h.b16 %v7279
  %v7584 = vunpack.c.l.b16 %v7280
  %v7585 = vunpack.c.h.b16 %v7280
  %v7586 = vunpack.c.l.b16 %v7281
  %v7587 = vunpack.c.h.b16 %v7281
  %v7588 = vunpack.c.l.b16 %v7282
  %v7589 = vunpack.c.h.b16 %v7282
  %v7590 = vunpack.c.l.b16 %v7283
  %v7591 = vunpack.c.h.b16 %v7283
  %v7592 = vunpack.c.l.b16 %v7284
  %v7593 = vunpack.c.h.b16 %v7284
  %v7594 = vunpack.c.l.b16 %v7285
  %v7595 = vunpack.c.h.b16 %v7285
  %v7596 = vunpack.c.l.b16 %v7286
  %v7597 = vunpack.c.h.b16 %v7286
  %v7598 = vunpack.c.l.b16 %v7287
  %v7599 = vunpack.c.h.b16 %v7287
  %v7600 = vunpack.c.l.b16 %v7288
  %v7601 = vunpack.c.h.b16 %v7288
  %v7602 = vunpack.c.l.b16 %v7289
  %v7603 = vunpack.c.h.b16 %v7289
  %v7604 = vunpack.c.l.b16 %v7290
  %v7605 = vunpack.c.h.b16 %v7290
  %v7606 = vunpack.c.l.b16 %v7291
  %v7607 = vunpack.c.h.b16 %v7291
  %v7608 = vunpack.c.l.b16 %v7292
  %v7609 = vunpack.c.h.b16 %v7292
  %v7610 = vunpack.c.l.b16 %v7293
  %v7611 = vunpack.c.h.b16 %v7293
  %v7612 = vunpack.c.l.b16 %v7294
  %v7613 = vunpack.c.h.b16 %v7294
  %v7614 = vunpack.c.l.b16 %v7295
  %v7615 = vunpack.c.h.b16 %v7295
  %v7616 = vunpack.c.l.b16 %v7296
  %v7617 = vunpack.c.h.b16 %v7296
  %v7618 = vunpack.c.l.b16 %v7297
  %v7619 = vunpack.c.h.b16 %v7297
  %v7620 = vunpack.c.l.b16 %v7298
  %v7621 = vunpack.c.h.b16 %v7298
  %v7622 = vunpack.c.l.b16 %v7299
  %v7623 = vunpack.c.h.b16 %v7299
  %v7624 = vunpack.c.l.b16 %v7300
  %v7625 = vunpack.c.h.b16 %v7300
  %v7626 = vunpack.c.l.b16 %v7301
  %v7627 = vunpack.c.h.b16 %v7301
  %v7628 = vunpack.c.l.b16 %v7302
  %v7629 = vunpack.c.h.b16 %v7302
  %v7630 = vunpack.c.l.b16 %v7303
  %v7631 = vunpack.c.h.b16 %v7303
  %v7632 = vunpack.c.l.b16 %v7304
  %v7633 = vunpack.c.h.b16 %v7304
  %v7634 = vunpack.c.l.b16 %v7305
  %v7635 = vunpack.c.h.b16 %v7305
  %v7636 = vunpack.c.l.b16 %v7306
  %v7637 = vunpack.c.h.b16 %v7306
  %v7638 = vunpack.c.l.b16 %v7307
  %v7639 = vunpack.c.h.b16 %v7307
  %v7640 = vunpack.c.l.b16 %v7308
  %v7641 = vunpack.c.h.b16 %v7308
  %v7642 = vunpack.c.l.b16 %v7309
  %v7643 = vunpack.c.h.b16 %v7309
  %v7644 = vunpack.c.l.b16 %v7310
  %v7645 = vunpack.c.h.b16 %v7310
  %v7646 = vunpack.c.l.b16 %v7311
  %v7647 = vunpack.c.h.b16 %v7311
  %v7648 = vunpack.c.l.b16 %v7312
  %v7649 = vunpack.c.h.b16 %v7312
  %v7650 = vunpack.c.l.b16 %v7313
  %v7651 = vunpack.c.h.b16 %v7313
  %v7652 = vunpack.c.l.b16 %v7314
  %v7653 = vunpack.c.h.b16 %v7314
  %v7654 = vunpack.c.l.b16 %v7315
  %v7655 = vunpack.c.h.b16 %v7315
  %v7656 = vunpack.c.l.b16 %v7316
  %v7657 = vunpack.c.h.b16 %v7316
  %v7658 = vunpack.c.l.b16 %v7317
  %v7659 = vunpack.c.h.b16 %v7317
  %v7660 = vunpack.c.l.b16 %v7318
  %v7661 = vunpack.c.h.b16 %v7318
  %v7662 = vunpack.c.l.b16 %v7319
  %v7663 = vunpack.c.h.b16 %v7319
  %v7664 = vunpack.c.l.b16 %v7320
  %v7665 = vunpack.c.h.b16 %v7320
  %v7666 = vunpack.c.l.b16 %v7321
  %v7667 = vunpack.c.h.b16 %v7321
  %v7668 = vunpack.c.l.b16 %v7322
  %v7669 = vunpack.c.h.b16 %v7322
  %v7670 = vunpack.c.l.b16 %v7323
  %v7671 = vunpack.c.h.b16 %v7323
  %v7672 = vunpack.c.l.b16 %v7324
  %v7673 = vunpack.c.h.b16 %v7324
  %v7674 = vunpack.c.l.b16 %v7325
  %v7675 = vunpack.c.h.b16 %v7325
  %v7676 = vunpack.c.l.b16 %v7326
  %v7677 = vunpack.c.h.b16 %v7326
  %v7678 = vunpack.c.l.b16 %v7327
  %v7679 = vunpack.c.h.b16 %v7327
  %v7680 = vunpack.c.l.b16 %v7328
  %v7681 = vunpack.c.h.b16 %v7328
  %v7682 = vunpack.c.l.b16 %v7329
  %v7683 = vunpack.c.h.b16 %v7329
  %v7684 = vunpack.c.l.b16 %v7330
  %v7685 = vunpack.c.h.b16 %v7330
  %v7686 = vunpack.c.l.b16 %v7331
  %v7687 = vunpack.c.h.b16 %v7331
  %v7688 = vunpack.c.l.b16 %v7332
  %v7689 = vunpack.c.h.b16 %v7332
  %v7690 = vunpack.c.l.b16 %v7333
  %v7691 = vunpack.c.h.b16 %v7333
  %v7692 = vunpack.c.l.b16 %v7334
  %v7693 = vunpack.c.h.b16 %v7334
  %v7694 = vunpack.c.l.b16 %v7335
  %v7695 = vunpack.c.h.b16 %v7335
  %v7696 = vunpack.c.l.b16 %v7336
  %v7697 = vunpack.c.h.b16 %v7336
  %v7698 = vunpack.c.l.b16 %v7337
  %v7699 = vunpack.c.h.b16 %v7337
  %v7700 = vunpack.c.l.b16 %v7338
  %v7701 = vunpack.c.h.b16 %v7338
  %v7702 = vunpack.c.l.b16 %v7339
  %v7703 = vunpack.c.h.b16 %v7339
  %v7704 = vunpack.c.l.b16 %v7340
  %v7705 = vunpack.c.h.b16 %v7340
  %v7706 = vunpack.c.l.b16 %v7341
  %v7707 = vunpack.c.h.b16 %v7341
  %v7708 = vunpack.c.l.b16 %v7342
  %v7709 = vunpack.c.h.b16 %v7342
  %v7710 = vunpack.c.l.b16 %v7343
  %v7711 = vunpack.c.h.b16 %v7343
  %v7712 = vunpack.c.l.b16 %v7344
  %v7713 = vunpack.c.h.b16 %v7344
  %v7714 = vunpack.c.l.b16 %v7345
  %v7715 = vunpack.c.h.b16 %v7345
  %v7716 = vunpack.c.l.b16 %v7346
  %v7717 = vunpack.c.h.b16 %v7346
  %v7718 = vunpack.c.l.b16 %v7347
  %v7719 = vunpack.c.h.b16 %v7347
  %v7720 = vunpack.c.l.b16 %v7348
  %v7721 = vunpack.c.h.b16 %v7348
  %v7722 = vunpack.c.l.b16 %v7349
  %v7723 = vunpack.c.h.b16 %v7349
  %v7724 = vunpack.c.l.b16 %v7350
  %v7725 = vunpack.c.h.b16 %v7350
  %v7726 = vunpack.c.l.b16 %v7351
  %v7727 = vunpack.c.h.b16 %v7351
  %v7728 = vunpack.c.l.b16 %v7352
  %v7729 = vunpack.c.h.b16 %v7352
  %v7730 = vunpack.c.l.b16 %v7353
  %v7731 = vunpack.c.h.b16 %v7353
  %v7732 = vunpack.c.l.b16 %v7354
  %v7733 = vunpack.c.h.b16 %v7354
  %v7734 = vunpack.c.l.b16 %v7355
  %v7735 = vunpack.c.h.b16 %v7355
  %v7736 = vunpack.c.l.b16 %v7356
  %v7737 = vunpack.c.h.b16 %v7356
  %v7738 = vunpack.c.l.b16 %v7357
  %v7739 = vunpack.c.h.b16 %v7357
  %v7740 = vunpack.c.l.b16 %v7358
  %v7741 = vunpack.c.h.b16 %v7358
  %v7742 = vunpack.c.l.b16 %v7359
  %v7743 = vunpack.c.h.b16 %v7359
  %v7744 = vpack.c.b16 %v7496, %v7488
  %v7745 = vpack.c.b16 %v7497, %v7489
  %v7746 = vpack.c.b16 %v7498, %v7490
  %v7747 = vpack.c.b16 %v7499, %v7491
  %v7748 = vpack.c.b16 %v7500, %v7492
  %v7749 = vpack.c.b16 %v7501, %v7493
  %v7750 = vpack.c.b16 %v7502, %v7494
  %v7751 = vpack.c.b16 %v7503, %v7495
  %v7752 = vpack.c.b16 %v7512, %v7504
  %v7753 = vpack.c.b16 %v7513, %v7505
  %v7754 = vpack.c.b16 %v7514, %v7506
  %v7755 = vpack.c.b16 %v7515, %v7507
  %v7756 = vpack.c.b16 %v7516, %v7508
  %v7757 = vpack.c.b16 %v7517, %v7509
  %v7758 = vpack.c.b16 %v7518, %v7510
  %v7759 = vpack.c.b16 %v7519, %v7511
  %v7760 = vpack.c.b16 %v7528, %v7520
  %v7761 = vpack.c.b16 %v7529, %v7521
  %v7762 = vpack.c.b16 %v7530, %v7522
  %v7763 = vpack.c.b16 %v7531, %v7523
  %v7764 = vpack.c.b16 %v7532, %v7524
  %v7765 = vpack.c.b16 %v7533, %v7525
  %v7766 = vpack.c.b16 %v7534, %v7526
  %v7767 = vpack.c.b16 %v7535, %v7527
  %v7768 = vpack.c.b16 %v7544, %v7536
  %v7769 = vpack.c.b16 %v7545, %v7537
  %v7770 = vpack.c.b16 %v7546, %v7538
  %v7771 = vpack.c.b16 %v7547, %v7539
  %v7772 = vpack.c.b16 %v7548, %v7540
  %v7773 = vpack.c.b16 %v7549, %v7541
  %v7774 = vpack.c.b16 %v7550, %v7542
  %v7775 = vpack.c.b16 %v7551, %v7543
  %v7776 = vpack.c.b16 %v7560, %v7552
  %v7777 = vpack.c.b16 %v7561, %v7553
  %v7778 = vpack.c.b16 %v7562, %v7554
  %v7779 = vpack.c.b16 %v7563, %v7555
  %v7780 = vpack.c.b16 %v7564, %v7556
  %v7781 = vpack.c.b16 %v7565, %v7557
  %v7782 = vpack.c.b16 %v7566, %v7558
  %v7783 = vpack.c.b16 %v7567, %v7559
  %v7784 = vpack.c.b16 %v7576, %v7568
  %v7785 = vpack.c.b16 %v7577, %v7569
  %v7786 = vpack.c.b16 %v7578, %v7570
  %v7787 = vpack.c.b16 %v7579, %v7571
  %v7788 = vpack.c.b16 %v7580, %v7572
  %v7789 = vpack.c.b16 %v7581, %v7573
  %v7790 = vpack.c.b16 %v7582, %v7574
  %v7791 = vpack.c.b16 %v7583, %v7575
  %v7792 = vpack.c.b16 %v7592, %v7584
  %v7793 = vpack.c.b16 %v7593, %v7585
  %v7794 = vpack.c.b16 %v7594, %v7586
  %v7795 = vpack.c.b16 %v7595, %v7587
  %v7796 = vpack.c.b16 %v7596, %v7588
  %v7797 = vpack.c.b16 %v7597, %v7589
  %v7798 = vpack.c.b16 %v7598, %v7590
  %v7799 = vpack.c.b16 %v7599, %v7591
  %v7800 = vpack.c.b16 %v7608, %v7600
  %v7801 = vpack.c.b16 %v7609, %v7601
  %v7802 = vpack.c.b16 %v7610, %v7602
  %v7803 = vpack.c.b16 %v7611, %v7603
  %v7804 = vpack.c.b16 %v7612, %v7604
  %v7805 = vpack.c.b16 %v7613, %v7605
  %v7806 = vpack.c.b16 %v7614, %v7606
  %v7807 = vpack.c.b16 %v7615, %v7607
  %v7808 = vpack.c.b16 %v7624, %v7616
  %v7809 = vpack.c.b16 %v7625, %v7617
  %v7810 = vpack.c.b16 %v7626, %v7618
  %v7811 = vpack.c.b16 %v7627, %v7619
  %v7812 = vpack.c.b16 %v7628, %v7620
  %v7813 = vpack.c.b16 %v7629, %v7621
  %v7814 = vpack.c.b16 %v7630, %v7622
  %v7815 = vpack.c.b16 %v7631, %v7623
  %v7816 = vpack.c.b16 %v7640, %v7632
  %v7817 = vpack.c.b16 %v7641, %v7633
  %v7818 = vpack.c.b16 %v7642, %v7634
  %v7819 = vpack.c.b16 %v7643, %v7635
  %v7820 = vpack.c.b16 %v7644, %v7636
  %v7821 = vpack.c.b16 %v7645, %v7637
  %v7822 = vpack.c.b16 %v7646, %v7638
  %v7823 = vpack.c.b16 %v7647, %v7639
  %v7824 = vpack.c.b16 %v7656, %v7648
  %v7825 = vpack.c.b16 %v7657, %v7649
  %v7826 = vpack.c.b16 %v7658, %v7650
  %v7827 = vpack.c.b16 %v7659, %v7651
  %v7828 = vpack.c.b16 %v7660, %v7652
  %v7829 = vpack.c.b16 %v7661, %v7653
  %v7830 = vpack.c.b16 %v7662, %v7654
  %v7831 = vpack.c.b16 %v7663, %v7655
  %v7832 = vpack.c.b16 %v7672, %v7664
  %v7833 = vpack.c.b16 %v7673, %v7665
  %v7834 = vpack.c.b16 %v7674, %v7666
  %v7835 = vpack.c.b16 %v7675, %v7667
  %v7836 = vpack.c.b16 %v7676, %v7668
  %v7837 = vpack.c.b16 %v7677, %v7669
  %v7838 = vpack.c.b16 %v7678, %v7670
  %v7839 = vpack.c.b16 %v7679, %v7671
  %v7840 = vpack.c.b16 %v7688, %v7680
  %v7841 = vpack.c.b16 %v7689, %v7681
  %v7842 = vpack.c.b16 %v7690, %v7682
  %v7843 = vpack.c.b16 %v7691, %v7683
  %v7844 = vpack.c.b16 %v7692, %v7684
  %v7845 = vpack.c.b16 %v7693, %v7685
  %v7846 = vpack.c.b16 %v7694, %v7686
  %v7847 = vpack.c.b16 %v7695, %v7687
  %v7848 = vpack.c.b16 %v7704, %v7696
  %v7849 = vpack.c.b16 %v7705, %v7697
  %v7850 = vpack.c.b16 %v7706, %v7698
  %v7851 = vpack.c.b16 %v7707, %v7699
  %v7852 = vpack.c.b16 %v7708, %v7700
  %v7853 = vpack.c.b16 %v7709, %v7701
  %v7854 = vpack.c.b16 %v7710, %v7702
  %v7855 = vpack.c.b16 %v7711, %v7703
  %v7856 = vpack.c.b16 %v7720, %v7712
  %v7857 = vpack.c.b16 %v7721, %v7713
  %v7858 = vpack.c.b16 %v7722, %v7714
  %v7859 = vpack.c.b16 %v7723, %v7715
  %v7860 = vpack.c.b16 %v7724, %v7716
  %v7861 = vpack.c.b16 %v7725, %v7717
  %v7862 = vpack.c.b16 %v7726, %v7718
  %v7863 = vpack.c.b16 %v7727, %v7719
  %v7864 = vpack.c.b16 %v7736, %v7728
  %v7865 = vpack.c.b16 %v7737, %v7729
  %v7866 = vpack.c.b16 %v7738, %v7730
  %v7867 = vpack.c.b16 %v7739, %v7731
  %v7868 = vpack.c.b16 %v7740, %v7732
  %v7869 = vpack.c.b16 %v7741, %v7733
  %v7870 = vpack.c.b16 %v7742, %v7734
  %v7871 = vpack.c.b16 %v7743, %v7735
  %8000 = vmatprep.subr.bf16.mxu0 %v7745
  %8001 = vmatpush1.bf16.msra.mxu0 %v7744
  %8002 = vmatprep.subr.bf16.mxu0 %v7753
  %8003 = vmatpush1.bf16.msra.mxu0 %v7752
  %8004 = vmatprep.subr.bf16.mxu0 %v7761
  %8005 = vmatpush1.bf16.msra.mxu0 %v7760
  %8006 = vmatprep.subr.bf16.mxu0 %v7769
  %8007 = vmatpush1.bf16.msra.mxu0 %v7768
  %8008 = vmatprep.subr.bf16.mxu0 %v7777
  %8009 = vmatpush1.bf16.msra.mxu0 %v7776
  %8010 = vmatprep.subr.bf16.mxu0 %v7785
  %8011 = vmatpush1.bf16.msra.mxu0 %v7784
  %8012 = vmatprep.subr.bf16.mxu0 %v7793
  %8013 = vmatpush1.bf16.msra.mxu0 %v7792
  %8014 = vmatprep.subr.bf16.mxu0 %v7801
  %8015 = vmatpush1.bf16.msra.mxu0 %v7800
  %8016 = vmatprep.subr.bf16.mxu0 %v7809
  %8017 = vmatpush1.bf16.msra.mxu0 %v7808
  %8018 = vmatprep.subr.bf16.mxu0 %v7817
  %8019 = vmatpush1.bf16.msra.mxu0 %v7816
  %8020 = vmatprep.subr.bf16.mxu0 %v7825
  %8021 = vmatpush1.bf16.msra.mxu0 %v7824
  %8022 = vmatprep.subr.bf16.mxu0 %v7833
  %8023 = vmatpush1.bf16.msra.mxu0 %v7832
  %8024 = vmatprep.subr.bf16.mxu0 %v7841
  %8025 = vmatpush1.bf16.msra.mxu0 %v7840
  %8026 = vmatprep.subr.bf16.mxu0 %v7849
  %8027 = vmatpush1.bf16.msra.mxu0 %v7848
  %8028 = vmatprep.subr.bf16.mxu0 %v7857
  %8029 = vmatpush1.bf16.msra.mxu0 %v7856
  %8030 = vmatprep.subr.bf16.mxu0 %v7865
  %8031 = vmatpush1.bf16.msra.mxu0 %v7864
  %8032 = vmatprep.mubr.bf16.mxu0 %v7231
  %8033 = vmatmul.mubr.bf16.gmra.mrb[0].mxu0 %v7230
  %v8034 = vpop.f32.mrb[0].mxu0
  %v8035 = vadd.f32 0.0, %v8034
  %v8036 = vpop.f32.mrb[0].mxu0
  %v8037 = vadd.f32 0.0, %v8036
  %v8038 = vpop.f32.mrb[0].mxu0
  %v8039 = vpop.f32.mrb[0].mxu0
  %8040 = vdwg.mxu0
  %8041 = vmatprep.subr.bf16.mxu0 %v7747
  %8042 = vmatpush1.bf16.msra.mxu0 %v7746
  %8043 = vmatprep.subr.bf16.mxu0 %v7755
  %8044 = vmatpush1.bf16.msra.mxu0 %v7754
  %8045 = vmatprep.subr.bf16.mxu0 %v7763
  %8046 = vmatpush1.bf16.msra.mxu0 %v7762
  %8047 = vmatprep.subr.bf16.mxu0 %v7771
  %8048 = vmatpush1.bf16.msra.mxu0 %v7770
  %8049 = vmatprep.subr.bf16.mxu0 %v7779
  %8050 = vmatpush1.bf16.msra.mxu0 %v7778
  %8051 = vmatprep.subr.bf16.mxu0 %v7787
  %8052 = vmatpush1.bf16.msra.mxu0 %v7786
  %8053 = vmatprep.subr.bf16.mxu0 %v7795
  %8054 = vmatpush1.bf16.msra.mxu0 %v7794
  %8055 = vmatprep.subr.bf16.mxu0 %v7803
  %8056 = vmatpush1.bf16.msra.mxu0 %v7802
  %8057 = vmatprep.subr.bf16.mxu0 %v7811
  %8058 = vmatpush1.bf16.msra.mxu0 %v7810
  %8059 = vmatprep.subr.bf16.mxu0 %v7819
  %8060 = vmatpush1.bf16.msra.mxu0 %v7818
  %8061 = vmatprep.subr.bf16.mxu0 %v7827
  %8062 = vmatpush1.bf16.msra.mxu0 %v7826
  %8063 = vmatprep.subr.bf16.mxu0 %v7835
  %8064 = vmatpush1.bf16.msra.mxu0 %v7834
  %8065 = vmatprep.subr.bf16.mxu0 %v7843
  %8066 = vmatpush1.bf16.msra.mxu0 %v7842
  %8067 = vmatprep.subr.bf16.mxu0 %v7851
  %8068 = vmatpush1.bf16.msra.mxu0 %v7850
  %8069 = vmatprep.subr.bf16.mxu0 %v7859
  %8070 = vmatpush1.bf16.msra.mxu0 %v7858
  %8071 = vmatprep.subr.bf16.mxu0 %v7867
  %8072 = vmatpush1.bf16.msra.mxu0 %v7866
  %8073 = vmatprep.mubr.bf16.mxu0 %v7231
  %8074 = vmatmul.mubr.bf16.gmra.mrb[0].mxu0 %v7230
  %v8075 = vpop.f32.mrb[0].mxu0
  %v8076 = vadd.f32 0.0, %v8075
  %v8077 = vpop.f32.mrb[0].mxu0
  %v8078 = vadd.f32 0.0, %v8077
  %v8079 = vpop.f32.mrb[0].mxu0
  %v8080 = vpop.f32.mrb[0].mxu0
  %8081 = vdwg.mxu0
  %8082 = vmatprep.subr.bf16.mxu0 %v7749
  %8083 = vmatpush1.bf16.msra.mxu0 %v7748
  %8084 = vmatprep.subr.bf16.mxu0 %v7757
  %8085 = vmatpush1.bf16.msra.mxu0 %v7756
  %8086 = vmatprep.subr.bf16.mxu0 %v7765
  %8087 = vmatpush1.bf16.msra.mxu0 %v7764
  %8088 = vmatprep.subr.bf16.mxu0 %v7773
  %8089 = vmatpush1.bf16.msra.mxu0 %v7772
  %8090 = vmatprep.subr.bf16.mxu0 %v7781
  %8091 = vmatpush1.bf16.msra.mxu0 %v7780
  %8092 = vmatprep.subr.bf16.mxu0 %v7789
  %8093 = vmatpush1.bf16.msra.mxu0 %v7788
  %8094 = vmatprep.subr.bf16.mxu0 %v7797
  %8095 = vmatpush1.bf16.msra.mxu0 %v7796
  %8096 = vmatprep.subr.bf16.mxu0 %v7805
  %8097 = vmatpush1.bf16.msra.mxu0 %v7804
  %8098 = vmatprep.subr.bf16.mxu0 %v7813
  %8099 = vmatpush1.bf16.msra.mxu0 %v7812
  %8100 = vmatprep.subr.bf16.mxu0 %v7821
  %8101 = vmatpush1.bf16.msra.mxu0 %v7820
  %8102 = vmatprep.subr.bf16.mxu0 %v7829
  %8103 = vmatpush1.bf16.msra.mxu0 %v7828
  %8104 = vmatprep.subr.bf16.mxu0 %v7837
  %8105 = vmatpush1.bf16.msra.mxu0 %v7836
  %8106 = vmatprep.subr.bf16.mxu0 %v7845
  %8107 = vmatpush1.bf16.msra.mxu0 %v7844
  %8108 = vmatprep.subr.bf16.mxu0 %v7853
  %8109 = vmatpush1.bf16.msra.mxu0 %v7852
  %8110 = vmatprep.subr.bf16.mxu0 %v7861
  %8111 = vmatpush1.bf16.msra.mxu0 %v7860
  %8112 = vmatprep.subr.bf16.mxu0 %v7869
  %8113 = vmatpush1.bf16.msra.mxu0 %v7868
  %8114 = vmatprep.mubr.bf16.mxu0 %v7231
  %8115 = vmatmul.mubr.bf16.gmra.mrb[0].mxu0 %v7230
  %v8116 = vpop.f32.mrb[0].mxu0
  %v8117 = vadd.f32 0.0, %v8116
  %v8118 = vpop.f32.mrb[0].mxu0
  %v8119 = vadd.f32 0.0, %v8118
  %v8120 = vpop.f32.mrb[0].mxu0
  %v8121 = vpop.f32.mrb[0].mxu0
  %8122 = vdwg.mxu0
  %8123 = vmatprep.subr.bf16.mxu0 %v7751
  %8124 = vmatpush1.bf16.msra.mxu0 %v7750
  %8125 = vmatprep.subr.bf16.mxu0 %v7759
  %8126 = vmatpush1.bf16.msra.mxu0 %v7758
  %8127 = vmatprep.subr.bf16.mxu0 %v7767
  %8128 = vmatpush1.bf16.msra.mxu0 %v7766
  %8129 = vmatprep.subr.bf16.mxu0 %v7775
  %8130 = vmatpush1.bf16.msra.mxu0 %v7774
  %8131 = vmatprep.subr.bf16.mxu0 %v7783
  %8132 = vmatpush1.bf16.msra.mxu0 %v7782
  %8133 = vmatprep.subr.bf16.mxu0 %v7791
  %8134 = vmatpush1.bf16.msra.mxu0 %v7790
  %8135 = vmatprep.subr.bf16.mxu0 %v7799
  %8136 = vmatpush1.bf16.msra.mxu0 %v7798
  %8137 = vmatprep.subr.bf16.mxu0 %v7807
  %8138 = vmatpush1.bf16.msra.mxu0 %v7806
  %8139 = vmatprep.subr.bf16.mxu0 %v7815
  %8140 = vmatpush1.bf16.msra.mxu0 %v7814
  %8141 = vmatprep.subr.bf16.mxu0 %v7823
  %8142 = vmatpush1.bf16.msra.mxu0 %v7822
  %8143 = vmatprep.subr.bf16.mxu0 %v7831
  %8144 = vmatpush1.bf16.msra.mxu0 %v7830
  %8145 = vmatprep.subr.bf16.mxu0 %v7839
  %8146 = vmatpush1.bf16.msra.mxu0 %v7838
  %8147 = vmatprep.subr.bf16.mxu0 %v7847
  %8148 = vmatpush1.bf16.msra.mxu0 %v7846
  %8149 = vmatprep.subr.bf16.mxu0 %v7855
  %8150 = vmatpush1.bf16.msra.mxu0 %v7854
  %8151 = vmatprep.subr.bf16.mxu0 %v7863
  %8152 = vmatpush1.bf16.msra.mxu0 %v7862
  %8153 = vmatprep.subr.bf16.mxu0 %v7871
  %8154 = vmatpush1.bf16.msra.mxu0 %v7870
  %8155 = vmatprep.mubr.bf16.mxu0 %v7231
  %8156 = vmatmul.mubr.bf16.gmra.mrb[0].mxu0 %v7230
  %v8157 = vpop.f32.mrb[0].mxu0
  %v8158 = vadd.f32 0.0, %v8157
  %v8159 = vpop.f32.mrb[0].mxu0
  %v8160 = vadd.f32 0.0, %v8159
  %v8161 = vpop.f32.mrb[0].mxu0
  %v8162 = vpop.f32.mrb[0].mxu0
  %8163 = vdwg.mxu0
  %v8164 = vadd.f32 %v7222, %v8035
  %v8165 = vadd.f32 %v7223, %v8037
  %v8166 = vadd.f32 %v7224, %v8076
  %v8167 = vadd.f32 %v7225, %v8078
  %v8168 = vadd.f32 %v7226, %v8117
  %v8169 = vadd.f32 %v7227, %v8119
  %v8170 = vadd.f32 %v7228, %v8158
  %v8171 = vadd.f32 %v7229, %v8160
  %v8172 = vxor.u32 %v8164, 2147483648
  %v8173 = vxor.u32 %v8165, 2147483648
  %v8174 = vmul.f32 %v8172, 1.442695
  %v8175 = vpow.pop %v8174
  %v8176 = vmul.f32 %v8173, 1.442695
  %v8177 = vpow.pop %v8176
  %v8178 = vadd.f32 %v8175, 1.0
  %v8179 = vadd.f32 %v8177, 1.0
  %v8180 = vrcp.pop %v8178
  %v8181 = vmul.f32 1.0, %v8180
  %v8182 = vrcp.pop %v8179
  %v8183 = vmul.f32 1.0, %v8182
  %v8184 = vxor.u32 %v8166, 2147483648
  %v8185 = vxor.u32 %v8167, 2147483648
  %v8186 = vmul.f32 %v8184, 1.442695
  %v8187 = vpow.pop %v8186
  %v8188 = vmul.f32 %v8185, 1.442695
  %v8189 = vpow.pop %v8188
  %v8190 = vadd.f32 %v8187, 1.0
  %v8191 = vadd.f32 %v8189, 1.0
  %v8192 = vrcp.pop %v8190
  %v8193 = vmul.f32 1.0, %v8192
  %v8194 = vrcp.pop %v8191
  %v8195 = vmul.f32 1.0, %v8194
  %v8196 = vtanh.pop %v8168
  %v8197 = vtanh.pop %v8169
  %v8198 = vxor.u32 %v8170, 2147483648
  %v8199 = vxor.u32 %v8171, 2147483648
  %v8200 = vmul.f32 %v8198, 1.442695
  %v8201 = vpow.pop %v8200
  %v8202 = vmul.f32 %v8199, 1.442695
  %v8203 = vpow.pop %v8202
  %v8204 = vadd.f32 %v8201, 1.0
  %v8205 = vadd.f32 %v8203, 1.0
  %v8206 = vrcp.pop %v8204
  %v8207 = vmul.f32 1.0, %v8206
  %v8208 = vrcp.pop %v8205
  %v8209 = vmul.f32 1.0, %v8208
  %v8210 = vmul.f32 %v8193, %v7198
  %v8211 = vmul.f32 %v8195, %v7199
  %v8212 = vmul.f32 %v8181, %v8196
  %v8213 = vmul.f32 %v8183, %v8197
  %v8214 = vadd.f32 %v8210, %v8212
  %v8215 = vadd.f32 %v8211, %v8213
  %v8216 = vtanh.pop %v8214
  %v8217 = vtanh.pop %v8215
  %v8218 = vmul.f32 %v8207, %v8216
  %v8219 = vmul.f32 %v8209, %v8217
  %8220 = vst [vmem:[#allocation3 + $0x60] sm:$0xff] %v8218
  %8221 = vst [vmem:[#allocation3 + $0x18] sm:$0xff] %v8219
  %v8222 = vld [vmem:[#allocation2 + $0x1c0] sm:$0xff]
  %v8223 = vld [vmem:[#allocation2 + $0x1c8] sm:$0xff]
  %v8224 = vld [vmem:[#allocation2 + $0x1d0] sm:$0xff]
  %v8225 = vld [vmem:[#allocation2 + $0x1d8] sm:$0xff]
  %v8226 = vld [vmem:[#allocation2 + $0x1e0] sm:$0xff]
  %v8227 = vld [vmem:[#allocation2 + $0x1e8] sm:$0xff]
  %v8228 = vld [vmem:[#allocation2 + $0x1f0] sm:$0xff]
  %v8229 = vld [vmem:[#allocation2 + $0x1f8] sm:$0xff]
  %v8230 = vld [vmem:[#allocation2] sm:$0xff]
  %v8231 = vld [vmem:[#allocation2 + $0x8] sm:$0xff]
  %v8232 = vld [vmem:[#allocation2 + $0x10] sm:$0xff]
  %v8233 = vld [vmem:[#allocation2 + $0x18] sm:$0xff]
  %v8234 = vld [vmem:[#allocation2 + $0x20] sm:$0xff]
  %v8235 = vld [vmem:[#allocation2 + $0x28] sm:$0xff]
  %v8236 = vld [vmem:[#allocation2 + $0x30] sm:$0xff]
  %v8237 = vld [vmem:[#allocation2 + $0x38] sm:$0xff]
  %v8238 = vsel %vm318, %v8222, %v8230
  %v8239 = vsel %vm319, %v8223, %v8231
  %v8240 = vsel %vm320, %v8224, %v8232
  %v8241 = vsel %vm321, %v8225, %v8233
  %v8242 = vsel %vm322, %v8226, %v8234
  %v8243 = vsel %vm323, %v8227, %v8235
  %v8244 = vsel %vm324, %v8228, %v8236
  %v8245 = vsel %vm325, %v8229, %v8237
  %v8246 = vpack.c.bf16 %v8218, %v8218
  %v8247 = vpack.c.bf16 %v8219, %v8219
  %v8248 = vld [vmem:[%s4] sm:$0xff]
  %v8249 = vld [vmem:[%s4 + $0x8] sm:$0xff]
  %v8250 = vld [vmem:[%s4 + $0x10] sm:$0xff]
  %v8251 = vld [vmem:[%s4 + $0x18] sm:$0xff]
  %v8252 = vld [vmem:[%s4 + $0x20] sm:$0xff]
  %v8253 = vld [vmem:[%s4 + $0x28] sm:$0xff]
  %v8254 = vld [vmem:[%s4 + $0x30] sm:$0xff]
  %v8255 = vld [vmem:[%s4 + $0x38] sm:$0xff]
  %v8256 = vld [vmem:[%s4 + $0x40] sm:$0xff]
  %v8257 = vld [vmem:[%s4 + $0x48] sm:$0xff]
  %v8258 = vld [vmem:[%s4 + $0x50] sm:$0xff]
  %v8259 = vld [vmem:[%s4 + $0x58] sm:$0xff]
  %v8260 = vld [vmem:[%s4 + $0x60] sm:$0xff]
  %v8261 = vld [vmem:[%s4 + $0x68] sm:$0xff]
  %v8262 = vld [vmem:[%s4 + $0x70] sm:$0xff]
  %v8263 = vld [vmem:[%s4 + $0x78] sm:$0xff]
  %v8264 = vld [vmem:[%s4 + $0x80] sm:$0xff]
  %v8265 = vld [vmem:[%s4 + $0x88] sm:$0xff]
  %v8266 = vld [vmem:[%s4 + $0x90] sm:$0xff]
  %v8267 = vld [vmem:[%s4 + $0x98] sm:$0xff]
  %v8268 = vld [vmem:[%s4 + $0xa0] sm:$0xff]
  %v8269 = vld [vmem:[%s4 + $0xa8] sm:$0xff]
  %v8270 = vld [vmem:[%s4 + $0xb0] sm:$0xff]
  %v8271 = vld [vmem:[%s4 + $0xb8] sm:$0xff]
  %v8272 = vld [vmem:[%s4 + $0xc0] sm:$0xff]
  %v8273 = vld [vmem:[%s4 + $0xc8] sm:$0xff]
  %v8274 = vld [vmem:[%s4 + $0xd0] sm:$0xff]
  %v8275 = vld [vmem:[%s4 + $0xd8] sm:$0xff]
  %v8276 = vld [vmem:[%s4 + $0xe0] sm:$0xff]
  %v8277 = vld [vmem:[%s4 + $0xe8] sm:$0xff]
  %v8278 = vld [vmem:[%s4 + $0xf0] sm:$0xff]
  %v8279 = vld [vmem:[%s4 + $0xf8] sm:$0xff]
  %v8280 = vld [vmem:[%s4 + $0x100] sm:$0xff]
  %v8281 = vld [vmem:[%s4 + $0x108] sm:$0xff]
  %v8282 = vld [vmem:[%s4 + $0x110] sm:$0xff]
  %v8283 = vld [vmem:[%s4 + $0x118] sm:$0xff]
  %v8284 = vld [vmem:[%s4 + $0x120] sm:$0xff]
  %v8285 = vld [vmem:[%s4 + $0x128] sm:$0xff]
  %v8286 = vld [vmem:[%s4 + $0x130] sm:$0xff]
  %v8287 = vld [vmem:[%s4 + $0x138] sm:$0xff]
  %v8288 = vld [vmem:[%s4 + $0x140] sm:$0xff]
  %v8289 = vld [vmem:[%s4 + $0x148] sm:$0xff]
  %v8290 = vld [vmem:[%s4 + $0x150] sm:$0xff]
  %v8291 = vld [vmem:[%s4 + $0x158] sm:$0xff]
  %v8292 = vld [vmem:[%s4 + $0x160] sm:$0xff]
  %v8293 = vld [vmem:[%s4 + $0x168] sm:$0xff]
  %v8294 = vld [vmem:[%s4 + $0x170] sm:$0xff]
  %v8295 = vld [vmem:[%s4 + $0x178] sm:$0xff]
  %v8296 = vld [vmem:[%s4 + $0x180] sm:$0xff]
  %v8297 = vld [vmem:[%s4 + $0x188] sm:$0xff]
  %v8298 = vld [vmem:[%s4 + $0x190] sm:$0xff]
  %v8299 = vld [vmem:[%s4 + $0x198] sm:$0xff]
  %v8300 = vld [vmem:[%s4 + $0x1a0] sm:$0xff]
  %v8301 = vld [vmem:[%s4 + $0x1a8] sm:$0xff]
  %v8302 = vld [vmem:[%s4 + $0x1b0] sm:$0xff]
  %v8303 = vld [vmem:[%s4 + $0x1b8] sm:$0xff]
  %v8304 = vld [vmem:[%s4 + $0x1c0] sm:$0xff]
  %v8305 = vld [vmem:[%s4 + $0x1c8] sm:$0xff]
  %v8306 = vld [vmem:[%s4 + $0x1d0] sm:$0xff]
  %v8307 = vld [vmem:[%s4 + $0x1d8] sm:$0xff]
  %v8308 = vld [vmem:[%s4 + $0x1e0] sm:$0xff]
  %v8309 = vld [vmem:[%s4 + $0x1e8] sm:$0xff]
  %v8310 = vld [vmem:[%s4 + $0x1f0] sm:$0xff]
  %v8311 = vld [vmem:[%s4 + $0x1f8] sm:$0xff]
  %v8312 = vld [vmem:[%s4 + $0x200] sm:$0xff]
  %v8313 = vld [vmem:[%s4 + $0x208] sm:$0xff]
  %v8314 = vld [vmem:[%s4 + $0x210] sm:$0xff]
  %v8315 = vld [vmem:[%s4 + $0x218] sm:$0xff]
  %v8316 = vld [vmem:[%s4 + $0x220] sm:$0xff]
  %v8317 = vld [vmem:[%s4 + $0x228] sm:$0xff]
  %v8318 = vld [vmem:[%s4 + $0x230] sm:$0xff]
  %v8319 = vld [vmem:[%s4 + $0x238] sm:$0xff]
  %v8320 = vld [vmem:[%s4 + $0x240] sm:$0xff]
  %v8321 = vld [vmem:[%s4 + $0x248] sm:$0xff]
  %v8322 = vld [vmem:[%s4 + $0x250] sm:$0xff]
  %v8323 = vld [vmem:[%s4 + $0x258] sm:$0xff]
  %v8324 = vld [vmem:[%s4 + $0x260] sm:$0xff]
  %v8325 = vld [vmem:[%s4 + $0x268] sm:$0xff]
  %v8326 = vld [vmem:[%s4 + $0x270] sm:$0xff]
  %v8327 = vld [vmem:[%s4 + $0x278] sm:$0xff]
  %v8328 = vld [vmem:[%s4 + $0x280] sm:$0xff]
  %v8329 = vld [vmem:[%s4 + $0x288] sm:$0xff]
  %v8330 = vld [vmem:[%s4 + $0x290] sm:$0xff]
  %v8331 = vld [vmem:[%s4 + $0x298] sm:$0xff]
  %v8332 = vld [vmem:[%s4 + $0x2a0] sm:$0xff]
  %v8333 = vld [vmem:[%s4 + $0x2a8] sm:$0xff]
  %v8334 = vld [vmem:[%s4 + $0x2b0] sm:$0xff]
  %v8335 = vld [vmem:[%s4 + $0x2b8] sm:$0xff]
  %v8336 = vld [vmem:[%s4 + $0x2c0] sm:$0xff]
  %v8337 = vld [vmem:[%s4 + $0x2c8] sm:$0xff]
  %v8338 = vld [vmem:[%s4 + $0x2d0] sm:$0xff]
  %v8339 = vld [vmem:[%s4 + $0x2d8] sm:$0xff]
  %v8340 = vld [vmem:[%s4 + $0x2e0] sm:$0xff]
  %v8341 = vld [vmem:[%s4 + $0x2e8] sm:$0xff]
  %v8342 = vld [vmem:[%s4 + $0x2f0] sm:$0xff]
  %v8343 = vld [vmem:[%s4 + $0x2f8] sm:$0xff]
  %v8344 = vld [vmem:[%s4 + $0x300] sm:$0xff]
  %v8345 = vld [vmem:[%s4 + $0x308] sm:$0xff]
  %v8346 = vld [vmem:[%s4 + $0x310] sm:$0xff]
  %v8347 = vld [vmem:[%s4 + $0x318] sm:$0xff]
  %v8348 = vld [vmem:[%s4 + $0x320] sm:$0xff]
  %v8349 = vld [vmem:[%s4 + $0x328] sm:$0xff]
  %v8350 = vld [vmem:[%s4 + $0x330] sm:$0xff]
  %v8351 = vld [vmem:[%s4 + $0x338] sm:$0xff]
  %v8352 = vld [vmem:[%s4 + $0x340] sm:$0xff]
  %v8353 = vld [vmem:[%s4 + $0x348] sm:$0xff]
  %v8354 = vld [vmem:[%s4 + $0x350] sm:$0xff]
  %v8355 = vld [vmem:[%s4 + $0x358] sm:$0xff]
  %v8356 = vld [vmem:[%s4 + $0x360] sm:$0xff]
  %v8357 = vld [vmem:[%s4 + $0x368] sm:$0xff]
  %v8358 = vld [vmem:[%s4 + $0x370] sm:$0xff]
  %v8359 = vld [vmem:[%s4 + $0x378] sm:$0xff]
  %v8360 = vld [vmem:[%s4 + $0x380] sm:$0xff]
  %v8361 = vld [vmem:[%s4 + $0x388] sm:$0xff]
  %v8362 = vld [vmem:[%s4 + $0x390] sm:$0xff]
  %v8363 = vld [vmem:[%s4 + $0x398] sm:$0xff]
  %v8364 = vld [vmem:[%s4 + $0x3a0] sm:$0xff]
  %v8365 = vld [vmem:[%s4 + $0x3a8] sm:$0xff]
  %v8366 = vld [vmem:[%s4 + $0x3b0] sm:$0xff]
  %v8367 = vld [vmem:[%s4 + $0x3b8] sm:$0xff]
  %v8368 = vld [vmem:[%s4 + $0x3c0] sm:$0xff]
  %v8369 = vld [vmem:[%s4 + $0x3c8] sm:$0xff]
  %v8370 = vld [vmem:[%s4 + $0x3d0] sm:$0xff]
  %v8371 = vld [vmem:[%s4 + $0x3d8] sm:$0xff]
  %v8372 = vld [vmem:[%s4 + $0x3e0] sm:$0xff]
  %v8373 = vld [vmem:[%s4 + $0x3e8] sm:$0xff]
  %v8374 = vld [vmem:[%s4 + $0x3f0] sm:$0xff]
  %v8375 = vld [vmem:[%s4 + $0x3f8] sm:$0xff]
  %v8504 = vunpack.c.l.b16 %v8248
  %v8505 = vunpack.c.h.b16 %v8248
  %v8506 = vunpack.c.l.b16 %v8249
  %v8507 = vunpack.c.h.b16 %v8249
  %v8508 = vunpack.c.l.b16 %v8250
  %v8509 = vunpack.c.h.b16 %v8250
  %v8510 = vunpack.c.l.b16 %v8251
  %v8511 = vunpack.c.h.b16 %v8251
  %v8512 = vunpack.c.l.b16 %v8252
  %v8513 = vunpack.c.h.b16 %v8252
  %v8514 = vunpack.c.l.b16 %v8253
  %v8515 = vunpack.c.h.b16 %v8253
  %v8516 = vunpack.c.l.b16 %v8254
  %v8517 = vunpack.c.h.b16 %v8254
  %v8518 = vunpack.c.l.b16 %v8255
  %v8519 = vunpack.c.h.b16 %v8255
  %v8520 = vunpack.c.l.b16 %v8256
  %v8521 = vunpack.c.h.b16 %v8256
  %v8522 = vunpack.c.l.b16 %v8257
  %v8523 = vunpack.c.h.b16 %v8257
  %v8524 = vunpack.c.l.b16 %v8258
  %v8525 = vunpack.c.h.b16 %v8258
  %v8526 = vunpack.c.l.b16 %v8259
  %v8527 = vunpack.c.h.b16 %v8259
  %v8528 = vunpack.c.l.b16 %v8260
  %v8529 = vunpack.c.h.b16 %v8260
  %v8530 = vunpack.c.l.b16 %v8261
  %v8531 = vunpack.c.h.b16 %v8261
  %v8532 = vunpack.c.l.b16 %v8262
  %v8533 = vunpack.c.h.b16 %v8262
  %v8534 = vunpack.c.l.b16 %v8263
  %v8535 = vunpack.c.h.b16 %v8263
  %v8536 = vunpack.c.l.b16 %v8264
  %v8537 = vunpack.c.h.b16 %v8264
  %v8538 = vunpack.c.l.b16 %v8265
  %v8539 = vunpack.c.h.b16 %v8265
  %v8540 = vunpack.c.l.b16 %v8266
  %v8541 = vunpack.c.h.b16 %v8266
  %v8542 = vunpack.c.l.b16 %v8267
  %v8543 = vunpack.c.h.b16 %v8267
  %v8544 = vunpack.c.l.b16 %v8268
  %v8545 = vunpack.c.h.b16 %v8268
  %v8546 = vunpack.c.l.b16 %v8269
  %v8547 = vunpack.c.h.b16 %v8269
  %v8548 = vunpack.c.l.b16 %v8270
  %v8549 = vunpack.c.h.b16 %v8270
  %v8550 = vunpack.c.l.b16 %v8271
  %v8551 = vunpack.c.h.b16 %v8271
  %v8552 = vunpack.c.l.b16 %v8272
  %v8553 = vunpack.c.h.b16 %v8272
  %v8554 = vunpack.c.l.b16 %v8273
  %v8555 = vunpack.c.h.b16 %v8273
  %v8556 = vunpack.c.l.b16 %v8274
  %v8557 = vunpack.c.h.b16 %v8274
  %v8558 = vunpack.c.l.b16 %v8275
  %v8559 = vunpack.c.h.b16 %v8275
  %v8560 = vunpack.c.l.b16 %v8276
  %v8561 = vunpack.c.h.b16 %v8276
  %v8562 = vunpack.c.l.b16 %v8277
  %v8563 = vunpack.c.h.b16 %v8277
  %v8564 = vunpack.c.l.b16 %v8278
  %v8565 = vunpack.c.h.b16 %v8278
  %v8566 = vunpack.c.l.b16 %v8279
  %v8567 = vunpack.c.h.b16 %v8279
  %v8568 = vunpack.c.l.b16 %v8280
  %v8569 = vunpack.c.h.b16 %v8280
  %v8570 = vunpack.c.l.b16 %v8281
  %v8571 = vunpack.c.h.b16 %v8281
  %v8572 = vunpack.c.l.b16 %v8282
  %v8573 = vunpack.c.h.b16 %v8282
  %v8574 = vunpack.c.l.b16 %v8283
  %v8575 = vunpack.c.h.b16 %v8283
  %v8576 = vunpack.c.l.b16 %v8284
  %v8577 = vunpack.c.h.b16 %v8284
  %v8578 = vunpack.c.l.b16 %v8285
  %v8579 = vunpack.c.h.b16 %v8285
  %v8580 = vunpack.c.l.b16 %v8286
  %v8581 = vunpack.c.h.b16 %v8286
  %v8582 = vunpack.c.l.b16 %v8287
  %v8583 = vunpack.c.h.b16 %v8287
  %v8584 = vunpack.c.l.b16 %v8288
  %v8585 = vunpack.c.h.b16 %v8288
  %v8586 = vunpack.c.l.b16 %v8289
  %v8587 = vunpack.c.h.b16 %v8289
  %v8588 = vunpack.c.l.b16 %v8290
  %v8589 = vunpack.c.h.b16 %v8290
  %v8590 = vunpack.c.l.b16 %v8291
  %v8591 = vunpack.c.h.b16 %v8291
  %v8592 = vunpack.c.l.b16 %v8292
  %v8593 = vunpack.c.h.b16 %v8292
  %v8594 = vunpack.c.l.b16 %v8293
  %v8595 = vunpack.c.h.b16 %v8293
  %v8596 = vunpack.c.l.b16 %v8294
  %v8597 = vunpack.c.h.b16 %v8294
  %v8598 = vunpack.c.l.b16 %v8295
  %v8599 = vunpack.c.h.b16 %v8295
  %v8600 = vunpack.c.l.b16 %v8296
  %v8601 = vunpack.c.h.b16 %v8296
  %v8602 = vunpack.c.l.b16 %v8297
  %v8603 = vunpack.c.h.b16 %v8297
  %v8604 = vunpack.c.l.b16 %v8298
  %v8605 = vunpack.c.h.b16 %v8298
  %v8606 = vunpack.c.l.b16 %v8299
  %v8607 = vunpack.c.h.b16 %v8299
  %v8608 = vunpack.c.l.b16 %v8300
  %v8609 = vunpack.c.h.b16 %v8300
  %v8610 = vunpack.c.l.b16 %v8301
  %v8611 = vunpack.c.h.b16 %v8301
  %v8612 = vunpack.c.l.b16 %v8302
  %v8613 = vunpack.c.h.b16 %v8302
  %v8614 = vunpack.c.l.b16 %v8303
  %v8615 = vunpack.c.h.b16 %v8303
  %v8616 = vunpack.c.l.b16 %v8304
  %v8617 = vunpack.c.h.b16 %v8304
  %v8618 = vunpack.c.l.b16 %v8305
  %v8619 = vunpack.c.h.b16 %v8305
  %v8620 = vunpack.c.l.b16 %v8306
  %v8621 = vunpack.c.h.b16 %v8306
  %v8622 = vunpack.c.l.b16 %v8307
  %v8623 = vunpack.c.h.b16 %v8307
  %v8624 = vunpack.c.l.b16 %v8308
  %v8625 = vunpack.c.h.b16 %v8308
  %v8626 = vunpack.c.l.b16 %v8309
  %v8627 = vunpack.c.h.b16 %v8309
  %v8628 = vunpack.c.l.b16 %v8310
  %v8629 = vunpack.c.h.b16 %v8310
  %v8630 = vunpack.c.l.b16 %v8311
  %v8631 = vunpack.c.h.b16 %v8311
  %v8632 = vunpack.c.l.b16 %v8312
  %v8633 = vunpack.c.h.b16 %v8312
  %v8634 = vunpack.c.l.b16 %v8313
  %v8635 = vunpack.c.h.b16 %v8313
  %v8636 = vunpack.c.l.b16 %v8314
  %v8637 = vunpack.c.h.b16 %v8314
  %v8638 = vunpack.c.l.b16 %v8315
  %v8639 = vunpack.c.h.b16 %v8315
  %v8640 = vunpack.c.l.b16 %v8316
  %v8641 = vunpack.c.h.b16 %v8316
  %v8642 = vunpack.c.l.b16 %v8317
  %v8643 = vunpack.c.h.b16 %v8317
  %v8644 = vunpack.c.l.b16 %v8318
  %v8645 = vunpack.c.h.b16 %v8318
  %v8646 = vunpack.c.l.b16 %v8319
  %v8647 = vunpack.c.h.b16 %v8319
  %v8648 = vunpack.c.l.b16 %v8320
  %v8649 = vunpack.c.h.b16 %v8320
  %v8650 = vunpack.c.l.b16 %v8321
  %v8651 = vunpack.c.h.b16 %v8321
  %v8652 = vunpack.c.l.b16 %v8322
  %v8653 = vunpack.c.h.b16 %v8322
  %v8654 = vunpack.c.l.b16 %v8323
  %v8655 = vunpack.c.h.b16 %v8323
  %v8656 = vunpack.c.l.b16 %v8324
  %v8657 = vunpack.c.h.b16 %v8324
  %v8658 = vunpack.c.l.b16 %v8325
  %v8659 = vunpack.c.h.b16 %v8325
  %v8660 = vunpack.c.l.b16 %v8326
  %v8661 = vunpack.c.h.b16 %v8326
  %v8662 = vunpack.c.l.b16 %v8327
  %v8663 = vunpack.c.h.b16 %v8327
  %v8664 = vunpack.c.l.b16 %v8328
  %v8665 = vunpack.c.h.b16 %v8328
  %v8666 = vunpack.c.l.b16 %v8329
  %v8667 = vunpack.c.h.b16 %v8329
  %v8668 = vunpack.c.l.b16 %v8330
  %v8669 = vunpack.c.h.b16 %v8330
  %v8670 = vunpack.c.l.b16 %v8331
  %v8671 = vunpack.c.h.b16 %v8331
  %v8672 = vunpack.c.l.b16 %v8332
  %v8673 = vunpack.c.h.b16 %v8332
  %v8674 = vunpack.c.l.b16 %v8333
  %v8675 = vunpack.c.h.b16 %v8333
  %v8676 = vunpack.c.l.b16 %v8334
  %v8677 = vunpack.c.h.b16 %v8334
  %v8678 = vunpack.c.l.b16 %v8335
  %v8679 = vunpack.c.h.b16 %v8335
  %v8680 = vunpack.c.l.b16 %v8336
  %v8681 = vunpack.c.h.b16 %v8336
  %v8682 = vunpack.c.l.b16 %v8337
  %v8683 = vunpack.c.h.b16 %v8337
  %v8684 = vunpack.c.l.b16 %v8338
  %v8685 = vunpack.c.h.b16 %v8338
  %v8686 = vunpack.c.l.b16 %v8339
  %v8687 = vunpack.c.h.b16 %v8339
  %v8688 = vunpack.c.l.b16 %v8340
  %v8689 = vunpack.c.h.b16 %v8340
  %v8690 = vunpack.c.l.b16 %v8341
  %v8691 = vunpack.c.h.b16 %v8341
  %v8692 = vunpack.c.l.b16 %v8342
  %v8693 = vunpack.c.h.b16 %v8342
  %v8694 = vunpack.c.l.b16 %v8343
  %v8695 = vunpack.c.h.b16 %v8343
  %v8696 = vunpack.c.l.b16 %v8344
  %v8697 = vunpack.c.h.b16 %v8344
  %v8698 = vunpack.c.l.b16 %v8345
  %v8699 = vunpack.c.h.b16 %v8345
  %v8700 = vunpack.c.l.b16 %v8346
  %v8701 = vunpack.c.h.b16 %v8346
  %v8702 = vunpack.c.l.b16 %v8347
  %v8703 = vunpack.c.h.b16 %v8347
  %v8704 = vunpack.c.l.b16 %v8348
  %v8705 = vunpack.c.h.b16 %v8348
  %v8706 = vunpack.c.l.b16 %v8349
  %v8707 = vunpack.c.h.b16 %v8349
  %v8708 = vunpack.c.l.b16 %v8350
  %v8709 = vunpack.c.h.b16 %v8350
  %v8710 = vunpack.c.l.b16 %v8351
  %v8711 = vunpack.c.h.b16 %v8351
  %v8712 = vunpack.c.l.b16 %v8352
  %v8713 = vunpack.c.h.b16 %v8352
  %v8714 = vunpack.c.l.b16 %v8353
  %v8715 = vunpack.c.h.b16 %v8353
  %v8716 = vunpack.c.l.b16 %v8354
  %v8717 = vunpack.c.h.b16 %v8354
  %v8718 = vunpack.c.l.b16 %v8355
  %v8719 = vunpack.c.h.b16 %v8355
  %v8720 = vunpack.c.l.b16 %v8356
  %v8721 = vunpack.c.h.b16 %v8356
  %v8722 = vunpack.c.l.b16 %v8357
  %v8723 = vunpack.c.h.b16 %v8357
  %v8724 = vunpack.c.l.b16 %v8358
  %v8725 = vunpack.c.h.b16 %v8358
  %v8726 = vunpack.c.l.b16 %v8359
  %v8727 = vunpack.c.h.b16 %v8359
  %v8728 = vunpack.c.l.b16 %v8360
  %v8729 = vunpack.c.h.b16 %v8360
  %v8730 = vunpack.c.l.b16 %v8361
  %v8731 = vunpack.c.h.b16 %v8361
  %v8732 = vunpack.c.l.b16 %v8362
  %v8733 = vunpack.c.h.b16 %v8362
  %v8734 = vunpack.c.l.b16 %v8363
  %v8735 = vunpack.c.h.b16 %v8363
  %v8736 = vunpack.c.l.b16 %v8364
  %v8737 = vunpack.c.h.b16 %v8364
  %v8738 = vunpack.c.l.b16 %v8365
  %v8739 = vunpack.c.h.b16 %v8365
  %v8740 = vunpack.c.l.b16 %v8366
  %v8741 = vunpack.c.h.b16 %v8366
  %v8742 = vunpack.c.l.b16 %v8367
  %v8743 = vunpack.c.h.b16 %v8367
  %v8744 = vunpack.c.l.b16 %v8368
  %v8745 = vunpack.c.h.b16 %v8368
  %v8746 = vunpack.c.l.b16 %v8369
  %v8747 = vunpack.c.h.b16 %v8369
  %v8748 = vunpack.c.l.b16 %v8370
  %v8749 = vunpack.c.h.b16 %v8370
  %v8750 = vunpack.c.l.b16 %v8371
  %v8751 = vunpack.c.h.b16 %v8371
  %v8752 = vunpack.c.l.b16 %v8372
  %v8753 = vunpack.c.h.b16 %v8372
  %v8754 = vunpack.c.l.b16 %v8373
  %v8755 = vunpack.c.h.b16 %v8373
  %v8756 = vunpack.c.l.b16 %v8374
  %v8757 = vunpack.c.h.b16 %v8374
  %v8758 = vunpack.c.l.b16 %v8375
  %v8759 = vunpack.c.h.b16 %v8375
  %v8760 = vpack.c.b16 %v8512, %v8504
  %v8761 = vpack.c.b16 %v8513, %v8505
  %v8762 = vpack.c.b16 %v8514, %v8506
  %v8763 = vpack.c.b16 %v8515, %v8507
  %v8764 = vpack.c.b16 %v8516, %v8508
  %v8765 = vpack.c.b16 %v8517, %v8509
  %v8766 = vpack.c.b16 %v8518, %v8510
  %v8767 = vpack.c.b16 %v8519, %v8511
  %v8768 = vpack.c.b16 %v8528, %v8520
  %v8769 = vpack.c.b16 %v8529, %v8521
  %v8770 = vpack.c.b16 %v8530, %v8522
  %v8771 = vpack.c.b16 %v8531, %v8523
  %v8772 = vpack.c.b16 %v8532, %v8524
  %v8773 = vpack.c.b16 %v8533, %v8525
  %v8774 = vpack.c.b16 %v8534, %v8526
  %v8775 = vpack.c.b16 %v8535, %v8527
  %v8776 = vpack.c.b16 %v8544, %v8536
  %v8777 = vpack.c.b16 %v8545, %v8537
  %v8778 = vpack.c.b16 %v8546, %v8538
  %v8779 = vpack.c.b16 %v8547, %v8539
  %v8780 = vpack.c.b16 %v8548, %v8540
  %v8781 = vpack.c.b16 %v8549, %v8541
  %v8782 = vpack.c.b16 %v8550, %v8542
  %v8783 = vpack.c.b16 %v8551, %v8543
  %v8784 = vpack.c.b16 %v8560, %v8552
  %v8785 = vpack.c.b16 %v8561, %v8553
  %v8786 = vpack.c.b16 %v8562, %v8554
  %v8787 = vpack.c.b16 %v8563, %v8555
  %v8788 = vpack.c.b16 %v8564, %v8556
  %v8789 = vpack.c.b16 %v8565, %v8557
  %v8790 = vpack.c.b16 %v8566, %v8558
  %v8791 = vpack.c.b16 %v8567, %v8559
  %v8792 = vpack.c.b16 %v8576, %v8568
  %v8793 = vpack.c.b16 %v8577, %v8569
  %v8794 = vpack.c.b16 %v8578, %v8570
  %v8795 = vpack.c.b16 %v8579, %v8571
  %v8796 = vpack.c.b16 %v8580, %v8572
  %v8797 = vpack.c.b16 %v8581, %v8573
  %v8798 = vpack.c.b16 %v8582, %v8574
  %v8799 = vpack.c.b16 %v8583, %v8575
  %v8800 = vpack.c.b16 %v8592, %v8584
  %v8801 = vpack.c.b16 %v8593, %v8585
  %v8802 = vpack.c.b16 %v8594, %v8586
  %v8803 = vpack.c.b16 %v8595, %v8587
  %v8804 = vpack.c.b16 %v8596, %v8588
  %v8805 = vpack.c.b16 %v8597, %v8589
  %v8806 = vpack.c.b16 %v8598, %v8590
  %v8807 = vpack.c.b16 %v8599, %v8591
  %v8808 = vpack.c.b16 %v8608, %v8600
  %v8809 = vpack.c.b16 %v8609, %v8601
  %v8810 = vpack.c.b16 %v8610, %v8602
  %v8811 = vpack.c.b16 %v8611, %v8603
  %v8812 = vpack.c.b16 %v8612, %v8604
  %v8813 = vpack.c.b16 %v8613, %v8605
  %v8814 = vpack.c.b16 %v8614, %v8606
  %v8815 = vpack.c.b16 %v8615, %v8607
  %v8816 = vpack.c.b16 %v8624, %v8616
  %v8817 = vpack.c.b16 %v8625, %v8617
  %v8818 = vpack.c.b16 %v8626, %v8618
  %v8819 = vpack.c.b16 %v8627, %v8619
  %v8820 = vpack.c.b16 %v8628, %v8620
  %v8821 = vpack.c.b16 %v8629, %v8621
  %v8822 = vpack.c.b16 %v8630, %v8622
  %v8823 = vpack.c.b16 %v8631, %v8623
  %v8824 = vpack.c.b16 %v8640, %v8632
  %v8825 = vpack.c.b16 %v8641, %v8633
  %v8826 = vpack.c.b16 %v8642, %v8634
  %v8827 = vpack.c.b16 %v8643, %v8635
  %v8828 = vpack.c.b16 %v8644, %v8636
  %v8829 = vpack.c.b16 %v8645, %v8637
  %v8830 = vpack.c.b16 %v8646, %v8638
  %v8831 = vpack.c.b16 %v8647, %v8639
  %v8832 = vpack.c.b16 %v8656, %v8648
  %v8833 = vpack.c.b16 %v8657, %v8649
  %v8834 = vpack.c.b16 %v8658, %v8650
  %v8835 = vpack.c.b16 %v8659, %v8651
  %v8836 = vpack.c.b16 %v8660, %v8652
  %v8837 = vpack.c.b16 %v8661, %v8653
  %v8838 = vpack.c.b16 %v8662, %v8654
  %v8839 = vpack.c.b16 %v8663, %v8655
  %v8840 = vpack.c.b16 %v8672, %v8664
  %v8841 = vpack.c.b16 %v8673, %v8665
  %v8842 = vpack.c.b16 %v8674, %v8666
  %v8843 = vpack.c.b16 %v8675, %v8667
  %v8844 = vpack.c.b16 %v8676, %v8668
  %v8845 = vpack.c.b16 %v8677, %v8669
  %v8846 = vpack.c.b16 %v8678, %v8670
  %v8847 = vpack.c.b16 %v8679, %v8671
  %v8848 = vpack.c.b16 %v8688, %v8680
  %v8849 = vpack.c.b16 %v8689, %v8681
  %v8850 = vpack.c.b16 %v8690, %v8682
  %v8851 = vpack.c.b16 %v8691, %v8683
  %v8852 = vpack.c.b16 %v8692, %v8684
  %v8853 = vpack.c.b16 %v8693, %v8685
  %v8854 = vpack.c.b16 %v8694, %v8686
  %v8855 = vpack.c.b16 %v8695, %v8687
  %v8856 = vpack.c.b16 %v8704, %v8696
  %v8857 = vpack.c.b16 %v8705, %v8697
  %v8858 = vpack.c.b16 %v8706, %v8698
  %v8859 = vpack.c.b16 %v8707, %v8699
  %v8860 = vpack.c.b16 %v8708, %v8700
  %v8861 = vpack.c.b16 %v8709, %v8701
  %v8862 = vpack.c.b16 %v8710, %v8702
  %v8863 = vpack.c.b16 %v8711, %v8703
  %v8864 = vpack.c.b16 %v8720, %v8712
  %v8865 = vpack.c.b16 %v8721, %v8713
  %v8866 = vpack.c.b16 %v8722, %v8714
  %v8867 = vpack.c.b16 %v8723, %v8715
  %v8868 = vpack.c.b16 %v8724, %v8716
  %v8869 = vpack.c.b16 %v8725, %v8717
  %v8870 = vpack.c.b16 %v8726, %v8718
  %v8871 = vpack.c.b16 %v8727, %v8719
  %v8872 = vpack.c.b16 %v8736, %v8728
  %v8873 = vpack.c.b16 %v8737, %v8729
  %v8874 = vpack.c.b16 %v8738, %v8730
  %v8875 = vpack.c.b16 %v8739, %v8731
  %v8876 = vpack.c.b16 %v8740, %v8732
  %v8877 = vpack.c.b16 %v8741, %v8733
  %v8878 = vpack.c.b16 %v8742, %v8734
  %v8879 = vpack.c.b16 %v8743, %v8735
  %v8880 = vpack.c.b16 %v8752, %v8744
  %v8881 = vpack.c.b16 %v8753, %v8745
  %v8882 = vpack.c.b16 %v8754, %v8746
  %v8883 = vpack.c.b16 %v8755, %v8747
  %v8884 = vpack.c.b16 %v8756, %v8748
  %v8885 = vpack.c.b16 %v8757, %v8749
  %v8886 = vpack.c.b16 %v8758, %v8750
  %v8887 = vpack.c.b16 %v8759, %v8751
  %9016 = vmatprep.subr.bf16.mxu0 %v8761
  %9017 = vmatpush1.bf16.msra.mxu0 %v8760
  %9018 = vmatprep.subr.bf16.mxu0 %v8769
  %9019 = vmatpush1.bf16.msra.mxu0 %v8768
  %9020 = vmatprep.subr.bf16.mxu0 %v8777
  %9021 = vmatpush1.bf16.msra.mxu0 %v8776
  %9022 = vmatprep.subr.bf16.mxu0 %v8785
  %9023 = vmatpush1.bf16.msra.mxu0 %v8784
  %9024 = vmatprep.subr.bf16.mxu0 %v8793
  %9025 = vmatpush1.bf16.msra.mxu0 %v8792
  %9026 = vmatprep.subr.bf16.mxu0 %v8801
  %9027 = vmatpush1.bf16.msra.mxu0 %v8800
  %9028 = vmatprep.subr.bf16.mxu0 %v8809
  %9029 = vmatpush1.bf16.msra.mxu0 %v8808
  %9030 = vmatprep.subr.bf16.mxu0 %v8817
  %9031 = vmatpush1.bf16.msra.mxu0 %v8816
  %9032 = vmatprep.subr.bf16.mxu0 %v8825
  %9033 = vmatpush1.bf16.msra.mxu0 %v8824
  %9034 = vmatprep.subr.bf16.mxu0 %v8833
  %9035 = vmatpush1.bf16.msra.mxu0 %v8832
  %9036 = vmatprep.subr.bf16.mxu0 %v8841
  %9037 = vmatpush1.bf16.msra.mxu0 %v8840
  %9038 = vmatprep.subr.bf16.mxu0 %v8849
  %9039 = vmatpush1.bf16.msra.mxu0 %v8848
  %9040 = vmatprep.subr.bf16.mxu0 %v8857
  %9041 = vmatpush1.bf16.msra.mxu0 %v8856
  %9042 = vmatprep.subr.bf16.mxu0 %v8865
  %9043 = vmatpush1.bf16.msra.mxu0 %v8864
  %9044 = vmatprep.subr.bf16.mxu0 %v8873
  %9045 = vmatpush1.bf16.msra.mxu0 %v8872
  %9046 = vmatprep.subr.bf16.mxu0 %v8881
  %9047 = vmatpush1.bf16.msra.mxu0 %v8880
  %9048 = vmatprep.mubr.bf16.mxu0 %v8247
  %9049 = vmatmul.mubr.bf16.gmra.mrb[0].mxu0 %v8246
  %v9050 = vpop.f32.mrb[0].mxu0
  %v9051 = vadd.f32 0.0, %v9050
  %v9052 = vpop.f32.mrb[0].mxu0
  %v9053 = vadd.f32 0.0, %v9052
  %v9054 = vpop.f32.mrb[0].mxu0
  %v9055 = vpop.f32.mrb[0].mxu0
  %9056 = vdwg.mxu0
  %9057 = vmatprep.subr.bf16.mxu0 %v8763
  %9058 = vmatpush1.bf16.msra.mxu0 %v8762
  %9059 = vmatprep.subr.bf16.mxu0 %v8771
  %9060 = vmatpush1.bf16.msra.mxu0 %v8770
  %9061 = vmatprep.subr.bf16.mxu0 %v8779
  %9062 = vmatpush1.bf16.msra.mxu0 %v8778
  %9063 = vmatprep.subr.bf16.mxu0 %v8787
  %9064 = vmatpush1.bf16.msra.mxu0 %v8786
  %9065 = vmatprep.subr.bf16.mxu0 %v8795
  %9066 = vmatpush1.bf16.msra.mxu0 %v8794
  %9067 = vmatprep.subr.bf16.mxu0 %v8803
  %9068 = vmatpush1.bf16.msra.mxu0 %v8802
  %9069 = vmatprep.subr.bf16.mxu0 %v8811
  %9070 = vmatpush1.bf16.msra.mxu0 %v8810
  %9071 = vmatprep.subr.bf16.mxu0 %v8819
  %9072 = vmatpush1.bf16.msra.mxu0 %v8818
  %9073 = vmatprep.subr.bf16.mxu0 %v8827
  %9074 = vmatpush1.bf16.msra.mxu0 %v8826
  %9075 = vmatprep.subr.bf16.mxu0 %v8835
  %9076 = vmatpush1.bf16.msra.mxu0 %v8834
  %9077 = vmatprep.subr.bf16.mxu0 %v8843
  %9078 = vmatpush1.bf16.msra.mxu0 %v8842
  %9079 = vmatprep.subr.bf16.mxu0 %v8851
  %9080 = vmatpush1.bf16.msra.mxu0 %v8850
  %9081 = vmatprep.subr.bf16.mxu0 %v8859
  %9082 = vmatpush1.bf16.msra.mxu0 %v8858
  %9083 = vmatprep.subr.bf16.mxu0 %v8867
  %9084 = vmatpush1.bf16.msra.mxu0 %v8866
  %9085 = vmatprep.subr.bf16.mxu0 %v8875
  %9086 = vmatpush1.bf16.msra.mxu0 %v8874
  %9087 = vmatprep.subr.bf16.mxu0 %v8883
  %9088 = vmatpush1.bf16.msra.mxu0 %v8882
  %9089 = vmatprep.mubr.bf16.mxu0 %v8247
  %9090 = vmatmul.mubr.bf16.gmra.mrb[0].mxu0 %v8246
  %v9091 = vpop.f32.mrb[0].mxu0
  %v9092 = vadd.f32 0.0, %v9091
  %v9093 = vpop.f32.mrb[0].mxu0
  %v9094 = vadd.f32 0.0, %v9093
  %v9095 = vpop.f32.mrb[0].mxu0
  %v9096 = vpop.f32.mrb[0].mxu0
  %9097 = vdwg.mxu0
  %9098 = vmatprep.subr.bf16.mxu0 %v8765
  %9099 = vmatpush1.bf16.msra.mxu0 %v8764
  %9100 = vmatprep.subr.bf16.mxu0 %v8773
  %9101 = vmatpush1.bf16.msra.mxu0 %v8772
  %9102 = vmatprep.subr.bf16.mxu0 %v8781
  %9103 = vmatpush1.bf16.msra.mxu0 %v8780
  %9104 = vmatprep.subr.bf16.mxu0 %v8789
  %9105 = vmatpush1.bf16.msra.mxu0 %v8788
  %9106 = vmatprep.subr.bf16.mxu0 %v8797
  %9107 = vmatpush1.bf16.msra.mxu0 %v8796
  %9108 = vmatprep.subr.bf16.mxu0 %v8805
  %9109 = vmatpush1.bf16.msra.mxu0 %v8804
  %9110 = vmatprep.subr.bf16.mxu0 %v8813
  %9111 = vmatpush1.bf16.msra.mxu0 %v8812
  %9112 = vmatprep.subr.bf16.mxu0 %v8821
  %9113 = vmatpush1.bf16.msra.mxu0 %v8820
  %9114 = vmatprep.subr.bf16.mxu0 %v8829
  %9115 = vmatpush1.bf16.msra.mxu0 %v8828
  %9116 = vmatprep.subr.bf16.mxu0 %v8837
  %9117 = vmatpush1.bf16.msra.mxu0 %v8836
  %9118 = vmatprep.subr.bf16.mxu0 %v8845
  %9119 = vmatpush1.bf16.msra.mxu0 %v8844
  %9120 = vmatprep.subr.bf16.mxu0 %v8853
  %9121 = vmatpush1.bf16.msra.mxu0 %v8852
  %9122 = vmatprep.subr.bf16.mxu0 %v8861
  %9123 = vmatpush1.bf16.msra.mxu0 %v8860
  %9124 = vmatprep.subr.bf16.mxu0 %v8869
  %9125 = vmatpush1.bf16.msra.mxu0 %v8868
  %9126 = vmatprep.subr.bf16.mxu0 %v8877
  %9127 = vmatpush1.bf16.msra.mxu0 %v8876
  %9128 = vmatprep.subr.bf16.mxu0 %v8885
  %9129 = vmatpush1.bf16.msra.mxu0 %v8884
  %9130 = vmatprep.mubr.bf16.mxu0 %v8247
  %9131 = vmatmul.mubr.bf16.gmra.mrb[0].mxu0 %v8246
  %v9132 = vpop.f32.mrb[0].mxu0
  %v9133 = vadd.f32 0.0, %v9132
  %v9134 = vpop.f32.mrb[0].mxu0
  %v9135 = vadd.f32 0.0, %v9134
  %v9136 = vpop.f32.mrb[0].mxu0
  %v9137 = vpop.f32.mrb[0].mxu0
  %9138 = vdwg.mxu0
  %9139 = vmatprep.subr.bf16.mxu0 %v8767
  %9140 = vmatpush1.bf16.msra.mxu0 %v8766
  %9141 = vmatprep.subr.bf16.mxu0 %v8775
  %9142 = vmatpush1.bf16.msra.mxu0 %v8774
  %9143 = vmatprep.subr.bf16.mxu0 %v8783
  %9144 = vmatpush1.bf16.msra.mxu0 %v8782
  %9145 = vmatprep.subr.bf16.mxu0 %v8791
  %9146 = vmatpush1.bf16.msra.mxu0 %v8790
  %9147 = vmatprep.subr.bf16.mxu0 %v8799
  %9148 = vmatpush1.bf16.msra.mxu0 %v8798
  %9149 = vmatprep.subr.bf16.mxu0 %v8807
  %9150 = vmatpush1.bf16.msra.mxu0 %v8806
  %9151 = vmatprep.subr.bf16.mxu0 %v8815
  %9152 = vmatpush1.bf16.msra.mxu0 %v8814
  %9153 = vmatprep.subr.bf16.mxu0 %v8823
  %9154 = vmatpush1.bf16.msra.mxu0 %v8822
  %9155 = vmatprep.subr.bf16.mxu0 %v8831
  %9156 = vmatpush1.bf16.msra.mxu0 %v8830
  %9157 = vmatprep.subr.bf16.mxu0 %v8839
  %9158 = vmatpush1.bf16.msra.mxu0 %v8838
  %9159 = vmatprep.subr.bf16.mxu0 %v8847
  %9160 = vmatpush1.bf16.msra.mxu0 %v8846
  %9161 = vmatprep.subr.bf16.mxu0 %v8855
  %9162 = vmatpush1.bf16.msra.mxu0 %v8854
  %9163 = vmatprep.subr.bf16.mxu0 %v8863
  %9164 = vmatpush1.bf16.msra.mxu0 %v8862
  %9165 = vmatprep.subr.bf16.mxu0 %v8871
  %9166 = vmatpush1.bf16.msra.mxu0 %v8870
  %9167 = vmatprep.subr.bf16.mxu0 %v8879
  %9168 = vmatpush1.bf16.msra.mxu0 %v8878
  %9169 = vmatprep.subr.bf16.mxu0 %v8887
  %9170 = vmatpush1.bf16.msra.mxu0 %v8886
  %9171 = vmatprep.mubr.bf16.mxu0 %v8247
  %9172 = vmatmul.mubr.bf16.gmra.mrb[0].mxu0 %v8246
  %v9173 = vpop.f32.mrb[0].mxu0
  %v9174 = vadd.f32 0.0, %v9173
  %v9175 = vpop.f32.mrb[0].mxu0
  %v9176 = vadd.f32 0.0, %v9175
  %v9177 = vpop.f32.mrb[0].mxu0
  %v9178 = vpop.f32.mrb[0].mxu0
  %9179 = vdwg.mxu0
  %v9180 = vadd.f32 %v8238, %v9051
  %v9181 = vadd.f32 %v8239, %v9053
  %v9182 = vadd.f32 %v8240, %v9092
  %v9183 = vadd.f32 %v8241, %v9094
  %v9184 = vadd.f32 %v8242, %v9133
  %v9185 = vadd.f32 %v8243, %v9135
  %v9186 = vadd.f32 %v8244, %v9174
  %v9187 = vadd.f32 %v8245, %v9176
  %v9188 = vxor.u32 %v9180, 2147483648
  %v9189 = vxor.u32 %v9181, 2147483648
  %v9190 = vmul.f32 %v9188, 1.442695
  %v9191 = vpow.pop %v9190
  %v9192 = vmul.f32 %v9189, 1.442695
  %v9193 = vpow.pop %v9192
  %v9194 = vadd.f32 %v9191, 1.0
  %v9195 = vadd.f32 %v9193, 1.0
  %v9196 = vrcp.pop %v9194
  %v9197 = vmul.f32 1.0, %v9196
  %v9198 = vrcp.pop %v9195
  %v9199 = vmul.f32 1.0, %v9198
  %v9200 = vxor.u32 %v9182, 2147483648
  %v9201 = vxor.u32 %v9183, 2147483648
  %v9202 = vmul.f32 %v9200, 1.442695
  %v9203 = vpow.pop %v9202
  %v9204 = vmul.f32 %v9201, 1.442695
  %v9205 = vpow.pop %v9204
  %v9206 = vadd.f32 %v9203, 1.0
  %v9207 = vadd.f32 %v9205, 1.0
  %v9208 = vrcp.pop %v9206
  %v9209 = vmul.f32 1.0, %v9208
  %v9210 = vrcp.pop %v9207
  %v9211 = vmul.f32 1.0, %v9210
  %v9212 = vtanh.pop %v9184
  %v9213 = vtanh.pop %v9185
  %v9214 = vxor.u32 %v9186, 2147483648
  %v9215 = vxor.u32 %v9187, 2147483648
  %v9216 = vmul.f32 %v9214, 1.442695
  %v9217 = vpow.pop %v9216
  %v9218 = vmul.f32 %v9215, 1.442695
  %v9219 = vpow.pop %v9218
  %v9220 = vadd.f32 %v9217, 1.0
  %v9221 = vadd.f32 %v9219, 1.0
  %v9222 = vrcp.pop %v9220
  %v9223 = vmul.f32 1.0, %v9222
  %v9224 = vrcp.pop %v9221
  %v9225 = vmul.f32 1.0, %v9224
  %v9226 = vmul.f32 %v9209, %v8214
  %v9227 = vmul.f32 %v9211, %v8215
  %v9228 = vmul.f32 %v9197, %v9212
  %v9229 = vmul.f32 %v9199, %v9213
  %v9230 = vadd.f32 %v9226, %v9228
  %v9231 = vadd.f32 %v9227, %v9229
  %v9232 = vtanh.pop %v9230
  %v9233 = vtanh.pop %v9231
  %v9234 = vmul.f32 %v9223, %v9232
  %v9235 = vmul.f32 %v9225, %v9233
  %9236 = vst [vmem:[#allocation3 + $0x70] sm:$0xff] %v9234
  %9237 = vst [vmem:[#allocation3 + $0x8] sm:$0xff] %v9235
  %v9238 = vld [vmem:[#allocation3] sm:$0xff]
  %v9239 = vld [vmem:[#allocation3 + $0x8] sm:$0xff]
  %v9240 = vld [vmem:[#allocation3 + $0x10] sm:$0xff]
  %v9241 = vld [vmem:[#allocation3 + $0x18] sm:$0xff]
  %v9242 = vld [vmem:[#allocation3 + $0x20] sm:$0xff]
  %v9243 = vld [vmem:[#allocation3 + $0x28] sm:$0xff]
  %v9244 = vld [vmem:[#allocation3 + $0x30] sm:$0xff]
  %v9245 = vld [vmem:[#allocation3 + $0x38] sm:$0xff]
  %v9246 = vld [vmem:[#allocation3 + $0x40] sm:$0xff]
  %v9247 = vld [vmem:[#allocation3 + $0x48] sm:$0xff]
  %v9248 = vld [vmem:[#allocation3 + $0x50] sm:$0xff]
  %v9249 = vld [vmem:[#allocation3 + $0x58] sm:$0xff]
  %v9250 = vld [vmem:[#allocation3 + $0x60] sm:$0xff]
  %v9251 = vld [vmem:[#allocation3 + $0x68] sm:$0xff]
  %v9252 = vld [vmem:[#allocation3 + $0x70] sm:$0xff]
  %v9253 = vld [vmem:[#allocation3 + $0x78] sm:$0xff]
  %v9254 = vpack.c.bf16 %v9240, %v9238
  %v9255 = vpack.c.bf16 %v9241, %v9239
  %v9256 = vpack.c.bf16 %v9244, %v9242
  %v9257 = vpack.c.bf16 %v9245, %v9243
  %v9258 = vpack.c.bf16 %v9248, %v9246
  %v9259 = vpack.c.bf16 %v9249, %v9247
  %v9260 = vpack.c.bf16 %v9252, %v9250
  %v9261 = vpack.c.bf16 %v9253, %v9251
  %v9262 = vld [vmem:[%s5] sm:$0xff]
  %v9263 = vld [vmem:[%s5 + $0x8] sm:$0xff]
  %v9264 = vld [vmem:[%s5 + $0x10] sm:$0xff]
  %v9265 = vld [vmem:[%s5 + $0x18] sm:$0xff]
  %v9266 = vld [vmem:[%s5 + $0x20] sm:$0xff]
  %v9267 = vld [vmem:[%s5 + $0x28] sm:$0xff]
  %v9268 = vld [vmem:[%s5 + $0x30] sm:$0xff]
  %v9269 = vld [vmem:[%s5 + $0x38] sm:$0xff]
  %v9270 = vld [vmem:[%s5 + $0x40] sm:$0xff]
  %v9271 = vld [vmem:[%s5 + $0x48] sm:$0xff]
  %v9272 = vld [vmem:[%s5 + $0x50] sm:$0xff]
  %v9273 = vld [vmem:[%s5 + $0x58] sm:$0xff]
  %v9274 = vld [vmem:[%s5 + $0x60] sm:$0xff]
  %v9275 = vld [vmem:[%s5 + $0x68] sm:$0xff]
  %v9276 = vld [vmem:[%s5 + $0x70] sm:$0xff]
  %v9277 = vld [vmem:[%s5 + $0x78] sm:$0xff]
  %v9278 = vld [vmem:[%s5 + $0x80] sm:$0xff]
  %v9279 = vld [vmem:[%s5 + $0x88] sm:$0xff]
  %v9280 = vld [vmem:[%s5 + $0x90] sm:$0xff]
  %v9281 = vld [vmem:[%s5 + $0x98] sm:$0xff]
  %v9282 = vld [vmem:[%s5 + $0xa0] sm:$0xff]
  %v9283 = vld [vmem:[%s5 + $0xa8] sm:$0xff]
  %v9284 = vld [vmem:[%s5 + $0xb0] sm:$0xff]
  %v9285 = vld [vmem:[%s5 + $0xb8] sm:$0xff]
  %v9286 = vld [vmem:[%s5 + $0xc0] sm:$0xff]
  %v9287 = vld [vmem:[%s5 + $0xc8] sm:$0xff]
  %v9288 = vld [vmem:[%s5 + $0xd0] sm:$0xff]
  %v9289 = vld [vmem:[%s5 + $0xd8] sm:$0xff]
  %v9290 = vld [vmem:[%s5 + $0xe0] sm:$0xff]
  %v9291 = vld [vmem:[%s5 + $0xe8] sm:$0xff]
  %v9292 = vld [vmem:[%s5 + $0xf0] sm:$0xff]
  %v9293 = vld [vmem:[%s5 + $0xf8] sm:$0xff]
  %v9294 = vld [vmem:[%s5 + $0x100] sm:$0xff]
  %v9295 = vld [vmem:[%s5 + $0x108] sm:$0xff]
  %v9296 = vld [vmem:[%s5 + $0x110] sm:$0xff]
  %v9297 = vld [vmem:[%s5 + $0x118] sm:$0xff]
  %v9298 = vld [vmem:[%s5 + $0x120] sm:$0xff]
  %v9299 = vld [vmem:[%s5 + $0x128] sm:$0xff]
  %v9300 = vld [vmem:[%s5 + $0x130] sm:$0xff]
  %v9301 = vld [vmem:[%s5 + $0x138] sm:$0xff]
  %v9302 = vld [vmem:[%s5 + $0x140] sm:$0xff]
  %v9303 = vld [vmem:[%s5 + $0x148] sm:$0xff]
  %v9304 = vld [vmem:[%s5 + $0x150] sm:$0xff]
  %v9305 = vld [vmem:[%s5 + $0x158] sm:$0xff]
  %v9306 = vld [vmem:[%s5 + $0x160] sm:$0xff]
  %v9307 = vld [vmem:[%s5 + $0x168] sm:$0xff]
  %v9308 = vld [vmem:[%s5 + $0x170] sm:$0xff]
  %v9309 = vld [vmem:[%s5 + $0x178] sm:$0xff]
  %v9310 = vld [vmem:[%s5 + $0x180] sm:$0xff]
  %v9311 = vld [vmem:[%s5 + $0x188] sm:$0xff]
  %v9312 = vld [vmem:[%s5 + $0x190] sm:$0xff]
  %v9313 = vld [vmem:[%s5 + $0x198] sm:$0xff]
  %v9314 = vld [vmem:[%s5 + $0x1a0] sm:$0xff]
  %v9315 = vld [vmem:[%s5 + $0x1a8] sm:$0xff]
  %v9316 = vld [vmem:[%s5 + $0x1b0] sm:$0xff]
  %v9317 = vld [vmem:[%s5 + $0x1b8] sm:$0xff]
  %v9318 = vld [vmem:[%s5 + $0x1c0] sm:$0xff]
  %v9319 = vld [vmem:[%s5 + $0x1c8] sm:$0xff]
  %v9320 = vld [vmem:[%s5 + $0x1d0] sm:$0xff]
  %v9321 = vld [vmem:[%s5 + $0x1d8] sm:$0xff]
  %v9322 = vld [vmem:[%s5 + $0x1e0] sm:$0xff]
  %v9323 = vld [vmem:[%s5 + $0x1e8] sm:$0xff]
  %v9324 = vld [vmem:[%s5 + $0x1f0] sm:$0xff]
  %v9325 = vld [vmem:[%s5 + $0x1f8] sm:$0xff]
  %v9326 = vld [vmem:[%s5 + $0x200] sm:$0xff]
  %v9327 = vld [vmem:[%s5 + $0x208] sm:$0xff]
  %v9328 = vld [vmem:[%s5 + $0x210] sm:$0xff]
  %v9329 = vld [vmem:[%s5 + $0x218] sm:$0xff]
  %v9330 = vld [vmem:[%s5 + $0x220] sm:$0xff]
  %v9331 = vld [vmem:[%s5 + $0x228] sm:$0xff]
  %v9332 = vld [vmem:[%s5 + $0x230] sm:$0xff]
  %v9333 = vld [vmem:[%s5 + $0x238] sm:$0xff]
  %v9334 = vld [vmem:[%s5 + $0x240] sm:$0xff]
  %v9335 = vld [vmem:[%s5 + $0x248] sm:$0xff]
  %v9336 = vld [vmem:[%s5 + $0x250] sm:$0xff]
  %v9337 = vld [vmem:[%s5 + $0x258] sm:$0xff]
  %v9338 = vld [vmem:[%s5 + $0x260] sm:$0xff]
  %v9339 = vld [vmem:[%s5 + $0x268] sm:$0xff]
  %v9340 = vld [vmem:[%s5 + $0x270] sm:$0xff]
  %v9341 = vld [vmem:[%s5 + $0x278] sm:$0xff]
  %v9342 = vld [vmem:[%s5 + $0x280] sm:$0xff]
  %v9343 = vld [vmem:[%s5 + $0x288] sm:$0xff]
  %v9344 = vld [vmem:[%s5 + $0x290] sm:$0xff]
  %v9345 = vld [vmem:[%s5 + $0x298] sm:$0xff]
  %v9346 = vld [vmem:[%s5 + $0x2a0] sm:$0xff]
  %v9347 = vld [vmem:[%s5 + $0x2a8] sm:$0xff]
  %v9348 = vld [vmem:[%s5 + $0x2b0] sm:$0xff]
  %v9349 = vld [vmem:[%s5 + $0x2b8] sm:$0xff]
  %v9350 = vld [vmem:[%s5 + $0x2c0] sm:$0xff]
  %v9351 = vld [vmem:[%s5 + $0x2c8] sm:$0xff]
  %v9352 = vld [vmem:[%s5 + $0x2d0] sm:$0xff]
  %v9353 = vld [vmem:[%s5 + $0x2d8] sm:$0xff]
  %v9354 = vld [vmem:[%s5 + $0x2e0] sm:$0xff]
  %v9355 = vld [vmem:[%s5 + $0x2e8] sm:$0xff]
  %v9356 = vld [vmem:[%s5 + $0x2f0] sm:$0xff]
  %v9357 = vld [vmem:[%s5 + $0x2f8] sm:$0xff]
  %v9358 = vld [vmem:[%s5 + $0x300] sm:$0xff]
  %v9359 = vld [vmem:[%s5 + $0x308] sm:$0xff]
  %v9360 = vld [vmem:[%s5 + $0x310] sm:$0xff]
  %v9361 = vld [vmem:[%s5 + $0x318] sm:$0xff]
  %v9362 = vld [vmem:[%s5 + $0x320] sm:$0xff]
  %v9363 = vld [vmem:[%s5 + $0x328] sm:$0xff]
  %v9364 = vld [vmem:[%s5 + $0x330] sm:$0xff]
  %v9365 = vld [vmem:[%s5 + $0x338] sm:$0xff]
  %v9366 = vld [vmem:[%s5 + $0x340] sm:$0xff]
  %v9367 = vld [vmem:[%s5 + $0x348] sm:$0xff]
  %v9368 = vld [vmem:[%s5 + $0x350] sm:$0xff]
  %v9369 = vld [vmem:[%s5 + $0x358] sm:$0xff]
  %v9370 = vld [vmem:[%s5 + $0x360] sm:$0xff]
  %v9371 = vld [vmem:[%s5 + $0x368] sm:$0xff]
  %v9372 = vld [vmem:[%s5 + $0x370] sm:$0xff]
  %v9373 = vld [vmem:[%s5 + $0x378] sm:$0xff]
  %v9374 = vld [vmem:[%s5 + $0x380] sm:$0xff]
  %v9375 = vld [vmem:[%s5 + $0x388] sm:$0xff]
  %v9376 = vld [vmem:[%s5 + $0x390] sm:$0xff]
  %v9377 = vld [vmem:[%s5 + $0x398] sm:$0xff]
  %v9378 = vld [vmem:[%s5 + $0x3a0] sm:$0xff]
  %v9379 = vld [vmem:[%s5 + $0x3a8] sm:$0xff]
  %v9380 = vld [vmem:[%s5 + $0x3b0] sm:$0xff]
  %v9381 = vld [vmem:[%s5 + $0x3b8] sm:$0xff]
  %v9382 = vld [vmem:[%s5 + $0x3c0] sm:$0xff]
  %v9383 = vld [vmem:[%s5 + $0x3c8] sm:$0xff]
  %v9384 = vld [vmem:[%s5 + $0x3d0] sm:$0xff]
  %v9385 = vld [vmem:[%s5 + $0x3d8] sm:$0xff]
  %v9386 = vld [vmem:[%s5 + $0x3e0] sm:$0xff]
  %v9387 = vld [vmem:[%s5 + $0x3e8] sm:$0xff]
  %v9388 = vld [vmem:[%s5 + $0x3f0] sm:$0xff]
  %v9389 = vld [vmem:[%s5 + $0x3f8] sm:$0xff]
  %v9390 = vld [vmem:[%s6] sm:$0xff]
  %v9392 = vlaneseq
  %v9393 = vshrl.u32 %v9392, 7
  %v9394 = vsub.s32 0, %v9393
  %v9395 = vrot.slane %v9390, %v9394
  %v9396 = vlaneseq
  %v9397 = vshrl.u32 %v9396, 7
  %v9398 = vsub.s32 1, %v9397
  %v9399 = vrot.slane %v9390, %v9398
  %v9400 = vlaneseq
  %v9401 = vshrl.u32 %v9400, 7
  %v9402 = vsub.s32 2, %v9401
  %v9403 = vrot.slane %v9390, %v9402
  %v9404 = vlaneseq
  %v9405 = vshrl.u32 %v9404, 7
  %v9406 = vsub.s32 3, %v9405
  %v9407 = vrot.slane %v9390, %v9406
  %v9408 = vlaneseq
  %v9409 = vshrl.u32 %v9408, 7
  %v9410 = vsub.s32 4, %v9409
  %v9411 = vrot.slane %v9390, %v9410
  %v9412 = vlaneseq
  %v9413 = vshrl.u32 %v9412, 7
  %v9414 = vsub.s32 5, %v9413
  %v9415 = vrot.slane %v9390, %v9414
  %v9416 = vlaneseq
  %v9417 = vshrl.u32 %v9416, 7
  %v9418 = vsub.s32 6, %v9417
  %v9419 = vrot.slane %v9390, %v9418
  %v9420 = vlaneseq
  %v9421 = vshrl.u32 %v9420, 7
  %v9422 = vsub.s32 7, %v9421
  %v9423 = vrot.slane %v9390, %v9422
  %v9560 = vunpack.c.l.b16 %v9262
  %v9561 = vunpack.c.h.b16 %v9262
  %v9562 = vunpack.c.l.b16 %v9263
  %v9563 = vunpack.c.h.b16 %v9263
  %v9564 = vunpack.c.l.b16 %v9264
  %v9565 = vunpack.c.h.b16 %v9264
  %v9566 = vunpack.c.l.b16 %v9265
  %v9567 = vunpack.c.h.b16 %v9265
  %v9568 = vunpack.c.l.b16 %v9266
  %v9569 = vunpack.c.h.b16 %v9266
  %v9570 = vunpack.c.l.b16 %v9267
  %v9571 = vunpack.c.h.b16 %v9267
  %v9572 = vunpack.c.l.b16 %v9268
  %v9573 = vunpack.c.h.b16 %v9268
  %v9574 = vunpack.c.l.b16 %v9269
  %v9575 = vunpack.c.h.b16 %v9269
  %v9576 = vunpack.c.l.b16 %v9270
  %v9577 = vunpack.c.h.b16 %v9270
  %v9578 = vunpack.c.l.b16 %v9271
  %v9579 = vunpack.c.h.b16 %v9271
  %v9580 = vunpack.c.l.b16 %v9272
  %v9581 = vunpack.c.h.b16 %v9272
  %v9582 = vunpack.c.l.b16 %v9273
  %v9583 = vunpack.c.h.b16 %v9273
  %v9584 = vunpack.c.l.b16 %v9274
  %v9585 = vunpack.c.h.b16 %v9274
  %v9586 = vunpack.c.l.b16 %v9275
  %v9587 = vunpack.c.h.b16 %v9275
  %v9588 = vunpack.c.l.b16 %v9276
  %v9589 = vunpack.c.h.b16 %v9276
  %v9590 = vunpack.c.l.b16 %v9277
  %v9591 = vunpack.c.h.b16 %v9277
  %v9592 = vunpack.c.l.b16 %v9278
  %v9593 = vunpack.c.h.b16 %v9278
  %v9594 = vunpack.c.l.b16 %v9279
  %v9595 = vunpack.c.h.b16 %v9279
  %v9596 = vunpack.c.l.b16 %v9280
  %v9597 = vunpack.c.h.b16 %v9280
  %v9598 = vunpack.c.l.b16 %v9281
  %v9599 = vunpack.c.h.b16 %v9281
  %v9600 = vunpack.c.l.b16 %v9282
  %v9601 = vunpack.c.h.b16 %v9282
  %v9602 = vunpack.c.l.b16 %v9283
  %v9603 = vunpack.c.h.b16 %v9283
  %v9604 = vunpack.c.l.b16 %v9284
  %v9605 = vunpack.c.h.b16 %v9284
  %v9606 = vunpack.c.l.b16 %v9285
  %v9607 = vunpack.c.h.b16 %v9285
  %v9608 = vunpack.c.l.b16 %v9286
  %v9609 = vunpack.c.h.b16 %v9286
  %v9610 = vunpack.c.l.b16 %v9287
  %v9611 = vunpack.c.h.b16 %v9287
  %v9612 = vunpack.c.l.b16 %v9288
  %v9613 = vunpack.c.h.b16 %v9288
  %v9614 = vunpack.c.l.b16 %v9289
  %v9615 = vunpack.c.h.b16 %v9289
  %v9616 = vunpack.c.l.b16 %v9290
  %v9617 = vunpack.c.h.b16 %v9290
  %v9618 = vunpack.c.l.b16 %v9291
  %v9619 = vunpack.c.h.b16 %v9291
  %v9620 = vunpack.c.l.b16 %v9292
  %v9621 = vunpack.c.h.b16 %v9292
  %v9622 = vunpack.c.l.b16 %v9293
  %v9623 = vunpack.c.h.b16 %v9293
  %v9624 = vunpack.c.l.b16 %v9294
  %v9625 = vunpack.c.h.b16 %v9294
  %v9626 = vunpack.c.l.b16 %v9295
  %v9627 = vunpack.c.h.b16 %v9295
  %v9628 = vunpack.c.l.b16 %v9296
  %v9629 = vunpack.c.h.b16 %v9296
  %v9630 = vunpack.c.l.b16 %v9297
  %v9631 = vunpack.c.h.b16 %v9297
  %v9632 = vunpack.c.l.b16 %v9298
  %v9633 = vunpack.c.h.b16 %v9298
  %v9634 = vunpack.c.l.b16 %v9299
  %v9635 = vunpack.c.h.b16 %v9299
  %v9636 = vunpack.c.l.b16 %v9300
  %v9637 = vunpack.c.h.b16 %v9300
  %v9638 = vunpack.c.l.b16 %v9301
  %v9639 = vunpack.c.h.b16 %v9301
  %v9640 = vunpack.c.l.b16 %v9302
  %v9641 = vunpack.c.h.b16 %v9302
  %v9642 = vunpack.c.l.b16 %v9303
  %v9643 = vunpack.c.h.b16 %v9303
  %v9644 = vunpack.c.l.b16 %v9304
  %v9645 = vunpack.c.h.b16 %v9304
  %v9646 = vunpack.c.l.b16 %v9305
  %v9647 = vunpack.c.h.b16 %v9305
  %v9648 = vunpack.c.l.b16 %v9306
  %v9649 = vunpack.c.h.b16 %v9306
  %v9650 = vunpack.c.l.b16 %v9307
  %v9651 = vunpack.c.h.b16 %v9307
  %v9652 = vunpack.c.l.b16 %v9308
  %v9653 = vunpack.c.h.b16 %v9308
  %v9654 = vunpack.c.l.b16 %v9309
  %v9655 = vunpack.c.h.b16 %v9309
  %v9656 = vunpack.c.l.b16 %v9310
  %v9657 = vunpack.c.h.b16 %v9310
  %v9658 = vunpack.c.l.b16 %v9311
  %v9659 = vunpack.c.h.b16 %v9311
  %v9660 = vunpack.c.l.b16 %v9312
  %v9661 = vunpack.c.h.b16 %v9312
  %v9662 = vunpack.c.l.b16 %v9313
  %v9663 = vunpack.c.h.b16 %v9313
  %v9664 = vunpack.c.l.b16 %v9314
  %v9665 = vunpack.c.h.b16 %v9314
  %v9666 = vunpack.c.l.b16 %v9315
  %v9667 = vunpack.c.h.b16 %v9315
  %v9668 = vunpack.c.l.b16 %v9316
  %v9669 = vunpack.c.h.b16 %v9316
  %v9670 = vunpack.c.l.b16 %v9317
  %v9671 = vunpack.c.h.b16 %v9317
  %v9672 = vunpack.c.l.b16 %v9318
  %v9673 = vunpack.c.h.b16 %v9318
  %v9674 = vunpack.c.l.b16 %v9319
  %v9675 = vunpack.c.h.b16 %v9319
  %v9676 = vunpack.c.l.b16 %v9320
  %v9677 = vunpack.c.h.b16 %v9320
  %v9678 = vunpack.c.l.b16 %v9321
  %v9679 = vunpack.c.h.b16 %v9321
  %v9680 = vunpack.c.l.b16 %v9322
  %v9681 = vunpack.c.h.b16 %v9322
  %v9682 = vunpack.c.l.b16 %v9323
  %v9683 = vunpack.c.h.b16 %v9323
  %v9684 = vunpack.c.l.b16 %v9324
  %v9685 = vunpack.c.h.b16 %v9324
  %v9686 = vunpack.c.l.b16 %v9325
  %v9687 = vunpack.c.h.b16 %v9325
  %v9688 = vunpack.c.l.b16 %v9326
  %v9689 = vunpack.c.h.b16 %v9326
  %v9690 = vunpack.c.l.b16 %v9327
  %v9691 = vunpack.c.h.b16 %v9327
  %v9692 = vunpack.c.l.b16 %v9328
  %v9693 = vunpack.c.h.b16 %v9328
  %v9694 = vunpack.c.l.b16 %v9329
  %v9695 = vunpack.c.h.b16 %v9329
  %v9696 = vunpack.c.l.b16 %v9330
  %v9697 = vunpack.c.h.b16 %v9330
  %v9698 = vunpack.c.l.b16 %v9331
  %v9699 = vunpack.c.h.b16 %v9331
  %v9700 = vunpack.c.l.b16 %v9332
  %v9701 = vunpack.c.h.b16 %v9332
  %v9702 = vunpack.c.l.b16 %v9333
  %v9703 = vunpack.c.h.b16 %v9333
  %v9704 = vunpack.c.l.b16 %v9334
  %v9705 = vunpack.c.h.b16 %v9334
  %v9706 = vunpack.c.l.b16 %v9335
  %v9707 = vunpack.c.h.b16 %v9335
  %v9708 = vunpack.c.l.b16 %v9336
  %v9709 = vunpack.c.h.b16 %v9336
  %v9710 = vunpack.c.l.b16 %v9337
  %v9711 = vunpack.c.h.b16 %v9337
  %v9712 = vunpack.c.l.b16 %v9338
  %v9713 = vunpack.c.h.b16 %v9338
  %v9714 = vunpack.c.l.b16 %v9339
  %v9715 = vunpack.c.h.b16 %v9339
  %v9716 = vunpack.c.l.b16 %v9340
  %v9717 = vunpack.c.h.b16 %v9340
  %v9718 = vunpack.c.l.b16 %v9341
  %v9719 = vunpack.c.h.b16 %v9341
  %v9720 = vunpack.c.l.b16 %v9342
  %v9721 = vunpack.c.h.b16 %v9342
  %v9722 = vunpack.c.l.b16 %v9343
  %v9723 = vunpack.c.h.b16 %v9343
  %v9724 = vunpack.c.l.b16 %v9344
  %v9725 = vunpack.c.h.b16 %v9344
  %v9726 = vunpack.c.l.b16 %v9345
  %v9727 = vunpack.c.h.b16 %v9345
  %v9728 = vunpack.c.l.b16 %v9346
  %v9729 = vunpack.c.h.b16 %v9346
  %v9730 = vunpack.c.l.b16 %v9347
  %v9731 = vunpack.c.h.b16 %v9347
  %v9732 = vunpack.c.l.b16 %v9348
  %v9733 = vunpack.c.h.b16 %v9348
  %v9734 = vunpack.c.l.b16 %v9349
  %v9735 = vunpack.c.h.b16 %v9349
  %v9736 = vunpack.c.l.b16 %v9350
  %v9737 = vunpack.c.h.b16 %v9350
  %v9738 = vunpack.c.l.b16 %v9351
  %v9739 = vunpack.c.h.b16 %v9351
  %v9740 = vunpack.c.l.b16 %v9352
  %v9741 = vunpack.c.h.b16 %v9352
  %v9742 = vunpack.c.l.b16 %v9353
  %v9743 = vunpack.c.h.b16 %v9353
  %v9744 = vunpack.c.l.b16 %v9354
  %v9745 = vunpack.c.h.b16 %v9354
  %v9746 = vunpack.c.l.b16 %v9355
  %v9747 = vunpack.c.h.b16 %v9355
  %v9748 = vunpack.c.l.b16 %v9356
  %v9749 = vunpack.c.h.b16 %v9356
  %v9750 = vunpack.c.l.b16 %v9357
  %v9751 = vunpack.c.h.b16 %v9357
  %v9752 = vunpack.c.l.b16 %v9358
  %v9753 = vunpack.c.h.b16 %v9358
  %v9754 = vunpack.c.l.b16 %v9359
  %v9755 = vunpack.c.h.b16 %v9359
  %v9756 = vunpack.c.l.b16 %v9360
  %v9757 = vunpack.c.h.b16 %v9360
  %v9758 = vunpack.c.l.b16 %v9361
  %v9759 = vunpack.c.h.b16 %v9361
  %v9760 = vunpack.c.l.b16 %v9362
  %v9761 = vunpack.c.h.b16 %v9362
  %v9762 = vunpack.c.l.b16 %v9363
  %v9763 = vunpack.c.h.b16 %v9363
  %v9764 = vunpack.c.l.b16 %v9364
  %v9765 = vunpack.c.h.b16 %v9364
  %v9766 = vunpack.c.l.b16 %v9365
  %v9767 = vunpack.c.h.b16 %v9365
  %v9768 = vunpack.c.l.b16 %v9366
  %v9769 = vunpack.c.h.b16 %v9366
  %v9770 = vunpack.c.l.b16 %v9367
  %v9771 = vunpack.c.h.b16 %v9367
  %v9772 = vunpack.c.l.b16 %v9368
  %v9773 = vunpack.c.h.b16 %v9368
  %v9774 = vunpack.c.l.b16 %v9369
  %v9775 = vunpack.c.h.b16 %v9369
  %v9776 = vunpack.c.l.b16 %v9370
  %v9777 = vunpack.c.h.b16 %v9370
  %v9778 = vunpack.c.l.b16 %v9371
  %v9779 = vunpack.c.h.b16 %v9371
  %v9780 = vunpack.c.l.b16 %v9372
  %v9781 = vunpack.c.h.b16 %v9372
  %v9782 = vunpack.c.l.b16 %v9373
  %v9783 = vunpack.c.h.b16 %v9373
  %v9784 = vunpack.c.l.b16 %v9374
  %v9785 = vunpack.c.h.b16 %v9374
  %v9786 = vunpack.c.l.b16 %v9375
  %v9787 = vunpack.c.h.b16 %v9375
  %v9788 = vunpack.c.l.b16 %v9376
  %v9789 = vunpack.c.h.b16 %v9376
  %v9790 = vunpack.c.l.b16 %v9377
  %v9791 = vunpack.c.h.b16 %v9377
  %v9792 = vunpack.c.l.b16 %v9378
  %v9793 = vunpack.c.h.b16 %v9378
  %v9794 = vunpack.c.l.b16 %v9379
  %v9795 = vunpack.c.h.b16 %v9379
  %v9796 = vunpack.c.l.b16 %v9380
  %v9797 = vunpack.c.h.b16 %v9380
  %v9798 = vunpack.c.l.b16 %v9381
  %v9799 = vunpack.c.h.b16 %v9381
  %v9800 = vunpack.c.l.b16 %v9382
  %v9801 = vunpack.c.h.b16 %v9382
  %v9802 = vunpack.c.l.b16 %v9383
  %v9803 = vunpack.c.h.b16 %v9383
  %v9804 = vunpack.c.l.b16 %v9384
  %v9805 = vunpack.c.h.b16 %v9384
  %v9806 = vunpack.c.l.b16 %v9385
  %v9807 = vunpack.c.h.b16 %v9385
  %v9808 = vunpack.c.l.b16 %v9386
  %v9809 = vunpack.c.h.b16 %v9386
  %v9810 = vunpack.c.l.b16 %v9387
  %v9811 = vunpack.c.h.b16 %v9387
  %v9812 = vunpack.c.l.b16 %v9388
  %v9813 = vunpack.c.h.b16 %v9388
  %v9814 = vunpack.c.l.b16 %v9389
  %v9815 = vunpack.c.h.b16 %v9389
  %v9816 = vpack.c.b16 %v9568, %v9560
  %v9817 = vpack.c.b16 %v9569, %v9561
  %v9818 = vpack.c.b16 %v9570, %v9562
  %v9819 = vpack.c.b16 %v9571, %v9563
  %v9820 = vpack.c.b16 %v9572, %v9564
  %v9821 = vpack.c.b16 %v9573, %v9565
  %v9822 = vpack.c.b16 %v9574, %v9566
  %v9823 = vpack.c.b16 %v9575, %v9567
  %v9824 = vpack.c.b16 %v9584, %v9576
  %v9825 = vpack.c.b16 %v9585, %v9577
  %v9826 = vpack.c.b16 %v9586, %v9578
  %v9827 = vpack.c.b16 %v9587, %v9579
  %v9828 = vpack.c.b16 %v9588, %v9580
  %v9829 = vpack.c.b16 %v9589, %v9581
  %v9830 = vpack.c.b16 %v9590, %v9582
  %v9831 = vpack.c.b16 %v9591, %v9583
  %v9832 = vpack.c.b16 %v9600, %v9592
  %v9833 = vpack.c.b16 %v9601, %v9593
  %v9834 = vpack.c.b16 %v9602, %v9594
  %v9835 = vpack.c.b16 %v9603, %v9595
  %v9836 = vpack.c.b16 %v9604, %v9596
  %v9837 = vpack.c.b16 %v9605, %v9597
  %v9838 = vpack.c.b16 %v9606, %v9598
  %v9839 = vpack.c.b16 %v9607, %v9599
  %v9840 = vpack.c.b16 %v9616, %v9608
  %v9841 = vpack.c.b16 %v9617, %v9609
  %v9842 = vpack.c.b16 %v9618, %v9610
  %v9843 = vpack.c.b16 %v9619, %v9611
  %v9844 = vpack.c.b16 %v9620, %v9612
  %v9845 = vpack.c.b16 %v9621, %v9613
  %v9846 = vpack.c.b16 %v9622, %v9614
  %v9847 = vpack.c.b16 %v9623, %v9615
  %v9848 = vpack.c.b16 %v9632, %v9624
  %v9849 = vpack.c.b16 %v9633, %v9625
  %v9850 = vpack.c.b16 %v9634, %v9626
  %v9851 = vpack.c.b16 %v9635, %v9627
  %v9852 = vpack.c.b16 %v9636, %v9628
  %v9853 = vpack.c.b16 %v9637, %v9629
  %v9854 = vpack.c.b16 %v9638, %v9630
  %v9855 = vpack.c.b16 %v9639, %v9631
  %v9856 = vpack.c.b16 %v9648, %v9640
  %v9857 = vpack.c.b16 %v9649, %v9641
  %v9858 = vpack.c.b16 %v9650, %v9642
  %v9859 = vpack.c.b16 %v9651, %v9643
  %v9860 = vpack.c.b16 %v9652, %v9644
  %v9861 = vpack.c.b16 %v9653, %v9645
  %v9862 = vpack.c.b16 %v9654, %v9646
  %v9863 = vpack.c.b16 %v9655, %v9647
  %v9864 = vpack.c.b16 %v9664, %v9656
  %v9865 = vpack.c.b16 %v9665, %v9657
  %v9866 = vpack.c.b16 %v9666, %v9658
  %v9867 = vpack.c.b16 %v9667, %v9659
  %v9868 = vpack.c.b16 %v9668, %v9660
  %v9869 = vpack.c.b16 %v9669, %v9661
  %v9870 = vpack.c.b16 %v9670, %v9662
  %v9871 = vpack.c.b16 %v9671, %v9663
  %v9872 = vpack.c.b16 %v9680, %v9672
  %v9873 = vpack.c.b16 %v9681, %v9673
  %v9874 = vpack.c.b16 %v9682, %v9674
  %v9875 = vpack.c.b16 %v9683, %v9675
  %v9876 = vpack.c.b16 %v9684, %v9676
  %v9877 = vpack.c.b16 %v9685, %v9677
  %v9878 = vpack.c.b16 %v9686, %v9678
  %v9879 = vpack.c.b16 %v9687, %v9679
  %v9880 = vpack.c.b16 %v9696, %v9688
  %v9881 = vpack.c.b16 %v9697, %v9689
  %v9882 = vpack.c.b16 %v9698, %v9690
  %v9883 = vpack.c.b16 %v9699, %v9691
  %v9884 = vpack.c.b16 %v9700, %v9692
  %v9885 = vpack.c.b16 %v9701, %v9693
  %v9886 = vpack.c.b16 %v9702, %v9694
  %v9887 = vpack.c.b16 %v9703, %v9695
  %v9888 = vpack.c.b16 %v9712, %v9704
  %v9889 = vpack.c.b16 %v9713, %v9705
  %v9890 = vpack.c.b16 %v9714, %v9706
  %v9891 = vpack.c.b16 %v9715, %v9707
  %v9892 = vpack.c.b16 %v9716, %v9708
  %v9893 = vpack.c.b16 %v9717, %v9709
  %v9894 = vpack.c.b16 %v9718, %v9710
  %v9895 = vpack.c.b16 %v9719, %v9711
  %v9896 = vpack.c.b16 %v9728, %v9720
  %v9897 = vpack.c.b16 %v9729, %v9721
  %v9898 = vpack.c.b16 %v9730, %v9722
  %v9899 = vpack.c.b16 %v9731, %v9723
  %v9900 = vpack.c.b16 %v9732, %v9724
  %v9901 = vpack.c.b16 %v9733, %v9725
  %v9902 = vpack.c.b16 %v9734, %v9726
  %v9903 = vpack.c.b16 %v9735, %v9727
  %v9904 = vpack.c.b16 %v9744, %v9736
  %v9905 = vpack.c.b16 %v9745, %v9737
  %v9906 = vpack.c.b16 %v9746, %v9738
  %v9907 = vpack.c.b16 %v9747, %v9739
  %v9908 = vpack.c.b16 %v9748, %v9740
  %v9909 = vpack.c.b16 %v9749, %v9741
  %v9910 = vpack.c.b16 %v9750, %v9742
  %v9911 = vpack.c.b16 %v9751, %v9743
  %v9912 = vpack.c.b16 %v9760, %v9752
  %v9913 = vpack.c.b16 %v9761, %v9753
  %v9914 = vpack.c.b16 %v9762, %v9754
  %v9915 = vpack.c.b16 %v9763, %v9755
  %v9916 = vpack.c.b16 %v9764, %v9756
  %v9917 = vpack.c.b16 %v9765, %v9757
  %v9918 = vpack.c.b16 %v9766, %v9758
  %v9919 = vpack.c.b16 %v9767, %v9759
  %v9920 = vpack.c.b16 %v9776, %v9768
  %v9921 = vpack.c.b16 %v9777, %v9769
  %v9922 = vpack.c.b16 %v9778, %v9770
  %v9923 = vpack.c.b16 %v9779, %v9771
  %v9924 = vpack.c.b16 %v9780, %v9772
  %v9925 = vpack.c.b16 %v9781, %v9773
  %v9926 = vpack.c.b16 %v9782, %v9774
  %v9927 = vpack.c.b16 %v9783, %v9775
  %v9928 = vpack.c.b16 %v9792, %v9784
  %v9929 = vpack.c.b16 %v9793, %v9785
  %v9930 = vpack.c.b16 %v9794, %v9786
  %v9931 = vpack.c.b16 %v9795, %v9787
  %v9932 = vpack.c.b16 %v9796, %v9788
  %v9933 = vpack.c.b16 %v9797, %v9789
  %v9934 = vpack.c.b16 %v9798, %v9790
  %v9935 = vpack.c.b16 %v9799, %v9791
  %v9936 = vpack.c.b16 %v9808, %v9800
  %v9937 = vpack.c.b16 %v9809, %v9801
  %v9938 = vpack.c.b16 %v9810, %v9802
  %v9939 = vpack.c.b16 %v9811, %v9803
  %v9940 = vpack.c.b16 %v9812, %v9804
  %v9941 = vpack.c.b16 %v9813, %v9805
  %v9942 = vpack.c.b16 %v9814, %v9806
  %v9943 = vpack.c.b16 %v9815, %v9807
  %10072 = vmatprep.subr.bf16.mxu0 %v9817
  %10073 = vmatpush1.bf16.msra.mxu0 %v9816
  %10074 = vmatprep.subr.bf16.mxu0 %v9825
  %10075 = vmatpush1.bf16.msra.mxu0 %v9824
  %10076 = vmatprep.subr.bf16.mxu0 %v9833
  %10077 = vmatpush1.bf16.msra.mxu0 %v9832
  %10078 = vmatprep.subr.bf16.mxu0 %v9841
  %10079 = vmatpush1.bf16.msra.mxu0 %v9840
  %10080 = vmatprep.subr.bf16.mxu0 %v9849
  %10081 = vmatpush1.bf16.msra.mxu0 %v9848
  %10082 = vmatprep.subr.bf16.mxu0 %v9857
  %10083 = vmatpush1.bf16.msra.mxu0 %v9856
  %10084 = vmatprep.subr.bf16.mxu0 %v9865
  %10085 = vmatpush1.bf16.msra.mxu0 %v9864
  %10086 = vmatprep.subr.bf16.mxu0 %v9873
  %10087 = vmatpush1.bf16.msra.mxu0 %v9872
  %10088 = vmatprep.subr.bf16.mxu0 %v9881
  %10089 = vmatpush1.bf16.msra.mxu0 %v9880
  %10090 = vmatprep.subr.bf16.mxu0 %v9889
  %10091 = vmatpush1.bf16.msra.mxu0 %v9888
  %10092 = vmatprep.subr.bf16.mxu0 %v9897
  %10093 = vmatpush1.bf16.msra.mxu0 %v9896
  %10094 = vmatprep.subr.bf16.mxu0 %v9905
  %10095 = vmatpush1.bf16.msra.mxu0 %v9904
  %10096 = vmatprep.subr.bf16.mxu0 %v9913
  %10097 = vmatpush1.bf16.msra.mxu0 %v9912
  %10098 = vmatprep.subr.bf16.mxu0 %v9921
  %10099 = vmatpush1.bf16.msra.mxu0 %v9920
  %10100 = vmatprep.subr.bf16.mxu0 %v9929
  %10101 = vmatpush1.bf16.msra.mxu0 %v9928
  %10102 = vmatprep.subr.bf16.mxu0 %v9937
  %10103 = vmatpush1.bf16.msra.mxu0 %v9936
  %10104 = vmatprep.mubr.bf16.mxu0 %v9255
  %10105 = vmatmul.mubr.bf16.gmra.mrb[0].mxu0 %v9254
  %v10106 = vpop.f32.mrb[0].mxu0
  %v10107 = vadd.f32 %v9395, %v10106
  %v10108 = vpop.f32.mrb[0].mxu0
  %v10109 = vadd.f32 %v9399, %v10108
  %v10110 = vpop.f32.mrb[0].mxu0
  %v10111 = vadd.f32 %v9395, %v10110
  %v10112 = vpop.f32.mrb[0].mxu0
  %v10113 = vadd.f32 %v9399, %v10112
  %10114 = vmatprep.mubr.bf16.mxu0 %v9257
  %10115 = vmatmul.mubr.bf16.gmra.mrb[0].mxu0 %v9256
  %v10116 = vpop.f32.mrb[0].mxu0
  %v10117 = vadd.f32 %v9395, %v10116
  %v10118 = vpop.f32.mrb[0].mxu0
  %v10119 = vadd.f32 %v9399, %v10118
  %v10120 = vpop.f32.mrb[0].mxu0
  %v10121 = vadd.f32 %v9395, %v10120
  %v10122 = vpop.f32.mrb[0].mxu0
  %v10123 = vadd.f32 %v9399, %v10122
  %10124 = vmatprep.mubr.bf16.mxu0 %v9259
  %10125 = vmatmul.mubr.bf16.gmra.mrb[0].mxu0 %v9258
  %v10126 = vpop.f32.mrb[0].mxu0
  %v10127 = vadd.f32 %v9395, %v10126
  %v10128 = vpop.f32.mrb[0].mxu0
  %v10129 = vadd.f32 %v9399, %v10128
  %v10130 = vpop.f32.mrb[0].mxu0
  %v10131 = vadd.f32 %v9395, %v10130
  %v10132 = vpop.f32.mrb[0].mxu0
  %v10133 = vadd.f32 %v9399, %v10132
  %10134 = vmatprep.mubr.bf16.mxu0 %v9261
  %10135 = vmatmul.mubr.bf16.gmra.mrb[0].mxu0 %v9260
  %v10136 = vpop.f32.mrb[0].mxu0
  %v10137 = vadd.f32 %v9395, %v10136
  %v10138 = vpop.f32.mrb[0].mxu0
  %v10139 = vadd.f32 %v9399, %v10138
  %v10140 = vpop.f32.mrb[0].mxu0
  %v10141 = vadd.f32 %v9395, %v10140
  %v10142 = vpop.f32.mrb[0].mxu0
  %v10143 = vadd.f32 %v9399, %v10142
  %10144 = vdwg.mxu0
  %10145 = vmatprep.subr.bf16.mxu0 %v9819
  %10146 = vmatpush1.bf16.msra.mxu0 %v9818
  %10147 = vmatprep.subr.bf16.mxu0 %v9827
  %10148 = vmatpush1.bf16.msra.mxu0 %v9826
  %10149 = vmatprep.subr.bf16.mxu0 %v9835
  %10150 = vmatpush1.bf16.msra.mxu0 %v9834
  %10151 = vmatprep.subr.bf16.mxu0 %v9843
  %10152 = vmatpush1.bf16.msra.mxu0 %v9842
  %10153 = vmatprep.subr.bf16.mxu0 %v9851
  %10154 = vmatpush1.bf16.msra.mxu0 %v9850
  %10155 = vmatprep.subr.bf16.mxu0 %v9859
  %10156 = vmatpush1.bf16.msra.mxu0 %v9858
  %10157 = vmatprep.subr.bf16.mxu0 %v9867
  %10158 = vmatpush1.bf16.msra.mxu0 %v9866
  %10159 = vmatprep.subr.bf16.mxu0 %v9875
  %10160 = vmatpush1.bf16.msra.mxu0 %v9874
  %10161 = vmatprep.subr.bf16.mxu0 %v9883
  %10162 = vmatpush1.bf16.msra.mxu0 %v9882
  %10163 = vmatprep.subr.bf16.mxu0 %v9891
  %10164 = vmatpush1.bf16.msra.mxu0 %v9890
  %10165 = vmatprep.subr.bf16.mxu0 %v9899
  %10166 = vmatpush1.bf16.msra.mxu0 %v9898
  %10167 = vmatprep.subr.bf16.mxu0 %v9907
  %10168 = vmatpush1.bf16.msra.mxu0 %v9906
  %10169 = vmatprep.subr.bf16.mxu0 %v9915
  %10170 = vmatpush1.bf16.msra.mxu0 %v9914
  %10171 = vmatprep.subr.bf16.mxu0 %v9923
  %10172 = vmatpush1.bf16.msra.mxu0 %v9922
  %10173 = vmatprep.subr.bf16.mxu0 %v9931
  %10174 = vmatpush1.bf16.msra.mxu0 %v9930
  %10175 = vmatprep.subr.bf16.mxu0 %v9939
  %10176 = vmatpush1.bf16.msra.mxu0 %v9938
  %10177 = vmatprep.mubr.bf16.mxu0 %v9255
  %10178 = vmatmul.mubr.bf16.gmra.mrb[0].mxu0 %v9254
  %v10179 = vpop.f32.mrb[0].mxu0
  %v10180 = vadd.f32 %v9403, %v10179
  %v10181 = vpop.f32.mrb[0].mxu0
  %v10182 = vadd.f32 %v9407, %v10181
  %v10183 = vpop.f32.mrb[0].mxu0
  %v10184 = vadd.f32 %v9403, %v10183
  %v10185 = vpop.f32.mrb[0].mxu0
  %v10186 = vadd.f32 %v9407, %v10185
  %10187 = vmatprep.mubr.bf16.mxu0 %v9257
  %10188 = vmatmul.mubr.bf16.gmra.mrb[0].mxu0 %v9256
  %v10189 = vpop.f32.mrb[0].mxu0
  %v10190 = vadd.f32 %v9403, %v10189
  %v10191 = vpop.f32.mrb[0].mxu0
  %v10192 = vadd.f32 %v9407, %v10191
  %v10193 = vpop.f32.mrb[0].mxu0
  %v10194 = vadd.f32 %v9403, %v10193
  %v10195 = vpop.f32.mrb[0].mxu0
  %v10196 = vadd.f32 %v9407, %v10195
  %10197 = vmatprep.mubr.bf16.mxu0 %v9259
  %10198 = vmatmul.mubr.bf16.gmra.mrb[0].mxu0 %v9258
  %v10199 = vpop.f32.mrb[0].mxu0
  %v10200 = vadd.f32 %v9403, %v10199
  %v10201 = vpop.f32.mrb[0].mxu0
  %v10202 = vadd.f32 %v9407, %v10201
  %v10203 = vpop.f32.mrb[0].mxu0
  %v10204 = vadd.f32 %v9403, %v10203
  %v10205 = vpop.f32.mrb[0].mxu0
  %v10206 = vadd.f32 %v9407, %v10205
  %10207 = vmatprep.mubr.bf16.mxu0 %v9261
  %10208 = vmatmul.mubr.bf16.gmra.mrb[0].mxu0 %v9260
  %v10209 = vpop.f32.mrb[0].mxu0
  %v10210 = vadd.f32 %v9403, %v10209
  %v10211 = vpop.f32.mrb[0].mxu0
  %v10212 = vadd.f32 %v9407, %v10211
  %v10213 = vpop.f32.mrb[0].mxu0
  %v10214 = vadd.f32 %v9403, %v10213
  %v10215 = vpop.f32.mrb[0].mxu0
  %v10216 = vadd.f32 %v9407, %v10215
  %10217 = vdwg.mxu0
  %10218 = vmatprep.subr.bf16.mxu0 %v9821
  %10219 = vmatpush1.bf16.msra.mxu0 %v9820
  %10220 = vmatprep.subr.bf16.mxu0 %v9829
  %10221 = vmatpush1.bf16.msra.mxu0 %v9828
  %10222 = vmatprep.subr.bf16.mxu0 %v9837
  %10223 = vmatpush1.bf16.msra.mxu0 %v9836
  %10224 = vmatprep.subr.bf16.mxu0 %v9845
  %10225 = vmatpush1.bf16.msra.mxu0 %v9844
  %10226 = vmatprep.subr.bf16.mxu0 %v9853
  %10227 = vmatpush1.bf16.msra.mxu0 %v9852
  %10228 = vmatprep.subr.bf16.mxu0 %v9861
  %10229 = vmatpush1.bf16.msra.mxu0 %v9860
  %10230 = vmatprep.subr.bf16.mxu0 %v9869
  %10231 = vmatpush1.bf16.msra.mxu0 %v9868
  %10232 = vmatprep.subr.bf16.mxu0 %v9877
  %10233 = vmatpush1.bf16.msra.mxu0 %v9876
  %10234 = vmatprep.subr.bf16.mxu0 %v9885
  %10235 = vmatpush1.bf16.msra.mxu0 %v9884
  %10236 = vmatprep.subr.bf16.mxu0 %v9893
  %10237 = vmatpush1.bf16.msra.mxu0 %v9892
  %10238 = vmatprep.subr.bf16.mxu0 %v9901
  %10239 = vmatpush1.bf16.msra.mxu0 %v9900
  %10240 = vmatprep.subr.bf16.mxu0 %v9909
  %10241 = vmatpush1.bf16.msra.mxu0 %v9908
  %10242 = vmatprep.subr.bf16.mxu0 %v9917
  %10243 = vmatpush1.bf16.msra.mxu0 %v9916
  %10244 = vmatprep.subr.bf16.mxu0 %v9925
  %10245 = vmatpush1.bf16.msra.mxu0 %v9924
  %10246 = vmatprep.subr.bf16.mxu0 %v9933
  %10247 = vmatpush1.bf16.msra.mxu0 %v9932
  %10248 = vmatprep.subr.bf16.mxu0 %v9941
  %10249 = vmatpush1.bf16.msra.mxu0 %v9940
  %10250 = vmatprep.mubr.bf16.mxu0 %v9255
  %10251 = vmatmul.mubr.bf16.gmra.mrb[0].mxu0 %v9254
  %v10252 = vpop.f32.mrb[0].mxu0
  %v10253 = vadd.f32 %v9411, %v10252
  %v10254 = vpop.f32.mrb[0].mxu0
  %v10255 = vadd.f32 %v9415, %v10254
  %v10256 = vpop.f32.mrb[0].mxu0
  %v10257 = vadd.f32 %v9411, %v10256
  %v10258 = vpop.f32.mrb[0].mxu0
  %v10259 = vadd.f32 %v9415, %v10258
  %10260 = vmatprep.mubr.bf16.mxu0 %v9257
  %10261 = vmatmul.mubr.bf16.gmra.mrb[0].mxu0 %v9256
  %v10262 = vpop.f32.mrb[0].mxu0
  %v10263 = vadd.f32 %v9411, %v10262
  %v10264 = vpop.f32.mrb[0].mxu0
  %v10265 = vadd.f32 %v9415, %v10264
  %v10266 = vpop.f32.mrb[0].mxu0
  %v10267 = vadd.f32 %v9411, %v10266
  %v10268 = vpop.f32.mrb[0].mxu0
  %v10269 = vadd.f32 %v9415, %v10268
  %10270 = vmatprep.mubr.bf16.mxu0 %v9259
  %10271 = vmatmul.mubr.bf16.gmra.mrb[0].mxu0 %v9258
  %v10272 = vpop.f32.mrb[0].mxu0
  %v10273 = vadd.f32 %v9411, %v10272
  %v10274 = vpop.f32.mrb[0].mxu0
  %v10275 = vadd.f32 %v9415, %v10274
  %v10276 = vpop.f32.mrb[0].mxu0
  %v10277 = vadd.f32 %v9411, %v10276
  %v10278 = vpop.f32.mrb[0].mxu0
  %v10279 = vadd.f32 %v9415, %v10278
  %10280 = vmatprep.mubr.bf16.mxu0 %v9261
  %10281 = vmatmul.mubr.bf16.gmra.mrb[0].mxu0 %v9260
  %v10282 = vpop.f32.mrb[0].mxu0
  %v10283 = vadd.f32 %v9411, %v10282
  %v10284 = vpop.f32.mrb[0].mxu0
  %v10285 = vadd.f32 %v9415, %v10284
  %v10286 = vpop.f32.mrb[0].mxu0
  %v10287 = vadd.f32 %v9411, %v10286
  %v10288 = vpop.f32.mrb[0].mxu0
  %v10289 = vadd.f32 %v9415, %v10288
  %10290 = vdwg.mxu0
  %10291 = vmatprep.subr.bf16.mxu0 %v9823
  %10292 = vmatpush1.bf16.msra.mxu0 %v9822
  %10293 = vmatprep.subr.bf16.mxu0 %v9831
  %10294 = vmatpush1.bf16.msra.mxu0 %v9830
  %10295 = vmatprep.subr.bf16.mxu0 %v9839
  %10296 = vmatpush1.bf16.msra.mxu0 %v9838
  %10297 = vmatprep.subr.bf16.mxu0 %v9847
  %10298 = vmatpush1.bf16.msra.mxu0 %v9846
  %10299 = vmatprep.subr.bf16.mxu0 %v9855
  %10300 = vmatpush1.bf16.msra.mxu0 %v9854
  %10301 = vmatprep.subr.bf16.mxu0 %v9863
  %10302 = vmatpush1.bf16.msra.mxu0 %v9862
  %10303 = vmatprep.subr.bf16.mxu0 %v9871
  %10304 = vmatpush1.bf16.msra.mxu0 %v9870
  %10305 = vmatprep.subr.bf16.mxu0 %v9879
  %10306 = vmatpush1.bf16.msra.mxu0 %v9878
  %10307 = vmatprep.subr.bf16.mxu0 %v9887
  %10308 = vmatpush1.bf16.msra.mxu0 %v9886
  %10309 = vmatprep.subr.bf16.mxu0 %v9895
  %10310 = vmatpush1.bf16.msra.mxu0 %v9894
  %10311 = vmatprep.subr.bf16.mxu0 %v9903
  %10312 = vmatpush1.bf16.msra.mxu0 %v9902
  %10313 = vmatprep.subr.bf16.mxu0 %v9911
  %10314 = vmatpush1.bf16.msra.mxu0 %v9910
  %10315 = vmatprep.subr.bf16.mxu0 %v9919
  %10316 = vmatpush1.bf16.msra.mxu0 %v9918
  %10317 = vmatprep.subr.bf16.mxu0 %v9927
  %10318 = vmatpush1.bf16.msra.mxu0 %v9926
  %10319 = vmatprep.subr.bf16.mxu0 %v9935
  %10320 = vmatpush1.bf16.msra.mxu0 %v9934
  %10321 = vmatprep.subr.bf16.mxu0 %v9943
  %10322 = vmatpush1.bf16.msra.mxu0 %v9942
  %10323 = vmatprep.mubr.bf16.mxu0 %v9255
  %10324 = vmatmul.mubr.bf16.gmra.mrb[0].mxu0 %v9254
  %v10325 = vpop.f32.mrb[0].mxu0
  %v10326 = vadd.f32 %v9419, %v10325
  %v10327 = vpop.f32.mrb[0].mxu0
  %v10328 = vadd.f32 %v9423, %v10327
  %v10329 = vpop.f32.mrb[0].mxu0
  %v10330 = vadd.f32 %v9419, %v10329
  %v10331 = vpop.f32.mrb[0].mxu0
  %v10332 = vadd.f32 %v9423, %v10331
  %10333 = vmatprep.mubr.bf16.mxu0 %v9257
  %10334 = vmatmul.mubr.bf16.gmra.mrb[0].mxu0 %v9256
  %v10335 = vpop.f32.mrb[0].mxu0
  %v10336 = vadd.f32 %v9419, %v10335
  %v10337 = vpop.f32.mrb[0].mxu0
  %v10338 = vadd.f32 %v9423, %v10337
  %v10339 = vpop.f32.mrb[0].mxu0
  %v10340 = vadd.f32 %v9419, %v10339
  %v10341 = vpop.f32.mrb[0].mxu0
  %v10342 = vadd.f32 %v9423, %v10341
  %10343 = vmatprep.mubr.bf16.mxu0 %v9259
  %10344 = vmatmul.mubr.bf16.gmra.mrb[0].mxu0 %v9258
  %v10345 = vpop.f32.mrb[0].mxu0
  %v10346 = vadd.f32 %v9419, %v10345
  %v10347 = vpop.f32.mrb[0].mxu0
  %v10348 = vadd.f32 %v9423, %v10347
  %v10349 = vpop.f32.mrb[0].mxu0
  %v10350 = vadd.f32 %v9419, %v10349
  %v10351 = vpop.f32.mrb[0].mxu0
  %v10352 = vadd.f32 %v9423, %v10351
  %10353 = vmatprep.mubr.bf16.mxu0 %v9261
  %10354 = vmatmul.mubr.bf16.gmra.mrb[0].mxu0 %v9260
  %v10355 = vpop.f32.mrb[0].mxu0
  %v10356 = vadd.f32 %v9419, %v10355
  %v10357 = vpop.f32.mrb[0].mxu0
  %v10358 = vadd.f32 %v9423, %v10357
  %v10359 = vpop.f32.mrb[0].mxu0
  %v10360 = vadd.f32 %v9419, %v10359
  %v10361 = vpop.f32.mrb[0].mxu0
  %v10362 = vadd.f32 %v9423, %v10361
  %10363 = vdwg.mxu0
  %10364 = vst [vmem:[#allocation2] sm:$0xff] %v10107
  %10365 = vst [vmem:[#allocation2 + $0x8] sm:$0xff] %v10109
  %10366 = vst [vmem:[#allocation2 + $0x10] sm:$0xff] %v10180
  %10367 = vst [vmem:[#allocation2 + $0x18] sm:$0xff] %v10182
  %10368 = vst [vmem:[#allocation2 + $0x20] sm:$0xff] %v10253
  %10369 = vst [vmem:[#allocation2 + $0x28] sm:$0xff] %v10255
  %10370 = vst [vmem:[#allocation2 + $0x30] sm:$0xff] %v10326
  %10371 = vst [vmem:[#allocation2 + $0x38] sm:$0xff] %v10328
  %10372 = vst [vmem:[#allocation2 + $0x40] sm:$0xff] %v10111
  %10373 = vst [vmem:[#allocation2 + $0x48] sm:$0xff] %v10113
  %10374 = vst [vmem:[#allocation2 + $0x50] sm:$0xff] %v10184
  %10375 = vst [vmem:[#allocation2 + $0x58] sm:$0xff] %v10186
  %10376 = vst [vmem:[#allocation2 + $0x60] sm:$0xff] %v10257
  %10377 = vst [vmem:[#allocation2 + $0x68] sm:$0xff] %v10259
  %10378 = vst [vmem:[#allocation2 + $0x70] sm:$0xff] %v10330
  %10379 = vst [vmem:[#allocation2 + $0x78] sm:$0xff] %v10332
  %10380 = vst [vmem:[#allocation2 + $0x80] sm:$0xff] %v10117
  %10381 = vst [vmem:[#allocation2 + $0x88] sm:$0xff] %v10119
  %10382 = vst [vmem:[#allocation2 + $0x90] sm:$0xff] %v10190
  %10383 = vst [vmem:[#allocation2 + $0x98] sm:$0xff] %v10192
  %10384 = vst [vmem:[#allocation2 + $0xa0] sm:$0xff] %v10263
  %10385 = vst [vmem:[#allocation2 + $0xa8] sm:$0xff] %v10265
  %10386 = vst [vmem:[#allocation2 + $0xb0] sm:$0xff] %v10336
  %10387 = vst [vmem:[#allocation2 + $0xb8] sm:$0xff] %v10338
  %10388 = vst [vmem:[#allocation2 + $0xc0] sm:$0xff] %v10121
  %10389 = vst [vmem:[#allocation2 + $0xc8] sm:$0xff] %v10123
  %10390 = vst [vmem:[#allocation2 + $0xd0] sm:$0xff] %v10194
  %10391 = vst [vmem:[#allocation2 + $0xd8] sm:$0xff] %v10196
  %10392 = vst [vmem:[#allocation2 + $0xe0] sm:$0xff] %v10267
  %10393 = vst [vmem:[#allocation2 + $0xe8] sm:$0xff] %v10269
  %10394 = vst [vmem:[#allocation2 + $0xf0] sm:$0xff] %v10340
  %10395 = vst [vmem:[#allocation2 + $0xf8] sm:$0xff] %v10342
  %10396 = vst [vmem:[#allocation2 + $0x100] sm:$0xff] %v10127
  %10397 = vst [vmem:[#allocation2 + $0x108] sm:$0xff] %v10129
  %10398 = vst [vmem:[#allocation2 + $0x110] sm:$0xff] %v10200
  %10399 = vst [vmem:[#allocation2 + $0x118] sm:$0xff] %v10202
  %10400 = vst [vmem:[#allocation2 + $0x120] sm:$0xff] %v10273
  %10401 = vst [vmem:[#allocation2 + $0x128] sm:$0xff] %v10275
  %10402 = vst [vmem:[#allocation2 + $0x130] sm:$0xff] %v10346
  %10403 = vst [vmem:[#allocation2 + $0x138] sm:$0xff] %v10348
  %10404 = vst [vmem:[#allocation2 + $0x140] sm:$0xff] %v10131
  %10405 = vst [vmem:[#allocation2 + $0x148] sm:$0xff] %v10133
  %10406 = vst [vmem:[#allocation2 + $0x150] sm:$0xff] %v10204
  %10407 = vst [vmem:[#allocation2 + $0x158] sm:$0xff] %v10206
  %10408 = vst [vmem:[#allocation2 + $0x160] sm:$0xff] %v10277
  %10409 = vst [vmem:[#allocation2 + $0x168] sm:$0xff] %v10279
  %10410 = vst [vmem:[#allocation2 + $0x170] sm:$0xff] %v10350
  %10411 = vst [vmem:[#allocation2 + $0x178] sm:$0xff] %v10352
  %10412 = vst [vmem:[#allocation2 + $0x180] sm:$0xff] %v10137
  %10413 = vst [vmem:[#allocation2 + $0x188] sm:$0xff] %v10139
  %10414 = vst [vmem:[#allocation2 + $0x190] sm:$0xff] %v10210
  %10415 = vst [vmem:[#allocation2 + $0x198] sm:$0xff] %v10212
  %10416 = vst [vmem:[#allocation2 + $0x1a0] sm:$0xff] %v10283
  %10417 = vst [vmem:[#allocation2 + $0x1a8] sm:$0xff] %v10285
  %10418 = vst [vmem:[#allocation2 + $0x1b0] sm:$0xff] %v10356
  %10419 = vst [vmem:[#allocation2 + $0x1b8] sm:$0xff] %v10358
  %10420 = vst [vmem:[#allocation2 + $0x1c0] sm:$0xff] %v10141
  %10421 = vst [vmem:[#allocation2 + $0x1c8] sm:$0xff] %v10143
  %10422 = vst [vmem:[#allocation2 + $0x1d0] sm:$0xff] %v10214
  %10423 = vst [vmem:[#allocation2 + $0x1d8] sm:$0xff] %v10216
  %10424 = vst [vmem:[#allocation2 + $0x1e0] sm:$0xff] %v10287
  %10425 = vst [vmem:[#allocation2 + $0x1e8] sm:$0xff] %v10289
  %10426 = vst [vmem:[#allocation2 + $0x1f0] sm:$0xff] %v10360
  %10427 = vst [vmem:[#allocation2 + $0x1f8] sm:$0xff] %v10362
  %v10428 = vld [vmem:[#allocation2] sm:$0xff]
  %v10429 = vld [vmem:[#allocation2 + $0x8] sm:$0xff]
  %v10430 = vld [vmem:[#allocation2 + $0x10] sm:$0xff]
  %v10431 = vld [vmem:[#allocation2 + $0x18] sm:$0xff]
  %v10432 = vld [vmem:[#allocation2 + $0x20] sm:$0xff]
  %v10433 = vld [vmem:[#allocation2 + $0x28] sm:$0xff]
  %v10434 = vld [vmem:[#allocation2 + $0x30] sm:$0xff]
  %v10435 = vld [vmem:[#allocation2 + $0x38] sm:$0xff]
  %v10436 = vld [vmem:[#allocation2 + $0x1c0] sm:$0xff]
  %v10437 = vld [vmem:[#allocation2 + $0x1c8] sm:$0xff]
  %v10438 = vld [vmem:[#allocation2 + $0x1d0] sm:$0xff]
  %v10439 = vld [vmem:[#allocation2 + $0x1d8] sm:$0xff]
  %v10440 = vld [vmem:[#allocation2 + $0x1e0] sm:$0xff]
  %v10441 = vld [vmem:[#allocation2 + $0x1e8] sm:$0xff]
  %v10442 = vld [vmem:[#allocation2 + $0x1f0] sm:$0xff]
  %v10443 = vld [vmem:[#allocation2 + $0x1f8] sm:$0xff]
  %v10444 = vsel %vm318, %v10428, %v10436
  %v10445 = vsel %vm319, %v10429, %v10437
  %v10446 = vsel %vm320, %v10430, %v10438
  %v10447 = vsel %vm321, %v10431, %v10439
  %v10448 = vsel %vm322, %v10432, %v10440
  %v10449 = vsel %vm323, %v10433, %v10441
  %v10450 = vsel %vm324, %v10434, %v10442
  %v10451 = vsel %vm325, %v10435, %v10443
  %v10452 = vld [vmem:[%s7] sm:$0xff]
  %v10453 = vld [vmem:[%s7 + $0x8] sm:$0xff]
  %v10454 = vld [vmem:[%s7 + $0x10] sm:$0xff]
  %v10455 = vld [vmem:[%s7 + $0x18] sm:$0xff]
  %v10456 = vld [vmem:[%s7 + $0x20] sm:$0xff]
  %v10457 = vld [vmem:[%s7 + $0x28] sm:$0xff]
  %v10458 = vld [vmem:[%s7 + $0x30] sm:$0xff]
  %v10459 = vld [vmem:[%s7 + $0x38] sm:$0xff]
  %v10460 = vld [vmem:[%s7 + $0x40] sm:$0xff]
  %v10461 = vld [vmem:[%s7 + $0x48] sm:$0xff]
  %v10462 = vld [vmem:[%s7 + $0x50] sm:$0xff]
  %v10463 = vld [vmem:[%s7 + $0x58] sm:$0xff]
  %v10464 = vld [vmem:[%s7 + $0x60] sm:$0xff]
  %v10465 = vld [vmem:[%s7 + $0x68] sm:$0xff]
  %v10466 = vld [vmem:[%s7 + $0x70] sm:$0xff]
  %v10467 = vld [vmem:[%s7 + $0x78] sm:$0xff]
  %v10468 = vld [vmem:[%s7 + $0x80] sm:$0xff]
  %v10469 = vld [vmem:[%s7 + $0x88] sm:$0xff]
  %v10470 = vld [vmem:[%s7 + $0x90] sm:$0xff]
  %v10471 = vld [vmem:[%s7 + $0x98] sm:$0xff]
  %v10472 = vld [vmem:[%s7 + $0xa0] sm:$0xff]
  %v10473 = vld [vmem:[%s7 + $0xa8] sm:$0xff]
  %v10474 = vld [vmem:[%s7 + $0xb0] sm:$0xff]
  %v10475 = vld [vmem:[%s7 + $0xb8] sm:$0xff]
  %v10476 = vld [vmem:[%s7 + $0xc0] sm:$0xff]
  %v10477 = vld [vmem:[%s7 + $0xc8] sm:$0xff]
  %v10478 = vld [vmem:[%s7 + $0xd0] sm:$0xff]
  %v10479 = vld [vmem:[%s7 + $0xd8] sm:$0xff]
  %v10480 = vld [vmem:[%s7 + $0xe0] sm:$0xff]
  %v10481 = vld [vmem:[%s7 + $0xe8] sm:$0xff]
  %v10482 = vld [vmem:[%s7 + $0xf0] sm:$0xff]
  %v10483 = vld [vmem:[%s7 + $0xf8] sm:$0xff]
  %v10484 = vld [vmem:[%s7 + $0x100] sm:$0xff]
  %v10485 = vld [vmem:[%s7 + $0x108] sm:$0xff]
  %v10486 = vld [vmem:[%s7 + $0x110] sm:$0xff]
  %v10487 = vld [vmem:[%s7 + $0x118] sm:$0xff]
  %v10488 = vld [vmem:[%s7 + $0x120] sm:$0xff]
  %v10489 = vld [vmem:[%s7 + $0x128] sm:$0xff]
  %v10490 = vld [vmem:[%s7 + $0x130] sm:$0xff]
  %v10491 = vld [vmem:[%s7 + $0x138] sm:$0xff]
  %v10492 = vld [vmem:[%s7 + $0x140] sm:$0xff]
  %v10493 = vld [vmem:[%s7 + $0x148] sm:$0xff]
  %v10494 = vld [vmem:[%s7 + $0x150] sm:$0xff]
  %v10495 = vld [vmem:[%s7 + $0x158] sm:$0xff]
  %v10496 = vld [vmem:[%s7 + $0x160] sm:$0xff]
  %v10497 = vld [vmem:[%s7 + $0x168] sm:$0xff]
  %v10498 = vld [vmem:[%s7 + $0x170] sm:$0xff]
  %v10499 = vld [vmem:[%s7 + $0x178] sm:$0xff]
  %v10500 = vld [vmem:[%s7 + $0x180] sm:$0xff]
  %v10501 = vld [vmem:[%s7 + $0x188] sm:$0xff]
  %v10502 = vld [vmem:[%s7 + $0x190] sm:$0xff]
  %v10503 = vld [vmem:[%s7 + $0x198] sm:$0xff]
  %v10504 = vld [vmem:[%s7 + $0x1a0] sm:$0xff]
  %v10505 = vld [vmem:[%s7 + $0x1a8] sm:$0xff]
  %v10506 = vld [vmem:[%s7 + $0x1b0] sm:$0xff]
  %v10507 = vld [vmem:[%s7 + $0x1b8] sm:$0xff]
  %v10508 = vld [vmem:[%s7 + $0x1c0] sm:$0xff]
  %v10509 = vld [vmem:[%s7 + $0x1c8] sm:$0xff]
  %v10510 = vld [vmem:[%s7 + $0x1d0] sm:$0xff]
  %v10511 = vld [vmem:[%s7 + $0x1d8] sm:$0xff]
  %v10512 = vld [vmem:[%s7 + $0x1e0] sm:$0xff]
  %v10513 = vld [vmem:[%s7 + $0x1e8] sm:$0xff]
  %v10514 = vld [vmem:[%s7 + $0x1f0] sm:$0xff]
  %v10515 = vld [vmem:[%s7 + $0x1f8] sm:$0xff]
  %v10516 = vld [vmem:[%s7 + $0x200] sm:$0xff]
  %v10517 = vld [vmem:[%s7 + $0x208] sm:$0xff]
  %v10518 = vld [vmem:[%s7 + $0x210] sm:$0xff]
  %v10519 = vld [vmem:[%s7 + $0x218] sm:$0xff]
  %v10520 = vld [vmem:[%s7 + $0x220] sm:$0xff]
  %v10521 = vld [vmem:[%s7 + $0x228] sm:$0xff]
  %v10522 = vld [vmem:[%s7 + $0x230] sm:$0xff]
  %v10523 = vld [vmem:[%s7 + $0x238] sm:$0xff]
  %v10524 = vld [vmem:[%s7 + $0x240] sm:$0xff]
  %v10525 = vld [vmem:[%s7 + $0x248] sm:$0xff]
  %v10526 = vld [vmem:[%s7 + $0x250] sm:$0xff]
  %v10527 = vld [vmem:[%s7 + $0x258] sm:$0xff]
  %v10528 = vld [vmem:[%s7 + $0x260] sm:$0xff]
  %v10529 = vld [vmem:[%s7 + $0x268] sm:$0xff]
  %v10530 = vld [vmem:[%s7 + $0x270] sm:$0xff]
  %v10531 = vld [vmem:[%s7 + $0x278] sm:$0xff]
  %v10532 = vld [vmem:[%s7 + $0x280] sm:$0xff]
  %v10533 = vld [vmem:[%s7 + $0x288] sm:$0xff]
  %v10534 = vld [vmem:[%s7 + $0x290] sm:$0xff]
  %v10535 = vld [vmem:[%s7 + $0x298] sm:$0xff]
  %v10536 = vld [vmem:[%s7 + $0x2a0] sm:$0xff]
  %v10537 = vld [vmem:[%s7 + $0x2a8] sm:$0xff]
  %v10538 = vld [vmem:[%s7 + $0x2b0] sm:$0xff]
  %v10539 = vld [vmem:[%s7 + $0x2b8] sm:$0xff]
  %v10540 = vld [vmem:[%s7 + $0x2c0] sm:$0xff]
  %v10541 = vld [vmem:[%s7 + $0x2c8] sm:$0xff]
  %v10542 = vld [vmem:[%s7 + $0x2d0] sm:$0xff]
  %v10543 = vld [vmem:[%s7 + $0x2d8] sm:$0xff]
  %v10544 = vld [vmem:[%s7 + $0x2e0] sm:$0xff]
  %v10545 = vld [vmem:[%s7 + $0x2e8] sm:$0xff]
  %v10546 = vld [vmem:[%s7 + $0x2f0] sm:$0xff]
  %v10547 = vld [vmem:[%s7 + $0x2f8] sm:$0xff]
  %v10548 = vld [vmem:[%s7 + $0x300] sm:$0xff]
  %v10549 = vld [vmem:[%s7 + $0x308] sm:$0xff]
  %v10550 = vld [vmem:[%s7 + $0x310] sm:$0xff]
  %v10551 = vld [vmem:[%s7 + $0x318] sm:$0xff]
  %v10552 = vld [vmem:[%s7 + $0x320] sm:$0xff]
  %v10553 = vld [vmem:[%s7 + $0x328] sm:$0xff]
  %v10554 = vld [vmem:[%s7 + $0x330] sm:$0xff]
  %v10555 = vld [vmem:[%s7 + $0x338] sm:$0xff]
  %v10556 = vld [vmem:[%s7 + $0x340] sm:$0xff]
  %v10557 = vld [vmem:[%s7 + $0x348] sm:$0xff]
  %v10558 = vld [vmem:[%s7 + $0x350] sm:$0xff]
  %v10559 = vld [vmem:[%s7 + $0x358] sm:$0xff]
  %v10560 = vld [vmem:[%s7 + $0x360] sm:$0xff]
  %v10561 = vld [vmem:[%s7 + $0x368] sm:$0xff]
  %v10562 = vld [vmem:[%s7 + $0x370] sm:$0xff]
  %v10563 = vld [vmem:[%s7 + $0x378] sm:$0xff]
  %v10564 = vld [vmem:[%s7 + $0x380] sm:$0xff]
  %v10565 = vld [vmem:[%s7 + $0x388] sm:$0xff]
  %v10566 = vld [vmem:[%s7 + $0x390] sm:$0xff]
  %v10567 = vld [vmem:[%s7 + $0x398] sm:$0xff]
  %v10568 = vld [vmem:[%s7 + $0x3a0] sm:$0xff]
  %v10569 = vld [vmem:[%s7 + $0x3a8] sm:$0xff]
  %v10570 = vld [vmem:[%s7 + $0x3b0] sm:$0xff]
  %v10571 = vld [vmem:[%s7 + $0x3b8] sm:$0xff]
  %v10572 = vld [vmem:[%s7 + $0x3c0] sm:$0xff]
  %v10573 = vld [vmem:[%s7 + $0x3c8] sm:$0xff]
  %v10574 = vld [vmem:[%s7 + $0x3d0] sm:$0xff]
  %v10575 = vld [vmem:[%s7 + $0x3d8] sm:$0xff]
  %v10576 = vld [vmem:[%s7 + $0x3e0] sm:$0xff]
  %v10577 = vld [vmem:[%s7 + $0x3e8] sm:$0xff]
  %v10578 = vld [vmem:[%s7 + $0x3f0] sm:$0xff]
  %v10579 = vld [vmem:[%s7 + $0x3f8] sm:$0xff]
  %v10708 = vunpack.c.l.b16 %v10452
  %v10709 = vunpack.c.h.b16 %v10452
  %v10710 = vunpack.c.l.b16 %v10453
  %v10711 = vunpack.c.h.b16 %v10453
  %v10712 = vunpack.c.l.b16 %v10454
  %v10713 = vunpack.c.h.b16 %v10454
  %v10714 = vunpack.c.l.b16 %v10455
  %v10715 = vunpack.c.h.b16 %v10455
  %v10716 = vunpack.c.l.b16 %v10456
  %v10717 = vunpack.c.h.b16 %v10456
  %v10718 = vunpack.c.l.b16 %v10457
  %v10719 = vunpack.c.h.b16 %v10457
  %v10720 = vunpack.c.l.b16 %v10458
  %v10721 = vunpack.c.h.b16 %v10458
  %v10722 = vunpack.c.l.b16 %v10459
  %v10723 = vunpack.c.h.b16 %v10459
  %v10724 = vunpack.c.l.b16 %v10460
  %v10725 = vunpack.c.h.b16 %v10460
  %v10726 = vunpack.c.l.b16 %v10461
  %v10727 = vunpack.c.h.b16 %v10461
  %v10728 = vunpack.c.l.b16 %v10462
  %v10729 = vunpack.c.h.b16 %v10462
  %v10730 = vunpack.c.l.b16 %v10463
  %v10731 = vunpack.c.h.b16 %v10463
  %v10732 = vunpack.c.l.b16 %v10464
  %v10733 = vunpack.c.h.b16 %v10464
  %v10734 = vunpack.c.l.b16 %v10465
  %v10735 = vunpack.c.h.b16 %v10465
  %v10736 = vunpack.c.l.b16 %v10466
  %v10737 = vunpack.c.h.b16 %v10466
  %v10738 = vunpack.c.l.b16 %v10467
  %v10739 = vunpack.c.h.b16 %v10467
  %v10740 = vunpack.c.l.b16 %v10468
  %v10741 = vunpack.c.h.b16 %v10468
  %v10742 = vunpack.c.l.b16 %v10469
  %v10743 = vunpack.c.h.b16 %v10469
  %v10744 = vunpack.c.l.b16 %v10470
  %v10745 = vunpack.c.h.b16 %v10470
  %v10746 = vunpack.c.l.b16 %v10471
  %v10747 = vunpack.c.h.b16 %v10471
  %v10748 = vunpack.c.l.b16 %v10472
  %v10749 = vunpack.c.h.b16 %v10472
  %v10750 = vunpack.c.l.b16 %v10473
  %v10751 = vunpack.c.h.b16 %v10473
  %v10752 = vunpack.c.l.b16 %v10474
  %v10753 = vunpack.c.h.b16 %v10474
  %v10754 = vunpack.c.l.b16 %v10475
  %v10755 = vunpack.c.h.b16 %v10475
  %v10756 = vunpack.c.l.b16 %v10476
  %v10757 = vunpack.c.h.b16 %v10476
  %v10758 = vunpack.c.l.b16 %v10477
  %v10759 = vunpack.c.h.b16 %v10477
  %v10760 = vunpack.c.l.b16 %v10478
  %v10761 = vunpack.c.h.b16 %v10478
  %v10762 = vunpack.c.l.b16 %v10479
  %v10763 = vunpack.c.h.b16 %v10479
  %v10764 = vunpack.c.l.b16 %v10480
  %v10765 = vunpack.c.h.b16 %v10480
  %v10766 = vunpack.c.l.b16 %v10481
  %v10767 = vunpack.c.h.b16 %v10481
  %v10768 = vunpack.c.l.b16 %v10482
  %v10769 = vunpack.c.h.b16 %v10482
  %v10770 = vunpack.c.l.b16 %v10483
  %v10771 = vunpack.c.h.b16 %v10483
  %v10772 = vunpack.c.l.b16 %v10484
  %v10773 = vunpack.c.h.b16 %v10484
  %v10774 = vunpack.c.l.b16 %v10485
  %v10775 = vunpack.c.h.b16 %v10485
  %v10776 = vunpack.c.l.b16 %v10486
  %v10777 = vunpack.c.h.b16 %v10486
  %v10778 = vunpack.c.l.b16 %v10487
  %v10779 = vunpack.c.h.b16 %v10487
  %v10780 = vunpack.c.l.b16 %v10488
  %v10781 = vunpack.c.h.b16 %v10488
  %v10782 = vunpack.c.l.b16 %v10489
  %v10783 = vunpack.c.h.b16 %v10489
  %v10784 = vunpack.c.l.b16 %v10490
  %v10785 = vunpack.c.h.b16 %v10490
  %v10786 = vunpack.c.l.b16 %v10491
  %v10787 = vunpack.c.h.b16 %v10491
  %v10788 = vunpack.c.l.b16 %v10492
  %v10789 = vunpack.c.h.b16 %v10492
  %v10790 = vunpack.c.l.b16 %v10493
  %v10791 = vunpack.c.h.b16 %v10493
  %v10792 = vunpack.c.l.b16 %v10494
  %v10793 = vunpack.c.h.b16 %v10494
  %v10794 = vunpack.c.l.b16 %v10495
  %v10795 = vunpack.c.h.b16 %v10495
  %v10796 = vunpack.c.l.b16 %v10496
  %v10797 = vunpack.c.h.b16 %v10496
  %v10798 = vunpack.c.l.b16 %v10497
  %v10799 = vunpack.c.h.b16 %v10497
  %v10800 = vunpack.c.l.b16 %v10498
  %v10801 = vunpack.c.h.b16 %v10498
  %v10802 = vunpack.c.l.b16 %v10499
  %v10803 = vunpack.c.h.b16 %v10499
  %v10804 = vunpack.c.l.b16 %v10500
  %v10805 = vunpack.c.h.b16 %v10500
  %v10806 = vunpack.c.l.b16 %v10501
  %v10807 = vunpack.c.h.b16 %v10501
  %v10808 = vunpack.c.l.b16 %v10502
  %v10809 = vunpack.c.h.b16 %v10502
  %v10810 = vunpack.c.l.b16 %v10503
  %v10811 = vunpack.c.h.b16 %v10503
  %v10812 = vunpack.c.l.b16 %v10504
  %v10813 = vunpack.c.h.b16 %v10504
  %v10814 = vunpack.c.l.b16 %v10505
  %v10815 = vunpack.c.h.b16 %v10505
  %v10816 = vunpack.c.l.b16 %v10506
  %v10817 = vunpack.c.h.b16 %v10506
  %v10818 = vunpack.c.l.b16 %v10507
  %v10819 = vunpack.c.h.b16 %v10507
  %v10820 = vunpack.c.l.b16 %v10508
  %v10821 = vunpack.c.h.b16 %v10508
  %v10822 = vunpack.c.l.b16 %v10509
  %v10823 = vunpack.c.h.b16 %v10509
  %v10824 = vunpack.c.l.b16 %v10510
  %v10825 = vunpack.c.h.b16 %v10510
  %v10826 = vunpack.c.l.b16 %v10511
  %v10827 = vunpack.c.h.b16 %v10511
  %v10828 = vunpack.c.l.b16 %v10512
  %v10829 = vunpack.c.h.b16 %v10512
  %v10830 = vunpack.c.l.b16 %v10513
  %v10831 = vunpack.c.h.b16 %v10513
  %v10832 = vunpack.c.l.b16 %v10514
  %v10833 = vunpack.c.h.b16 %v10514
  %v10834 = vunpack.c.l.b16 %v10515
  %v10835 = vunpack.c.h.b16 %v10515
  %v10836 = vunpack.c.l.b16 %v10516
  %v10837 = vunpack.c.h.b16 %v10516
  %v10838 = vunpack.c.l.b16 %v10517
  %v10839 = vunpack.c.h.b16 %v10517
  %v10840 = vunpack.c.l.b16 %v10518
  %v10841 = vunpack.c.h.b16 %v10518
  %v10842 = vunpack.c.l.b16 %v10519
  %v10843 = vunpack.c.h.b16 %v10519
  %v10844 = vunpack.c.l.b16 %v10520
  %v10845 = vunpack.c.h.b16 %v10520
  %v10846 = vunpack.c.l.b16 %v10521
  %v10847 = vunpack.c.h.b16 %v10521
  %v10848 = vunpack.c.l.b16 %v10522
  %v10849 = vunpack.c.h.b16 %v10522
  %v10850 = vunpack.c.l.b16 %v10523
  %v10851 = vunpack.c.h.b16 %v10523
  %v10852 = vunpack.c.l.b16 %v10524
  %v10853 = vunpack.c.h.b16 %v10524
  %v10854 = vunpack.c.l.b16 %v10525
  %v10855 = vunpack.c.h.b16 %v10525
  %v10856 = vunpack.c.l.b16 %v10526
  %v10857 = vunpack.c.h.b16 %v10526
  %v10858 = vunpack.c.l.b16 %v10527
  %v10859 = vunpack.c.h.b16 %v10527
  %v10860 = vunpack.c.l.b16 %v10528
  %v10861 = vunpack.c.h.b16 %v10528
  %v10862 = vunpack.c.l.b16 %v10529
  %v10863 = vunpack.c.h.b16 %v10529
  %v10864 = vunpack.c.l.b16 %v10530
  %v10865 = vunpack.c.h.b16 %v10530
  %v10866 = vunpack.c.l.b16 %v10531
  %v10867 = vunpack.c.h.b16 %v10531
  %v10868 = vunpack.c.l.b16 %v10532
  %v10869 = vunpack.c.h.b16 %v10532
  %v10870 = vunpack.c.l.b16 %v10533
  %v10871 = vunpack.c.h.b16 %v10533
  %v10872 = vunpack.c.l.b16 %v10534
  %v10873 = vunpack.c.h.b16 %v10534
  %v10874 = vunpack.c.l.b16 %v10535
  %v10875 = vunpack.c.h.b16 %v10535
  %v10876 = vunpack.c.l.b16 %v10536
  %v10877 = vunpack.c.h.b16 %v10536
  %v10878 = vunpack.c.l.b16 %v10537
  %v10879 = vunpack.c.h.b16 %v10537
  %v10880 = vunpack.c.l.b16 %v10538
  %v10881 = vunpack.c.h.b16 %v10538
  %v10882 = vunpack.c.l.b16 %v10539
  %v10883 = vunpack.c.h.b16 %v10539
  %v10884 = vunpack.c.l.b16 %v10540
  %v10885 = vunpack.c.h.b16 %v10540
  %v10886 = vunpack.c.l.b16 %v10541
  %v10887 = vunpack.c.h.b16 %v10541
  %v10888 = vunpack.c.l.b16 %v10542
  %v10889 = vunpack.c.h.b16 %v10542
  %v10890 = vunpack.c.l.b16 %v10543
  %v10891 = vunpack.c.h.b16 %v10543
  %v10892 = vunpack.c.l.b16 %v10544
  %v10893 = vunpack.c.h.b16 %v10544
  %v10894 = vunpack.c.l.b16 %v10545
  %v10895 = vunpack.c.h.b16 %v10545
  %v10896 = vunpack.c.l.b16 %v10546
  %v10897 = vunpack.c.h.b16 %v10546
  %v10898 = vunpack.c.l.b16 %v10547
  %v10899 = vunpack.c.h.b16 %v10547
  %v10900 = vunpack.c.l.b16 %v10548
  %v10901 = vunpack.c.h.b16 %v10548
  %v10902 = vunpack.c.l.b16 %v10549
  %v10903 = vunpack.c.h.b16 %v10549
  %v10904 = vunpack.c.l.b16 %v10550
  %v10905 = vunpack.c.h.b16 %v10550
  %v10906 = vunpack.c.l.b16 %v10551
  %v10907 = vunpack.c.h.b16 %v10551
  %v10908 = vunpack.c.l.b16 %v10552
  %v10909 = vunpack.c.h.b16 %v10552
  %v10910 = vunpack.c.l.b16 %v10553
  %v10911 = vunpack.c.h.b16 %v10553
  %v10912 = vunpack.c.l.b16 %v10554
  %v10913 = vunpack.c.h.b16 %v10554
  %v10914 = vunpack.c.l.b16 %v10555
  %v10915 = vunpack.c.h.b16 %v10555
  %v10916 = vunpack.c.l.b16 %v10556
  %v10917 = vunpack.c.h.b16 %v10556
  %v10918 = vunpack.c.l.b16 %v10557
  %v10919 = vunpack.c.h.b16 %v10557
  %v10920 = vunpack.c.l.b16 %v10558
  %v10921 = vunpack.c.h.b16 %v10558
  %v10922 = vunpack.c.l.b16 %v10559
  %v10923 = vunpack.c.h.b16 %v10559
  %v10924 = vunpack.c.l.b16 %v10560
  %v10925 = vunpack.c.h.b16 %v10560
  %v10926 = vunpack.c.l.b16 %v10561
  %v10927 = vunpack.c.h.b16 %v10561
  %v10928 = vunpack.c.l.b16 %v10562
  %v10929 = vunpack.c.h.b16 %v10562
  %v10930 = vunpack.c.l.b16 %v10563
  %v10931 = vunpack.c.h.b16 %v10563
  %v10932 = vunpack.c.l.b16 %v10564
  %v10933 = vunpack.c.h.b16 %v10564
  %v10934 = vunpack.c.l.b16 %v10565
  %v10935 = vunpack.c.h.b16 %v10565
  %v10936 = vunpack.c.l.b16 %v10566
  %v10937 = vunpack.c.h.b16 %v10566
  %v10938 = vunpack.c.l.b16 %v10567
  %v10939 = vunpack.c.h.b16 %v10567
  %v10940 = vunpack.c.l.b16 %v10568
  %v10941 = vunpack.c.h.b16 %v10568
  %v10942 = vunpack.c.l.b16 %v10569
  %v10943 = vunpack.c.h.b16 %v10569
  %v10944 = vunpack.c.l.b16 %v10570
  %v10945 = vunpack.c.h.b16 %v10570
  %v10946 = vunpack.c.l.b16 %v10571
  %v10947 = vunpack.c.h.b16 %v10571
  %v10948 = vunpack.c.l.b16 %v10572
  %v10949 = vunpack.c.h.b16 %v10572
  %v10950 = vunpack.c.l.b16 %v10573
  %v10951 = vunpack.c.h.b16 %v10573
  %v10952 = vunpack.c.l.b16 %v10574
  %v10953 = vunpack.c.h.b16 %v10574
  %v10954 = vunpack.c.l.b16 %v10575
  %v10955 = vunpack.c.h.b16 %v10575
  %v10956 = vunpack.c.l.b16 %v10576
  %v10957 = vunpack.c.h.b16 %v10576
  %v10958 = vunpack.c.l.b16 %v10577
  %v10959 = vunpack.c.h.b16 %v10577
  %v10960 = vunpack.c.l.b16 %v10578
  %v10961 = vunpack.c.h.b16 %v10578
  %v10962 = vunpack.c.l.b16 %v10579
  %v10963 = vunpack.c.h.b16 %v10579
  %v10964 = vpack.c.b16 %v10716, %v10708
  %v10965 = vpack.c.b16 %v10717, %v10709
  %v10966 = vpack.c.b16 %v10718, %v10710
  %v10967 = vpack.c.b16 %v10719, %v10711
  %v10968 = vpack.c.b16 %v10720, %v10712
  %v10969 = vpack.c.b16 %v10721, %v10713
  %v10970 = vpack.c.b16 %v10722, %v10714
  %v10971 = vpack.c.b16 %v10723, %v10715
  %v10972 = vpack.c.b16 %v10732, %v10724
  %v10973 = vpack.c.b16 %v10733, %v10725
  %v10974 = vpack.c.b16 %v10734, %v10726
  %v10975 = vpack.c.b16 %v10735, %v10727
  %v10976 = vpack.c.b16 %v10736, %v10728
  %v10977 = vpack.c.b16 %v10737, %v10729
  %v10978 = vpack.c.b16 %v10738, %v10730
  %v10979 = vpack.c.b16 %v10739, %v10731
  %v10980 = vpack.c.b16 %v10748, %v10740
  %v10981 = vpack.c.b16 %v10749, %v10741
  %v10982 = vpack.c.b16 %v10750, %v10742
  %v10983 = vpack.c.b16 %v10751, %v10743
  %v10984 = vpack.c.b16 %v10752, %v10744
  %v10985 = vpack.c.b16 %v10753, %v10745
  %v10986 = vpack.c.b16 %v10754, %v10746
  %v10987 = vpack.c.b16 %v10755, %v10747
  %v10988 = vpack.c.b16 %v10764, %v10756
  %v10989 = vpack.c.b16 %v10765, %v10757
  %v10990 = vpack.c.b16 %v10766, %v10758
  %v10991 = vpack.c.b16 %v10767, %v10759
  %v10992 = vpack.c.b16 %v10768, %v10760
  %v10993 = vpack.c.b16 %v10769, %v10761
  %v10994 = vpack.c.b16 %v10770, %v10762
  %v10995 = vpack.c.b16 %v10771, %v10763
  %v10996 = vpack.c.b16 %v10780, %v10772
  %v10997 = vpack.c.b16 %v10781, %v10773
  %v10998 = vpack.c.b16 %v10782, %v10774
  %v10999 = vpack.c.b16 %v10783, %v10775
  %v11000 = vpack.c.b16 %v10784, %v10776
  %v11001 = vpack.c.b16 %v10785, %v10777
  %v11002 = vpack.c.b16 %v10786, %v10778
  %v11003 = vpack.c.b16 %v10787, %v10779
  %v11004 = vpack.c.b16 %v10796, %v10788
  %v11005 = vpack.c.b16 %v10797, %v10789
  %v11006 = vpack.c.b16 %v10798, %v10790
  %v11007 = vpack.c.b16 %v10799, %v10791
  %v11008 = vpack.c.b16 %v10800, %v10792
  %v11009 = vpack.c.b16 %v10801, %v10793
  %v11010 = vpack.c.b16 %v10802, %v10794
  %v11011 = vpack.c.b16 %v10803, %v10795
  %v11012 = vpack.c.b16 %v10812, %v10804
  %v11013 = vpack.c.b16 %v10813, %v10805
  %v11014 = vpack.c.b16 %v10814, %v10806
  %v11015 = vpack.c.b16 %v10815, %v10807
  %v11016 = vpack.c.b16 %v10816, %v10808
  %v11017 = vpack.c.b16 %v10817, %v10809
  %v11018 = vpack.c.b16 %v10818, %v10810
  %v11019 = vpack.c.b16 %v10819, %v10811
  %v11020 = vpack.c.b16 %v10828, %v10820
  %v11021 = vpack.c.b16 %v10829, %v10821
  %v11022 = vpack.c.b16 %v10830, %v10822
  %v11023 = vpack.c.b16 %v10831, %v10823
  %v11024 = vpack.c.b16 %v10832, %v10824
  %v11025 = vpack.c.b16 %v10833, %v10825
  %v11026 = vpack.c.b16 %v10834, %v10826
  %v11027 = vpack.c.b16 %v10835, %v10827
  %v11028 = vpack.c.b16 %v10844, %v10836
  %v11029 = vpack.c.b16 %v10845, %v10837
  %v11030 = vpack.c.b16 %v10846, %v10838
  %v11031 = vpack.c.b16 %v10847, %v10839
  %v11032 = vpack.c.b16 %v10848, %v10840
  %v11033 = vpack.c.b16 %v10849, %v10841
  %v11034 = vpack.c.b16 %v10850, %v10842
  %v11035 = vpack.c.b16 %v10851, %v10843
  %v11036 = vpack.c.b16 %v10860, %v10852
  %v11037 = vpack.c.b16 %v10861, %v10853
  %v11038 = vpack.c.b16 %v10862, %v10854
  %v11039 = vpack.c.b16 %v10863, %v10855
  %v11040 = vpack.c.b16 %v10864, %v10856
  %v11041 = vpack.c.b16 %v10865, %v10857
  %v11042 = vpack.c.b16 %v10866, %v10858
  %v11043 = vpack.c.b16 %v10867, %v10859
  %v11044 = vpack.c.b16 %v10876, %v10868
  %v11045 = vpack.c.b16 %v10877, %v10869
  %v11046 = vpack.c.b16 %v10878, %v10870
  %v11047 = vpack.c.b16 %v10879, %v10871
  %v11048 = vpack.c.b16 %v10880, %v10872
  %v11049 = vpack.c.b16 %v10881, %v10873
  %v11050 = vpack.c.b16 %v10882, %v10874
  %v11051 = vpack.c.b16 %v10883, %v10875
  %v11052 = vpack.c.b16 %v10892, %v10884
  %v11053 = vpack.c.b16 %v10893, %v10885
  %v11054 = vpack.c.b16 %v10894, %v10886
  %v11055 = vpack.c.b16 %v10895, %v10887
  %v11056 = vpack.c.b16 %v10896, %v10888
  %v11057 = vpack.c.b16 %v10897, %v10889
  %v11058 = vpack.c.b16 %v10898, %v10890
  %v11059 = vpack.c.b16 %v10899, %v10891
  %v11060 = vpack.c.b16 %v10908, %v10900
  %v11061 = vpack.c.b16 %v10909, %v10901
  %v11062 = vpack.c.b16 %v10910, %v10902
  %v11063 = vpack.c.b16 %v10911, %v10903
  %v11064 = vpack.c.b16 %v10912, %v10904
  %v11065 = vpack.c.b16 %v10913, %v10905
  %v11066 = vpack.c.b16 %v10914, %v10906
  %v11067 = vpack.c.b16 %v10915, %v10907
  %v11068 = vpack.c.b16 %v10924, %v10916
  %v11069 = vpack.c.b16 %v10925, %v10917
  %v11070 = vpack.c.b16 %v10926, %v10918
  %v11071 = vpack.c.b16 %v10927, %v10919
  %v11072 = vpack.c.b16 %v10928, %v10920
  %v11073 = vpack.c.b16 %v10929, %v10921
  %v11074 = vpack.c.b16 %v10930, %v10922
  %v11075 = vpack.c.b16 %v10931, %v10923
  %v11076 = vpack.c.b16 %v10940, %v10932
  %v11077 = vpack.c.b16 %v10941, %v10933
  %v11078 = vpack.c.b16 %v10942, %v10934
  %v11079 = vpack.c.b16 %v10943, %v10935
  %v11080 = vpack.c.b16 %v10944, %v10936
  %v11081 = vpack.c.b16 %v10945, %v10937
  %v11082 = vpack.c.b16 %v10946, %v10938
  %v11083 = vpack.c.b16 %v10947, %v10939
  %v11084 = vpack.c.b16 %v10956, %v10948
  %v11085 = vpack.c.b16 %v10957, %v10949
  %v11086 = vpack.c.b16 %v10958, %v10950
  %v11087 = vpack.c.b16 %v10959, %v10951
  %v11088 = vpack.c.b16 %v10960, %v10952
  %v11089 = vpack.c.b16 %v10961, %v10953
  %v11090 = vpack.c.b16 %v10962, %v10954
  %v11091 = vpack.c.b16 %v10963, %v10955
  %11220 = vmatprep.subr.bf16.mxu0 %v10965
  %11221 = vmatpush1.bf16.msra.mxu0 %v10964
  %11222 = vmatprep.subr.bf16.mxu0 %v10973
  %11223 = vmatpush1.bf16.msra.mxu0 %v10972
  %11224 = vmatprep.subr.bf16.mxu0 %v10981
  %11225 = vmatpush1.bf16.msra.mxu0 %v10980
  %11226 = vmatprep.subr.bf16.mxu0 %v10989
  %11227 = vmatpush1.bf16.msra.mxu0 %v10988
  %11228 = vmatprep.subr.bf16.mxu0 %v10997
  %11229 = vmatpush1.bf16.msra.mxu0 %v10996
  %11230 = vmatprep.subr.bf16.mxu0 %v11005
  %11231 = vmatpush1.bf16.msra.mxu0 %v11004
  %11232 = vmatprep.subr.bf16.mxu0 %v11013
  %11233 = vmatpush1.bf16.msra.mxu0 %v11012
  %11234 = vmatprep.subr.bf16.mxu0 %v11021
  %11235 = vmatpush1.bf16.msra.mxu0 %v11020
  %11236 = vmatprep.subr.bf16.mxu0 %v11029
  %11237 = vmatpush1.bf16.msra.mxu0 %v11028
  %11238 = vmatprep.subr.bf16.mxu0 %v11037
  %11239 = vmatpush1.bf16.msra.mxu0 %v11036
  %11240 = vmatprep.subr.bf16.mxu0 %v11045
  %11241 = vmatpush1.bf16.msra.mxu0 %v11044
  %11242 = vmatprep.subr.bf16.mxu0 %v11053
  %11243 = vmatpush1.bf16.msra.mxu0 %v11052
  %11244 = vmatprep.subr.bf16.mxu0 %v11061
  %11245 = vmatpush1.bf16.msra.mxu0 %v11060
  %11246 = vmatprep.subr.bf16.mxu0 %v11069
  %11247 = vmatpush1.bf16.msra.mxu0 %v11068
  %11248 = vmatprep.subr.bf16.mxu0 %v11077
  %11249 = vmatpush1.bf16.msra.mxu0 %v11076
  %11250 = vmatprep.subr.bf16.mxu0 %v11085
  %11251 = vmatpush1.bf16.msra.mxu0 %v11084
  %11252 = vmatprep.mubr.bf16.mxu0 0
  %11253 = vmatmul.mubr.bf16.gmra.mrb[0].mxu0 0
  %v11254 = vpop.f32.mrb[0].mxu0
  %v11255 = vadd.f32 0.0, %v11254
  %v11256 = vpop.f32.mrb[0].mxu0
  %v11257 = vadd.f32 0.0, %v11256
  %v11258 = vpop.f32.mrb[0].mxu0
  %v11259 = vpop.f32.mrb[0].mxu0
  %11260 = vdwg.mxu0
  %11261 = vmatprep.subr.bf16.mxu0 %v10967
  %11262 = vmatpush1.bf16.msra.mxu0 %v10966
  %11263 = vmatprep.subr.bf16.mxu0 %v10975
  %11264 = vmatpush1.bf16.msra.mxu0 %v10974
  %11265 = vmatprep.subr.bf16.mxu0 %v10983
  %11266 = vmatpush1.bf16.msra.mxu0 %v10982
  %11267 = vmatprep.subr.bf16.mxu0 %v10991
  %11268 = vmatpush1.bf16.msra.mxu0 %v10990
  %11269 = vmatprep.subr.bf16.mxu0 %v10999
  %11270 = vmatpush1.bf16.msra.mxu0 %v10998
  %11271 = vmatprep.subr.bf16.mxu0 %v11007
  %11272 = vmatpush1.bf16.msra.mxu0 %v11006
  %11273 = vmatprep.subr.bf16.mxu0 %v11015
  %11274 = vmatpush1.bf16.msra.mxu0 %v11014
  %11275 = vmatprep.subr.bf16.mxu0 %v11023
  %11276 = vmatpush1.bf16.msra.mxu0 %v11022
  %11277 = vmatprep.subr.bf16.mxu0 %v11031
  %11278 = vmatpush1.bf16.msra.mxu0 %v11030
  %11279 = vmatprep.subr.bf16.mxu0 %v11039
  %11280 = vmatpush1.bf16.msra.mxu0 %v11038
  %11281 = vmatprep.subr.bf16.mxu0 %v11047
  %11282 = vmatpush1.bf16.msra.mxu0 %v11046
  %11283 = vmatprep.subr.bf16.mxu0 %v11055
  %11284 = vmatpush1.bf16.msra.mxu0 %v11054
  %11285 = vmatprep.subr.bf16.mxu0 %v11063
  %11286 = vmatpush1.bf16.msra.mxu0 %v11062
  %11287 = vmatprep.subr.bf16.mxu0 %v11071
  %11288 = vmatpush1.bf16.msra.mxu0 %v11070
  %11289 = vmatprep.subr.bf16.mxu0 %v11079
  %11290 = vmatpush1.bf16.msra.mxu0 %v11078
  %11291 = vmatprep.subr.bf16.mxu0 %v11087
  %11292 = vmatpush1.bf16.msra.mxu0 %v11086
  %11293 = vmatprep.mubr.bf16.mxu0 0
  %11294 = vmatmul.mubr.bf16.gmra.mrb[0].mxu0 0
  %v11295 = vpop.f32.mrb[0].mxu0
  %v11296 = vadd.f32 0.0, %v11295
  %v11297 = vpop.f32.mrb[0].mxu0
  %v11298 = vadd.f32 0.0, %v11297
  %v11299 = vpop.f32.mrb[0].mxu0
  %v11300 = vpop.f32.mrb[0].mxu0
  %11301 = vdwg.mxu0
  %11302 = vmatprep.subr.bf16.mxu0 %v10969
  %11303 = vmatpush1.bf16.msra.mxu0 %v10968
  %11304 = vmatprep.subr.bf16.mxu0 %v10977
  %11305 = vmatpush1.bf16.msra.mxu0 %v10976
  %11306 = vmatprep.subr.bf16.mxu0 %v10985
  %11307 = vmatpush1.bf16.msra.mxu0 %v10984
  %11308 = vmatprep.subr.bf16.mxu0 %v10993
  %11309 = vmatpush1.bf16.msra.mxu0 %v10992
  %11310 = vmatprep.subr.bf16.mxu0 %v11001
  %11311 = vmatpush1.bf16.msra.mxu0 %v11000
  %11312 = vmatprep.subr.bf16.mxu0 %v11009
  %11313 = vmatpush1.bf16.msra.mxu0 %v11008
  %11314 = vmatprep.subr.bf16.mxu0 %v11017
  %11315 = vmatpush1.bf16.msra.mxu0 %v11016
  %11316 = vmatprep.subr.bf16.mxu0 %v11025
  %11317 = vmatpush1.bf16.msra.mxu0 %v11024
  %11318 = vmatprep.subr.bf16.mxu0 %v11033
  %11319 = vmatpush1.bf16.msra.mxu0 %v11032
  %11320 = vmatprep.subr.bf16.mxu0 %v11041
  %11321 = vmatpush1.bf16.msra.mxu0 %v11040
  %11322 = vmatprep.subr.bf16.mxu0 %v11049
  %11323 = vmatpush1.bf16.msra.mxu0 %v11048
  %11324 = vmatprep.subr.bf16.mxu0 %v11057
  %11325 = vmatpush1.bf16.msra.mxu0 %v11056
  %11326 = vmatprep.subr.bf16.mxu0 %v11065
  %11327 = vmatpush1.bf16.msra.mxu0 %v11064
  %11328 = vmatprep.subr.bf16.mxu0 %v11073
  %11329 = vmatpush1.bf16.msra.mxu0 %v11072
  %11330 = vmatprep.subr.bf16.mxu0 %v11081
  %11331 = vmatpush1.bf16.msra.mxu0 %v11080
  %11332 = vmatprep.subr.bf16.mxu0 %v11089
  %11333 = vmatpush1.bf16.msra.mxu0 %v11088
  %11334 = vmatprep.mubr.bf16.mxu0 0
  %11335 = vmatmul.mubr.bf16.gmra.mrb[0].mxu0 0
  %v11336 = vpop.f32.mrb[0].mxu0
  %v11337 = vadd.f32 0.0, %v11336
  %v11338 = vpop.f32.mrb[0].mxu0
  %v11339 = vadd.f32 0.0, %v11338
  %v11340 = vpop.f32.mrb[0].mxu0
  %v11341 = vpop.f32.mrb[0].mxu0
  %11342 = vdwg.mxu0
  %11343 = vmatprep.subr.bf16.mxu0 %v10971
  %11344 = vmatpush1.bf16.msra.mxu0 %v10970
  %11345 = vmatprep.subr.bf16.mxu0 %v10979
  %11346 = vmatpush1.bf16.msra.mxu0 %v10978
  %11347 = vmatprep.subr.bf16.mxu0 %v10987
  %11348 = vmatpush1.bf16.msra.mxu0 %v10986
  %11349 = vmatprep.subr.bf16.mxu0 %v10995
  %11350 = vmatpush1.bf16.msra.mxu0 %v10994
  %11351 = vmatprep.subr.bf16.mxu0 %v11003
  %11352 = vmatpush1.bf16.msra.mxu0 %v11002
  %11353 = vmatprep.subr.bf16.mxu0 %v11011
  %11354 = vmatpush1.bf16.msra.mxu0 %v11010
  %11355 = vmatprep.subr.bf16.mxu0 %v11019
  %11356 = vmatpush1.bf16.msra.mxu0 %v11018
  %11357 = vmatprep.subr.bf16.mxu0 %v11027
  %11358 = vmatpush1.bf16.msra.mxu0 %v11026
  %11359 = vmatprep.subr.bf16.mxu0 %v11035
  %11360 = vmatpush1.bf16.msra.mxu0 %v11034
  %11361 = vmatprep.subr.bf16.mxu0 %v11043
  %11362 = vmatpush1.bf16.msra.mxu0 %v11042
  %11363 = vmatprep.subr.bf16.mxu0 %v11051
  %11364 = vmatpush1.bf16.msra.mxu0 %v11050
  %11365 = vmatprep.subr.bf16.mxu0 %v11059
  %11366 = vmatpush1.bf16.msra.mxu0 %v11058
  %11367 = vmatprep.subr.bf16.mxu0 %v11067
  %11368 = vmatpush1.bf16.msra.mxu0 %v11066
  %11369 = vmatprep.subr.bf16.mxu0 %v11075
  %11370 = vmatpush1.bf16.msra.mxu0 %v11074
  %11371 = vmatprep.subr.bf16.mxu0 %v11083
  %11372 = vmatpush1.bf16.msra.mxu0 %v11082
  %11373 = vmatprep.subr.bf16.mxu0 %v11091
  %11374 = vmatpush1.bf16.msra.mxu0 %v11090
  %11375 = vmatprep.mubr.bf16.mxu0 0
  %11376 = vmatmul.mubr.bf16.gmra.mrb[0].mxu0 0
  %v11377 = vpop.f32.mrb[0].mxu0
  %v11378 = vadd.f32 0.0, %v11377
  %v11379 = vpop.f32.mrb[0].mxu0
  %v11380 = vadd.f32 0.0, %v11379
  %v11381 = vpop.f32.mrb[0].mxu0
  %v11382 = vpop.f32.mrb[0].mxu0
  %11383 = vdwg.mxu0
  %v11384 = vadd.f32 %v10444, %v11255
  %v11385 = vadd.f32 %v10445, %v11257
  %v11386 = vadd.f32 %v10446, %v11296
  %v11387 = vadd.f32 %v10447, %v11298
  %v11388 = vadd.f32 %v10448, %v11337
  %v11389 = vadd.f32 %v10449, %v11339
  %v11390 = vadd.f32 %v10450, %v11378
  %v11391 = vadd.f32 %v10451, %v11380
  %v11392 = vxor.u32 %v11384, 2147483648
  %v11393 = vxor.u32 %v11385, 2147483648
  %v11394 = vmul.f32 %v11392, 1.442695
  %v11395 = vpow.pop %v11394
  %v11396 = vmul.f32 %v11393, 1.442695
  %v11397 = vpow.pop %v11396
  %v11398 = vadd.f32 %v11395, 1.0
  %v11399 = vadd.f32 %v11397, 1.0
  %v11400 = vrcp.pop %v11398
  %v11401 = vmul.f32 1.0, %v11400
  %v11402 = vrcp.pop %v11399
  %v11403 = vmul.f32 1.0, %v11402
  %v11404 = vxor.u32 %v11386, 2147483648
  %v11405 = vxor.u32 %v11387, 2147483648
  %v11406 = vmul.f32 %v11404, 1.442695
  %v11407 = vpow.pop %v11406
  %v11408 = vmul.f32 %v11405, 1.442695
  %v11409 = vpow.pop %v11408
  %v11410 = vadd.f32 %v11407, 1.0
  %v11411 = vadd.f32 %v11409, 1.0
  %v11412 = vrcp.pop %v11410
  %v11413 = vmul.f32 1.0, %v11412
  %v11414 = vrcp.pop %v11411
  %v11415 = vmul.f32 1.0, %v11414
  %v11416 = vtanh.pop %v11388
  %v11417 = vtanh.pop %v11389
  %v11418 = vxor.u32 %v11390, 2147483648
  %v11419 = vxor.u32 %v11391, 2147483648
  %v11420 = vmul.f32 %v11418, 1.442695
  %v11421 = vpow.pop %v11420
  %v11422 = vmul.f32 %v11419, 1.442695
  %v11423 = vpow.pop %v11422
  %v11424 = vadd.f32 %v11421, 1.0
  %v11425 = vadd.f32 %v11423, 1.0
  %v11426 = vrcp.pop %v11424
  %v11427 = vmul.f32 1.0, %v11426
  %v11428 = vrcp.pop %v11425
  %v11429 = vmul.f32 1.0, %v11428
  %v11430 = vmul.f32 %v11413, 0.0
  %v11431 = vmul.f32 %v11415, 0.0
  %v11432 = vmul.f32 %v11401, %v11416
  %v11433 = vmul.f32 %v11403, %v11417
  %v11434 = vadd.f32 %v11430, %v11432
  %v11435 = vadd.f32 %v11431, %v11433
  %v11436 = vtanh.pop %v11434
  %v11437 = vtanh.pop %v11435
  %v11438 = vmul.f32 %v11427, %v11436
  %v11439 = vmul.f32 %v11429, %v11437
  %v11440 = vadd.f32 %v11438, 0.0
  %v11441 = vadd.f32 %v11439, 0.0
  %v11442 = vld [vmem:[#allocation2 + $0x40] sm:$0xff]
  %v11443 = vld [vmem:[#allocation2 + $0x48] sm:$0xff]
  %v11444 = vld [vmem:[#allocation2 + $0x50] sm:$0xff]
  %v11445 = vld [vmem:[#allocation2 + $0x58] sm:$0xff]
  %v11446 = vld [vmem:[#allocation2 + $0x60] sm:$0xff]
  %v11447 = vld [vmem:[#allocation2 + $0x68] sm:$0xff]
  %v11448 = vld [vmem:[#allocation2 + $0x70] sm:$0xff]
  %v11449 = vld [vmem:[#allocation2 + $0x78] sm:$0xff]
  %v11450 = vld [vmem:[#allocation2 + $0x180] sm:$0xff]
  %v11451 = vld [vmem:[#allocation2 + $0x188] sm:$0xff]
  %v11452 = vld [vmem:[#allocation2 + $0x190] sm:$0xff]
  %v11453 = vld [vmem:[#allocation2 + $0x198] sm:$0xff]
  %v11454 = vld [vmem:[#allocation2 + $0x1a0] sm:$0xff]
  %v11455 = vld [vmem:[#allocation2 + $0x1a8] sm:$0xff]
  %v11456 = vld [vmem:[#allocation2 + $0x1b0] sm:$0xff]
  %v11457 = vld [vmem:[#allocation2 + $0x1b8] sm:$0xff]
  %v11458 = vsel %vm318, %v11442, %v11450
  %v11459 = vsel %vm319, %v11443, %v11451
  %v11460 = vsel %vm320, %v11444, %v11452
  %v11461 = vsel %vm321, %v11445, %v11453
  %v11462 = vsel %vm322, %v11446, %v11454
  %v11463 = vsel %vm323, %v11447, %v11455
  %v11464 = vsel %vm324, %v11448, %v11456
  %v11465 = vsel %vm325, %v11449, %v11457
  %v11466 = vpack.c.bf16 %v11438, %v11438
  %v11467 = vpack.c.bf16 %v11439, %v11439
  %11468 = vmatprep.subr.bf16.mxu0 %v10965
  %11469 = vmatpush1.bf16.msra.mxu0 %v10964
  %11470 = vmatprep.subr.bf16.mxu0 %v10973
  %11471 = vmatpush1.bf16.msra.mxu0 %v10972
  %11472 = vmatprep.subr.bf16.mxu0 %v10981
  %11473 = vmatpush1.bf16.msra.mxu0 %v10980
  %11474 = vmatprep.subr.bf16.mxu0 %v10989
  %11475 = vmatpush1.bf16.msra.mxu0 %v10988
  %11476 = vmatprep.subr.bf16.mxu0 %v10997
  %11477 = vmatpush1.bf16.msra.mxu0 %v10996
  %11478 = vmatprep.subr.bf16.mxu0 %v11005
  %11479 = vmatpush1.bf16.msra.mxu0 %v11004
  %11480 = vmatprep.subr.bf16.mxu0 %v11013
  %11481 = vmatpush1.bf16.msra.mxu0 %v11012
  %11482 = vmatprep.subr.bf16.mxu0 %v11021
  %11483 = vmatpush1.bf16.msra.mxu0 %v11020
  %11484 = vmatprep.subr.bf16.mxu0 %v11029
  %11485 = vmatpush1.bf16.msra.mxu0 %v11028
  %11486 = vmatprep.subr.bf16.mxu0 %v11037
  %11487 = vmatpush1.bf16.msra.mxu0 %v11036
  %11488 = vmatprep.subr.bf16.mxu0 %v11045
  %11489 = vmatpush1.bf16.msra.mxu0 %v11044
  %11490 = vmatprep.subr.bf16.mxu0 %v11053
  %11491 = vmatpush1.bf16.msra.mxu0 %v11052
  %11492 = vmatprep.subr.bf16.mxu0 %v11061
  %11493 = vmatpush1.bf16.msra.mxu0 %v11060
  %11494 = vmatprep.subr.bf16.mxu0 %v11069
  %11495 = vmatpush1.bf16.msra.mxu0 %v11068
  %11496 = vmatprep.subr.bf16.mxu0 %v11077
  %11497 = vmatpush1.bf16.msra.mxu0 %v11076
  %11498 = vmatprep.subr.bf16.mxu0 %v11085
  %11499 = vmatpush1.bf16.msra.mxu0 %v11084
  %11500 = vmatprep.mubr.bf16.mxu0 %v11467
  %11501 = vmatmul.mubr.bf16.gmra.mrb[0].mxu0 %v11466
  %v11502 = vpop.f32.mrb[0].mxu0
  %v11503 = vadd.f32 0.0, %v11502
  %v11504 = vpop.f32.mrb[0].mxu0
  %v11505 = vadd.f32 0.0, %v11504
  %v11506 = vpop.f32.mrb[0].mxu0
  %v11507 = vpop.f32.mrb[0].mxu0
  %11508 = vdwg.mxu0
  %11509 = vmatprep.subr.bf16.mxu0 %v10967
  %11510 = vmatpush1.bf16.msra.mxu0 %v10966
  %11511 = vmatprep.subr.bf16.mxu0 %v10975
  %11512 = vmatpush1.bf16.msra.mxu0 %v10974
  %11513 = vmatprep.subr.bf16.mxu0 %v10983
  %11514 = vmatpush1.bf16.msra.mxu0 %v10982
  %11515 = vmatprep.subr.bf16.mxu0 %v10991
  %11516 = vmatpush1.bf16.msra.mxu0 %v10990
  %11517 = vmatprep.subr.bf16.mxu0 %v10999
  %11518 = vmatpush1.bf16.msra.mxu0 %v10998
  %11519 = vmatprep.subr.bf16.mxu0 %v11007
  %11520 = vmatpush1.bf16.msra.mxu0 %v11006
  %11521 = vmatprep.subr.bf16.mxu0 %v11015
  %11522 = vmatpush1.bf16.msra.mxu0 %v11014
  %11523 = vmatprep.subr.bf16.mxu0 %v11023
  %11524 = vmatpush1.bf16.msra.mxu0 %v11022
  %11525 = vmatprep.subr.bf16.mxu0 %v11031
  %11526 = vmatpush1.bf16.msra.mxu0 %v11030
  %11527 = vmatprep.subr.bf16.mxu0 %v11039
  %11528 = vmatpush1.bf16.msra.mxu0 %v11038
  %11529 = vmatprep.subr.bf16.mxu0 %v11047
  %11530 = vmatpush1.bf16.msra.mxu0 %v11046
  %11531 = vmatprep.subr.bf16.mxu0 %v11055
  %11532 = vmatpush1.bf16.msra.mxu0 %v11054
  %11533 = vmatprep.subr.bf16.mxu0 %v11063
  %11534 = vmatpush1.bf16.msra.mxu0 %v11062
  %11535 = vmatprep.subr.bf16.mxu0 %v11071
  %11536 = vmatpush1.bf16.msra.mxu0 %v11070
  %11537 = vmatprep.subr.bf16.mxu0 %v11079
  %11538 = vmatpush1.bf16.msra.mxu0 %v11078
  %11539 = vmatprep.subr.bf16.mxu0 %v11087
  %11540 = vmatpush1.bf16.msra.mxu0 %v11086
  %11541 = vmatprep.mubr.bf16.mxu0 %v11467
  %11542 = vmatmul.mubr.bf16.gmra.mrb[0].mxu0 %v11466
  %v11543 = vpop.f32.mrb[0].mxu0
  %v11544 = vadd.f32 0.0, %v11543
  %v11545 = vpop.f32.mrb[0].mxu0
  %v11546 = vadd.f32 0.0, %v11545
  %v11547 = vpop.f32.mrb[0].mxu0
  %v11548 = vpop.f32.mrb[0].mxu0
  %11549 = vdwg.mxu0
  %11550 = vmatprep.subr.bf16.mxu0 %v10969
  %11551 = vmatpush1.bf16.msra.mxu0 %v10968
  %11552 = vmatprep.subr.bf16.mxu0 %v10977
  %11553 = vmatpush1.bf16.msra.mxu0 %v10976
  %11554 = vmatprep.subr.bf16.mxu0 %v10985
  %11555 = vmatpush1.bf16.msra.mxu0 %v10984
  %11556 = vmatprep.subr.bf16.mxu0 %v10993
  %11557 = vmatpush1.bf16.msra.mxu0 %v10992
  %11558 = vmatprep.subr.bf16.mxu0 %v11001
  %11559 = vmatpush1.bf16.msra.mxu0 %v11000
  %11560 = vmatprep.subr.bf16.mxu0 %v11009
  %11561 = vmatpush1.bf16.msra.mxu0 %v11008
  %11562 = vmatprep.subr.bf16.mxu0 %v11017
  %11563 = vmatpush1.bf16.msra.mxu0 %v11016
  %11564 = vmatprep.subr.bf16.mxu0 %v11025
  %11565 = vmatpush1.bf16.msra.mxu0 %v11024
  %11566 = vmatprep.subr.bf16.mxu0 %v11033
  %11567 = vmatpush1.bf16.msra.mxu0 %v11032
  %11568 = vmatprep.subr.bf16.mxu0 %v11041
  %11569 = vmatpush1.bf16.msra.mxu0 %v11040
  %11570 = vmatprep.subr.bf16.mxu0 %v11049
  %11571 = vmatpush1.bf16.msra.mxu0 %v11048
  %11572 = vmatprep.subr.bf16.mxu0 %v11057
  %11573 = vmatpush1.bf16.msra.mxu0 %v11056
  %11574 = vmatprep.subr.bf16.mxu0 %v11065
  %11575 = vmatpush1.bf16.msra.mxu0 %v11064
  %11576 = vmatprep.subr.bf16.mxu0 %v11073
  %11577 = vmatpush1.bf16.msra.mxu0 %v11072
  %11578 = vmatprep.subr.bf16.mxu0 %v11081
  %11579 = vmatpush1.bf16.msra.mxu0 %v11080
  %11580 = vmatprep.subr.bf16.mxu0 %v11089
  %11581 = vmatpush1.bf16.msra.mxu0 %v11088
  %11582 = vmatprep.mubr.bf16.mxu0 %v11467
  %11583 = vmatmul.mubr.bf16.gmra.mrb[0].mxu0 %v11466
  %v11584 = vpop.f32.mrb[0].mxu0
  %v11585 = vadd.f32 0.0, %v11584
  %v11586 = vpop.f32.mrb[0].mxu0
  %v11587 = vadd.f32 0.0, %v11586
  %v11588 = vpop.f32.mrb[0].mxu0
  %v11589 = vpop.f32.mrb[0].mxu0
  %11590 = vdwg.mxu0
  %11591 = vmatprep.subr.bf16.mxu0 %v10971
  %11592 = vmatpush1.bf16.msra.mxu0 %v10970
  %11593 = vmatprep.subr.bf16.mxu0 %v10979
  %11594 = vmatpush1.bf16.msra.mxu0 %v10978
  %11595 = vmatprep.subr.bf16.mxu0 %v10987
  %11596 = vmatpush1.bf16.msra.mxu0 %v10986
  %11597 = vmatprep.subr.bf16.mxu0 %v10995
  %11598 = vmatpush1.bf16.msra.mxu0 %v10994
  %11599 = vmatprep.subr.bf16.mxu0 %v11003
  %11600 = vmatpush1.bf16.msra.mxu0 %v11002
  %11601 = vmatprep.subr.bf16.mxu0 %v11011
  %11602 = vmatpush1.bf16.msra.mxu0 %v11010
  %11603 = vmatprep.subr.bf16.mxu0 %v11019
  %11604 = vmatpush1.bf16.msra.mxu0 %v11018
  %11605 = vmatprep.subr.bf16.mxu0 %v11027
  %11606 = vmatpush1.bf16.msra.mxu0 %v11026
  %11607 = vmatprep.subr.bf16.mxu0 %v11035
  %11608 = vmatpush1.bf16.msra.mxu0 %v11034
  %11609 = vmatprep.subr.bf16.mxu0 %v11043
  %11610 = vmatpush1.bf16.msra.mxu0 %v11042
  %11611 = vmatprep.subr.bf16.mxu0 %v11051
  %11612 = vmatpush1.bf16.msra.mxu0 %v11050
  %11613 = vmatprep.subr.bf16.mxu0 %v11059
  %11614 = vmatpush1.bf16.msra.mxu0 %v11058
  %11615 = vmatprep.subr.bf16.mxu0 %v11067
  %11616 = vmatpush1.bf16.msra.mxu0 %v11066
  %11617 = vmatprep.subr.bf16.mxu0 %v11075
  %11618 = vmatpush1.bf16.msra.mxu0 %v11074
  %11619 = vmatprep.subr.bf16.mxu0 %v11083
  %11620 = vmatpush1.bf16.msra.mxu0 %v11082
  %11621 = vmatprep.subr.bf16.mxu0 %v11091
  %11622 = vmatpush1.bf16.msra.mxu0 %v11090
  %11623 = vmatprep.mubr.bf16.mxu0 %v11467
  %11624 = vmatmul.mubr.bf16.gmra.mrb[0].mxu0 %v11466
  %v11625 = vpop.f32.mrb[0].mxu0
  %v11626 = vadd.f32 0.0, %v11625
  %v11627 = vpop.f32.mrb[0].mxu0
  %v11628 = vadd.f32 0.0, %v11627
  %v11629 = vpop.f32.mrb[0].mxu0
  %v11630 = vpop.f32.mrb[0].mxu0
  %11631 = vdwg.mxu0
  %v11632 = vadd.f32 %v11458, %v11503
  %v11633 = vadd.f32 %v11459, %v11505
  %v11634 = vadd.f32 %v11460, %v11544
  %v11635 = vadd.f32 %v11461, %v11546
  %v11636 = vadd.f32 %v11462, %v11585
  %v11637 = vadd.f32 %v11463, %v11587
  %v11638 = vadd.f32 %v11464, %v11626
  %v11639 = vadd.f32 %v11465, %v11628
  %v11640 = vxor.u32 %v11632, 2147483648
  %v11641 = vxor.u32 %v11633, 2147483648
  %v11642 = vmul.f32 %v11640, 1.442695
  %v11643 = vpow.pop %v11642
  %v11644 = vmul.f32 %v11641, 1.442695
  %v11645 = vpow.pop %v11644
  %v11646 = vadd.f32 %v11643, 1.0
  %v11647 = vadd.f32 %v11645, 1.0
  %v11648 = vrcp.pop %v11646
  %v11649 = vmul.f32 1.0, %v11648
  %v11650 = vrcp.pop %v11647
  %v11651 = vmul.f32 1.0, %v11650
  %v11652 = vxor.u32 %v11634, 2147483648
  %v11653 = vxor.u32 %v11635, 2147483648
  %v11654 = vmul.f32 %v11652, 1.442695
  %v11655 = vpow.pop %v11654
  %v11656 = vmul.f32 %v11653, 1.442695
  %v11657 = vpow.pop %v11656
  %v11658 = vadd.f32 %v11655, 1.0
  %v11659 = vadd.f32 %v11657, 1.0
  %v11660 = vrcp.pop %v11658
  %v11661 = vmul.f32 1.0, %v11660
  %v11662 = vrcp.pop %v11659
  %v11663 = vmul.f32 1.0, %v11662
  %v11664 = vtanh.pop %v11636
  %v11665 = vtanh.pop %v11637
  %v11666 = vxor.u32 %v11638, 2147483648
  %v11667 = vxor.u32 %v11639, 2147483648
  %v11668 = vmul.f32 %v11666, 1.442695
  %v11669 = vpow.pop %v11668
  %v11670 = vmul.f32 %v11667, 1.442695
  %v11671 = vpow.pop %v11670
  %v11672 = vadd.f32 %v11669, 1.0
  %v11673 = vadd.f32 %v11671, 1.0
  %v11674 = vrcp.pop %v11672
  %v11675 = vmul.f32 1.0, %v11674
  %v11676 = vrcp.pop %v11673
  %v11677 = vmul.f32 1.0, %v11676
  %v11678 = vmul.f32 %v11661, %v11434
  %v11679 = vmul.f32 %v11663, %v11435
  %v11680 = vmul.f32 %v11649, %v11664
  %v11681 = vmul.f32 %v11651, %v11665
  %v11682 = vadd.f32 %v11678, %v11680
  %v11683 = vadd.f32 %v11679, %v11681
  %v11684 = vtanh.pop %v11682
  %v11685 = vtanh.pop %v11683
  %v11686 = vmul.f32 %v11675, %v11684
  %v11687 = vmul.f32 %v11677, %v11685
  %v11688 = vadd.f32 %v11440, %v11686
  %v11689 = vadd.f32 %v11441, %v11687
  %v11690 = vld [vmem:[#allocation2 + $0x80] sm:$0xff]
  %v11691 = vld [vmem:[#allocation2 + $0x88] sm:$0xff]
  %v11692 = vld [vmem:[#allocation2 + $0x90] sm:$0xff]
  %v11693 = vld [vmem:[#allocation2 + $0x98] sm:$0xff]
  %v11694 = vld [vmem:[#allocation2 + $0xa0] sm:$0xff]
  %v11695 = vld [vmem:[#allocation2 + $0xa8] sm:$0xff]
  %v11696 = vld [vmem:[#allocation2 + $0xb0] sm:$0xff]
  %v11697 = vld [vmem:[#allocation2 + $0xb8] sm:$0xff]
  %v11698 = vld [vmem:[#allocation2 + $0x140] sm:$0xff]
  %v11699 = vld [vmem:[#allocation2 + $0x148] sm:$0xff]
  %v11700 = vld [vmem:[#allocation2 + $0x150] sm:$0xff]
  %v11701 = vld [vmem:[#allocation2 + $0x158] sm:$0xff]
  %v11702 = vld [vmem:[#allocation2 + $0x160] sm:$0xff]
  %v11703 = vld [vmem:[#allocation2 + $0x168] sm:$0xff]
  %v11704 = vld [vmem:[#allocation2 + $0x170] sm:$0xff]
  %v11705 = vld [vmem:[#allocation2 + $0x178] sm:$0xff]
  %v11706 = vsel %vm318, %v11690, %v11698
  %v11707 = vsel %vm319, %v11691, %v11699
  %v11708 = vsel %vm320, %v11692, %v11700
  %v11709 = vsel %vm321, %v11693, %v11701
  %v11710 = vsel %vm322, %v11694, %v11702
  %v11711 = vsel %vm323, %v11695, %v11703
  %v11712 = vsel %vm324, %v11696, %v11704
  %v11713 = vsel %vm325, %v11697, %v11705
  %v11714 = vpack.c.bf16 %v11686, %v11686
  %v11715 = vpack.c.bf16 %v11687, %v11687
  %11716 = vmatprep.subr.bf16.mxu0 %v10965
  %11717 = vmatpush1.bf16.msra.mxu0 %v10964
  %11718 = vmatprep.subr.bf16.mxu0 %v10973
  %11719 = vmatpush1.bf16.msra.mxu0 %v10972
  %11720 = vmatprep.subr.bf16.mxu0 %v10981
  %11721 = vmatpush1.bf16.msra.mxu0 %v10980
  %11722 = vmatprep.subr.bf16.mxu0 %v10989
  %11723 = vmatpush1.bf16.msra.mxu0 %v10988
  %11724 = vmatprep.subr.bf16.mxu0 %v10997
  %11725 = vmatpush1.bf16.msra.mxu0 %v10996
  %11726 = vmatprep.subr.bf16.mxu0 %v11005
  %11727 = vmatpush1.bf16.msra.mxu0 %v11004
  %11728 = vmatprep.subr.bf16.mxu0 %v11013
  %11729 = vmatpush1.bf16.msra.mxu0 %v11012
  %11730 = vmatprep.subr.bf16.mxu0 %v11021
  %11731 = vmatpush1.bf16.msra.mxu0 %v11020
  %11732 = vmatprep.subr.bf16.mxu0 %v11029
  %11733 = vmatpush1.bf16.msra.mxu0 %v11028
  %11734 = vmatprep.subr.bf16.mxu0 %v11037
  %11735 = vmatpush1.bf16.msra.mxu0 %v11036
  %11736 = vmatprep.subr.bf16.mxu0 %v11045
  %11737 = vmatpush1.bf16.msra.mxu0 %v11044
  %11738 = vmatprep.subr.bf16.mxu0 %v11053
  %11739 = vmatpush1.bf16.msra.mxu0 %v11052
  %11740 = vmatprep.subr.bf16.mxu0 %v11061
  %11741 = vmatpush1.bf16.msra.mxu0 %v11060
  %11742 = vmatprep.subr.bf16.mxu0 %v11069
  %11743 = vmatpush1.bf16.msra.mxu0 %v11068
  %11744 = vmatprep.subr.bf16.mxu0 %v11077
  %11745 = vmatpush1.bf16.msra.mxu0 %v11076
  %11746 = vmatprep.subr.bf16.mxu0 %v11085
  %11747 = vmatpush1.bf16.msra.mxu0 %v11084
  %11748 = vmatprep.mubr.bf16.mxu0 %v11715
  %11749 = vmatmul.mubr.bf16.gmra.mrb[0].mxu0 %v11714
  %v11750 = vpop.f32.mrb[0].mxu0
  %v11751 = vadd.f32 0.0, %v11750
  %v11752 = vpop.f32.mrb[0].mxu0
  %v11753 = vadd.f32 0.0, %v11752
  %v11754 = vpop.f32.mrb[0].mxu0
  %v11755 = vpop.f32.mrb[0].mxu0
  %11756 = vdwg.mxu0
  %11757 = vmatprep.subr.bf16.mxu0 %v10967
  %11758 = vmatpush1.bf16.msra.mxu0 %v10966
  %11759 = vmatprep.subr.bf16.mxu0 %v10975
  %11760 = vmatpush1.bf16.msra.mxu0 %v10974
  %11761 = vmatprep.subr.bf16.mxu0 %v10983
  %11762 = vmatpush1.bf16.msra.mxu0 %v10982
  %11763 = vmatprep.subr.bf16.mxu0 %v10991
  %11764 = vmatpush1.bf16.msra.mxu0 %v10990
  %11765 = vmatprep.subr.bf16.mxu0 %v10999
  %11766 = vmatpush1.bf16.msra.mxu0 %v10998
  %11767 = vmatprep.subr.bf16.mxu0 %v11007
  %11768 = vmatpush1.bf16.msra.mxu0 %v11006
  %11769 = vmatprep.subr.bf16.mxu0 %v11015
  %11770 = vmatpush1.bf16.msra.mxu0 %v11014
  %11771 = vmatprep.subr.bf16.mxu0 %v11023
  %11772 = vmatpush1.bf16.msra.mxu0 %v11022
  %11773 = vmatprep.subr.bf16.mxu0 %v11031
  %11774 = vmatpush1.bf16.msra.mxu0 %v11030
  %11775 = vmatprep.subr.bf16.mxu0 %v11039
  %11776 = vmatpush1.bf16.msra.mxu0 %v11038
  %11777 = vmatprep.subr.bf16.mxu0 %v11047
  %11778 = vmatpush1.bf16.msra.mxu0 %v11046
  %11779 = vmatprep.subr.bf16.mxu0 %v11055
  %11780 = vmatpush1.bf16.msra.mxu0 %v11054
  %11781 = vmatprep.subr.bf16.mxu0 %v11063
  %11782 = vmatpush1.bf16.msra.mxu0 %v11062
  %11783 = vmatprep.subr.bf16.mxu0 %v11071
  %11784 = vmatpush1.bf16.msra.mxu0 %v11070
  %11785 = vmatprep.subr.bf16.mxu0 %v11079
  %11786 = vmatpush1.bf16.msra.mxu0 %v11078
  %11787 = vmatprep.subr.bf16.mxu0 %v11087
  %11788 = vmatpush1.bf16.msra.mxu0 %v11086
  %11789 = vmatprep.mubr.bf16.mxu0 %v11715
  %11790 = vmatmul.mubr.bf16.gmra.mrb[0].mxu0 %v11714
  %v11791 = vpop.f32.mrb[0].mxu0
  %v11792 = vadd.f32 0.0, %v11791
  %v11793 = vpop.f32.mrb[0].mxu0
  %v11794 = vadd.f32 0.0, %v11793
  %v11795 = vpop.f32.mrb[0].mxu0
  %v11796 = vpop.f32.mrb[0].mxu0
  %11797 = vdwg.mxu0
  %11798 = vmatprep.subr.bf16.mxu0 %v10969
  %11799 = vmatpush1.bf16.msra.mxu0 %v10968
  %11800 = vmatprep.subr.bf16.mxu0 %v10977
  %11801 = vmatpush1.bf16.msra.mxu0 %v10976
  %11802 = vmatprep.subr.bf16.mxu0 %v10985
  %11803 = vmatpush1.bf16.msra.mxu0 %v10984
  %11804 = vmatprep.subr.bf16.mxu0 %v10993
  %11805 = vmatpush1.bf16.msra.mxu0 %v10992
  %11806 = vmatprep.subr.bf16.mxu0 %v11001
  %11807 = vmatpush1.bf16.msra.mxu0 %v11000
  %11808 = vmatprep.subr.bf16.mxu0 %v11009
  %11809 = vmatpush1.bf16.msra.mxu0 %v11008
  %11810 = vmatprep.subr.bf16.mxu0 %v11017
  %11811 = vmatpush1.bf16.msra.mxu0 %v11016
  %11812 = vmatprep.subr.bf16.mxu0 %v11025
  %11813 = vmatpush1.bf16.msra.mxu0 %v11024
  %11814 = vmatprep.subr.bf16.mxu0 %v11033
  %11815 = vmatpush1.bf16.msra.mxu0 %v11032
  %11816 = vmatprep.subr.bf16.mxu0 %v11041
  %11817 = vmatpush1.bf16.msra.mxu0 %v11040
  %11818 = vmatprep.subr.bf16.mxu0 %v11049
  %11819 = vmatpush1.bf16.msra.mxu0 %v11048
  %11820 = vmatprep.subr.bf16.mxu0 %v11057
  %11821 = vmatpush1.bf16.msra.mxu0 %v11056
  %11822 = vmatprep.subr.bf16.mxu0 %v11065
  %11823 = vmatpush1.bf16.msra.mxu0 %v11064
  %11824 = vmatprep.subr.bf16.mxu0 %v11073
  %11825 = vmatpush1.bf16.msra.mxu0 %v11072
  %11826 = vmatprep.subr.bf16.mxu0 %v11081
  %11827 = vmatpush1.bf16.msra.mxu0 %v11080
  %11828 = vmatprep.subr.bf16.mxu0 %v11089
  %11829 = vmatpush1.bf16.msra.mxu0 %v11088
  %11830 = vmatprep.mubr.bf16.mxu0 %v11715
  %11831 = vmatmul.mubr.bf16.gmra.mrb[0].mxu0 %v11714
  %v11832 = vpop.f32.mrb[0].mxu0
  %v11833 = vadd.f32 0.0, %v11832
  %v11834 = vpop.f32.mrb[0].mxu0
  %v11835 = vadd.f32 0.0, %v11834
  %v11836 = vpop.f32.mrb[0].mxu0
  %v11837 = vpop.f32.mrb[0].mxu0
  %11838 = vdwg.mxu0
  %11839 = vmatprep.subr.bf16.mxu0 %v10971
  %11840 = vmatpush1.bf16.msra.mxu0 %v10970
  %11841 = vmatprep.subr.bf16.mxu0 %v10979
  %11842 = vmatpush1.bf16.msra.mxu0 %v10978
  %11843 = vmatprep.subr.bf16.mxu0 %v10987
  %11844 = vmatpush1.bf16.msra.mxu0 %v10986
  %11845 = vmatprep.subr.bf16.mxu0 %v10995
  %11846 = vmatpush1.bf16.msra.mxu0 %v10994
  %11847 = vmatprep.subr.bf16.mxu0 %v11003
  %11848 = vmatpush1.bf16.msra.mxu0 %v11002
  %11849 = vmatprep.subr.bf16.mxu0 %v11011
  %11850 = vmatpush1.bf16.msra.mxu0 %v11010
  %11851 = vmatprep.subr.bf16.mxu0 %v11019
  %11852 = vmatpush1.bf16.msra.mxu0 %v11018
  %11853 = vmatprep.subr.bf16.mxu0 %v11027
  %11854 = vmatpush1.bf16.msra.mxu0 %v11026
  %11855 = vmatprep.subr.bf16.mxu0 %v11035
  %11856 = vmatpush1.bf16.msra.mxu0 %v11034
  %11857 = vmatprep.subr.bf16.mxu0 %v11043
  %11858 = vmatpush1.bf16.msra.mxu0 %v11042
  %11859 = vmatprep.subr.bf16.mxu0 %v11051
  %11860 = vmatpush1.bf16.msra.mxu0 %v11050
  %11861 = vmatprep.subr.bf16.mxu0 %v11059
  %11862 = vmatpush1.bf16.msra.mxu0 %v11058
  %11863 = vmatprep.subr.bf16.mxu0 %v11067
  %11864 = vmatpush1.bf16.msra.mxu0 %v11066
  %11865 = vmatprep.subr.bf16.mxu0 %v11075
  %11866 = vmatpush1.bf16.msra.mxu0 %v11074
  %11867 = vmatprep.subr.bf16.mxu0 %v11083
  %11868 = vmatpush1.bf16.msra.mxu0 %v11082
  %11869 = vmatprep.subr.bf16.mxu0 %v11091
  %11870 = vmatpush1.bf16.msra.mxu0 %v11090
  %11871 = vmatprep.mubr.bf16.mxu0 %v11715
  %11872 = vmatmul.mubr.bf16.gmra.mrb[0].mxu0 %v11714
  %v11873 = vpop.f32.mrb[0].mxu0
  %v11874 = vadd.f32 0.0, %v11873
  %v11875 = vpop.f32.mrb[0].mxu0
  %v11876 = vadd.f32 0.0, %v11875
  %v11877 = vpop.f32.mrb[0].mxu0
  %v11878 = vpop.f32.mrb[0].mxu0
  %11879 = vdwg.mxu0
  %v11880 = vadd.f32 %v11706, %v11751
  %v11881 = vadd.f32 %v11707, %v11753
  %v11882 = vadd.f32 %v11708, %v11792
  %v11883 = vadd.f32 %v11709, %v11794
  %v11884 = vadd.f32 %v11710, %v11833
  %v11885 = vadd.f32 %v11711, %v11835
  %v11886 = vadd.f32 %v11712, %v11874
  %v11887 = vadd.f32 %v11713, %v11876
  %v11888 = vxor.u32 %v11880, 2147483648
  %v11889 = vxor.u32 %v11881, 2147483648
  %v11890 = vmul.f32 %v11888, 1.442695
  %v11891 = vpow.pop %v11890
  %v11892 = vmul.f32 %v11889, 1.442695
  %v11893 = vpow.pop %v11892
  %v11894 = vadd.f32 %v11891, 1.0
  %v11895 = vadd.f32 %v11893, 1.0
  %v11896 = vrcp.pop %v11894
  %v11897 = vmul.f32 1.0, %v11896
  %v11898 = vrcp.pop %v11895
  %v11899 = vmul.f32 1.0, %v11898
  %v11900 = vxor.u32 %v11882, 2147483648
  %v11901 = vxor.u32 %v11883, 2147483648
  %v11902 = vmul.f32 %v11900, 1.442695
  %v11903 = vpow.pop %v11902
  %v11904 = vmul.f32 %v11901, 1.442695
  %v11905 = vpow.pop %v11904
  %v11906 = vadd.f32 %v11903, 1.0
  %v11907 = vadd.f32 %v11905, 1.0
  %v11908 = vrcp.pop %v11906
  %v11909 = vmul.f32 1.0, %v11908
  %v11910 = vrcp.pop %v11907
  %v11911 = vmul.f32 1.0, %v11910
  %v11912 = vtanh.pop %v11884
  %v11913 = vtanh.pop %v11885
  %v11914 = vxor.u32 %v11886, 2147483648
  %v11915 = vxor.u32 %v11887, 2147483648
  %v11916 = vmul.f32 %v11914, 1.442695
  %v11917 = vpow.pop %v11916
  %v11918 = vmul.f32 %v11915, 1.442695
  %v11919 = vpow.pop %v11918
  %v11920 = vadd.f32 %v11917, 1.0
  %v11921 = vadd.f32 %v11919, 1.0
  %v11922 = vrcp.pop %v11920
  %v11923 = vmul.f32 1.0, %v11922
  %v11924 = vrcp.pop %v11921
  %v11925 = vmul.f32 1.0, %v11924
  %v11926 = vmul.f32 %v11909, %v11682
  %v11927 = vmul.f32 %v11911, %v11683
  %v11928 = vmul.f32 %v11897, %v11912
  %v11929 = vmul.f32 %v11899, %v11913
  %v11930 = vadd.f32 %v11926, %v11928
  %v11931 = vadd.f32 %v11927, %v11929
  %v11932 = vtanh.pop %v11930
  %v11933 = vtanh.pop %v11931
  %v11934 = vmul.f32 %v11923, %v11932
  %v11935 = vmul.f32 %v11925, %v11933
  %v11936 = vadd.f32 %v11688, %v11934
  %v11937 = vadd.f32 %v11689, %v11935
  %v11938 = vld [vmem:[#allocation2 + $0xc0] sm:$0xff]
  %v11939 = vld [vmem:[#allocation2 + $0xc8] sm:$0xff]
  %v11940 = vld [vmem:[#allocation2 + $0xd0] sm:$0xff]
  %v11941 = vld [vmem:[#allocation2 + $0xd8] sm:$0xff]
  %v11942 = vld [vmem:[#allocation2 + $0xe0] sm:$0xff]
  %v11943 = vld [vmem:[#allocation2 + $0xe8] sm:$0xff]
  %v11944 = vld [vmem:[#allocation2 + $0xf0] sm:$0xff]
  %v11945 = vld [vmem:[#allocation2 + $0xf8] sm:$0xff]
  %v11946 = vld [vmem:[#allocation2 + $0x100] sm:$0xff]
  %v11947 = vld [vmem:[#allocation2 + $0x108] sm:$0xff]
  %v11948 = vld [vmem:[#allocation2 + $0x110] sm:$0xff]
  %v11949 = vld [vmem:[#allocation2 + $0x118] sm:$0xff]
  %v11950 = vld [vmem:[#allocation2 + $0x120] sm:$0xff]
  %v11951 = vld [vmem:[#allocation2 + $0x128] sm:$0xff]
  %v11952 = vld [vmem:[#allocation2 + $0x130] sm:$0xff]
  %v11953 = vld [vmem:[#allocation2 + $0x138] sm:$0xff]
  %v11954 = vsel %vm318, %v11938, %v11946
  %v11955 = vsel %vm319, %v11939, %v11947
  %v11956 = vsel %vm320, %v11940, %v11948
  %v11957 = vsel %vm321, %v11941, %v11949
  %v11958 = vsel %vm322, %v11942, %v11950
  %v11959 = vsel %vm323, %v11943, %v11951
  %v11960 = vsel %vm324, %v11944, %v11952
  %v11961 = vsel %vm325, %v11945, %v11953
  %v11962 = vpack.c.bf16 %v11934, %v11934
  %v11963 = vpack.c.bf16 %v11935, %v11935
  %11964 = vmatprep.subr.bf16.mxu0 %v10965
  %11965 = vmatpush1.bf16.msra.mxu0 %v10964
  %11966 = vmatprep.subr.bf16.mxu0 %v10973
  %11967 = vmatpush1.bf16.msra.mxu0 %v10972
  %11968 = vmatprep.subr.bf16.mxu0 %v10981
  %11969 = vmatpush1.bf16.msra.mxu0 %v10980
  %11970 = vmatprep.subr.bf16.mxu0 %v10989
  %11971 = vmatpush1.bf16.msra.mxu0 %v10988
  %11972 = vmatprep.subr.bf16.mxu0 %v10997
  %11973 = vmatpush1.bf16.msra.mxu0 %v10996
  %11974 = vmatprep.subr.bf16.mxu0 %v11005
  %11975 = vmatpush1.bf16.msra.mxu0 %v11004
  %11976 = vmatprep.subr.bf16.mxu0 %v11013
  %11977 = vmatpush1.bf16.msra.mxu0 %v11012
  %11978 = vmatprep.subr.bf16.mxu0 %v11021
  %11979 = vmatpush1.bf16.msra.mxu0 %v11020
  %11980 = vmatprep.subr.bf16.mxu0 %v11029
  %11981 = vmatpush1.bf16.msra.mxu0 %v11028
  %11982 = vmatprep.subr.bf16.mxu0 %v11037
  %11983 = vmatpush1.bf16.msra.mxu0 %v11036
  %11984 = vmatprep.subr.bf16.mxu0 %v11045
  %11985 = vmatpush1.bf16.msra.mxu0 %v11044
  %11986 = vmatprep.subr.bf16.mxu0 %v11053
  %11987 = vmatpush1.bf16.msra.mxu0 %v11052
  %11988 = vmatprep.subr.bf16.mxu0 %v11061
  %11989 = vmatpush1.bf16.msra.mxu0 %v11060
  %11990 = vmatprep.subr.bf16.mxu0 %v11069
  %11991 = vmatpush1.bf16.msra.mxu0 %v11068
  %11992 = vmatprep.subr.bf16.mxu0 %v11077
  %11993 = vmatpush1.bf16.msra.mxu0 %v11076
  %11994 = vmatprep.subr.bf16.mxu0 %v11085
  %11995 = vmatpush1.bf16.msra.mxu0 %v11084
  %11996 = vmatprep.mubr.bf16.mxu0 %v11963
  %11997 = vmatmul.mubr.bf16.gmra.mrb[0].mxu0 %v11962
  %v11998 = vpop.f32.mrb[0].mxu0
  %v11999 = vadd.f32 0.0, %v11998
  %v12000 = vpop.f32.mrb[0].mxu0
  %v12001 = vadd.f32 0.0, %v12000
  %v12002 = vpop.f32.mrb[0].mxu0
  %v12003 = vpop.f32.mrb[0].mxu0
  %12004 = vdwg.mxu0
  %12005 = vmatprep.subr.bf16.mxu0 %v10967
  %12006 = vmatpush1.bf16.msra.mxu0 %v10966
  %12007 = vmatprep.subr.bf16.mxu0 %v10975
  %12008 = vmatpush1.bf16.msra.mxu0 %v10974
  %12009 = vmatprep.subr.bf16.mxu0 %v10983
  %12010 = vmatpush1.bf16.msra.mxu0 %v10982
  %12011 = vmatprep.subr.bf16.mxu0 %v10991
  %12012 = vmatpush1.bf16.msra.mxu0 %v10990
  %12013 = vmatprep.subr.bf16.mxu0 %v10999
  %12014 = vmatpush1.bf16.msra.mxu0 %v10998
  %12015 = vmatprep.subr.bf16.mxu0 %v11007
  %12016 = vmatpush1.bf16.msra.mxu0 %v11006
  %12017 = vmatprep.subr.bf16.mxu0 %v11015
  %12018 = vmatpush1.bf16.msra.mxu0 %v11014
  %12019 = vmatprep.subr.bf16.mxu0 %v11023
  %12020 = vmatpush1.bf16.msra.mxu0 %v11022
  %12021 = vmatprep.subr.bf16.mxu0 %v11031
  %12022 = vmatpush1.bf16.msra.mxu0 %v11030
  %12023 = vmatprep.subr.bf16.mxu0 %v11039
  %12024 = vmatpush1.bf16.msra.mxu0 %v11038
  %12025 = vmatprep.subr.bf16.mxu0 %v11047
  %12026 = vmatpush1.bf16.msra.mxu0 %v11046
  %12027 = vmatprep.subr.bf16.mxu0 %v11055
  %12028 = vmatpush1.bf16.msra.mxu0 %v11054
  %12029 = vmatprep.subr.bf16.mxu0 %v11063
  %12030 = vmatpush1.bf16.msra.mxu0 %v11062
  %12031 = vmatprep.subr.bf16.mxu0 %v11071
  %12032 = vmatpush1.bf16.msra.mxu0 %v11070
  %12033 = vmatprep.subr.bf16.mxu0 %v11079
  %12034 = vmatpush1.bf16.msra.mxu0 %v11078
  %12035 = vmatprep.subr.bf16.mxu0 %v11087
  %12036 = vmatpush1.bf16.msra.mxu0 %v11086
  %12037 = vmatprep.mubr.bf16.mxu0 %v11963
  %12038 = vmatmul.mubr.bf16.gmra.mrb[0].mxu0 %v11962
  %v12039 = vpop.f32.mrb[0].mxu0
  %v12040 = vadd.f32 0.0, %v12039
  %v12041 = vpop.f32.mrb[0].mxu0
  %v12042 = vadd.f32 0.0, %v12041
  %v12043 = vpop.f32.mrb[0].mxu0
  %v12044 = vpop.f32.mrb[0].mxu0
  %12045 = vdwg.mxu0
  %12046 = vmatprep.subr.bf16.mxu0 %v10969
  %12047 = vmatpush1.bf16.msra.mxu0 %v10968
  %12048 = vmatprep.subr.bf16.mxu0 %v10977
  %12049 = vmatpush1.bf16.msra.mxu0 %v10976
  %12050 = vmatprep.subr.bf16.mxu0 %v10985
  %12051 = vmatpush1.bf16.msra.mxu0 %v10984
  %12052 = vmatprep.subr.bf16.mxu0 %v10993
  %12053 = vmatpush1.bf16.msra.mxu0 %v10992
  %12054 = vmatprep.subr.bf16.mxu0 %v11001
  %12055 = vmatpush1.bf16.msra.mxu0 %v11000
  %12056 = vmatprep.subr.bf16.mxu0 %v11009
  %12057 = vmatpush1.bf16.msra.mxu0 %v11008
  %12058 = vmatprep.subr.bf16.mxu0 %v11017
  %12059 = vmatpush1.bf16.msra.mxu0 %v11016
  %12060 = vmatprep.subr.bf16.mxu0 %v11025
  %12061 = vmatpush1.bf16.msra.mxu0 %v11024
  %12062 = vmatprep.subr.bf16.mxu0 %v11033
  %12063 = vmatpush1.bf16.msra.mxu0 %v11032
  %12064 = vmatprep.subr.bf16.mxu0 %v11041
  %12065 = vmatpush1.bf16.msra.mxu0 %v11040
  %12066 = vmatprep.subr.bf16.mxu0 %v11049
  %12067 = vmatpush1.bf16.msra.mxu0 %v11048
  %12068 = vmatprep.subr.bf16.mxu0 %v11057
  %12069 = vmatpush1.bf16.msra.mxu0 %v11056
  %12070 = vmatprep.subr.bf16.mxu0 %v11065
  %12071 = vmatpush1.bf16.msra.mxu0 %v11064
  %12072 = vmatprep.subr.bf16.mxu0 %v11073
  %12073 = vmatpush1.bf16.msra.mxu0 %v11072
  %12074 = vmatprep.subr.bf16.mxu0 %v11081
  %12075 = vmatpush1.bf16.msra.mxu0 %v11080
  %12076 = vmatprep.subr.bf16.mxu0 %v11089
  %12077 = vmatpush1.bf16.msra.mxu0 %v11088
  %12078 = vmatprep.mubr.bf16.mxu0 %v11963
  %12079 = vmatmul.mubr.bf16.gmra.mrb[0].mxu0 %v11962
  %v12080 = vpop.f32.mrb[0].mxu0
  %v12081 = vadd.f32 0.0, %v12080
  %v12082 = vpop.f32.mrb[0].mxu0
  %v12083 = vadd.f32 0.0, %v12082
  %v12084 = vpop.f32.mrb[0].mxu0
  %v12085 = vpop.f32.mrb[0].mxu0
  %12086 = vdwg.mxu0
  %12087 = vmatprep.subr.bf16.mxu0 %v10971
  %12088 = vmatpush1.bf16.msra.mxu0 %v10970
  %12089 = vmatprep.subr.bf16.mxu0 %v10979
  %12090 = vmatpush1.bf16.msra.mxu0 %v10978
  %12091 = vmatprep.subr.bf16.mxu0 %v10987
  %12092 = vmatpush1.bf16.msra.mxu0 %v10986
  %12093 = vmatprep.subr.bf16.mxu0 %v10995
  %12094 = vmatpush1.bf16.msra.mxu0 %v10994
  %12095 = vmatprep.subr.bf16.mxu0 %v11003
  %12096 = vmatpush1.bf16.msra.mxu0 %v11002
  %12097 = vmatprep.subr.bf16.mxu0 %v11011
  %12098 = vmatpush1.bf16.msra.mxu0 %v11010
  %12099 = vmatprep.subr.bf16.mxu0 %v11019
  %12100 = vmatpush1.bf16.msra.mxu0 %v11018
  %12101 = vmatprep.subr.bf16.mxu0 %v11027
  %12102 = vmatpush1.bf16.msra.mxu0 %v11026
  %12103 = vmatprep.subr.bf16.mxu0 %v11035
  %12104 = vmatpush1.bf16.msra.mxu0 %v11034
  %12105 = vmatprep.subr.bf16.mxu0 %v11043
  %12106 = vmatpush1.bf16.msra.mxu0 %v11042
  %12107 = vmatprep.subr.bf16.mxu0 %v11051
  %12108 = vmatpush1.bf16.msra.mxu0 %v11050
  %12109 = vmatprep.subr.bf16.mxu0 %v11059
  %12110 = vmatpush1.bf16.msra.mxu0 %v11058
  %12111 = vmatprep.subr.bf16.mxu0 %v11067
  %12112 = vmatpush1.bf16.msra.mxu0 %v11066
  %12113 = vmatprep.subr.bf16.mxu0 %v11075
  %12114 = vmatpush1.bf16.msra.mxu0 %v11074
  %12115 = vmatprep.subr.bf16.mxu0 %v11083
  %12116 = vmatpush1.bf16.msra.mxu0 %v11082
  %12117 = vmatprep.subr.bf16.mxu0 %v11091
  %12118 = vmatpush1.bf16.msra.mxu0 %v11090
  %12119 = vmatprep.mubr.bf16.mxu0 %v11963
  %12120 = vmatmul.mubr.bf16.gmra.mrb[0].mxu0 %v11962
  %v12121 = vpop.f32.mrb[0].mxu0
  %v12122 = vadd.f32 0.0, %v12121
  %v12123 = vpop.f32.mrb[0].mxu0
  %v12124 = vadd.f32 0.0, %v12123
  %v12125 = vpop.f32.mrb[0].mxu0
  %v12126 = vpop.f32.mrb[0].mxu0
  %12127 = vdwg.mxu0
  %v12128 = vadd.f32 %v11954, %v11999
  %v12129 = vadd.f32 %v11955, %v12001
  %v12130 = vadd.f32 %v11956, %v12040
  %v12131 = vadd.f32 %v11957, %v12042
  %v12132 = vadd.f32 %v11958, %v12081
  %v12133 = vadd.f32 %v11959, %v12083
  %v12134 = vadd.f32 %v11960, %v12122
  %v12135 = vadd.f32 %v11961, %v12124
  %v12136 = vxor.u32 %v12128, 2147483648
  %v12137 = vxor.u32 %v12129, 2147483648
  %v12138 = vmul.f32 %v12136, 1.442695
  %v12139 = vpow.pop %v12138
  %v12140 = vmul.f32 %v12137, 1.442695
  %v12141 = vpow.pop %v12140
  %v12142 = vadd.f32 %v12139, 1.0
  %v12143 = vadd.f32 %v12141, 1.0
  %v12144 = vrcp.pop %v12142
  %v12145 = vmul.f32 1.0, %v12144
  %v12146 = vrcp.pop %v12143
  %v12147 = vmul.f32 1.0, %v12146
  %v12148 = vxor.u32 %v12130, 2147483648
  %v12149 = vxor.u32 %v12131, 2147483648
  %v12150 = vmul.f32 %v12148, 1.442695
  %v12151 = vpow.pop %v12150
  %v12152 = vmul.f32 %v12149, 1.442695
  %v12153 = vpow.pop %v12152
  %v12154 = vadd.f32 %v12151, 1.0
  %v12155 = vadd.f32 %v12153, 1.0
  %v12156 = vrcp.pop %v12154
  %v12157 = vmul.f32 1.0, %v12156
  %v12158 = vrcp.pop %v12155
  %v12159 = vmul.f32 1.0, %v12158
  %v12160 = vtanh.pop %v12132
  %v12161 = vtanh.pop %v12133
  %v12162 = vxor.u32 %v12134, 2147483648
  %v12163 = vxor.u32 %v12135, 2147483648
  %v12164 = vmul.f32 %v12162, 1.442695
  %v12165 = vpow.pop %v12164
  %v12166 = vmul.f32 %v12163, 1.442695
  %v12167 = vpow.pop %v12166
  %v12168 = vadd.f32 %v12165, 1.0
  %v12169 = vadd.f32 %v12167, 1.0
  %v12170 = vrcp.pop %v12168
  %v12171 = vmul.f32 1.0, %v12170
  %v12172 = vrcp.pop %v12169
  %v12173 = vmul.f32 1.0, %v12172
  %v12174 = vmul.f32 %v12157, %v11930
  %v12175 = vmul.f32 %v12159, %v11931
  %v12176 = vmul.f32 %v12145, %v12160
  %v12177 = vmul.f32 %v12147, %v12161
  %v12178 = vadd.f32 %v12174, %v12176
  %v12179 = vadd.f32 %v12175, %v12177
  %v12180 = vtanh.pop %v12178
  %v12181 = vtanh.pop %v12179
  %v12182 = vmul.f32 %v12171, %v12180
  %v12183 = vmul.f32 %v12173, %v12181
  %v12184 = vadd.f32 %v11936, %v12182
  %v12185 = vadd.f32 %v11937, %v12183
  %v12186 = vsel %vm318, %v11946, %v11938
  %v12187 = vsel %vm319, %v11947, %v11939
  %v12188 = vsel %vm320, %v11948, %v11940
  %v12189 = vsel %vm321, %v11949, %v11941
  %v12190 = vsel %vm322, %v11950, %v11942
  %v12191 = vsel %vm323, %v11951, %v11943
  %v12192 = vsel %vm324, %v11952, %v11944
  %v12193 = vsel %vm325, %v11953, %v11945
  %v12194 = vpack.c.bf16 %v12182, %v12182
  %v12195 = vpack.c.bf16 %v12183, %v12183
  %12196 = vmatprep.subr.bf16.mxu0 %v10965
  %12197 = vmatpush1.bf16.msra.mxu0 %v10964
  %12198 = vmatprep.subr.bf16.mxu0 %v10973
  %12199 = vmatpush1.bf16.msra.mxu0 %v10972
  %12200 = vmatprep.subr.bf16.mxu0 %v10981
  %12201 = vmatpush1.bf16.msra.mxu0 %v10980
  %12202 = vmatprep.subr.bf16.mxu0 %v10989
  %12203 = vmatpush1.bf16.msra.mxu0 %v10988
  %12204 = vmatprep.subr.bf16.mxu0 %v10997
  %12205 = vmatpush1.bf16.msra.mxu0 %v10996
  %12206 = vmatprep.subr.bf16.mxu0 %v11005
  %12207 = vmatpush1.bf16.msra.mxu0 %v11004
  %12208 = vmatprep.subr.bf16.mxu0 %v11013
  %12209 = vmatpush1.bf16.msra.mxu0 %v11012
  %12210 = vmatprep.subr.bf16.mxu0 %v11021
  %12211 = vmatpush1.bf16.msra.mxu0 %v11020
  %12212 = vmatprep.subr.bf16.mxu0 %v11029
  %12213 = vmatpush1.bf16.msra.mxu0 %v11028
  %12214 = vmatprep.subr.bf16.mxu0 %v11037
  %12215 = vmatpush1.bf16.msra.mxu0 %v11036
  %12216 = vmatprep.subr.bf16.mxu0 %v11045
  %12217 = vmatpush1.bf16.msra.mxu0 %v11044
  %12218 = vmatprep.subr.bf16.mxu0 %v11053
  %12219 = vmatpush1.bf16.msra.mxu0 %v11052
  %12220 = vmatprep.subr.bf16.mxu0 %v11061
  %12221 = vmatpush1.bf16.msra.mxu0 %v11060
  %12222 = vmatprep.subr.bf16.mxu0 %v11069
  %12223 = vmatpush1.bf16.msra.mxu0 %v11068
  %12224 = vmatprep.subr.bf16.mxu0 %v11077
  %12225 = vmatpush1.bf16.msra.mxu0 %v11076
  %12226 = vmatprep.subr.bf16.mxu0 %v11085
  %12227 = vmatpush1.bf16.msra.mxu0 %v11084
  %12228 = vmatprep.mubr.bf16.mxu0 %v12195
  %12229 = vmatmul.mubr.bf16.gmra.mrb[0].mxu0 %v12194
  %v12230 = vpop.f32.mrb[0].mxu0
  %v12231 = vadd.f32 0.0, %v12230
  %v12232 = vpop.f32.mrb[0].mxu0
  %v12233 = vadd.f32 0.0, %v12232
  %v12234 = vpop.f32.mrb[0].mxu0
  %v12235 = vpop.f32.mrb[0].mxu0
  %12236 = vdwg.mxu0
  %12237 = vmatprep.subr.bf16.mxu0 %v10967
  %12238 = vmatpush1.bf16.msra.mxu0 %v10966
  %12239 = vmatprep.subr.bf16.mxu0 %v10975
  %12240 = vmatpush1.bf16.msra.mxu0 %v10974
  %12241 = vmatprep.subr.bf16.mxu0 %v10983
  %12242 = vmatpush1.bf16.msra.mxu0 %v10982
  %12243 = vmatprep.subr.bf16.mxu0 %v10991
  %12244 = vmatpush1.bf16.msra.mxu0 %v10990
  %12245 = vmatprep.subr.bf16.mxu0 %v10999
  %12246 = vmatpush1.bf16.msra.mxu0 %v10998
  %12247 = vmatprep.subr.bf16.mxu0 %v11007
  %12248 = vmatpush1.bf16.msra.mxu0 %v11006
  %12249 = vmatprep.subr.bf16.mxu0 %v11015
  %12250 = vmatpush1.bf16.msra.mxu0 %v11014
  %12251 = vmatprep.subr.bf16.mxu0 %v11023
  %12252 = vmatpush1.bf16.msra.mxu0 %v11022
  %12253 = vmatprep.subr.bf16.mxu0 %v11031
  %12254 = vmatpush1.bf16.msra.mxu0 %v11030
  %12255 = vmatprep.subr.bf16.mxu0 %v11039
  %12256 = vmatpush1.bf16.msra.mxu0 %v11038
  %12257 = vmatprep.subr.bf16.mxu0 %v11047
  %12258 = vmatpush1.bf16.msra.mxu0 %v11046
  %12259 = vmatprep.subr.bf16.mxu0 %v11055
  %12260 = vmatpush1.bf16.msra.mxu0 %v11054
  %12261 = vmatprep.subr.bf16.mxu0 %v11063
  %12262 = vmatpush1.bf16.msra.mxu0 %v11062
  %12263 = vmatprep.subr.bf16.mxu0 %v11071
  %12264 = vmatpush1.bf16.msra.mxu0 %v11070
  %12265 = vmatprep.subr.bf16.mxu0 %v11079
  %12266 = vmatpush1.bf16.msra.mxu0 %v11078
  %12267 = vmatprep.subr.bf16.mxu0 %v11087
  %12268 = vmatpush1.bf16.msra.mxu0 %v11086
  %12269 = vmatprep.mubr.bf16.mxu0 %v12195
  %12270 = vmatmul.mubr.bf16.gmra.mrb[0].mxu0 %v12194
  %v12271 = vpop.f32.mrb[0].mxu0
  %v12272 = vadd.f32 0.0, %v12271
  %v12273 = vpop.f32.mrb[0].mxu0
  %v12274 = vadd.f32 0.0, %v12273
  %v12275 = vpop.f32.mrb[0].mxu0
  %v12276 = vpop.f32.mrb[0].mxu0
  %12277 = vdwg.mxu0
  %12278 = vmatprep.subr.bf16.mxu0 %v10969
  %12279 = vmatpush1.bf16.msra.mxu0 %v10968
  %12280 = vmatprep.subr.bf16.mxu0 %v10977
  %12281 = vmatpush1.bf16.msra.mxu0 %v10976
  %12282 = vmatprep.subr.bf16.mxu0 %v10985
  %12283 = vmatpush1.bf16.msra.mxu0 %v10984
  %12284 = vmatprep.subr.bf16.mxu0 %v10993
  %12285 = vmatpush1.bf16.msra.mxu0 %v10992
  %12286 = vmatprep.subr.bf16.mxu0 %v11001
  %12287 = vmatpush1.bf16.msra.mxu0 %v11000
  %12288 = vmatprep.subr.bf16.mxu0 %v11009
  %12289 = vmatpush1.bf16.msra.mxu0 %v11008
  %12290 = vmatprep.subr.bf16.mxu0 %v11017
  %12291 = vmatpush1.bf16.msra.mxu0 %v11016
  %12292 = vmatprep.subr.bf16.mxu0 %v11025
  %12293 = vmatpush1.bf16.msra.mxu0 %v11024
  %12294 = vmatprep.subr.bf16.mxu0 %v11033
  %12295 = vmatpush1.bf16.msra.mxu0 %v11032
  %12296 = vmatprep.subr.bf16.mxu0 %v11041
  %12297 = vmatpush1.bf16.msra.mxu0 %v11040
  %12298 = vmatprep.subr.bf16.mxu0 %v11049
  %12299 = vmatpush1.bf16.msra.mxu0 %v11048
  %12300 = vmatprep.subr.bf16.mxu0 %v11057
  %12301 = vmatpush1.bf16.msra.mxu0 %v11056
  %12302 = vmatprep.subr.bf16.mxu0 %v11065
  %12303 = vmatpush1.bf16.msra.mxu0 %v11064
  %12304 = vmatprep.subr.bf16.mxu0 %v11073
  %12305 = vmatpush1.bf16.msra.mxu0 %v11072
  %12306 = vmatprep.subr.bf16.mxu0 %v11081
  %12307 = vmatpush1.bf16.msra.mxu0 %v11080
  %12308 = vmatprep.subr.bf16.mxu0 %v11089
  %12309 = vmatpush1.bf16.msra.mxu0 %v11088
  %12310 = vmatprep.mubr.bf16.mxu0 %v12195
  %12311 = vmatmul.mubr.bf16.gmra.mrb[0].mxu0 %v12194
  %v12312 = vpop.f32.mrb[0].mxu0
  %v12313 = vadd.f32 0.0, %v12312
  %v12314 = vpop.f32.mrb[0].mxu0
  %v12315 = vadd.f32 0.0, %v12314
  %v12316 = vpop.f32.mrb[0].mxu0
  %v12317 = vpop.f32.mrb[0].mxu0
  %12318 = vdwg.mxu0
  %12319 = vmatprep.subr.bf16.mxu0 %v10971
  %12320 = vmatpush1.bf16.msra.mxu0 %v10970
  %12321 = vmatprep.subr.bf16.mxu0 %v10979
  %12322 = vmatpush1.bf16.msra.mxu0 %v10978
  %12323 = vmatprep.subr.bf16.mxu0 %v10987
  %12324 = vmatpush1.bf16.msra.mxu0 %v10986
  %12325 = vmatprep.subr.bf16.mxu0 %v10995
  %12326 = vmatpush1.bf16.msra.mxu0 %v10994
  %12327 = vmatprep.subr.bf16.mxu0 %v11003
  %12328 = vmatpush1.bf16.msra.mxu0 %v11002
  %12329 = vmatprep.subr.bf16.mxu0 %v11011
  %12330 = vmatpush1.bf16.msra.mxu0 %v11010
  %12331 = vmatprep.subr.bf16.mxu0 %v11019
  %12332 = vmatpush1.bf16.msra.mxu0 %v11018
  %12333 = vmatprep.subr.bf16.mxu0 %v11027
  %12334 = vmatpush1.bf16.msra.mxu0 %v11026
  %12335 = vmatprep.subr.bf16.mxu0 %v11035
  %12336 = vmatpush1.bf16.msra.mxu0 %v11034
  %12337 = vmatprep.subr.bf16.mxu0 %v11043
  %12338 = vmatpush1.bf16.msra.mxu0 %v11042
  %12339 = vmatprep.subr.bf16.mxu0 %v11051
  %12340 = vmatpush1.bf16.msra.mxu0 %v11050
  %12341 = vmatprep.subr.bf16.mxu0 %v11059
  %12342 = vmatpush1.bf16.msra.mxu0 %v11058
  %12343 = vmatprep.subr.bf16.mxu0 %v11067
  %12344 = vmatpush1.bf16.msra.mxu0 %v11066
  %12345 = vmatprep.subr.bf16.mxu0 %v11075
  %12346 = vmatpush1.bf16.msra.mxu0 %v11074
  %12347 = vmatprep.subr.bf16.mxu0 %v11083
  %12348 = vmatpush1.bf16.msra.mxu0 %v11082
  %12349 = vmatprep.subr.bf16.mxu0 %v11091
  %12350 = vmatpush1.bf16.msra.mxu0 %v11090
  %12351 = vmatprep.mubr.bf16.mxu0 %v12195
  %12352 = vmatmul.mubr.bf16.gmra.mrb[0].mxu0 %v12194
  %v12353 = vpop.f32.mrb[0].mxu0
  %v12354 = vadd.f32 0.0, %v12353
  %v12355 = vpop.f32.mrb[0].mxu0
  %v12356 = vadd.f32 0.0, %v12355
  %v12357 = vpop.f32.mrb[0].mxu0
  %v12358 = vpop.f32.mrb[0].mxu0
  %12359 = vdwg.mxu0
  %v12360 = vadd.f32 %v12186, %v12231
  %v12361 = vadd.f32 %v12187, %v12233
  %v12362 = vadd.f32 %v12188, %v12272
  %v12363 = vadd.f32 %v12189, %v12274
  %v12364 = vadd.f32 %v12190, %v12313
  %v12365 = vadd.f32 %v12191, %v12315
  %v12366 = vadd.f32 %v12192, %v12354
  %v12367 = vadd.f32 %v12193, %v12356
  %v12368 = vxor.u32 %v12360, 2147483648
  %v12369 = vxor.u32 %v12361, 2147483648
  %v12370 = vmul.f32 %v12368, 1.442695
  %v12371 = vpow.pop %v12370
  %v12372 = vmul.f32 %v12369, 1.442695
  %v12373 = vpow.pop %v12372
  %v12374 = vadd.f32 %v12371, 1.0
  %v12375 = vadd.f32 %v12373, 1.0
  %v12376 = vrcp.pop %v12374
  %v12377 = vmul.f32 1.0, %v12376
  %v12378 = vrcp.pop %v12375
  %v12379 = vmul.f32 1.0, %v12378
  %v12380 = vxor.u32 %v12362, 2147483648
  %v12381 = vxor.u32 %v12363, 2147483648
  %v12382 = vmul.f32 %v12380, 1.442695
  %v12383 = vpow.pop %v12382
  %v12384 = vmul.f32 %v12381, 1.442695
  %v12385 = vpow.pop %v12384
  %v12386 = vadd.f32 %v12383, 1.0
  %v12387 = vadd.f32 %v12385, 1.0
  %v12388 = vrcp.pop %v12386
  %v12389 = vmul.f32 1.0, %v12388
  %v12390 = vrcp.pop %v12387
  %v12391 = vmul.f32 1.0, %v12390
  %v12392 = vtanh.pop %v12364
  %v12393 = vtanh.pop %v12365
  %v12394 = vxor.u32 %v12366, 2147483648
  %v12395 = vxor.u32 %v12367, 2147483648
  %v12396 = vmul.f32 %v12394, 1.442695
  %v12397 = vpow.pop %v12396
  %v12398 = vmul.f32 %v12395, 1.442695
  %v12399 = vpow.pop %v12398
  %v12400 = vadd.f32 %v12397, 1.0
  %v12401 = vadd.f32 %v12399, 1.0
  %v12402 = vrcp.pop %v12400
  %v12403 = vmul.f32 1.0, %v12402
  %v12404 = vrcp.pop %v12401
  %v12405 = vmul.f32 1.0, %v12404
  %v12406 = vmul.f32 %v12389, %v12178
  %v12407 = vmul.f32 %v12391, %v12179
  %v12408 = vmul.f32 %v12377, %v12392
  %v12409 = vmul.f32 %v12379, %v12393
  %v12410 = vadd.f32 %v12406, %v12408
  %v12411 = vadd.f32 %v12407, %v12409
  %v12412 = vtanh.pop %v12410
  %v12413 = vtanh.pop %v12411
  %v12414 = vmul.f32 %v12403, %v12412
  %v12415 = vmul.f32 %v12405, %v12413
  %v12416 = vadd.f32 %v12184, %v12414
  %v12417 = vadd.f32 %v12185, %v12415
  %v12418 = vsel %vm318, %v11698, %v11690
  %v12419 = vsel %vm319, %v11699, %v11691
  %v12420 = vsel %vm320, %v11700, %v11692
  %v12421 = vsel %vm321, %v11701, %v11693
  %v12422 = vsel %vm322, %v11702, %v11694
  %v12423 = vsel %vm323, %v11703, %v11695
  %v12424 = vsel %vm324, %v11704, %v11696
  %v12425 = vsel %vm325, %v11705, %v11697
  %v12426 = vpack.c.bf16 %v12414, %v12414
  %v12427 = vpack.c.bf16 %v12415, %v12415
  %12428 = vmatprep.subr.bf16.mxu0 %v10965
  %12429 = vmatpush1.bf16.msra.mxu0 %v10964
  %12430 = vmatprep.subr.bf16.mxu0 %v10973
  %12431 = vmatpush1.bf16.msra.mxu0 %v10972
  %12432 = vmatprep.subr.bf16.mxu0 %v10981
  %12433 = vmatpush1.bf16.msra.mxu0 %v10980
  %12434 = vmatprep.subr.bf16.mxu0 %v10989
  %12435 = vmatpush1.bf16.msra.mxu0 %v10988
  %12436 = vmatprep.subr.bf16.mxu0 %v10997
  %12437 = vmatpush1.bf16.msra.mxu0 %v10996
  %12438 = vmatprep.subr.bf16.mxu0 %v11005
  %12439 = vmatpush1.bf16.msra.mxu0 %v11004
  %12440 = vmatprep.subr.bf16.mxu0 %v11013
  %12441 = vmatpush1.bf16.msra.mxu0 %v11012
  %12442 = vmatprep.subr.bf16.mxu0 %v11021
  %12443 = vmatpush1.bf16.msra.mxu0 %v11020
  %12444 = vmatprep.subr.bf16.mxu0 %v11029
  %12445 = vmatpush1.bf16.msra.mxu0 %v11028
  %12446 = vmatprep.subr.bf16.mxu0 %v11037
  %12447 = vmatpush1.bf16.msra.mxu0 %v11036
  %12448 = vmatprep.subr.bf16.mxu0 %v11045
  %12449 = vmatpush1.bf16.msra.mxu0 %v11044
  %12450 = vmatprep.subr.bf16.mxu0 %v11053
  %12451 = vmatpush1.bf16.msra.mxu0 %v11052
  %12452 = vmatprep.subr.bf16.mxu0 %v11061
  %12453 = vmatpush1.bf16.msra.mxu0 %v11060
  %12454 = vmatprep.subr.bf16.mxu0 %v11069
  %12455 = vmatpush1.bf16.msra.mxu0 %v11068
  %12456 = vmatprep.subr.bf16.mxu0 %v11077
  %12457 = vmatpush1.bf16.msra.mxu0 %v11076
  %12458 = vmatprep.subr.bf16.mxu0 %v11085
  %12459 = vmatpush1.bf16.msra.mxu0 %v11084
  %12460 = vmatprep.mubr.bf16.mxu0 %v12427
  %12461 = vmatmul.mubr.bf16.gmra.mrb[0].mxu0 %v12426
  %v12462 = vpop.f32.mrb[0].mxu0
  %v12463 = vadd.f32 0.0, %v12462
  %v12464 = vpop.f32.mrb[0].mxu0
  %v12465 = vadd.f32 0.0, %v12464
  %v12466 = vpop.f32.mrb[0].mxu0
  %v12467 = vpop.f32.mrb[0].mxu0
  %12468 = vdwg.mxu0
  %12469 = vmatprep.subr.bf16.mxu0 %v10967
  %12470 = vmatpush1.bf16.msra.mxu0 %v10966
  %12471 = vmatprep.subr.bf16.mxu0 %v10975
  %12472 = vmatpush1.bf16.msra.mxu0 %v10974
  %12473 = vmatprep.subr.bf16.mxu0 %v10983
  %12474 = vmatpush1.bf16.msra.mxu0 %v10982
  %12475 = vmatprep.subr.bf16.mxu0 %v10991
  %12476 = vmatpush1.bf16.msra.mxu0 %v10990
  %12477 = vmatprep.subr.bf16.mxu0 %v10999
  %12478 = vmatpush1.bf16.msra.mxu0 %v10998
  %12479 = vmatprep.subr.bf16.mxu0 %v11007
  %12480 = vmatpush1.bf16.msra.mxu0 %v11006
  %12481 = vmatprep.subr.bf16.mxu0 %v11015
  %12482 = vmatpush1.bf16.msra.mxu0 %v11014
  %12483 = vmatprep.subr.bf16.mxu0 %v11023
  %12484 = vmatpush1.bf16.msra.mxu0 %v11022
  %12485 = vmatprep.subr.bf16.mxu0 %v11031
  %12486 = vmatpush1.bf16.msra.mxu0 %v11030
  %12487 = vmatprep.subr.bf16.mxu0 %v11039
  %12488 = vmatpush1.bf16.msra.mxu0 %v11038
  %12489 = vmatprep.subr.bf16.mxu0 %v11047
  %12490 = vmatpush1.bf16.msra.mxu0 %v11046
  %12491 = vmatprep.subr.bf16.mxu0 %v11055
  %12492 = vmatpush1.bf16.msra.mxu0 %v11054
  %12493 = vmatprep.subr.bf16.mxu0 %v11063
  %12494 = vmatpush1.bf16.msra.mxu0 %v11062
  %12495 = vmatprep.subr.bf16.mxu0 %v11071
  %12496 = vmatpush1.bf16.msra.mxu0 %v11070
  %12497 = vmatprep.subr.bf16.mxu0 %v11079
  %12498 = vmatpush1.bf16.msra.mxu0 %v11078
  %12499 = vmatprep.subr.bf16.mxu0 %v11087
  %12500 = vmatpush1.bf16.msra.mxu0 %v11086
  %12501 = vmatprep.mubr.bf16.mxu0 %v12427
  %12502 = vmatmul.mubr.bf16.gmra.mrb[0].mxu0 %v12426
  %v12503 = vpop.f32.mrb[0].mxu0
  %v12504 = vadd.f32 0.0, %v12503
  %v12505 = vpop.f32.mrb[0].mxu0
  %v12506 = vadd.f32 0.0, %v12505
  %v12507 = vpop.f32.mrb[0].mxu0
  %v12508 = vpop.f32.mrb[0].mxu0
  %12509 = vdwg.mxu0
  %12510 = vmatprep.subr.bf16.mxu0 %v10969
  %12511 = vmatpush1.bf16.msra.mxu0 %v10968
  %12512 = vmatprep.subr.bf16.mxu0 %v10977
  %12513 = vmatpush1.bf16.msra.mxu0 %v10976
  %12514 = vmatprep.subr.bf16.mxu0 %v10985
  %12515 = vmatpush1.bf16.msra.mxu0 %v10984
  %12516 = vmatprep.subr.bf16.mxu0 %v10993
  %12517 = vmatpush1.bf16.msra.mxu0 %v10992
  %12518 = vmatprep.subr.bf16.mxu0 %v11001
  %12519 = vmatpush1.bf16.msra.mxu0 %v11000
  %12520 = vmatprep.subr.bf16.mxu0 %v11009
  %12521 = vmatpush1.bf16.msra.mxu0 %v11008
  %12522 = vmatprep.subr.bf16.mxu0 %v11017
  %12523 = vmatpush1.bf16.msra.mxu0 %v11016
  %12524 = vmatprep.subr.bf16.mxu0 %v11025
  %12525 = vmatpush1.bf16.msra.mxu0 %v11024
  %12526 = vmatprep.subr.bf16.mxu0 %v11033
  %12527 = vmatpush1.bf16.msra.mxu0 %v11032
  %12528 = vmatprep.subr.bf16.mxu0 %v11041
  %12529 = vmatpush1.bf16.msra.mxu0 %v11040
  %12530 = vmatprep.subr.bf16.mxu0 %v11049
  %12531 = vmatpush1.bf16.msra.mxu0 %v11048
  %12532 = vmatprep.subr.bf16.mxu0 %v11057
  %12533 = vmatpush1.bf16.msra.mxu0 %v11056
  %12534 = vmatprep.subr.bf16.mxu0 %v11065
  %12535 = vmatpush1.bf16.msra.mxu0 %v11064
  %12536 = vmatprep.subr.bf16.mxu0 %v11073
  %12537 = vmatpush1.bf16.msra.mxu0 %v11072
  %12538 = vmatprep.subr.bf16.mxu0 %v11081
  %12539 = vmatpush1.bf16.msra.mxu0 %v11080
  %12540 = vmatprep.subr.bf16.mxu0 %v11089
  %12541 = vmatpush1.bf16.msra.mxu0 %v11088
  %12542 = vmatprep.mubr.bf16.mxu0 %v12427
  %12543 = vmatmul.mubr.bf16.gmra.mrb[0].mxu0 %v12426
  %v12544 = vpop.f32.mrb[0].mxu0
  %v12545 = vadd.f32 0.0, %v12544
  %v12546 = vpop.f32.mrb[0].mxu0
  %v12547 = vadd.f32 0.0, %v12546
  %v12548 = vpop.f32.mrb[0].mxu0
  %v12549 = vpop.f32.mrb[0].mxu0
  %12550 = vdwg.mxu0
  %12551 = vmatprep.subr.bf16.mxu0 %v10971
  %12552 = vmatpush1.bf16.msra.mxu0 %v10970
  %12553 = vmatprep.subr.bf16.mxu0 %v10979
  %12554 = vmatpush1.bf16.msra.mxu0 %v10978
  %12555 = vmatprep.subr.bf16.mxu0 %v10987
  %12556 = vmatpush1.bf16.msra.mxu0 %v10986
  %12557 = vmatprep.subr.bf16.mxu0 %v10995
  %12558 = vmatpush1.bf16.msra.mxu0 %v10994
  %12559 = vmatprep.subr.bf16.mxu0 %v11003
  %12560 = vmatpush1.bf16.msra.mxu0 %v11002
  %12561 = vmatprep.subr.bf16.mxu0 %v11011
  %12562 = vmatpush1.bf16.msra.mxu0 %v11010
  %12563 = vmatprep.subr.bf16.mxu0 %v11019
  %12564 = vmatpush1.bf16.msra.mxu0 %v11018
  %12565 = vmatprep.subr.bf16.mxu0 %v11027
  %12566 = vmatpush1.bf16.msra.mxu0 %v11026
  %12567 = vmatprep.subr.bf16.mxu0 %v11035
  %12568 = vmatpush1.bf16.msra.mxu0 %v11034
  %12569 = vmatprep.subr.bf16.mxu0 %v11043
  %12570 = vmatpush1.bf16.msra.mxu0 %v11042
  %12571 = vmatprep.subr.bf16.mxu0 %v11051
  %12572 = vmatpush1.bf16.msra.mxu0 %v11050
  %12573 = vmatprep.subr.bf16.mxu0 %v11059
  %12574 = vmatpush1.bf16.msra.mxu0 %v11058
  %12575 = vmatprep.subr.bf16.mxu0 %v11067
  %12576 = vmatpush1.bf16.msra.mxu0 %v11066
  %12577 = vmatprep.subr.bf16.mxu0 %v11075
  %12578 = vmatpush1.bf16.msra.mxu0 %v11074
  %12579 = vmatprep.subr.bf16.mxu0 %v11083
  %12580 = vmatpush1.bf16.msra.mxu0 %v11082
  %12581 = vmatprep.subr.bf16.mxu0 %v11091
  %12582 = vmatpush1.bf16.msra.mxu0 %v11090
  %12583 = vmatprep.mubr.bf16.mxu0 %v12427
  %12584 = vmatmul.mubr.bf16.gmra.mrb[0].mxu0 %v12426
  %v12585 = vpop.f32.mrb[0].mxu0
  %v12586 = vadd.f32 0.0, %v12585
  %v12587 = vpop.f32.mrb[0].mxu0
  %v12588 = vadd.f32 0.0, %v12587
  %v12589 = vpop.f32.mrb[0].mxu0
  %v12590 = vpop.f32.mrb[0].mxu0
  %12591 = vdwg.mxu0
  %v12592 = vadd.f32 %v12418, %v12463
  %v12593 = vadd.f32 %v12419, %v12465
  %v12594 = vadd.f32 %v12420, %v12504
  %v12595 = vadd.f32 %v12421, %v12506
  %v12596 = vadd.f32 %v12422, %v12545
  %v12597 = vadd.f32 %v12423, %v12547
  %v12598 = vadd.f32 %v12424, %v12586
  %v12599 = vadd.f32 %v12425, %v12588
  %v12600 = vxor.u32 %v12592, 2147483648
  %v12601 = vxor.u32 %v12593, 2147483648
  %v12602 = vmul.f32 %v12600, 1.442695
  %v12603 = vpow.pop %v12602
  %v12604 = vmul.f32 %v12601, 1.442695
  %v12605 = vpow.pop %v12604
  %v12606 = vadd.f32 %v12603, 1.0
  %v12607 = vadd.f32 %v12605, 1.0
  %v12608 = vrcp.pop %v12606
  %v12609 = vmul.f32 1.0, %v12608
  %v12610 = vrcp.pop %v12607
  %v12611 = vmul.f32 1.0, %v12610
  %v12612 = vxor.u32 %v12594, 2147483648
  %v12613 = vxor.u32 %v12595, 2147483648
  %v12614 = vmul.f32 %v12612, 1.442695
  %v12615 = vpow.pop %v12614
  %v12616 = vmul.f32 %v12613, 1.442695
  %v12617 = vpow.pop %v12616
  %v12618 = vadd.f32 %v12615, 1.0
  %v12619 = vadd.f32 %v12617, 1.0
  %v12620 = vrcp.pop %v12618
  %v12621 = vmul.f32 1.0, %v12620
  %v12622 = vrcp.pop %v12619
  %v12623 = vmul.f32 1.0, %v12622
  %v12624 = vtanh.pop %v12596
  %v12625 = vtanh.pop %v12597
  %v12626 = vxor.u32 %v12598, 2147483648
  %v12627 = vxor.u32 %v12599, 2147483648
  %v12628 = vmul.f32 %v12626, 1.442695
  %v12629 = vpow.pop %v12628
  %v12630 = vmul.f32 %v12627, 1.442695
  %v12631 = vpow.pop %v12630
  %v12632 = vadd.f32 %v12629, 1.0
  %v12633 = vadd.f32 %v12631, 1.0
  %v12634 = vrcp.pop %v12632
  %v12635 = vmul.f32 1.0, %v12634
  %v12636 = vrcp.pop %v12633
  %v12637 = vmul.f32 1.0, %v12636
  %v12638 = vmul.f32 %v12621, %v12410
  %v12639 = vmul.f32 %v12623, %v12411
  %v12640 = vmul.f32 %v12609, %v12624
  %v12641 = vmul.f32 %v12611, %v12625
  %v12642 = vadd.f32 %v12638, %v12640
  %v12643 = vadd.f32 %v12639, %v12641
  %v12644 = vtanh.pop %v12642
  %v12645 = vtanh.pop %v12643
  %v12646 = vmul.f32 %v12635, %v12644
  %v12647 = vmul.f32 %v12637, %v12645
  %v12648 = vadd.f32 %v12416, %v12646
  %v12649 = vadd.f32 %v12417, %v12647
  %v12650 = vsel %vm318, %v11450, %v11442
  %v12651 = vsel %vm319, %v11451, %v11443
  %v12652 = vsel %vm320, %v11452, %v11444
  %v12653 = vsel %vm321, %v11453, %v11445
  %v12654 = vsel %vm322, %v11454, %v11446
  %v12655 = vsel %vm323, %v11455, %v11447
  %v12656 = vsel %vm324, %v11456, %v11448
  %v12657 = vsel %vm325, %v11457, %v11449
  %v12658 = vpack.c.bf16 %v12646, %v12646
  %v12659 = vpack.c.bf16 %v12647, %v12647
  %12660 = vmatprep.subr.bf16.mxu0 %v10965
  %12661 = vmatpush1.bf16.msra.mxu0 %v10964
  %12662 = vmatprep.subr.bf16.mxu0 %v10973
  %12663 = vmatpush1.bf16.msra.mxu0 %v10972
  %12664 = vmatprep.subr.bf16.mxu0 %v10981
  %12665 = vmatpush1.bf16.msra.mxu0 %v10980
  %12666 = vmatprep.subr.bf16.mxu0 %v10989
  %12667 = vmatpush1.bf16.msra.mxu0 %v10988
  %12668 = vmatprep.subr.bf16.mxu0 %v10997
  %12669 = vmatpush1.bf16.msra.mxu0 %v10996
  %12670 = vmatprep.subr.bf16.mxu0 %v11005
  %12671 = vmatpush1.bf16.msra.mxu0 %v11004
  %12672 = vmatprep.subr.bf16.mxu0 %v11013
  %12673 = vmatpush1.bf16.msra.mxu0 %v11012
  %12674 = vmatprep.subr.bf16.mxu0 %v11021
  %12675 = vmatpush1.bf16.msra.mxu0 %v11020
  %12676 = vmatprep.subr.bf16.mxu0 %v11029
  %12677 = vmatpush1.bf16.msra.mxu0 %v11028
  %12678 = vmatprep.subr.bf16.mxu0 %v11037
  %12679 = vmatpush1.bf16.msra.mxu0 %v11036
  %12680 = vmatprep.subr.bf16.mxu0 %v11045
  %12681 = vmatpush1.bf16.msra.mxu0 %v11044
  %12682 = vmatprep.subr.bf16.mxu0 %v11053
  %12683 = vmatpush1.bf16.msra.mxu0 %v11052
  %12684 = vmatprep.subr.bf16.mxu0 %v11061
  %12685 = vmatpush1.bf16.msra.mxu0 %v11060
  %12686 = vmatprep.subr.bf16.mxu0 %v11069
  %12687 = vmatpush1.bf16.msra.mxu0 %v11068
  %12688 = vmatprep.subr.bf16.mxu0 %v11077
  %12689 = vmatpush1.bf16.msra.mxu0 %v11076
  %12690 = vmatprep.subr.bf16.mxu0 %v11085
  %12691 = vmatpush1.bf16.msra.mxu0 %v11084
  %12692 = vmatprep.mubr.bf16.mxu0 %v12659
  %12693 = vmatmul.mubr.bf16.gmra.mrb[0].mxu0 %v12658
  %v12694 = vpop.f32.mrb[0].mxu0
  %v12695 = vadd.f32 0.0, %v12694
  %v12696 = vpop.f32.mrb[0].mxu0
  %v12697 = vadd.f32 0.0, %v12696
  %v12698 = vpop.f32.mrb[0].mxu0
  %v12699 = vpop.f32.mrb[0].mxu0
  %12700 = vdwg.mxu0
  %12701 = vmatprep.subr.bf16.mxu0 %v10967
  %12702 = vmatpush1.bf16.msra.mxu0 %v10966
  %12703 = vmatprep.subr.bf16.mxu0 %v10975
  %12704 = vmatpush1.bf16.msra.mxu0 %v10974
  %12705 = vmatprep.subr.bf16.mxu0 %v10983
  %12706 = vmatpush1.bf16.msra.mxu0 %v10982
  %12707 = vmatprep.subr.bf16.mxu0 %v10991
  %12708 = vmatpush1.bf16.msra.mxu0 %v10990
  %12709 = vmatprep.subr.bf16.mxu0 %v10999
  %12710 = vmatpush1.bf16.msra.mxu0 %v10998
  %12711 = vmatprep.subr.bf16.mxu0 %v11007
  %12712 = vmatpush1.bf16.msra.mxu0 %v11006
  %12713 = vmatprep.subr.bf16.mxu0 %v11015
  %12714 = vmatpush1.bf16.msra.mxu0 %v11014
  %12715 = vmatprep.subr.bf16.mxu0 %v11023
  %12716 = vmatpush1.bf16.msra.mxu0 %v11022
  %12717 = vmatprep.subr.bf16.mxu0 %v11031
  %12718 = vmatpush1.bf16.msra.mxu0 %v11030
  %12719 = vmatprep.subr.bf16.mxu0 %v11039
  %12720 = vmatpush1.bf16.msra.mxu0 %v11038
  %12721 = vmatprep.subr.bf16.mxu0 %v11047
  %12722 = vmatpush1.bf16.msra.mxu0 %v11046
  %12723 = vmatprep.subr.bf16.mxu0 %v11055
  %12724 = vmatpush1.bf16.msra.mxu0 %v11054
  %12725 = vmatprep.subr.bf16.mxu0 %v11063
  %12726 = vmatpush1.bf16.msra.mxu0 %v11062
  %12727 = vmatprep.subr.bf16.mxu0 %v11071
  %12728 = vmatpush1.bf16.msra.mxu0 %v11070
  %12729 = vmatprep.subr.bf16.mxu0 %v11079
  %12730 = vmatpush1.bf16.msra.mxu0 %v11078
  %12731 = vmatprep.subr.bf16.mxu0 %v11087
  %12732 = vmatpush1.bf16.msra.mxu0 %v11086
  %12733 = vmatprep.mubr.bf16.mxu0 %v12659
  %12734 = vmatmul.mubr.bf16.gmra.mrb[0].mxu0 %v12658
  %v12735 = vpop.f32.mrb[0].mxu0
  %v12736 = vadd.f32 0.0, %v12735
  %v12737 = vpop.f32.mrb[0].mxu0
  %v12738 = vadd.f32 0.0, %v12737
  %v12739 = vpop.f32.mrb[0].mxu0
  %v12740 = vpop.f32.mrb[0].mxu0
  %12741 = vdwg.mxu0
  %12742 = vmatprep.subr.bf16.mxu0 %v10969
  %12743 = vmatpush1.bf16.msra.mxu0 %v10968
  %12744 = vmatprep.subr.bf16.mxu0 %v10977
  %12745 = vmatpush1.bf16.msra.mxu0 %v10976
  %12746 = vmatprep.subr.bf16.mxu0 %v10985
  %12747 = vmatpush1.bf16.msra.mxu0 %v10984
  %12748 = vmatprep.subr.bf16.mxu0 %v10993
  %12749 = vmatpush1.bf16.msra.mxu0 %v10992
  %12750 = vmatprep.subr.bf16.mxu0 %v11001
  %12751 = vmatpush1.bf16.msra.mxu0 %v11000
  %12752 = vmatprep.subr.bf16.mxu0 %v11009
  %12753 = vmatpush1.bf16.msra.mxu0 %v11008
  %12754 = vmatprep.subr.bf16.mxu0 %v11017
  %12755 = vmatpush1.bf16.msra.mxu0 %v11016
  %12756 = vmatprep.subr.bf16.mxu0 %v11025
  %12757 = vmatpush1.bf16.msra.mxu0 %v11024
  %12758 = vmatprep.subr.bf16.mxu0 %v11033
  %12759 = vmatpush1.bf16.msra.mxu0 %v11032
  %12760 = vmatprep.subr.bf16.mxu0 %v11041
  %12761 = vmatpush1.bf16.msra.mxu0 %v11040
  %12762 = vmatprep.subr.bf16.mxu0 %v11049
  %12763 = vmatpush1.bf16.msra.mxu0 %v11048
  %12764 = vmatprep.subr.bf16.mxu0 %v11057
  %12765 = vmatpush1.bf16.msra.mxu0 %v11056
  %12766 = vmatprep.subr.bf16.mxu0 %v11065
  %12767 = vmatpush1.bf16.msra.mxu0 %v11064
  %12768 = vmatprep.subr.bf16.mxu0 %v11073
  %12769 = vmatpush1.bf16.msra.mxu0 %v11072
  %12770 = vmatprep.subr.bf16.mxu0 %v11081
  %12771 = vmatpush1.bf16.msra.mxu0 %v11080
  %12772 = vmatprep.subr.bf16.mxu0 %v11089
  %12773 = vmatpush1.bf16.msra.mxu0 %v11088
  %12774 = vmatprep.mubr.bf16.mxu0 %v12659
  %12775 = vmatmul.mubr.bf16.gmra.mrb[0].mxu0 %v12658
  %v12776 = vpop.f32.mrb[0].mxu0
  %v12777 = vadd.f32 0.0, %v12776
  %v12778 = vpop.f32.mrb[0].mxu0
  %v12779 = vadd.f32 0.0, %v12778
  %v12780 = vpop.f32.mrb[0].mxu0
  %v12781 = vpop.f32.mrb[0].mxu0
  %12782 = vdwg.mxu0
  %12783 = vmatprep.subr.bf16.mxu0 %v10971
  %12784 = vmatpush1.bf16.msra.mxu0 %v10970
  %12785 = vmatprep.subr.bf16.mxu0 %v10979
  %12786 = vmatpush1.bf16.msra.mxu0 %v10978
  %12787 = vmatprep.subr.bf16.mxu0 %v10987
  %12788 = vmatpush1.bf16.msra.mxu0 %v10986
  %12789 = vmatprep.subr.bf16.mxu0 %v10995
  %12790 = vmatpush1.bf16.msra.mxu0 %v10994
  %12791 = vmatprep.subr.bf16.mxu0 %v11003
  %12792 = vmatpush1.bf16.msra.mxu0 %v11002
  %12793 = vmatprep.subr.bf16.mxu0 %v11011
  %12794 = vmatpush1.bf16.msra.mxu0 %v11010
  %12795 = vmatprep.subr.bf16.mxu0 %v11019
  %12796 = vmatpush1.bf16.msra.mxu0 %v11018
  %12797 = vmatprep.subr.bf16.mxu0 %v11027
  %12798 = vmatpush1.bf16.msra.mxu0 %v11026
  %12799 = vmatprep.subr.bf16.mxu0 %v11035
  %12800 = vmatpush1.bf16.msra.mxu0 %v11034
  %12801 = vmatprep.subr.bf16.mxu0 %v11043
  %12802 = vmatpush1.bf16.msra.mxu0 %v11042
  %12803 = vmatprep.subr.bf16.mxu0 %v11051
  %12804 = vmatpush1.bf16.msra.mxu0 %v11050
  %12805 = vmatprep.subr.bf16.mxu0 %v11059
  %12806 = vmatpush1.bf16.msra.mxu0 %v11058
  %12807 = vmatprep.subr.bf16.mxu0 %v11067
  %12808 = vmatpush1.bf16.msra.mxu0 %v11066
  %12809 = vmatprep.subr.bf16.mxu0 %v11075
  %12810 = vmatpush1.bf16.msra.mxu0 %v11074
  %12811 = vmatprep.subr.bf16.mxu0 %v11083
  %12812 = vmatpush1.bf16.msra.mxu0 %v11082
  %12813 = vmatprep.subr.bf16.mxu0 %v11091
  %12814 = vmatpush1.bf16.msra.mxu0 %v11090
  %12815 = vmatprep.mubr.bf16.mxu0 %v12659
  %12816 = vmatmul.mubr.bf16.gmra.mrb[0].mxu0 %v12658
  %v12817 = vpop.f32.mrb[0].mxu0
  %v12818 = vadd.f32 0.0, %v12817
  %v12819 = vpop.f32.mrb[0].mxu0
  %v12820 = vadd.f32 0.0, %v12819
  %v12821 = vpop.f32.mrb[0].mxu0
  %v12822 = vpop.f32.mrb[0].mxu0
  %12823 = vdwg.mxu0
  %v12824 = vadd.f32 %v12650, %v12695
  %v12825 = vadd.f32 %v12651, %v12697
  %v12826 = vadd.f32 %v12652, %v12736
  %v12827 = vadd.f32 %v12653, %v12738
  %v12828 = vadd.f32 %v12654, %v12777
  %v12829 = vadd.f32 %v12655, %v12779
  %v12830 = vadd.f32 %v12656, %v12818
  %v12831 = vadd.f32 %v12657, %v12820
  %v12832 = vxor.u32 %v12824, 2147483648
  %v12833 = vxor.u32 %v12825, 2147483648
  %v12834 = vmul.f32 %v12832, 1.442695
  %v12835 = vpow.pop %v12834
  %v12836 = vmul.f32 %v12833, 1.442695
  %v12837 = vpow.pop %v12836
  %v12838 = vadd.f32 %v12835, 1.0
  %v12839 = vadd.f32 %v12837, 1.0
  %v12840 = vrcp.pop %v12838
  %v12841 = vmul.f32 1.0, %v12840
  %v12842 = vrcp.pop %v12839
  %v12843 = vmul.f32 1.0, %v12842
  %v12844 = vxor.u32 %v12826, 2147483648
  %v12845 = vxor.u32 %v12827, 2147483648
  %v12846 = vmul.f32 %v12844, 1.442695
  %v12847 = vpow.pop %v12846
  %v12848 = vmul.f32 %v12845, 1.442695
  %v12849 = vpow.pop %v12848
  %v12850 = vadd.f32 %v12847, 1.0
  %v12851 = vadd.f32 %v12849, 1.0
  %v12852 = vrcp.pop %v12850
  %v12853 = vmul.f32 1.0, %v12852
  %v12854 = vrcp.pop %v12851
  %v12855 = vmul.f32 1.0, %v12854
  %v12856 = vtanh.pop %v12828
  %v12857 = vtanh.pop %v12829
  %v12858 = vxor.u32 %v12830, 2147483648
  %v12859 = vxor.u32 %v12831, 2147483648
  %v12860 = vmul.f32 %v12858, 1.442695
  %v12861 = vpow.pop %v12860
  %v12862 = vmul.f32 %v12859, 1.442695
  %v12863 = vpow.pop %v12862
  %v12864 = vadd.f32 %v12861, 1.0
  %v12865 = vadd.f32 %v12863, 1.0
  %v12866 = vrcp.pop %v12864
  %v12867 = vmul.f32 1.0, %v12866
  %v12868 = vrcp.pop %v12865
  %v12869 = vmul.f32 1.0, %v12868
  %v12870 = vmul.f32 %v12853, %v12642
  %v12871 = vmul.f32 %v12855, %v12643
  %v12872 = vmul.f32 %v12841, %v12856
  %v12873 = vmul.f32 %v12843, %v12857
  %v12874 = vadd.f32 %v12870, %v12872
  %v12875 = vadd.f32 %v12871, %v12873
  %v12876 = vtanh.pop %v12874
  %v12877 = vtanh.pop %v12875
  %v12878 = vmul.f32 %v12867, %v12876
  %v12879 = vmul.f32 %v12869, %v12877
  %v12880 = vadd.f32 %v12648, %v12878
  %v12881 = vadd.f32 %v12649, %v12879
  %v12882 = vsel %vm318, %v10436, %v10428
  %v12883 = vsel %vm319, %v10437, %v10429
  %v12884 = vsel %vm320, %v10438, %v10430
  %v12885 = vsel %vm321, %v10439, %v10431
  %v12886 = vsel %vm322, %v10440, %v10432
  %v12887 = vsel %vm323, %v10441, %v10433
  %v12888 = vsel %vm324, %v10442, %v10434
  %v12889 = vsel %vm325, %v10443, %v10435
  %v12890 = vpack.c.bf16 %v12878, %v12878
  %v12891 = vpack.c.bf16 %v12879, %v12879
  %12892 = vmatprep.subr.bf16.mxu0 %v10965
  %12893 = vmatpush1.bf16.msra.mxu0 %v10964
  %12894 = vmatprep.subr.bf16.mxu0 %v10973
  %12895 = vmatpush1.bf16.msra.mxu0 %v10972
  %12896 = vmatprep.subr.bf16.mxu0 %v10981
  %12897 = vmatpush1.bf16.msra.mxu0 %v10980
  %12898 = vmatprep.subr.bf16.mxu0 %v10989
  %12899 = vmatpush1.bf16.msra.mxu0 %v10988
  %12900 = vmatprep.subr.bf16.mxu0 %v10997
  %12901 = vmatpush1.bf16.msra.mxu0 %v10996
  %12902 = vmatprep.subr.bf16.mxu0 %v11005
  %12903 = vmatpush1.bf16.msra.mxu0 %v11004
  %12904 = vmatprep.subr.bf16.mxu0 %v11013
  %12905 = vmatpush1.bf16.msra.mxu0 %v11012
  %12906 = vmatprep.subr.bf16.mxu0 %v11021
  %12907 = vmatpush1.bf16.msra.mxu0 %v11020
  %12908 = vmatprep.subr.bf16.mxu0 %v11029
  %12909 = vmatpush1.bf16.msra.mxu0 %v11028
  %12910 = vmatprep.subr.bf16.mxu0 %v11037
  %12911 = vmatpush1.bf16.msra.mxu0 %v11036
  %12912 = vmatprep.subr.bf16.mxu0 %v11045
  %12913 = vmatpush1.bf16.msra.mxu0 %v11044
  %12914 = vmatprep.subr.bf16.mxu0 %v11053
  %12915 = vmatpush1.bf16.msra.mxu0 %v11052
  %12916 = vmatprep.subr.bf16.mxu0 %v11061
  %12917 = vmatpush1.bf16.msra.mxu0 %v11060
  %12918 = vmatprep.subr.bf16.mxu0 %v11069
  %12919 = vmatpush1.bf16.msra.mxu0 %v11068
  %12920 = vmatprep.subr.bf16.mxu0 %v11077
  %12921 = vmatpush1.bf16.msra.mxu0 %v11076
  %12922 = vmatprep.subr.bf16.mxu0 %v11085
  %12923 = vmatpush1.bf16.msra.mxu0 %v11084
  %12924 = vmatprep.mubr.bf16.mxu0 %v12891
  %12925 = vmatmul.mubr.bf16.gmra.mrb[0].mxu0 %v12890
  %v12926 = vpop.f32.mrb[0].mxu0
  %v12927 = vadd.f32 0.0, %v12926
  %v12928 = vpop.f32.mrb[0].mxu0
  %v12929 = vadd.f32 0.0, %v12928
  %v12930 = vpop.f32.mrb[0].mxu0
  %v12931 = vpop.f32.mrb[0].mxu0
  %12932 = vdwg.mxu0
  %12933 = vmatprep.subr.bf16.mxu0 %v10967
  %12934 = vmatpush1.bf16.msra.mxu0 %v10966
  %12935 = vmatprep.subr.bf16.mxu0 %v10975
  %12936 = vmatpush1.bf16.msra.mxu0 %v10974
  %12937 = vmatprep.subr.bf16.mxu0 %v10983
  %12938 = vmatpush1.bf16.msra.mxu0 %v10982
  %12939 = vmatprep.subr.bf16.mxu0 %v10991
  %12940 = vmatpush1.bf16.msra.mxu0 %v10990
  %12941 = vmatprep.subr.bf16.mxu0 %v10999
  %12942 = vmatpush1.bf16.msra.mxu0 %v10998
  %12943 = vmatprep.subr.bf16.mxu0 %v11007
  %12944 = vmatpush1.bf16.msra.mxu0 %v11006
  %12945 = vmatprep.subr.bf16.mxu0 %v11015
  %12946 = vmatpush1.bf16.msra.mxu0 %v11014
  %12947 = vmatprep.subr.bf16.mxu0 %v11023
  %12948 = vmatpush1.bf16.msra.mxu0 %v11022
  %12949 = vmatprep.subr.bf16.mxu0 %v11031
  %12950 = vmatpush1.bf16.msra.mxu0 %v11030
  %12951 = vmatprep.subr.bf16.mxu0 %v11039
  %12952 = vmatpush1.bf16.msra.mxu0 %v11038
  %12953 = vmatprep.subr.bf16.mxu0 %v11047
  %12954 = vmatpush1.bf16.msra.mxu0 %v11046
  %12955 = vmatprep.subr.bf16.mxu0 %v11055
  %12956 = vmatpush1.bf16.msra.mxu0 %v11054
  %12957 = vmatprep.subr.bf16.mxu0 %v11063
  %12958 = vmatpush1.bf16.msra.mxu0 %v11062
  %12959 = vmatprep.subr.bf16.mxu0 %v11071
  %12960 = vmatpush1.bf16.msra.mxu0 %v11070
  %12961 = vmatprep.subr.bf16.mxu0 %v11079
  %12962 = vmatpush1.bf16.msra.mxu0 %v11078
  %12963 = vmatprep.subr.bf16.mxu0 %v11087
  %12964 = vmatpush1.bf16.msra.mxu0 %v11086
  %12965 = vmatprep.mubr.bf16.mxu0 %v12891
  %12966 = vmatmul.mubr.bf16.gmra.mrb[0].mxu0 %v12890
  %v12967 = vpop.f32.mrb[0].mxu0
  %v12968 = vadd.f32 0.0, %v12967
  %v12969 = vpop.f32.mrb[0].mxu0
  %v12970 = vadd.f32 0.0, %v12969
  %v12971 = vpop.f32.mrb[0].mxu0
  %v12972 = vpop.f32.mrb[0].mxu0
  %12973 = vdwg.mxu0
  %12974 = vmatprep.subr.bf16.mxu0 %v10969
  %12975 = vmatpush1.bf16.msra.mxu0 %v10968
  %12976 = vmatprep.subr.bf16.mxu0 %v10977
  %12977 = vmatpush1.bf16.msra.mxu0 %v10976
  %12978 = vmatprep.subr.bf16.mxu0 %v10985
  %12979 = vmatpush1.bf16.msra.mxu0 %v10984
  %12980 = vmatprep.subr.bf16.mxu0 %v10993
  %12981 = vmatpush1.bf16.msra.mxu0 %v10992
  %12982 = vmatprep.subr.bf16.mxu0 %v11001
  %12983 = vmatpush1.bf16.msra.mxu0 %v11000
  %12984 = vmatprep.subr.bf16.mxu0 %v11009
  %12985 = vmatpush1.bf16.msra.mxu0 %v11008
  %12986 = vmatprep.subr.bf16.mxu0 %v11017
  %12987 = vmatpush1.bf16.msra.mxu0 %v11016
  %12988 = vmatprep.subr.bf16.mxu0 %v11025
  %12989 = vmatpush1.bf16.msra.mxu0 %v11024
  %12990 = vmatprep.subr.bf16.mxu0 %v11033
  %12991 = vmatpush1.bf16.msra.mxu0 %v11032
  %12992 = vmatprep.subr.bf16.mxu0 %v11041
  %12993 = vmatpush1.bf16.msra.mxu0 %v11040
  %12994 = vmatprep.subr.bf16.mxu0 %v11049
  %12995 = vmatpush1.bf16.msra.mxu0 %v11048
  %12996 = vmatprep.subr.bf16.mxu0 %v11057
  %12997 = vmatpush1.bf16.msra.mxu0 %v11056
  %12998 = vmatprep.subr.bf16.mxu0 %v11065
  %12999 = vmatpush1.bf16.msra.mxu0 %v11064
  %13000 = vmatprep.subr.bf16.mxu0 %v11073
  %13001 = vmatpush1.bf16.msra.mxu0 %v11072
  %13002 = vmatprep.subr.bf16.mxu0 %v11081
  %13003 = vmatpush1.bf16.msra.mxu0 %v11080
  %13004 = vmatprep.subr.bf16.mxu0 %v11089
  %13005 = vmatpush1.bf16.msra.mxu0 %v11088
  %13006 = vmatprep.mubr.bf16.mxu0 %v12891
  %13007 = vmatmul.mubr.bf16.gmra.mrb[0].mxu0 %v12890
  %v13008 = vpop.f32.mrb[0].mxu0
  %v13009 = vadd.f32 0.0, %v13008
  %v13010 = vpop.f32.mrb[0].mxu0
  %v13011 = vadd.f32 0.0, %v13010
  %v13012 = vpop.f32.mrb[0].mxu0
  %v13013 = vpop.f32.mrb[0].mxu0
  %13014 = vdwg.mxu0
  %13015 = vmatprep.subr.bf16.mxu0 %v10971
  %13016 = vmatpush1.bf16.msra.mxu0 %v10970
  %13017 = vmatprep.subr.bf16.mxu0 %v10979
  %13018 = vmatpush1.bf16.msra.mxu0 %v10978
  %13019 = vmatprep.subr.bf16.mxu0 %v10987
  %13020 = vmatpush1.bf16.msra.mxu0 %v10986
  %13021 = vmatprep.subr.bf16.mxu0 %v10995
  %13022 = vmatpush1.bf16.msra.mxu0 %v10994
  %13023 = vmatprep.subr.bf16.mxu0 %v11003
  %13024 = vmatpush1.bf16.msra.mxu0 %v11002
  %13025 = vmatprep.subr.bf16.mxu0 %v11011
  %13026 = vmatpush1.bf16.msra.mxu0 %v11010
  %13027 = vmatprep.subr.bf16.mxu0 %v11019
  %13028 = vmatpush1.bf16.msra.mxu0 %v11018
  %13029 = vmatprep.subr.bf16.mxu0 %v11027
  %13030 = vmatpush1.bf16.msra.mxu0 %v11026
  %13031 = vmatprep.subr.bf16.mxu0 %v11035
  %13032 = vmatpush1.bf16.msra.mxu0 %v11034
  %13033 = vmatprep.subr.bf16.mxu0 %v11043
  %13034 = vmatpush1.bf16.msra.mxu0 %v11042
  %13035 = vmatprep.subr.bf16.mxu0 %v11051
  %13036 = vmatpush1.bf16.msra.mxu0 %v11050
  %13037 = vmatprep.subr.bf16.mxu0 %v11059
  %13038 = vmatpush1.bf16.msra.mxu0 %v11058
  %13039 = vmatprep.subr.bf16.mxu0 %v11067
  %13040 = vmatpush1.bf16.msra.mxu0 %v11066
  %13041 = vmatprep.subr.bf16.mxu0 %v11075
  %13042 = vmatpush1.bf16.msra.mxu0 %v11074
  %13043 = vmatprep.subr.bf16.mxu0 %v11083
  %13044 = vmatpush1.bf16.msra.mxu0 %v11082
  %13045 = vmatprep.subr.bf16.mxu0 %v11091
  %13046 = vmatpush1.bf16.msra.mxu0 %v11090
  %13047 = vmatprep.mubr.bf16.mxu0 %v12891
  %13048 = vmatmul.mubr.bf16.gmra.mrb[0].mxu0 %v12890
  %v13049 = vpop.f32.mrb[0].mxu0
  %v13050 = vadd.f32 0.0, %v13049
  %v13051 = vpop.f32.mrb[0].mxu0
  %v13052 = vadd.f32 0.0, %v13051
  %v13053 = vpop.f32.mrb[0].mxu0
  %v13054 = vpop.f32.mrb[0].mxu0
  %13055 = vdwg.mxu0
  %v13056 = vadd.f32 %v12882, %v12927
  %v13057 = vadd.f32 %v12883, %v12929
  %v13058 = vadd.f32 %v12884, %v12968
  %v13059 = vadd.f32 %v12885, %v12970
  %v13060 = vadd.f32 %v12886, %v13009
  %v13061 = vadd.f32 %v12887, %v13011
  %v13062 = vadd.f32 %v12888, %v13050
  %v13063 = vadd.f32 %v12889, %v13052
  %v13064 = vxor.u32 %v13056, 2147483648
  %v13065 = vxor.u32 %v13057, 2147483648
  %v13066 = vmul.f32 %v13064, 1.442695
  %v13067 = vpow.pop %v13066
  %v13068 = vmul.f32 %v13065, 1.442695
  %v13069 = vpow.pop %v13068
  %v13070 = vadd.f32 %v13067, 1.0
  %v13071 = vadd.f32 %v13069, 1.0
  %v13072 = vrcp.pop %v13070
  %v13073 = vmul.f32 1.0, %v13072
  %v13074 = vrcp.pop %v13071
  %v13075 = vmul.f32 1.0, %v13074
  %v13076 = vxor.u32 %v13058, 2147483648
  %v13077 = vxor.u32 %v13059, 2147483648
  %v13078 = vmul.f32 %v13076, 1.442695
  %v13079 = vpow.pop %v13078
  %v13080 = vmul.f32 %v13077, 1.442695
  %v13081 = vpow.pop %v13080
  %v13082 = vadd.f32 %v13079, 1.0
  %v13083 = vadd.f32 %v13081, 1.0
  %v13084 = vrcp.pop %v13082
  %v13085 = vmul.f32 1.0, %v13084
  %v13086 = vrcp.pop %v13083
  %v13087 = vmul.f32 1.0, %v13086
  %v13088 = vtanh.pop %v13060
  %v13089 = vtanh.pop %v13061
  %v13090 = vxor.u32 %v13062, 2147483648
  %v13091 = vxor.u32 %v13063, 2147483648
  %v13092 = vmul.f32 %v13090, 1.442695
  %v13093 = vpow.pop %v13092
  %v13094 = vmul.f32 %v13091, 1.442695
  %v13095 = vpow.pop %v13094
  %v13096 = vadd.f32 %v13093, 1.0
  %v13097 = vadd.f32 %v13095, 1.0
  %v13098 = vrcp.pop %v13096
  %v13099 = vmul.f32 1.0, %v13098
  %v13100 = vrcp.pop %v13097
  %v13101 = vmul.f32 1.0, %v13100
  %v13102 = vmul.f32 %v13085, %v12874
  %v13103 = vmul.f32 %v13087, %v12875
  %v13104 = vmul.f32 %v13073, %v13088
  %v13105 = vmul.f32 %v13075, %v13089
  %v13106 = vadd.f32 %v13102, %v13104
  %v13107 = vadd.f32 %v13103, %v13105
  %v13108 = vtanh.pop %v13106
  %v13109 = vtanh.pop %v13107
  %v13110 = vmul.f32 %v13099, %v13108
  %v13111 = vmul.f32 %v13101, %v13109
  %v13112 = vadd.f32 %v12880, %v13110
  %v13113 = vadd.f32 %v12881, %v13111
  %v13114 = vmul.f32 %v13112, 0.125
  %v13115 = vmul.f32 %v13113, 0.125
  %v13116 = vld [vmem:[%s8] sm:$0xff]
  %v13117 = vld [vmem:[%s8 + $0x8] sm:$0xff]
  %v13118 = vld [vmem:[%s8 + $0x10] sm:$0xff]
  %v13119 = vld [vmem:[%s8 + $0x18] sm:$0xff]
  %v13120 = vld [vmem:[%s8 + $0x20] sm:$0xff]
  %v13121 = vld [vmem:[%s8 + $0x28] sm:$0xff]
  %v13122 = vld [vmem:[%s8 + $0x30] sm:$0xff]
  %v13123 = vld [vmem:[%s8 + $0x38] sm:$0xff]
  %v13124 = vld [vmem:[%s8 + $0x40] sm:$0xff]
  %v13125 = vld [vmem:[%s8 + $0x48] sm:$0xff]
  %v13126 = vld [vmem:[%s8 + $0x50] sm:$0xff]
  %v13127 = vld [vmem:[%s8 + $0x58] sm:$0xff]
  %v13128 = vld [vmem:[%s8 + $0x60] sm:$0xff]
  %v13129 = vld [vmem:[%s8 + $0x68] sm:$0xff]
  %v13130 = vld [vmem:[%s8 + $0x70] sm:$0xff]
  %v13131 = vld [vmem:[%s8 + $0x78] sm:$0xff]
  %v13132 = vld [vmem:[%s8 + $0x80] sm:$0xff]
  %v13133 = vld [vmem:[%s8 + $0x88] sm:$0xff]
  %v13134 = vld [vmem:[%s8 + $0x90] sm:$0xff]
  %v13135 = vld [vmem:[%s8 + $0x98] sm:$0xff]
  %v13136 = vld [vmem:[%s8 + $0xa0] sm:$0xff]
  %v13137 = vld [vmem:[%s8 + $0xa8] sm:$0xff]
  %v13138 = vld [vmem:[%s8 + $0xb0] sm:$0xff]
  %v13139 = vld [vmem:[%s8 + $0xb8] sm:$0xff]
  %v13140 = vld [vmem:[%s8 + $0xc0] sm:$0xff]
  %v13141 = vld [vmem:[%s8 + $0xc8] sm:$0xff]
  %v13142 = vld [vmem:[%s8 + $0xd0] sm:$0xff]
  %v13143 = vld [vmem:[%s8 + $0xd8] sm:$0xff]
  %v13144 = vld [vmem:[%s8 + $0xe0] sm:$0xff]
  %v13145 = vld [vmem:[%s8 + $0xe8] sm:$0xff]
  %v13146 = vld [vmem:[%s8 + $0xf0] sm:$0xff]
  %v13147 = vld [vmem:[%s8 + $0xf8] sm:$0xff]
  %v13148 = vld [vmem:[%s9] sm:$0x1]
  %v13150 = vlaneseq
  %v13151 = vshrl.u32 %v13150, 7
  %v13152 = vsub.s32 0, %v13151
  %v13153 = vrot.slane %v13148, %v13152
  %13155 = vmatprep.subr.mxu0 0.0
  %13156 = vmatpush1.msra.mxu0 %v13116
  %13157 = vmatprep.subr.mxu0 0.0
  %13158 = vmatpush1.msra.mxu0 %v13117
  %13159 = vmatprep.subr.mxu0 0.0
  %13160 = vmatpush1.msra.mxu0 %v13118
  %13161 = vmatprep.subr.mxu0 0.0
  %13162 = vmatpush1.msra.mxu0 %v13119
  %13163 = vmatprep.subr.mxu0 0.0
  %13164 = vmatpush1.msra.mxu0 %v13120
  %13165 = vmatprep.subr.mxu0 0.0
  %13166 = vmatpush1.msra.mxu0 %v13121
  %13167 = vmatprep.subr.mxu0 0.0
  %13168 = vmatpush1.msra.mxu0 %v13122
  %13169 = vmatprep.subr.mxu0 0.0
  %13170 = vmatpush1.msra.mxu0 %v13123
  %13171 = vmatprep.subr.mxu0 0.0
  %13172 = vmatpush1.msra.mxu0 %v13124
  %13173 = vmatprep.subr.mxu0 0.0
  %13174 = vmatpush1.msra.mxu0 %v13125
  %13175 = vmatprep.subr.mxu0 0.0
  %13176 = vmatpush1.msra.mxu0 %v13126
  %13177 = vmatprep.subr.mxu0 0.0
  %13178 = vmatpush1.msra.mxu0 %v13127
  %13179 = vmatprep.subr.mxu0 0.0
  %13180 = vmatpush1.msra.mxu0 %v13128
  %13181 = vmatprep.subr.mxu0 0.0
  %13182 = vmatpush1.msra.mxu0 %v13129
  %13183 = vmatprep.subr.mxu0 0.0
  %13184 = vmatpush1.msra.mxu0 %v13130
  %13185 = vmatprep.subr.mxu0 0.0
  %13186 = vmatpush1.msra.mxu0 %v13131
  %13187 = vmatprep.subr.mxu0 0.0
  %13188 = vmatpush1.msra.mxu0 %v13132
  %13189 = vmatprep.subr.mxu0 0.0
  %13190 = vmatpush1.msra.mxu0 %v13133
  %13191 = vmatprep.subr.mxu0 0.0
  %13192 = vmatpush1.msra.mxu0 %v13134
  %13193 = vmatprep.subr.mxu0 0.0
  %13194 = vmatpush1.msra.mxu0 %v13135
  %13195 = vmatprep.subr.mxu0 0.0
  %13196 = vmatpush1.msra.mxu0 %v13136
  %13197 = vmatprep.subr.mxu0 0.0
  %13198 = vmatpush1.msra.mxu0 %v13137
  %13199 = vmatprep.subr.mxu0 0.0
  %13200 = vmatpush1.msra.mxu0 %v13138
  %13201 = vmatprep.subr.mxu0 0.0
  %13202 = vmatpush1.msra.mxu0 %v13139
  %13203 = vmatprep.subr.mxu0 0.0
  %13204 = vmatpush1.msra.mxu0 %v13140
  %13205 = vmatprep.subr.mxu0 0.0
  %13206 = vmatpush1.msra.mxu0 %v13141
  %13207 = vmatprep.subr.mxu0 0.0
  %13208 = vmatpush1.msra.mxu0 %v13142
  %13209 = vmatprep.subr.mxu0 0.0
  %13210 = vmatpush1.msra.mxu0 %v13143
  %13211 = vmatprep.subr.mxu0 0.0
  %13212 = vmatpush1.msra.mxu0 %v13144
  %13213 = vmatprep.subr.mxu0 0.0
  %13214 = vmatpush1.msra.mxu0 %v13145
  %13215 = vmatprep.subr.mxu0 0.0
  %13216 = vmatpush1.msra.mxu0 %v13146
  %13217 = vmatprep.subr.mxu0 0.0
  %13218 = vmatpush1.msra.mxu0 %v13147
  %13219 = vmatprep.mubr.f32.mxu0 %v13115
  %13220 = vmatmul.mubr.f32.gmra.mrb[0].mxu0 %v13114
  %v13221 = vpop.f32.mrb[0].mxu0
  %v13222 = vadd.f32 %v13153, %v13221
  %v13223 = vpop.f32.mrb[0].mxu0
  %13224 = vdwg.mxu0
  %vm13225 = vcmask 31744
  %13226 = vst.msk [vmem:[%s10] sm:$0xff] %vm13225, %v13222
  // Predicated region
  $region42: #{forward.1} parent=0 // pred_check
    _
  $region43: #{forward.1} parent=0 // pred_check_branch
    %13228 = sbr.rel (0) target = $region45
  $region44: #{forward.1} parent=0 // pred_region
    _
  $region45: #{forward.1} parent=0 // pred_fallthru
    _
  // Predicated region
  $region46: #{forward.1} parent=0 // pred_check
    _
  $region47: #{forward.1} parent=0 // pred_check_branch
    %13230 = sbr.rel (0) target = $region49
  $region48: #{forward.1} parent=0 // pred_region
    _
  $region49: #{forward.1} parent=0 // pred_fallthru
    _

</llo_original>
